<compile_context>
chip_gen: v7x
topology: tpu7x:2x2x1
jax: 0.10.0
libtpu: 0.0.40
codegen_flags: <defaults>
</compile_context>

<pallas_src>
import jax
import jax.numpy as jnp
from jax import lax
from jax.experimental import pallas as pl
from jax.experimental.pallas import tpu as pltpu

_NEG_INF = -1e30  # finite "minus infinity" (avoids -inf - -inf = NaN corner cases)


def _tpc_attn_kernel(q_ref, k_ref, v_ref, mask_ref, o_ref, m_s, l_s, acc_s):
    # Blocks (Mg = heads per group, tk = kv tokens per step):
    #   q_ref    : [1, Mg, H]      bf16  (resident across kv steps)
    #   k_ref    : [1, tk, Mg, H]  bf16  native [B, KVT, M, H] slice
    #   v_ref    : [1, tk, Mg, H]  bf16
    #   mask_ref : [Mg, tk*Mg]     f32   additive head mask (0 / -1e30), resident
    #   o_ref    : [1, Mg, H]      bf16  (written on last kv step)
    # Scratch (persist across kv steps): m_s/l_s [Mg, 1] f32, acc_s [Mg, H] f32.
    kv = pl.program_id(2)

    @pl.when(kv == 0)
    def _():
        m_s[...] = jnp.full(m_s.shape, _NEG_INF, dtype=m_s.dtype)
        l_s[...] = jnp.zeros(l_s.shape, dtype=l_s.dtype)
        acc_s[...] = jnp.zeros(acc_s.shape, dtype=acc_s.dtype)

    _, tk, mg, h = k_ref.shape
    q = q_ref[0]                              # [Mg, H]            bf16
    k = k_ref[0].reshape(tk * mg, h)          # [tk*Mg, H]  free sublane-collapse
    v = v_ref[0].reshape(tk * mg, h)          # [tk*Mg, H]

    # Group-local all-pairs scores on the MXU (bf16 in, f32 acc); one additive
    # mask keeps only columns whose kv-head matches the query-head (r % Mg == m).
    s = lax.dot_general(
        q, k, (((1,), (1,)), ((), ())), preferred_element_type=jnp.float32
    ) + mask_ref[...]                         # [Mg, tk*Mg] f32

    # Online softmax update (per head).
    m_prev = m_s[...]                                             # [Mg, 1]
    m_new = jnp.maximum(m_prev, jnp.max(s, axis=-1, keepdims=True))
    alpha = jnp.exp(m_prev - m_new)                               # [Mg, 1]
    p = jnp.exp(s - m_new)                    # [Mg, tk*Mg], masked cols -> 0

    l_s[...] = alpha * l_s[...] + jnp.sum(p, axis=-1, keepdims=True)
    # Dense PV matmul on the MXU (masked columns contribute exactly 0); bf16
    # probabilities like the reference custom_matmul_bf16, f32 accumulation.
    acc_s[...] = alpha * acc_s[...] + jnp.dot(
        p.astype(jnp.bfloat16), v, preferred_element_type=jnp.float32
    )                                                             # [Mg, H]
    m_s[...] = m_new

    @pl.when(kv == pl.num_programs(2) - 1)
    def _():
        inv_l = pl.reciprocal(l_s[...], approx=True)              # EUP
        o_ref[0] = (acc_s[...] * inv_l).astype(o_ref.dtype)


def tpc_attn(q, k, v, *, B, QT, KVT, M, H, block_kv=512, block_heads=16):
    """q: [B, QT, M, H], k/v: [B, KVT, M, H] (any reshapeable layout)
    -> out: [B, M, QT, H] bf16.  Requires QT == 1 (decode attention)."""
    assert QT == 1, "TPCAttn kernel specializes QT == 1 (decode attention)"
    tk = min(block_kv, KVT)
    assert KVT % tk == 0, "KVT must be divisible by block_kv"
    mg = min(block_heads, M)
    assert M % mg == 0, "M must be divisible by the head-group size"
    n_kv = KVT // tk
    n_g = M // mg

    # Free (no data movement) reshapes only -- K/V stay in native layout.
    q3 = q.reshape(B, QT, M, H).reshape(B, M, H).astype(jnp.bfloat16)
    k4 = k.reshape(B, KVT, M, H).astype(jnp.bfloat16)
    v4 = v.reshape(B, KVT, M, H).astype(jnp.bfloat16)

    # Precomputed additive head mask: flattened K/V row r = t*Mg + mg holds
    # kv-head (r % Mg); only the matching query-head keeps its score.
    col_head = jnp.arange(tk * mg, dtype=jnp.int32) % mg
    row_head = jnp.arange(mg, dtype=jnp.int32)
    head_mask = jnp.where(
        row_head[:, None] == col_head[None, :], 0.0, _NEG_INF
    ).astype(jnp.float32)                                         # [Mg, tk*Mg]

    out = pl.pallas_call(
        _tpc_attn_kernel,
        out_shape=jax.ShapeDtypeStruct((B, M, H), jnp.bfloat16),
        grid_spec=pltpu.PrefetchScalarGridSpec(
            num_scalar_prefetch=0,
            grid=(B, n_g, n_kv),
            in_specs=[
                pl.BlockSpec((1, mg, H), lambda b, g, kv: (b, g, 0)),
                pl.BlockSpec((1, tk, mg, H), lambda b, g, kv: (b, kv, g, 0)),
                pl.BlockSpec((1, tk, mg, H), lambda b, g, kv: (b, kv, g, 0)),
                pl.BlockSpec((mg, tk * mg), lambda b, g, kv: (0, 0)),
            ],
            out_specs=pl.BlockSpec((1, mg, H), lambda b, g, kv: (b, g, 0)),
            scratch_shapes=[
                pltpu.VMEM((mg, 1), jnp.float32),   # running max
                pltpu.VMEM((mg, 1), jnp.float32),   # running denom
                pltpu.VMEM((mg, H), jnp.float32),   # output accumulator
            ],
        ),
        compiler_params=pltpu.CompilerParams(
            dimension_semantics=("parallel", "parallel", "arbitrary"),
            vmem_limit_bytes=48 * 1024 * 1024,   # headroom; < 64 MiB v7x per-TC
        ),
    )(q3, k4, v4, head_mask)
    return out.reshape(B, M, QT, H)


def _ref_attn(q, k, v, *, B, QT, KVT, M, H):
    qh = q.reshape(B, QT, M, H).transpose(0, 2, 1, 3)
    kh = k.reshape(B, KVT, M, H).transpose(0, 2, 1, 3)
    vh = v.reshape(B, KVT, M, H).transpose(0, 2, 1, 3)
    s = jnp.einsum("bmqh,bmkh->bmqk", qh, kh, preferred_element_type=jnp.float32)
    p = jax.nn.softmax(s, axis=-1)
    out = jnp.einsum(
        "bmqk,bmkh->bmqh", p.astype(jnp.bfloat16), vh,
        preferred_element_type=jnp.float32,
    )
    return out.astype(jnp.bfloat16)


if __name__ == "__main__":
    # Small shapes consistent with the module (module: B=64, QT=1, KVT=1024,
    # M=32, H=128); B scaled down, KVT/M/H kept so the head-group axis (G=2),
    # the online-softmax kv loop (n_kv=2 at block_kv=512) and lane/sublane
    # alignment are all exercised.
    B_, QT_, KVT_, M_, H_ = 2, 1, 1024, 32, 128

    key = jax.random.PRNGKey(0)
    kq, kk, kvk = jax.random.split(key, 3)
    q = jax.random.normal(kq, (B_, QT_, M_, H_), dtype=jnp.float32).astype(jnp.bfloat16)
    k = jax.random.normal(kk, (B_, KVT_, M_, H_), dtype=jnp.float32).astype(jnp.bfloat16)
    v = jax.random.normal(kvk, (B_, KVT_, M_, H_), dtype=jnp.float32).astype(jnp.bfloat16)

    out = tpc_attn(q, k, v, B=B_, QT=QT_, KVT=KVT_, M=M_, H=H_,
                   block_kv=512, block_heads=16)
    out = jax.block_until_ready(out)

    ref = _ref_attn(q, k, v, B=B_, QT=QT_, KVT=KVT_, M=M_, H=H_)
    assert out.shape == (B_, M_, QT_, H_) and out.dtype == jnp.bfloat16
    err = jnp.max(jnp.abs(out.astype(jnp.float32) - ref.astype(jnp.float32)))
    assert float(err) < 3e-2, f"max abs error {float(err)}"

    print("KERNEL_OK")
</pallas_src>

<mosaic_0001>
module attributes {stable_mosaic.version = 11 : i64} {
  func.func @_tpc_attn_kernel(%arg0: i32, %arg1: i32, %arg2: i32, %arg3: memref<1x16x128xbf16, #tpu.memory_space<vmem>>, %arg4: memref<1x512x16x128xbf16, #tpu.memory_space<vmem>>, %arg5: memref<1x512x16x128xbf16, #tpu.memory_space<vmem>>, %arg6: memref<16x8192xf32, #tpu.memory_space<vmem>>, %arg7: memref<1x16x128xbf16, #tpu.memory_space<vmem>>, %arg8: memref<16x1xf32, #tpu.memory_space<vmem>>, %arg9: memref<16x1xf32, #tpu.memory_space<vmem>>, %arg10: memref<16x128xf32, #tpu.memory_space<vmem>>) attributes {dimension_semantics = [#tpu.dimension_semantics<parallel>, #tpu.dimension_semantics<parallel>, #tpu.dimension_semantics<arbitrary>], iteration_bounds = array<i64: 2, 2, 2>, scalar_prefetch = 0 : i64, scratch_operands = 3 : i64, tpu.core_type = #tpu.core_type<tc>, window_params = [{transform_indices = @transform_0, window_bounds = array<i64: 1, 16, 128>}, {transform_indices = @transform_1, window_bounds = array<i64: 1, 512, 16, 128>}, {transform_indices = @transform_2, window_bounds = array<i64: 1, 512, 16, 128>}, {pipeline_mode = #tpu.pipeline_mode<synchronous>, transform_indices = @transform_3, window_bounds = array<i64: 16, 8192>}, {transform_indices = @transform_4, window_bounds = array<i64: 1, 16, 128>}]} {
    %c0_i32 = arith.constant 0 : i32
    %0 = arith.cmpi eq, %arg2, %c0_i32 : i32
    %1 = arith.extui %0 : i1 to i32
    %c0_i32_0 = arith.constant 0 : i32
    %2 = arith.cmpi ne, %1, %c0_i32_0 : i32
    scf.if %2 {
      %cst_29 = arith.constant -1.000000e+30 : f32
      %40 = vector.broadcast %cst_29 : f32 to vector<16x1xf32>
      %c0_30 = arith.constant 0 : index
      %c0_31 = arith.constant 0 : index
      %41 = vector.load %arg8[%c0_30, %c0_31] : memref<16x1xf32, #tpu.memory_space<vmem>>, vector<16x1xf32>
      tpu.vector_store %arg8[%c0_30, %c0_31], %40 {strides = array<i32>} : memref<16x1xf32, #tpu.memory_space<vmem>>, vector<16x1xf32>,
      %cst_32 = arith.constant 0.000000e+00 : f32
      %42 = vector.broadcast %cst_32 : f32 to vector<16x1xf32>
      %c0_33 = arith.constant 0 : index
      %c0_34 = arith.constant 0 : index
      %43 = vector.load %arg9[%c0_33, %c0_34] : memref<16x1xf32, #tpu.memory_space<vmem>>, vector<16x1xf32>
      tpu.vector_store %arg9[%c0_33, %c0_34], %42 {strides = array<i32>} : memref<16x1xf32, #tpu.memory_space<vmem>>, vector<16x1xf32>,
      %cst_35 = arith.constant 0.000000e+00 : f32
      %44 = vector.broadcast %cst_35 : f32 to vector<16x128xf32>
      %c0_36 = arith.constant 0 : index
      %c0_37 = arith.constant 0 : index
      %45 = vector.load %arg10[%c0_36, %c0_37] : memref<16x128xf32, #tpu.memory_space<vmem>>, vector<16x128xf32>
      tpu.vector_store %arg10[%c0_36, %c0_37], %44 {strides = array<i32>} : memref<16x128xf32, #tpu.memory_space<vmem>>, vector<16x128xf32>,
    } else {
    }
    %c0 = arith.constant 0 : index
    %c0_1 = arith.constant 0 : index
    %c0_2 = arith.constant 0 : index
    %3 = vector.load %arg3[%c0, %c0_1, %c0_2] : memref<1x16x128xbf16, #tpu.memory_space<vmem>>, vector<1x16x128xbf16>
    %4 = vector.shape_cast %3 : vector<1x16x128xbf16> to vector<16x128xbf16>
    %c0_3 = arith.constant 0 : index
    %c0_4 = arith.constant 0 : index
    %c0_5 = arith.constant 0 : index
    %c0_6 = arith.constant 0 : index
    %5 = vector.load %arg4[%c0_3, %c0_4, %c0_5, %c0_6] : memref<1x512x16x128xbf16, #tpu.memory_space<vmem>>, vector<1x512x16x128xbf16>
    %6 = vector.shape_cast %5 : vector<1x512x16x128xbf16> to vector<512x16x128xbf16>
    %7 = vector.shape_cast %6 : vector<512x16x128xbf16> to vector<8192x128xbf16>
    %c0_7 = arith.constant 0 : index
    %c0_8 = arith.constant 0 : index
    %c0_9 = arith.constant 0 : index
    %c0_10 = arith.constant 0 : index
    %8 = vector.load %arg5[%c0_7, %c0_8, %c0_9, %c0_10] : memref<1x512x16x128xbf16, #tpu.memory_space<vmem>>, vector<1x512x16x128xbf16>
    %9 = vector.shape_cast %8 : vector<1x512x16x128xbf16> to vector<512x16x128xbf16>
    %10 = vector.shape_cast %9 : vector<512x16x128xbf16> to vector<8192x128xbf16>
    %cst = arith.constant dense<0.000000e+00> : vector<16x8192xf32>
    %11 = tpu.matmul %4, %7, %cst {dimension_numbers = #tpu.dot_dimension_numbers<[1], [1], [0], [0], [0, 0, 1, 0], [], []>} : vector<16x128xbf16>, vector<8192x128xbf16>, vector<16x8192xf32> -> vector<16x8192xf32>
    %c0_11 = arith.constant 0 : index
    %c0_12 = arith.constant 0 : index
    %12 = vector.load %arg6[%c0_11, %c0_12] : memref<16x8192xf32, #tpu.memory_space<vmem>>, vector<16x8192xf32>
    %13 = arith.addf %11, %12 : vector<16x8192xf32>
    %c0_13 = arith.constant 0 : index
    %c0_14 = arith.constant 0 : index
    %14 = vector.load %arg8[%c0_13, %c0_14] : memref<16x1xf32, #tpu.memory_space<vmem>>, vector<16x1xf32>
    %cst_15 = arith.constant dense<0xFF800000> : vector<16xf32>
    %15 = vector.multi_reduction <maximumf>, %13, %cst_15 [1] : vector<16x8192xf32> to vector<16xf32>
    %16 = vector.shape_cast %15 : vector<16xf32> to vector<16x1xf32>
    %17 = arith.maximumf %14, %16 : vector<16x1xf32>
    %18 = arith.subf %14, %17 : vector<16x1xf32>
    %19 = math.exp %18 : vector<16x1xf32>
    %20 = vector.broadcast %17 : vector<16x1xf32> to vector<16x8192xf32>
    %21 = arith.subf %13, %20 : vector<16x8192xf32>
    %22 = math.exp %21 : vector<16x8192xf32>
    %c0_16 = arith.constant 0 : index
    %c0_17 = arith.constant 0 : index
    %23 = vector.load %arg9[%c0_16, %c0_17] : memref<16x1xf32, #tpu.memory_space<vmem>>, vector<16x1xf32>
    %24 = arith.mulf %19, %23 : vector<16x1xf32>
    %cst_18 = arith.constant dense<0.000000e+00> : vector<16xf32>
    %25 = vector.multi_reduction <add>, %22, %cst_18 [1] : vector<16x8192xf32> to vector<16xf32>
    %26 = vector.shape_cast %25 : vector<16xf32> to vector<16x1xf32>
    %27 = arith.addf %24, %26 : vector<16x1xf32>
    %c0_19 = arith.constant 0 : index
    %c0_20 = arith.constant 0 : index
    %28 = vector.load %arg9[%c0_19, %c0_20] : memref<16x1xf32, #tpu.memory_space<vmem>>, vector<16x1xf32>
    tpu.vector_store %arg9[%c0_19, %c0_20], %27 {strides = array<i32>} : memref<16x1xf32, #tpu.memory_space<vmem>>, vector<16x1xf32>,
    %c0_21 = arith.constant 0 : index
    %c0_22 = arith.constant 0 : index
    %29 = vector.load %arg10[%c0_21, %c0_22] : memref<16x128xf32, #tpu.memory_space<vmem>>, vector<16x128xf32>
    %30 = vector.broadcast %19 : vector<16x1xf32> to vector<16x128xf32>
    %31 = arith.mulf %30, %29 : vector<16x128xf32>
    %32 = arith.truncf %22 : vector<16x8192xf32> to vector<16x8192xbf16>
    %cst_23 = arith.constant dense<0.000000e+00> : vector<16x128xf32>
    %33 = tpu.matmul %32, %10, %cst_23 {dimension_numbers = #tpu.dot_dimension_numbers<[1], [0], [0], [1], [0, 0, 1, 1], [], []>} : vector<16x8192xbf16>, vector<8192x128xbf16>, vector<16x128xf32> -> vector<16x128xf32>
    %34 = arith.addf %31, %33 : vector<16x128xf32>
    %c0_24 = arith.constant 0 : index
    %c0_25 = arith.constant 0 : index
    %35 = vector.load %arg10[%c0_24, %c0_25] : memref<16x128xf32, #tpu.memory_space<vmem>>, vector<16x128xf32>
    tpu.vector_store %arg10[%c0_24, %c0_25], %34 {strides = array<i32>} : memref<16x128xf32, #tpu.memory_space<vmem>>, vector<16x128xf32>,
    %c0_26 = arith.constant 0 : index
    %c0_27 = arith.constant 0 : index
    %36 = vector.load %arg8[%c0_26, %c0_27] : memref<16x1xf32, #tpu.memory_space<vmem>>, vector<16x1xf32>
    tpu.vector_store %arg8[%c0_26, %c0_27], %17 {strides = array<i32>} : memref<16x1xf32, #tpu.memory_space<vmem>>, vector<16x1xf32>,
    %c1_i32 = arith.constant 1 : i32
    %37 = arith.cmpi eq, %arg2, %c1_i32 : i32
    %38 = arith.extui %37 : i1 to i32
    %c0_i32_28 = arith.constant 0 : i32
    %39 = arith.cmpi ne, %38, %c0_i32_28 : i32
    scf.if %39 {
      %c0_29 = arith.constant 0 : index
      %c0_30 = arith.constant 0 : index
      %40 = vector.load %arg9[%c0_29, %c0_30] : memref<16x1xf32, #tpu.memory_space<vmem>>, vector<16x1xf32>
      %41 = tpu.reciprocal %40 {approx = true} : vector<16x1xf32> -> vector<16x1xf32>
      %c0_31 = arith.constant 0 : index
      %c0_32 = arith.constant 0 : index
      %42 = vector.load %arg10[%c0_31, %c0_32] : memref<16x128xf32, #tpu.memory_space<vmem>>, vector<16x128xf32>
      %43 = vector.broadcast %41 : vector<16x1xf32> to vector<16x128xf32>
      %44 = arith.mulf %42, %43 : vector<16x128xf32>
      %45 = arith.truncf %44 : vector<16x128xf32> to vector<16x128xbf16>
      %c0_33 = arith.constant 0 : index
      %c0_34 = arith.constant 0 : index
      %c0_35 = arith.constant 0 : index
      %46 = vector.load %arg7[%c0_33, %c0_34, %c0_35] : memref<1x16x128xbf16, #tpu.memory_space<vmem>>, vector<1x16x128xbf16>
      %47 = vector.shape_cast %46 : vector<1x16x128xbf16> to vector<16x128xbf16>
      %48 = vector.shape_cast %45 : vector<16x128xbf16> to vector<1x16x128xbf16>
      tpu.vector_store %arg7[%c0_33, %c0_34, %c0_35], %48 {strides = array<i32>} : memref<1x16x128xbf16, #tpu.memory_space<vmem>>, vector<1x16x128xbf16>,
    } else {
    }
    return
  }
  func.func @transform_0(%arg0: i32, %arg1: i32, %arg2: i32) -> (i32, i32, i32) {
    %c0_i32 = arith.constant 0 : i32
    %c0_i32_0 = arith.constant 0 : i32
    return %arg0, %arg1, %c0_i32 : i32, i32, i32
  }
  func.func @transform_1(%arg0: i32, %arg1: i32, %arg2: i32) -> (i32, i32, i32, i32) {
    %c0_i32 = arith.constant 0 : i32
    %c0_i32_0 = arith.constant 0 : i32
    return %arg0, %arg2, %arg1, %c0_i32 : i32, i32, i32, i32
  }
  func.func @transform_2(%arg0: i32, %arg1: i32, %arg2: i32) -> (i32, i32, i32, i32) {
    %c0_i32 = arith.constant 0 : i32
    %c0_i32_0 = arith.constant 0 : i32
    return %arg0, %arg2, %arg1, %c0_i32 : i32, i32, i32, i32
  }
  func.func @transform_3(%arg0: i32, %arg1: i32, %arg2: i32) -> (i32, i32) {
    %c0_i32 = arith.constant 0 : i32
    %c0_i32_0 = arith.constant 0 : i32
    %c0_i32_1 = arith.constant 0 : i32
    return %c0_i32, %c0_i32_0 : i32, i32
  }
  func.func @transform_4(%arg0: i32, %arg1: i32, %arg2: i32) -> (i32, i32, i32) {
    %c0_i32 = arith.constant 0 : i32
    %c0_i32_0 = arith.constant 0 : i32
    return %arg0, %arg1, %c0_i32 : i32, i32, i32
  }
}

</mosaic_0001>

<llo_original>
// kernel: tpu_custom_call.1
$region0: #{tpu_custom_call.1}
  #allocation0 [shape = 'u32[]', space=smem, size = 0x4, offset = 0x4, fixed_abs, tag = 'smem constant byte address 0x4 - core index']
  #allocation1 [shape = 'u32[144,128]{1,0:T(1,128)}', space=vmem, size = 0x12000, scoped, tag = 'internal scratch']
  #allocation2 [shape = 'f32[16,1]{1,0:T(8,128)}', space=vmem, size = 0x2000, scoped, tag = 'scratch operand']
  #allocation3 [shape = 'f32[16,1]{1,0:T(8,128)}', space=vmem, size = 0x2000, scoped, tag = 'scratch operand']
  #allocation4 [shape = 'f32[16,128]{1,0:T(8,128)}', space=vmem, size = 0x2000, scoped, tag = 'scratch operand']
  #allocation14 [shape = 's32[]', space=sflag, size = 0x4, offset = 0, fixed_abs, tag = 'sflag constant byte address 0x0 - dummy sync flag']
  #allocation16 [shape = 's32[]', space=sflag, size = 0x4, offset = 0, fixed_abs, tag = 'sflag constant byte address 0x0 - dummy sync flag']
  %s0 = inlined_call_operand.hbm [shape: bf16[2,32,128], index: 0, kind: input, shape index: {}]
  %s1 = inlined_call_operand.hbm [shape: bf16[2,1024,32,128], index: 1, kind: input, shape index: {}]
  %s2 = inlined_call_operand.hbm [shape: bf16[2,1024,32,128], index: 2, kind: input, shape index: {}]
  %s3 = inlined_call_operand.hbm [shape: f32[16,8192], index: 3, kind: input, shape index: {}]
  %s4 = inlined_call_operand.hbm [shape: bf16[2,32,128], index: 4, kind: output, shape index: {}]
  %s5 = sld [smem:[#allocation0]]
  $region73: #{tpu_custom_call.1} parent=0
    _
  %s7 = ssub.s32 1, %s5
  %s8 = scalar_select 0, %s7, %s5
  $region1: #{tpu_custom_call.1} parent=0
    #allocation5 [shape = 'u8[8192]{0}', space=vmem, size = 0x2000, scoped, tag = 'input window, operand 0']
    #allocation6 [shape = 's32[2]{0}', space=sflag, size = 0x8, scoped, tag = 'scoped memory for tpu_custom_call.1']
    #allocation7 [shape = 's32[2]{0}', space=sflag, size = 0x8, scoped, tag = 'scoped memory for tpu_custom_call.1']
    #allocation8 [shape = 'u8[4194304]{0}', space=vmem, size = 0x400000, scoped, tag = 'input window, operand 1']
    #allocation9 [shape = 's32[2]{0}', space=sflag, size = 0x8, scoped, tag = 'scoped memory for tpu_custom_call.1']
    #allocation10 [shape = 'u8[4194304]{0}', space=vmem, size = 0x400000, scoped, tag = 'input window, operand 2']
    #allocation11 [shape = 'u8[524288]{0}', space=vmem, size = 0x80000, scoped, tag = 'input window, operand 3, single buffered']
    #allocation12 [shape = 's32[1]{0}', space=sflag, size = 0x4, scoped, tag = 'scoped memory for tpu_custom_call.1']
    #allocation13 [shape = 'u8[8192]{0}', space=vmem, size = 0x2000, scoped, tag = 'output window, operand 0']
    %9 = vsyncpa [#allocation6], 0
    %s10 = scalar_lea.sflag [#allocation6], 1
    %11 = vsyncpa %s10, 0
    %12 = vsyncpa [#allocation9], 0
    %s13 = scalar_lea.sflag [#allocation9], 1
    %14 = vsyncpa %s13, 0
    %15 = vsyncpa [#allocation12], 0
    %16 = vsyncpa [#allocation7], 0
    %s17 = scalar_lea.sflag [#allocation7], 1
    %18 = vsyncpa %s17, 0
    loop: start=0, step=1, limit=10
    $region2: #{tpu_custom_call.1} parent=1 // loop_pre_header
      _
    $region3: #{tpu_custom_call.1} parent=1 // loop_header
      %s20 = sphi 0, %s24
      %p21 = scmp.ge.s32.totalorder %s20, 10
      %s27 = sphi 0, %s46
      %s28 = sphi 0, %s42
      %s29 = sphi 0, %s38
      %s30 = sphi 0, %s27
      %s31 = sphi 0, %s28
      %s32 = sphi 0, %s29
      %s33 = sphi 0, %s30
      %s34 = sphi 0, %s31
      %s35 = sphi 0, %s32
      %s51 = sphi 0, %s53
      %s54 = sphi 0, %s51
      %s55 = sphi 0, %s54
      %s71 = sphi 0, %s55
      %s81 = sphi 0, %s83
      %s84 = sphi 0, %s81
      %s85 = sphi 0, %s84
      %s101 = sphi 0, %s85
      %s111 = sphi 0, %s113
      %s114 = sphi 0, %s111
      %s115 = sphi 0, %s114
      %s131 = sphi 0, %s115
      %s135 = sphi 0, %s135
      %s137 = sphi 0, %s135
      %s138 = sphi 0, %s137
      %s152 = sphi 0, %s138
      %s160 = sphi 0, %s162
      %s163 = sphi 0, %s160
      %s164 = sphi 0, %s163
      %s180 = sphi 0, %s164
    $region4: #{tpu_custom_call.1} parent=1 // loop_header_branch
      %23 = sbr.rel (%p21) target = $region8
    $region5: #{tpu_custom_call.1} parent=1 // loop_body
      %s25 = ssub.s32 %s20, 1
      %s26 = ssub.s32 %s20, 2
      %s36 = sadd.s32 1, %s29
      %p37 = scmp.ge.s32.totalorder %s36, 2
      %s38 = scalar_select %p37, 0, %s36
      %s39 = sadd.s32 1, %s28
      %s40 = scalar_select %p37, %s39, %s28
      %p41 = scmp.ge.s32.totalorder %s40, 2
      %s42 = scalar_select %p41, 0, %s40
      %s43 = sadd.s32 1, %s27
      %s44 = scalar_select %p41, %s43, %s27
      %p45 = scmp.ge.s32.totalorder %s44, 2
      %s46 = scalar_select %p45, 0, %s44
      %s47 = ssub.s32 %s27, %s46
      %s48 = ssub.s32 %s28, %s42
      %s49 = sor.u32 %s47, %s48
      %p50 = scmp.eq.s32.totalorder %s49, 0
      %s52 = sadd.s32 %s51, 1
      %s53 = scalar_select %p50, %s51, %s52
      %p56 = pneg %p50
      %p57 = scmp.eq.s32.totalorder %s20, 7
      %p58 = por %p56, %p57
      %p59 = scmp.ne.s32.totalorder %s51, %s54
      %p60 = scmp.eq.s32.totalorder %s20, 0
      %p61 = por %p59, %p60
      %p62 = scmp.ne.s32.totalorder %s51, %s54
      %p63 = scmp.eq.s32.totalorder %s25, 7
      %p64 = por %p62, %p63
      %p65 = scmp.ne.s32.totalorder %s54, %s55
      %p66 = scmp.eq.s32.totalorder %s25, 0
      %p67 = por %p65, %p66
      %p68 = scmp.ne.s32.totalorder %s54, %s55
      %p69 = scmp.eq.s32.totalorder %s26, 7
      %p70 = por %p68, %p69
      %p72 = scmp.ne.s32.totalorder %s55, %s71
      %p73 = scmp.eq.s32.totalorder %s26, 0
      %p74 = por %p72, %p73
      %s75 = ssub.s32 %s27, %s46
      %s76 = ssub.s32 %s29, %s38
      %s77 = sor.u32 %s75, %s76
      %s78 = ssub.s32 %s28, %s42
      %s79 = sor.u32 %s77, %s78
      %p80 = scmp.eq.s32.totalorder %s79, 0
      %s82 = sadd.s32 %s81, 1
      %s83 = scalar_select %p80, %s81, %s82
      %p86 = pneg %p80
      %p87 = scmp.eq.s32.totalorder %s20, 7
      %p88 = por %p86, %p87
      %p89 = scmp.ne.s32.totalorder %s81, %s84
      %p90 = scmp.eq.s32.totalorder %s20, 0
      %p91 = por %p89, %p90
      %p92 = scmp.ne.s32.totalorder %s81, %s84
      %p93 = scmp.eq.s32.totalorder %s25, 7
      %p94 = por %p92, %p93
      %p95 = scmp.ne.s32.totalorder %s84, %s85
      %p96 = scmp.eq.s32.totalorder %s25, 0
      %p97 = por %p95, %p96
      %p98 = scmp.ne.s32.totalorder %s84, %s85
      %p99 = scmp.eq.s32.totalorder %s26, 7
      %p100 = por %p98, %p99
      %p102 = scmp.ne.s32.totalorder %s85, %s101
      %p103 = scmp.eq.s32.totalorder %s26, 0
      %p104 = por %p102, %p103
      %s105 = ssub.s32 %s27, %s46
      %s106 = ssub.s32 %s29, %s38
      %s107 = sor.u32 %s105, %s106
      %s108 = ssub.s32 %s28, %s42
      %s109 = sor.u32 %s107, %s108
      %p110 = scmp.eq.s32.totalorder %s109, 0
      %s112 = sadd.s32 %s111, 1
      %s113 = scalar_select %p110, %s111, %s112
      %p116 = pneg %p110
      %p117 = scmp.eq.s32.totalorder %s20, 7
      %p118 = por %p116, %p117
      %p119 = scmp.ne.s32.totalorder %s111, %s114
      %p120 = scmp.eq.s32.totalorder %s20, 0
      %p121 = por %p119, %p120
      %p122 = scmp.ne.s32.totalorder %s111, %s114
      %p123 = scmp.eq.s32.totalorder %s25, 7
      %p124 = por %p122, %p123
      %p125 = scmp.ne.s32.totalorder %s114, %s115
      %p126 = scmp.eq.s32.totalorder %s25, 0
      %p127 = por %p125, %p126
      %p128 = scmp.ne.s32.totalorder %s114, %s115
      %p129 = scmp.eq.s32.totalorder %s26, 7
      %p130 = por %p128, %p129
      %p132 = scmp.ne.s32.totalorder %s115, %s131
      %p133 = scmp.eq.s32.totalorder %s26, 0
      %p134 = por %p132, %p133
      %s136 = sadd.s32 %s135, 1
      %p139 = scmp.eq.s32.totalorder %s20, 7
      %p140 = scmp.ne.s32.totalorder %s135, %s137
      %p141 = scmp.eq.s32.totalorder %s20, 0
      %p142 = por %p140, %p141
      %p143 = scmp.ne.s32.totalorder %s135, %s137
      %p144 = scmp.eq.s32.totalorder %s25, 7
      %p145 = por %p143, %p144
      %p146 = scmp.ne.s32.totalorder %s137, %s138
      %p147 = scmp.eq.s32.totalorder %s25, 0
      %p148 = por %p146, %p147
      %p149 = scmp.ne.s32.totalorder %s137, %s138
      %p150 = scmp.eq.s32.totalorder %s26, 7
      %p151 = por %p149, %p150
      %p153 = scmp.ne.s32.totalorder %s138, %s152
      %p154 = scmp.eq.s32.totalorder %s26, 0
      %p155 = por %p153, %p154
      %s156 = ssub.s32 %s27, %s46
      %s157 = ssub.s32 %s28, %s42
      %s158 = sor.u32 %s156, %s157
      %p159 = scmp.eq.s32.totalorder %s158, 0
      %s161 = sadd.s32 %s160, 1
      %s162 = scalar_select %p159, %s160, %s161
      %p165 = pneg %p159
      %p166 = scmp.eq.s32.totalorder %s20, 7
      %p167 = por %p165, %p166
      %p168 = scmp.ne.s32.totalorder %s160, %s163
      %p169 = scmp.eq.s32.totalorder %s20, 0
      %p170 = por %p168, %p169
      %p171 = scmp.ne.s32.totalorder %s160, %s163
      %p172 = scmp.eq.s32.totalorder %s25, 7
      %p173 = por %p171, %p172
      %p174 = scmp.ne.s32.totalorder %s163, %s164
      %p175 = scmp.eq.s32.totalorder %s25, 0
      %p176 = por %p174, %p175
      %p177 = scmp.ne.s32.totalorder %s163, %s164
      %p178 = scmp.eq.s32.totalorder %s26, 7
      %p179 = por %p177, %p178
      %p181 = scmp.ne.s32.totalorder %s164, %s180
      %p182 = scmp.eq.s32.totalorder %s26, 0
      %p183 = por %p181, %p182
      %p184 = scmp.le.s32.totalorder 1, %s20
      %p185 = scmp.lt.s32.totalorder %s20, 9
      %p186 = pnand %p184, %p185
      %p187 = pneg %p186
      // Predicated region
      $region9: #{tpu_custom_call.1} parent=5 // pred_check
        _
      $region10: #{tpu_custom_call.1} parent=5 // pred_check_branch
        %189 = sbr.rel (%p186) target = $region12
      $region11: #{tpu_custom_call.1} parent=5 // pred_region
        %s190 = ssub.s32 %s20, 1
        // Predicated region
        $region13: #{tpu_custom_call.1} parent=11 // pred_check
          %p191 = pneg %p148
        $region14: #{tpu_custom_call.1} parent=11 // pred_check_branch
          %193 = sbr.rel (%p191) target = $region16
        $region15: #{tpu_custom_call.1} parent=11 // pred_region
          %s195 = ssub.s32 16384, 16384
          %196 = vsyncadd [#allocation12], %s195
          %s197 = sshll.u32 [#allocation11], 4
          %s198 = int_to_ptr.vmem [resolvable:$true] %s197
          %203 = dma.hbm_to_vmem [thread:$0]  %s3, 16384, %s198, [#allocation12], 8192, 8192, 512
        $region16: #{tpu_custom_call.1} parent=11 // pred_fallthru
          _
      $region12: #{tpu_custom_call.1} parent=5 // pred_fallthru
        _
      %p204 = scmp.lt.s32.totalorder %s20, 8
      // Predicated region
      $region17: #{tpu_custom_call.1} parent=5 // pred_check
        %p205 = pneg %p204
      $region18: #{tpu_custom_call.1} parent=5 // pred_check_branch
        %207 = sbr.rel (%p205) target = $region20
      $region19: #{tpu_custom_call.1} parent=5 // pred_region
        // Predicated region
        $region21: #{tpu_custom_call.1} parent=19 // pred_check
          %p208 = pneg %p61
        $region22: #{tpu_custom_call.1} parent=19 // pred_check_branch
          %210 = sbr.rel (%p208) target = $region24
        $region23: #{tpu_custom_call.1} parent=19 // pred_region
          %s211 = sand.u32 %s51, 1
          %s212 = scalar_lea.sflag [#allocation6], %s211
          %s213 = sand.u32 %s51, 1
          %s214 = smul.addr %s213, 8
          %s215 = scalar_lea.vmem [#allocation5], %s214
          %s216 = smul.u32 2, %s28
          %s218 = ssub.s32 128, 128
          %219 = vsyncadd %s212, %s218
          %s220 = smul.addr %s27, 4
          %s221 = sadd.s32 %s216, %s220
          %s222 = smul.addr %s221, 64
          %s223 = scalar_lea.hbm %s0, %s222
          %s224 = sshll.u32 %s215, 4
          %s225 = int_to_ptr.vmem [resolvable:$true] %s224
          %230 = dma.hbm_to_vmem [thread:$0]  %s223, 128, %s225, %s212, 64, 64, 4
        $region24: #{tpu_custom_call.1} parent=19 // pred_fallthru
          _
        // Predicated region
        $region25: #{tpu_custom_call.1} parent=19 // pred_check
          %p231 = pneg %p91
        $region26: #{tpu_custom_call.1} parent=19 // pred_check_branch
          %233 = sbr.rel (%p231) target = $region28
        $region27: #{tpu_custom_call.1} parent=19 // pred_region
          #allocation15 [shape = 'u32[6]{0}', space=smem, size = 0x18, scoped, tag = 'DMA stride descriptor']
          %s234 = sand.u32 %s20, 1
          %s235 = scalar_lea.sflag [#allocation9], %s234
          %s236 = sand.u32 %s81, 1
          %s237 = smul.addr %s236, 4096
          %s238 = scalar_lea.vmem [#allocation8], %s237
          %s239 = smul.u32 512, %s29
          %s240 = smul.u32 2, %s28
          %s242 = ssub.s32 65536, 65536
          %243 = vsyncadd %s235, %s242
          %s244 = smul.addr %s239, 4
          %s245 = sadd.s32 %s240, %s244
          %s246 = smul.addr %s27, 4096
          %s247 = sadd.s32 %s245, %s246
          %s248 = smul.addr %s247, 64
          %s249 = scalar_lea.hbm %s1, %s248
          %s251 = sshll.u32 1, 14
          %s252 = sxor.u32 4294967295, %s251
          %s254 = sld [smem:[#allocation0]]
          %s255 = sadd.s32 2, %s254
          %s257 = sshll.u32 7, 26
          %s258 = sxor.u32 4294967295, %s257
          %s259 = sand.u32 0, %s258
          %s260 = sshll.u32 %s255, 26
          %s261 = sor.u32 %s259, %s260
          %s262 = sshll.u32 %s238, 4
          %s263 = int_to_ptr.vmem [resolvable:$true] %s262
          %269 = sst [smem:[#allocation15]] 256
          %s270 = scalar_lea.smem [#allocation15], 1
          %271 = sst [smem:[%s270]] 128
          %s272 = scalar_lea.smem [#allocation15], 2
          %273 = sst [smem:[%s272]] 2
          %s274 = scalar_lea.smem [#allocation15], 3
          %275 = sst [smem:[%s274]] 64
          %s276 = scalar_lea.smem [#allocation15], 4
          %277 = sst [smem:[%s276]] 64
          %s278 = scalar_lea.smem [#allocation15], 5
          %279 = sst [smem:[%s278]] 4
          %281 = dma.general %s249, 65536, %s263, %s235, [#allocation14], [#allocation15], %s261, 0
        $region28: #{tpu_custom_call.1} parent=19 // pred_fallthru
          _
        // Predicated region
        $region29: #{tpu_custom_call.1} parent=19 // pred_check
          %p282 = pneg %p121
        $region30: #{tpu_custom_call.1} parent=19 // pred_check_branch
          %284 = sbr.rel (%p282) target = $region32
        $region31: #{tpu_custom_call.1} parent=19 // pred_region
          #allocation17 [shape = 'u32[6]{0}', space=smem, size = 0x18, scoped, tag = 'DMA stride descriptor']
          %s285 = sand.u32 %s20, 1
          %s286 = scalar_lea.sflag [#allocation9], %s285
          %s287 = sand.u32 %s111, 1
          %s288 = smul.addr %s287, 4096
          %s289 = scalar_lea.vmem [#allocation10], %s288
          %s290 = smul.u32 512, %s29
          %s291 = smul.u32 2, %s28
          %s293 = ssub.s32 65536, 65536
          %294 = vsyncadd %s286, %s293
          %s295 = smul.addr %s290, 4
          %s296 = sadd.s32 %s291, %s295
          %s297 = smul.addr %s27, 4096
          %s298 = sadd.s32 %s296, %s297
          %s299 = smul.addr %s298, 64
          %s300 = scalar_lea.hbm %s2, %s299
          %s302 = sshll.u32 1, 14
          %s303 = sxor.u32 4294967295, %s302
          %s305 = sld [smem:[#allocation0]]
          %s306 = sadd.s32 2, %s305
          %s308 = sshll.u32 7, 26
          %s309 = sxor.u32 4294967295, %s308
          %s310 = sand.u32 0, %s309
          %s311 = sshll.u32 %s306, 26
          %s312 = sor.u32 %s310, %s311
          %s313 = sshll.u32 %s289, 4
          %s314 = int_to_ptr.vmem [resolvable:$true] %s313
          %320 = sst [smem:[#allocation17]] 256
          %s321 = scalar_lea.smem [#allocation17], 1
          %322 = sst [smem:[%s321]] 128
          %s323 = scalar_lea.smem [#allocation17], 2
          %324 = sst [smem:[%s323]] 2
          %s325 = scalar_lea.smem [#allocation17], 3
          %326 = sst [smem:[%s325]] 64
          %s327 = scalar_lea.smem [#allocation17], 4
          %328 = sst [smem:[%s327]] 64
          %s329 = scalar_lea.smem [#allocation17], 5
          %330 = sst [smem:[%s329]] 4
          %332 = dma.general %s300, 65536, %s314, %s286, [#allocation16], [#allocation17], %s312, 0
        $region32: #{tpu_custom_call.1} parent=19 // pred_fallthru
          _
      $region20: #{tpu_custom_call.1} parent=5 // pred_fallthru
        _
      %p333 = scmp.le.s32.totalorder 1, %s20
      %p334 = scmp.lt.s32.totalorder %s20, 9
      %p335 = pnand %p333, %p334
      %p336 = pneg %p335
      // Predicated region
      $region33: #{tpu_custom_call.1} parent=5 // pred_check
        _
      $region34: #{tpu_custom_call.1} parent=5 // pred_check_branch
        %338 = sbr.rel (%p335) target = $region36
      $region35: #{tpu_custom_call.1} parent=5 // pred_region
        %s339 = ssub.s32 %s20, 1
        %s340 = sand.u32 %s54, 1
        %s341 = scalar_lea.sflag [#allocation6], %s340
        %s342 = sand.u32 %s54, 1
        %s343 = smul.addr %s342, 8
        %s344 = scalar_lea.vmem [#allocation5], %s343
        // Predicated region
        $region37: #{tpu_custom_call.1} parent=35 // pred_check
          %p345 = pneg %p67
        $region38: #{tpu_custom_call.1} parent=35 // pred_check_branch
          %347 = sbr.rel (%p345) target = $region40
        $region39: #{tpu_custom_call.1} parent=35 // pred_region
          %348 = dma.done %s341, 128
        $region40: #{tpu_custom_call.1} parent=35 // pred_fallthru
          _
        %s349 = sand.u32 %s25, 1
        %s350 = scalar_lea.sflag [#allocation9], %s349
        %s351 = sand.u32 %s84, 1
        %s352 = smul.addr %s351, 4096
        %s353 = scalar_lea.vmem [#allocation8], %s352
        // Predicated region
        $region41: #{tpu_custom_call.1} parent=35 // pred_check
          %p354 = pneg %p97
        $region42: #{tpu_custom_call.1} parent=35 // pred_check_branch
          %356 = sbr.rel (%p354) target = $region44
        $region43: #{tpu_custom_call.1} parent=35 // pred_region
          %357 = dma.done %s350, 65536
        $region44: #{tpu_custom_call.1} parent=35 // pred_fallthru
          _
        %s358 = sand.u32 %s25, 1
        %s359 = scalar_lea.sflag [#allocation9], %s358
        %s360 = sand.u32 %s114, 1
        %s361 = smul.addr %s360, 4096
        %s362 = scalar_lea.vmem [#allocation10], %s361
        // Predicated region
        $region45: #{tpu_custom_call.1} parent=35 // pred_check
          %p363 = pneg %p127
        $region46: #{tpu_custom_call.1} parent=35 // pred_check_branch
          %365 = sbr.rel (%p363) target = $region48
        $region47: #{tpu_custom_call.1} parent=35 // pred_region
          %366 = dma.done %s359, 65536
        $region48: #{tpu_custom_call.1} parent=35 // pred_fallthru
          _
        // Predicated region
        $region49: #{tpu_custom_call.1} parent=35 // pred_check
          %p367 = pneg %p148
        $region50: #{tpu_custom_call.1} parent=35 // pred_check_branch
          %369 = sbr.rel (%p367) target = $region52
        $region51: #{tpu_custom_call.1} parent=35 // pred_region
          %370 = dma.done [#allocation12], 16384
        $region52: #{tpu_custom_call.1} parent=35 // pred_fallthru
          _
        %s371 = sand.u32 %s54, 1
        %s372 = scalar_lea.sflag [#allocation6], %s371
        %s373 = sand.u32 %s54, 1
        %s374 = smul.addr %s373, 8
        %s375 = scalar_lea.vmem [#allocation5], %s374
        %p376 = pneg %p67
        %p377 = pneg %p64
        %s378 = sand.u32 %s25, 1
        %s379 = scalar_lea.sflag [#allocation9], %s378
        %s380 = sand.u32 %s84, 1
        %s381 = smul.addr %s380, 4096
        %s382 = scalar_lea.vmem [#allocation8], %s381
        %p383 = pneg %p97
        %p384 = pneg %p94
        %s385 = sand.u32 %s25, 1
        %s386 = scalar_lea.sflag [#allocation9], %s385
        %s387 = sand.u32 %s114, 1
        %s388 = smul.addr %s387, 4096
        %s389 = scalar_lea.vmem [#allocation10], %s388
        %p390 = pneg %p127
        %p391 = pneg %p124
        %p392 = pneg %p148
        %p393 = pneg %p145
        %p394 = pneg %p176
        %p395 = pneg %p173
        %s396 = sand.u32 %s163, 1
        %s397 = scalar_lea.sflag [#allocation7], %s396
        %s398 = sand.u32 %s163, 1
        %s399 = smul.addr %s398, 8
        %s400 = scalar_lea.vmem [#allocation13], %s399
        %s401 = smul.u32 2, %s31
        %s402 = smul.u32 512, %s32
        %s403 = smul.u32 2, %s31
        %s404 = smul.u32 512, %s32
        %s405 = smul.u32 2, %s31
        %s406 = smul.u32 2, %s31
        %p408 = scmp.eq.s32.totalorder %s32, 0
        // Predicated region
        $region53: #{tpu_custom_call.1} parent=35 // pred_check
          %p409 = pneg %p408
        $region54: #{tpu_custom_call.1} parent=35 // pred_check_branch
          %411 = sbr.rel (%p409) target = $region56
        $region55: #{tpu_custom_call.1} parent=35 // pred_region
          %vm412 = vcmask 7168
          %413 = vst.msk [vmem:[#allocation2] sm:$0xff] %vm412, -1e+30
          %414 = vst.msk [vmem:[#allocation2 + $0x8] sm:$0xff] %vm412, -1e+30
          %415 = vst.msk [vmem:[#allocation3] sm:$0xff] %vm412, 0.0
          %416 = vst.msk [vmem:[#allocation3 + $0x8] sm:$0xff] %vm412, 0.0
          %417 = vst [vmem:[#allocation4] sm:$0xff] 0.0
          %418 = vst [vmem:[#allocation4 + $0x8] sm:$0xff] 0.0
        $region56: #{tpu_custom_call.1} parent=35 // pred_fallthru
          _
        %v419 = vld [vmem:[%s344] sm:$0xf]
        %v420 = vld [vmem:[%s344 + $0x4] sm:$0xf]
        %v421 = vld [vmem:[%s353] sm:$0xf]
        %v422 = vld [vmem:[%s353 + $0x4] sm:$0xf]
        %v423 = vld [vmem:[%s353 + $0x8] sm:$0xf]
        %v424 = vld [vmem:[%s353 + $0xc] sm:$0xf]
        %v425 = vld [vmem:[%s353 + $0x10] sm:$0xf]
        %v426 = vld [vmem:[%s353 + $0x14] sm:$0xf]
        %v427 = vld [vmem:[%s353 + $0x18] sm:$0xf]
        %v428 = vld [vmem:[%s353 + $0x1c] sm:$0xf]
        %v429 = vld [vmem:[%s353 + $0x20] sm:$0xf]
        %v430 = vld [vmem:[%s353 + $0x24] sm:$0xf]
        %v431 = vld [vmem:[%s353 + $0x28] sm:$0xf]
        %v432 = vld [vmem:[%s353 + $0x2c] sm:$0xf]
        %v433 = vld [vmem:[%s353 + $0x30] sm:$0xf]
        %v434 = vld [vmem:[%s353 + $0x34] sm:$0xf]
        %v435 = vld [vmem:[%s353 + $0x38] sm:$0xf]
        %v436 = vld [vmem:[%s353 + $0x3c] sm:$0xf]
        %v437 = vld [vmem:[%s353 + $0x40] sm:$0xf]
        %v438 = vld [vmem:[%s353 + $0x44] sm:$0xf]
        %v439 = vld [vmem:[%s353 + $0x48] sm:$0xf]
        %v440 = vld [vmem:[%s353 + $0x4c] sm:$0xf]
        %v441 = vld [vmem:[%s353 + $0x50] sm:$0xf]
        %v442 = vld [vmem:[%s353 + $0x54] sm:$0xf]
        %v443 = vld [vmem:[%s353 + $0x58] sm:$0xf]
        %v444 = vld [vmem:[%s353 + $0x5c] sm:$0xf]
        %v445 = vld [vmem:[%s353 + $0x60] sm:$0xf]
        %v446 = vld [vmem:[%s353 + $0x64] sm:$0xf]
        %v447 = vld [vmem:[%s353 + $0x68] sm:$0xf]
        %v448 = vld [vmem:[%s353 + $0x6c] sm:$0xf]
        %v449 = vld [vmem:[%s353 + $0x70] sm:$0xf]
        %v450 = vld [vmem:[%s353 + $0x74] sm:$0xf]
        %v451 = vld [vmem:[%s353 + $0x78] sm:$0xf]
        %v452 = vld [vmem:[%s353 + $0x7c] sm:$0xf]
        %v453 = vld [vmem:[%s353 + $0x80] sm:$0xf]
        %v454 = vld [vmem:[%s353 + $0x84] sm:$0xf]
        %v455 = vld [vmem:[%s353 + $0x88] sm:$0xf]
        %v456 = vld [vmem:[%s353 + $0x8c] sm:$0xf]
        %v457 = vld [vmem:[%s353 + $0x90] sm:$0xf]
        %v458 = vld [vmem:[%s353 + $0x94] sm:$0xf]
        %v459 = vld [vmem:[%s353 + $0x98] sm:$0xf]
        %v460 = vld [vmem:[%s353 + $0x9c] sm:$0xf]
        %v461 = vld [vmem:[%s353 + $0xa0] sm:$0xf]
        %v462 = vld [vmem:[%s353 + $0xa4] sm:$0xf]
        %v463 = vld [vmem:[%s353 + $0xa8] sm:$0xf]
        %v464 = vld [vmem:[%s353 + $0xac] sm:$0xf]
        %v465 = vld [vmem:[%s353 + $0xb0] sm:$0xf]
        %v466 = vld [vmem:[%s353 + $0xb4] sm:$0xf]
        %v467 = vld [vmem:[%s353 + $0xb8] sm:$0xf]
        %v468 = vld [vmem:[%s353 + $0xbc] sm:$0xf]
        %v469 = vld [vmem:[%s353 + $0xc0] sm:$0xf]
        %v470 = vld [vmem:[%s353 + $0xc4] sm:$0xf]
        %v471 = vld [vmem:[%s353 + $0xc8] sm:$0xf]
        %v472 = vld [vmem:[%s353 + $0xcc] sm:$0xf]
        %v473 = vld [vmem:[%s353 + $0xd0] sm:$0xf]
        %v474 = vld [vmem:[%s353 + $0xd4] sm:$0xf]
        %v475 = vld [vmem:[%s353 + $0xd8] sm:$0xf]
        %v476 = vld [vmem:[%s353 + $0xdc] sm:$0xf]
        %v477 = vld [vmem:[%s353 + $0xe0] sm:$0xf]
        %v478 = vld [vmem:[%s353 + $0xe4] sm:$0xf]
        %v479 = vld [vmem:[%s353 + $0xe8] sm:$0xf]
        %v480 = vld [vmem:[%s353 + $0xec] sm:$0xf]
        %v481 = vld [vmem:[%s353 + $0xf0] sm:$0xf]
        %v482 = vld [vmem:[%s353 + $0xf4] sm:$0xf]
        %v483 = vld [vmem:[%s353 + $0xf8] sm:$0xf]
        %v484 = vld [vmem:[%s353 + $0xfc] sm:$0xf]
        %v485 = vld [vmem:[%s353 + $0x100] sm:$0xf]
        %v486 = vld [vmem:[%s353 + $0x104] sm:$0xf]
        %v487 = vld [vmem:[%s353 + $0x108] sm:$0xf]
        %v488 = vld [vmem:[%s353 + $0x10c] sm:$0xf]
        %v489 = vld [vmem:[%s353 + $0x110] sm:$0xf]
        %v490 = vld [vmem:[%s353 + $0x114] sm:$0xf]
        %v491 = vld [vmem:[%s353 + $0x118] sm:$0xf]
        %v492 = vld [vmem:[%s353 + $0x11c] sm:$0xf]
        %v493 = vld [vmem:[%s353 + $0x120] sm:$0xf]
        %v494 = vld [vmem:[%s353 + $0x124] sm:$0xf]
        %v495 = vld [vmem:[%s353 + $0x128] sm:$0xf]
        %v496 = vld [vmem:[%s353 + $0x12c] sm:$0xf]
        %v497 = vld [vmem:[%s353 + $0x130] sm:$0xf]
        %v498 = vld [vmem:[%s353 + $0x134] sm:$0xf]
        %v499 = vld [vmem:[%s353 + $0x138] sm:$0xf]
        %v500 = vld [vmem:[%s353 + $0x13c] sm:$0xf]
        %v501 = vld [vmem:[%s353 + $0x140] sm:$0xf]
        %v502 = vld [vmem:[%s353 + $0x144] sm:$0xf]
        %v503 = vld [vmem:[%s353 + $0x148] sm:$0xf]
        %v504 = vld [vmem:[%s353 + $0x14c] sm:$0xf]
        %v505 = vld [vmem:[%s353 + $0x150] sm:$0xf]
        %v506 = vld [vmem:[%s353 + $0x154] sm:$0xf]
        %v507 = vld [vmem:[%s353 + $0x158] sm:$0xf]
        %v508 = vld [vmem:[%s353 + $0x15c] sm:$0xf]
        %v509 = vld [vmem:[%s353 + $0x160] sm:$0xf]
        %v510 = vld [vmem:[%s353 + $0x164] sm:$0xf]
        %v511 = vld [vmem:[%s353 + $0x168] sm:$0xf]
        %v512 = vld [vmem:[%s353 + $0x16c] sm:$0xf]
        %v513 = vld [vmem:[%s353 + $0x170] sm:$0xf]
        %v514 = vld [vmem:[%s353 + $0x174] sm:$0xf]
        %v515 = vld [vmem:[%s353 + $0x178] sm:$0xf]
        %v516 = vld [vmem:[%s353 + $0x17c] sm:$0xf]
        %v517 = vld [vmem:[%s353 + $0x180] sm:$0xf]
        %v518 = vld [vmem:[%s353 + $0x184] sm:$0xf]
        %v519 = vld [vmem:[%s353 + $0x188] sm:$0xf]
        %v520 = vld [vmem:[%s353 + $0x18c] sm:$0xf]
        %v521 = vld [vmem:[%s353 + $0x190] sm:$0xf]
        %v522 = vld [vmem:[%s353 + $0x194] sm:$0xf]
        %v523 = vld [vmem:[%s353 + $0x198] sm:$0xf]
        %v524 = vld [vmem:[%s353 + $0x19c] sm:$0xf]
        %v525 = vld [vmem:[%s353 + $0x1a0] sm:$0xf]
        %v526 = vld [vmem:[%s353 + $0x1a4] sm:$0xf]
        %v527 = vld [vmem:[%s353 + $0x1a8] sm:$0xf]
        %v528 = vld [vmem:[%s353 + $0x1ac] sm:$0xf]
        %v529 = vld [vmem:[%s353 + $0x1b0] sm:$0xf]
        %v530 = vld [vmem:[%s353 + $0x1b4] sm:$0xf]
        %v531 = vld [vmem:[%s353 + $0x1b8] sm:$0xf]
        %v532 = vld [vmem:[%s353 + $0x1bc] sm:$0xf]
        %v533 = vld [vmem:[%s353 + $0x1c0] sm:$0xf]
        %v534 = vld [vmem:[%s353 + $0x1c4] sm:$0xf]
        %v535 = vld [vmem:[%s353 + $0x1c8] sm:$0xf]
        %v536 = vld [vmem:[%s353 + $0x1cc] sm:$0xf]
        %v537 = vld [vmem:[%s353 + $0x1d0] sm:$0xf]
        %v538 = vld [vmem:[%s353 + $0x1d4] sm:$0xf]
        %v539 = vld [vmem:[%s353 + $0x1d8] sm:$0xf]
        %v540 = vld [vmem:[%s353 + $0x1dc] sm:$0xf]
        %v541 = vld [vmem:[%s353 + $0x1e0] sm:$0xf]
        %v542 = vld [vmem:[%s353 + $0x1e4] sm:$0xf]
        %v543 = vld [vmem:[%s353 + $0x1e8] sm:$0xf]
        %v544 = vld [vmem:[%s353 + $0x1ec] sm:$0xf]
        %v545 = vld [vmem:[%s353 + $0x1f0] sm:$0xf]
        %v546 = vld [vmem:[%s353 + $0x1f4] sm:$0xf]
        %v547 = vld [vmem:[%s353 + $0x1f8] sm:$0xf]
        %v548 = vld [vmem:[%s353 + $0x1fc] sm:$0xf]
        %v549 = vld [vmem:[%s353 + $0x200] sm:$0xf]
        %v550 = vld [vmem:[%s353 + $0x204] sm:$0xf]
        %v551 = vld [vmem:[%s353 + $0x208] sm:$0xf]
        %v552 = vld [vmem:[%s353 + $0x20c] sm:$0xf]
        %v553 = vld [vmem:[%s353 + $0x210] sm:$0xf]
        %v554 = vld [vmem:[%s353 + $0x214] sm:$0xf]
        %v555 = vld [vmem:[%s353 + $0x218] sm:$0xf]
        %v556 = vld [vmem:[%s353 + $0x21c] sm:$0xf]
        %v557 = vld [vmem:[%s353 + $0x220] sm:$0xf]
        %v558 = vld [vmem:[%s353 + $0x224] sm:$0xf]
        %v559 = vld [vmem:[%s353 + $0x228] sm:$0xf]
        %v560 = vld [vmem:[%s353 + $0x22c] sm:$0xf]
        %v561 = vld [vmem:[%s353 + $0x230] sm:$0xf]
        %v562 = vld [vmem:[%s353 + $0x234] sm:$0xf]
        %v563 = vld [vmem:[%s353 + $0x238] sm:$0xf]
        %v564 = vld [vmem:[%s353 + $0x23c] sm:$0xf]
        %v565 = vld [vmem:[%s353 + $0x240] sm:$0xf]
        %v566 = vld [vmem:[%s353 + $0x244] sm:$0xf]
        %v567 = vld [vmem:[%s353 + $0x248] sm:$0xf]
        %v568 = vld [vmem:[%s353 + $0x24c] sm:$0xf]
        %v569 = vld [vmem:[%s353 + $0x250] sm:$0xf]
        %v570 = vld [vmem:[%s353 + $0x254] sm:$0xf]
        %v571 = vld [vmem:[%s353 + $0x258] sm:$0xf]
        %v572 = vld [vmem:[%s353 + $0x25c] sm:$0xf]
        %v573 = vld [vmem:[%s353 + $0x260] sm:$0xf]
        %v574 = vld [vmem:[%s353 + $0x264] sm:$0xf]
        %v575 = vld [vmem:[%s353 + $0x268] sm:$0xf]
        %v576 = vld [vmem:[%s353 + $0x26c] sm:$0xf]
        %v577 = vld [vmem:[%s353 + $0x270] sm:$0xf]
        %v578 = vld [vmem:[%s353 + $0x274] sm:$0xf]
        %v579 = vld [vmem:[%s353 + $0x278] sm:$0xf]
        %v580 = vld [vmem:[%s353 + $0x27c] sm:$0xf]
        %v581 = vld [vmem:[%s353 + $0x280] sm:$0xf]
        %v582 = vld [vmem:[%s353 + $0x284] sm:$0xf]
        %v583 = vld [vmem:[%s353 + $0x288] sm:$0xf]
        %v584 = vld [vmem:[%s353 + $0x28c] sm:$0xf]
        %v585 = vld [vmem:[%s353 + $0x290] sm:$0xf]
        %v586 = vld [vmem:[%s353 + $0x294] sm:$0xf]
        %v587 = vld [vmem:[%s353 + $0x298] sm:$0xf]
        %v588 = vld [vmem:[%s353 + $0x29c] sm:$0xf]
        %v589 = vld [vmem:[%s353 + $0x2a0] sm:$0xf]
        %v590 = vld [vmem:[%s353 + $0x2a4] sm:$0xf]
        %v591 = vld [vmem:[%s353 + $0x2a8] sm:$0xf]
        %v592 = vld [vmem:[%s353 + $0x2ac] sm:$0xf]
        %v593 = vld [vmem:[%s353 + $0x2b0] sm:$0xf]
        %v594 = vld [vmem:[%s353 + $0x2b4] sm:$0xf]
        %v595 = vld [vmem:[%s353 + $0x2b8] sm:$0xf]
        %v596 = vld [vmem:[%s353 + $0x2bc] sm:$0xf]
        %v597 = vld [vmem:[%s353 + $0x2c0] sm:$0xf]
        %v598 = vld [vmem:[%s353 + $0x2c4] sm:$0xf]
        %v599 = vld [vmem:[%s353 + $0x2c8] sm:$0xf]
        %v600 = vld [vmem:[%s353 + $0x2cc] sm:$0xf]
        %v601 = vld [vmem:[%s353 + $0x2d0] sm:$0xf]
        %v602 = vld [vmem:[%s353 + $0x2d4] sm:$0xf]
        %v603 = vld [vmem:[%s353 + $0x2d8] sm:$0xf]
        %v604 = vld [vmem:[%s353 + $0x2dc] sm:$0xf]
        %v605 = vld [vmem:[%s353 + $0x2e0] sm:$0xf]
        %v606 = vld [vmem:[%s353 + $0x2e4] sm:$0xf]
        %v607 = vld [vmem:[%s353 + $0x2e8] sm:$0xf]
        %v608 = vld [vmem:[%s353 + $0x2ec] sm:$0xf]
        %v609 = vld [vmem:[%s353 + $0x2f0] sm:$0xf]
        %v610 = vld [vmem:[%s353 + $0x2f4] sm:$0xf]
        %v611 = vld [vmem:[%s353 + $0x2f8] sm:$0xf]
        %v612 = vld [vmem:[%s353 + $0x2fc] sm:$0xf]
        %v613 = vld [vmem:[%s353 + $0x300] sm:$0xf]
        %v614 = vld [vmem:[%s353 + $0x304] sm:$0xf]
        %v615 = vld [vmem:[%s353 + $0x308] sm:$0xf]
        %v616 = vld [vmem:[%s353 + $0x30c] sm:$0xf]
        %v617 = vld [vmem:[%s353 + $0x310] sm:$0xf]
        %v618 = vld [vmem:[%s353 + $0x314] sm:$0xf]
        %v619 = vld [vmem:[%s353 + $0x318] sm:$0xf]
        %v620 = vld [vmem:[%s353 + $0x31c] sm:$0xf]
        %v621 = vld [vmem:[%s353 + $0x320] sm:$0xf]
        %v622 = vld [vmem:[%s353 + $0x324] sm:$0xf]
        %v623 = vld [vmem:[%s353 + $0x328] sm:$0xf]
        %v624 = vld [vmem:[%s353 + $0x32c] sm:$0xf]
        %v625 = vld [vmem:[%s353 + $0x330] sm:$0xf]
        %v626 = vld [vmem:[%s353 + $0x334] sm:$0xf]
        %v627 = vld [vmem:[%s353 + $0x338] sm:$0xf]
        %v628 = vld [vmem:[%s353 + $0x33c] sm:$0xf]
        %v629 = vld [vmem:[%s353 + $0x340] sm:$0xf]
        %v630 = vld [vmem:[%s353 + $0x344] sm:$0xf]
        %v631 = vld [vmem:[%s353 + $0x348] sm:$0xf]
        %v632 = vld [vmem:[%s353 + $0x34c] sm:$0xf]
        %v633 = vld [vmem:[%s353 + $0x350] sm:$0xf]
        %v634 = vld [vmem:[%s353 + $0x354] sm:$0xf]
        %v635 = vld [vmem:[%s353 + $0x358] sm:$0xf]
        %v636 = vld [vmem:[%s353 + $0x35c] sm:$0xf]
        %v637 = vld [vmem:[%s353 + $0x360] sm:$0xf]
        %v638 = vld [vmem:[%s353 + $0x364] sm:$0xf]
        %v639 = vld [vmem:[%s353 + $0x368] sm:$0xf]
        %v640 = vld [vmem:[%s353 + $0x36c] sm:$0xf]
        %v641 = vld [vmem:[%s353 + $0x370] sm:$0xf]
        %v642 = vld [vmem:[%s353 + $0x374] sm:$0xf]
        %v643 = vld [vmem:[%s353 + $0x378] sm:$0xf]
        %v644 = vld [vmem:[%s353 + $0x37c] sm:$0xf]
        %v645 = vld [vmem:[%s353 + $0x380] sm:$0xf]
        %v646 = vld [vmem:[%s353 + $0x384] sm:$0xf]
        %v647 = vld [vmem:[%s353 + $0x388] sm:$0xf]
        %v648 = vld [vmem:[%s353 + $0x38c] sm:$0xf]
        %v649 = vld [vmem:[%s353 + $0x390] sm:$0xf]
        %v650 = vld [vmem:[%s353 + $0x394] sm:$0xf]
        %v651 = vld [vmem:[%s353 + $0x398] sm:$0xf]
        %v652 = vld [vmem:[%s353 + $0x39c] sm:$0xf]
        %v653 = vld [vmem:[%s353 + $0x3a0] sm:$0xf]
        %v654 = vld [vmem:[%s353 + $0x3a4] sm:$0xf]
        %v655 = vld [vmem:[%s353 + $0x3a8] sm:$0xf]
        %v656 = vld [vmem:[%s353 + $0x3ac] sm:$0xf]
        %v657 = vld [vmem:[%s353 + $0x3b0] sm:$0xf]
        %v658 = vld [vmem:[%s353 + $0x3b4] sm:$0xf]
        %v659 = vld [vmem:[%s353 + $0x3b8] sm:$0xf]
        %v660 = vld [vmem:[%s353 + $0x3bc] sm:$0xf]
        %v661 = vld [vmem:[%s353 + $0x3c0] sm:$0xf]
        %v662 = vld [vmem:[%s353 + $0x3c4] sm:$0xf]
        %v663 = vld [vmem:[%s353 + $0x3c8] sm:$0xf]
        %v664 = vld [vmem:[%s353 + $0x3cc] sm:$0xf]
        %v665 = vld [vmem:[%s353 + $0x3d0] sm:$0xf]
        %v666 = vld [vmem:[%s353 + $0x3d4] sm:$0xf]
        %v667 = vld [vmem:[%s353 + $0x3d8] sm:$0xf]
        %v668 = vld [vmem:[%s353 + $0x3dc] sm:$0xf]
        %v669 = vld [vmem:[%s353 + $0x3e0] sm:$0xf]
        %v670 = vld [vmem:[%s353 + $0x3e4] sm:$0xf]
        %v671 = vld [vmem:[%s353 + $0x3e8] sm:$0xf]
        %v672 = vld [vmem:[%s353 + $0x3ec] sm:$0xf]
        %v673 = vld [vmem:[%s353 + $0x3f0] sm:$0xf]
        %v674 = vld [vmem:[%s353 + $0x3f4] sm:$0xf]
        %v675 = vld [vmem:[%s353 + $0x3f8] sm:$0xf]
        %v676 = vld [vmem:[%s353 + $0x3fc] sm:$0xf]
        %v677 = vld [vmem:[%s353 + $0x400] sm:$0xf]
        %v678 = vld [vmem:[%s353 + $0x404] sm:$0xf]
        %v679 = vld [vmem:[%s353 + $0x408] sm:$0xf]
        %v680 = vld [vmem:[%s353 + $0x40c] sm:$0xf]
        %v681 = vld [vmem:[%s353 + $0x410] sm:$0xf]
        %v682 = vld [vmem:[%s353 + $0x414] sm:$0xf]
        %v683 = vld [vmem:[%s353 + $0x418] sm:$0xf]
        %v684 = vld [vmem:[%s353 + $0x41c] sm:$0xf]
        %v685 = vld [vmem:[%s353 + $0x420] sm:$0xf]
        %v686 = vld [vmem:[%s353 + $0x424] sm:$0xf]
        %v687 = vld [vmem:[%s353 + $0x428] sm:$0xf]
        %v688 = vld [vmem:[%s353 + $0x42c] sm:$0xf]
        %v689 = vld [vmem:[%s353 + $0x430] sm:$0xf]
        %v690 = vld [vmem:[%s353 + $0x434] sm:$0xf]
        %v691 = vld [vmem:[%s353 + $0x438] sm:$0xf]
        %v692 = vld [vmem:[%s353 + $0x43c] sm:$0xf]
        %v693 = vld [vmem:[%s353 + $0x440] sm:$0xf]
        %v694 = vld [vmem:[%s353 + $0x444] sm:$0xf]
        %v695 = vld [vmem:[%s353 + $0x448] sm:$0xf]
        %v696 = vld [vmem:[%s353 + $0x44c] sm:$0xf]
        %v697 = vld [vmem:[%s353 + $0x450] sm:$0xf]
        %v698 = vld [vmem:[%s353 + $0x454] sm:$0xf]
        %v699 = vld [vmem:[%s353 + $0x458] sm:$0xf]
        %v700 = vld [vmem:[%s353 + $0x45c] sm:$0xf]
        %v701 = vld [vmem:[%s353 + $0x460] sm:$0xf]
        %v702 = vld [vmem:[%s353 + $0x464] sm:$0xf]
        %v703 = vld [vmem:[%s353 + $0x468] sm:$0xf]
        %v704 = vld [vmem:[%s353 + $0x46c] sm:$0xf]
        %v705 = vld [vmem:[%s353 + $0x470] sm:$0xf]
        %v706 = vld [vmem:[%s353 + $0x474] sm:$0xf]
        %v707 = vld [vmem:[%s353 + $0x478] sm:$0xf]
        %v708 = vld [vmem:[%s353 + $0x47c] sm:$0xf]
        %v709 = vld [vmem:[%s353 + $0x480] sm:$0xf]
        %v710 = vld [vmem:[%s353 + $0x484] sm:$0xf]
        %v711 = vld [vmem:[%s353 + $0x488] sm:$0xf]
        %v712 = vld [vmem:[%s353 + $0x48c] sm:$0xf]
        %v713 = vld [vmem:[%s353 + $0x490] sm:$0xf]
        %v714 = vld [vmem:[%s353 + $0x494] sm:$0xf]
        %v715 = vld [vmem:[%s353 + $0x498] sm:$0xf]
        %v716 = vld [vmem:[%s353 + $0x49c] sm:$0xf]
        %v717 = vld [vmem:[%s353 + $0x4a0] sm:$0xf]
        %v718 = vld [vmem:[%s353 + $0x4a4] sm:$0xf]
        %v719 = vld [vmem:[%s353 + $0x4a8] sm:$0xf]
        %v720 = vld [vmem:[%s353 + $0x4ac] sm:$0xf]
        %v721 = vld [vmem:[%s353 + $0x4b0] sm:$0xf]
        %v722 = vld [vmem:[%s353 + $0x4b4] sm:$0xf]
        %v723 = vld [vmem:[%s353 + $0x4b8] sm:$0xf]
        %v724 = vld [vmem:[%s353 + $0x4bc] sm:$0xf]
        %v725 = vld [vmem:[%s353 + $0x4c0] sm:$0xf]
        %v726 = vld [vmem:[%s353 + $0x4c4] sm:$0xf]
        %v727 = vld [vmem:[%s353 + $0x4c8] sm:$0xf]
        %v728 = vld [vmem:[%s353 + $0x4cc] sm:$0xf]
        %v729 = vld [vmem:[%s353 + $0x4d0] sm:$0xf]
        %v730 = vld [vmem:[%s353 + $0x4d4] sm:$0xf]
        %v731 = vld [vmem:[%s353 + $0x4d8] sm:$0xf]
        %v732 = vld [vmem:[%s353 + $0x4dc] sm:$0xf]
        %v733 = vld [vmem:[%s353 + $0x4e0] sm:$0xf]
        %v734 = vld [vmem:[%s353 + $0x4e4] sm:$0xf]
        %v735 = vld [vmem:[%s353 + $0x4e8] sm:$0xf]
        %v736 = vld [vmem:[%s353 + $0x4ec] sm:$0xf]
        %v737 = vld [vmem:[%s353 + $0x4f0] sm:$0xf]
        %v738 = vld [vmem:[%s353 + $0x4f4] sm:$0xf]
        %v739 = vld [vmem:[%s353 + $0x4f8] sm:$0xf]
        %v740 = vld [vmem:[%s353 + $0x4fc] sm:$0xf]
        %v741 = vld [vmem:[%s353 + $0x500] sm:$0xf]
        %v742 = vld [vmem:[%s353 + $0x504] sm:$0xf]
        %v743 = vld [vmem:[%s353 + $0x508] sm:$0xf]
        %v744 = vld [vmem:[%s353 + $0x50c] sm:$0xf]
        %v745 = vld [vmem:[%s353 + $0x510] sm:$0xf]
        %v746 = vld [vmem:[%s353 + $0x514] sm:$0xf]
        %v747 = vld [vmem:[%s353 + $0x518] sm:$0xf]
        %v748 = vld [vmem:[%s353 + $0x51c] sm:$0xf]
        %v749 = vld [vmem:[%s353 + $0x520] sm:$0xf]
        %v750 = vld [vmem:[%s353 + $0x524] sm:$0xf]
        %v751 = vld [vmem:[%s353 + $0x528] sm:$0xf]
        %v752 = vld [vmem:[%s353 + $0x52c] sm:$0xf]
        %v753 = vld [vmem:[%s353 + $0x530] sm:$0xf]
        %v754 = vld [vmem:[%s353 + $0x534] sm:$0xf]
        %v755 = vld [vmem:[%s353 + $0x538] sm:$0xf]
        %v756 = vld [vmem:[%s353 + $0x53c] sm:$0xf]
        %v757 = vld [vmem:[%s353 + $0x540] sm:$0xf]
        %v758 = vld [vmem:[%s353 + $0x544] sm:$0xf]
        %v759 = vld [vmem:[%s353 + $0x548] sm:$0xf]
        %v760 = vld [vmem:[%s353 + $0x54c] sm:$0xf]
        %v761 = vld [vmem:[%s353 + $0x550] sm:$0xf]
        %v762 = vld [vmem:[%s353 + $0x554] sm:$0xf]
        %v763 = vld [vmem:[%s353 + $0x558] sm:$0xf]
        %v764 = vld [vmem:[%s353 + $0x55c] sm:$0xf]
        %v765 = vld [vmem:[%s353 + $0x560] sm:$0xf]
        %v766 = vld [vmem:[%s353 + $0x564] sm:$0xf]
        %v767 = vld [vmem:[%s353 + $0x568] sm:$0xf]
        %v768 = vld [vmem:[%s353 + $0x56c] sm:$0xf]
        %v769 = vld [vmem:[%s353 + $0x570] sm:$0xf]
        %v770 = vld [vmem:[%s353 + $0x574] sm:$0xf]
        %v771 = vld [vmem:[%s353 + $0x578] sm:$0xf]
        %v772 = vld [vmem:[%s353 + $0x57c] sm:$0xf]
        %v773 = vld [vmem:[%s353 + $0x580] sm:$0xf]
        %v774 = vld [vmem:[%s353 + $0x584] sm:$0xf]
        %v775 = vld [vmem:[%s353 + $0x588] sm:$0xf]
        %v776 = vld [vmem:[%s353 + $0x58c] sm:$0xf]
        %v777 = vld [vmem:[%s353 + $0x590] sm:$0xf]
        %v778 = vld [vmem:[%s353 + $0x594] sm:$0xf]
        %v779 = vld [vmem:[%s353 + $0x598] sm:$0xf]
        %v780 = vld [vmem:[%s353 + $0x59c] sm:$0xf]
        %v781 = vld [vmem:[%s353 + $0x5a0] sm:$0xf]
        %v782 = vld [vmem:[%s353 + $0x5a4] sm:$0xf]
        %v783 = vld [vmem:[%s353 + $0x5a8] sm:$0xf]
        %v784 = vld [vmem:[%s353 + $0x5ac] sm:$0xf]
        %v785 = vld [vmem:[%s353 + $0x5b0] sm:$0xf]
        %v786 = vld [vmem:[%s353 + $0x5b4] sm:$0xf]
        %v787 = vld [vmem:[%s353 + $0x5b8] sm:$0xf]
        %v788 = vld [vmem:[%s353 + $0x5bc] sm:$0xf]
        %v789 = vld [vmem:[%s353 + $0x5c0] sm:$0xf]
        %v790 = vld [vmem:[%s353 + $0x5c4] sm:$0xf]
        %v791 = vld [vmem:[%s353 + $0x5c8] sm:$0xf]
        %v792 = vld [vmem:[%s353 + $0x5cc] sm:$0xf]
        %v793 = vld [vmem:[%s353 + $0x5d0] sm:$0xf]
        %v794 = vld [vmem:[%s353 + $0x5d4] sm:$0xf]
        %v795 = vld [vmem:[%s353 + $0x5d8] sm:$0xf]
        %v796 = vld [vmem:[%s353 + $0x5dc] sm:$0xf]
        %v797 = vld [vmem:[%s353 + $0x5e0] sm:$0xf]
        %v798 = vld [vmem:[%s353 + $0x5e4] sm:$0xf]
        %v799 = vld [vmem:[%s353 + $0x5e8] sm:$0xf]
        %v800 = vld [vmem:[%s353 + $0x5ec] sm:$0xf]
        %v801 = vld [vmem:[%s353 + $0x5f0] sm:$0xf]
        %v802 = vld [vmem:[%s353 + $0x5f4] sm:$0xf]
        %v803 = vld [vmem:[%s353 + $0x5f8] sm:$0xf]
        %v804 = vld [vmem:[%s353 + $0x5fc] sm:$0xf]
        %v805 = vld [vmem:[%s353 + $0x600] sm:$0xf]
        %v806 = vld [vmem:[%s353 + $0x604] sm:$0xf]
        %v807 = vld [vmem:[%s353 + $0x608] sm:$0xf]
        %v808 = vld [vmem:[%s353 + $0x60c] sm:$0xf]
        %v809 = vld [vmem:[%s353 + $0x610] sm:$0xf]
        %v810 = vld [vmem:[%s353 + $0x614] sm:$0xf]
        %v811 = vld [vmem:[%s353 + $0x618] sm:$0xf]
        %v812 = vld [vmem:[%s353 + $0x61c] sm:$0xf]
        %v813 = vld [vmem:[%s353 + $0x620] sm:$0xf]
        %v814 = vld [vmem:[%s353 + $0x624] sm:$0xf]
        %v815 = vld [vmem:[%s353 + $0x628] sm:$0xf]
        %v816 = vld [vmem:[%s353 + $0x62c] sm:$0xf]
        %v817 = vld [vmem:[%s353 + $0x630] sm:$0xf]
        %v818 = vld [vmem:[%s353 + $0x634] sm:$0xf]
        %v819 = vld [vmem:[%s353 + $0x638] sm:$0xf]
        %v820 = vld [vmem:[%s353 + $0x63c] sm:$0xf]
        %v821 = vld [vmem:[%s353 + $0x640] sm:$0xf]
        %v822 = vld [vmem:[%s353 + $0x644] sm:$0xf]
        %v823 = vld [vmem:[%s353 + $0x648] sm:$0xf]
        %v824 = vld [vmem:[%s353 + $0x64c] sm:$0xf]
        %v825 = vld [vmem:[%s353 + $0x650] sm:$0xf]
        %v826 = vld [vmem:[%s353 + $0x654] sm:$0xf]
        %v827 = vld [vmem:[%s353 + $0x658] sm:$0xf]
        %v828 = vld [vmem:[%s353 + $0x65c] sm:$0xf]
        %v829 = vld [vmem:[%s353 + $0x660] sm:$0xf]
        %v830 = vld [vmem:[%s353 + $0x664] sm:$0xf]
        %v831 = vld [vmem:[%s353 + $0x668] sm:$0xf]
        %v832 = vld [vmem:[%s353 + $0x66c] sm:$0xf]
        %v833 = vld [vmem:[%s353 + $0x670] sm:$0xf]
        %v834 = vld [vmem:[%s353 + $0x674] sm:$0xf]
        %v835 = vld [vmem:[%s353 + $0x678] sm:$0xf]
        %v836 = vld [vmem:[%s353 + $0x67c] sm:$0xf]
        %v837 = vld [vmem:[%s353 + $0x680] sm:$0xf]
        %v838 = vld [vmem:[%s353 + $0x684] sm:$0xf]
        %v839 = vld [vmem:[%s353 + $0x688] sm:$0xf]
        %v840 = vld [vmem:[%s353 + $0x68c] sm:$0xf]
        %v841 = vld [vmem:[%s353 + $0x690] sm:$0xf]
        %v842 = vld [vmem:[%s353 + $0x694] sm:$0xf]
        %v843 = vld [vmem:[%s353 + $0x698] sm:$0xf]
        %v844 = vld [vmem:[%s353 + $0x69c] sm:$0xf]
        %v845 = vld [vmem:[%s353 + $0x6a0] sm:$0xf]
        %v846 = vld [vmem:[%s353 + $0x6a4] sm:$0xf]
        %v847 = vld [vmem:[%s353 + $0x6a8] sm:$0xf]
        %v848 = vld [vmem:[%s353 + $0x6ac] sm:$0xf]
        %v849 = vld [vmem:[%s353 + $0x6b0] sm:$0xf]
        %v850 = vld [vmem:[%s353 + $0x6b4] sm:$0xf]
        %v851 = vld [vmem:[%s353 + $0x6b8] sm:$0xf]
        %v852 = vld [vmem:[%s353 + $0x6bc] sm:$0xf]
        %v853 = vld [vmem:[%s353 + $0x6c0] sm:$0xf]
        %v854 = vld [vmem:[%s353 + $0x6c4] sm:$0xf]
        %v855 = vld [vmem:[%s353 + $0x6c8] sm:$0xf]
        %v856 = vld [vmem:[%s353 + $0x6cc] sm:$0xf]
        %v857 = vld [vmem:[%s353 + $0x6d0] sm:$0xf]
        %v858 = vld [vmem:[%s353 + $0x6d4] sm:$0xf]
        %v859 = vld [vmem:[%s353 + $0x6d8] sm:$0xf]
        %v860 = vld [vmem:[%s353 + $0x6dc] sm:$0xf]
        %v861 = vld [vmem:[%s353 + $0x6e0] sm:$0xf]
        %v862 = vld [vmem:[%s353 + $0x6e4] sm:$0xf]
        %v863 = vld [vmem:[%s353 + $0x6e8] sm:$0xf]
        %v864 = vld [vmem:[%s353 + $0x6ec] sm:$0xf]
        %v865 = vld [vmem:[%s353 + $0x6f0] sm:$0xf]
        %v866 = vld [vmem:[%s353 + $0x6f4] sm:$0xf]
        %v867 = vld [vmem:[%s353 + $0x6f8] sm:$0xf]
        %v868 = vld [vmem:[%s353 + $0x6fc] sm:$0xf]
        %v869 = vld [vmem:[%s353 + $0x700] sm:$0xf]
        %v870 = vld [vmem:[%s353 + $0x704] sm:$0xf]
        %v871 = vld [vmem:[%s353 + $0x708] sm:$0xf]
        %v872 = vld [vmem:[%s353 + $0x70c] sm:$0xf]
        %v873 = vld [vmem:[%s353 + $0x710] sm:$0xf]
        %v874 = vld [vmem:[%s353 + $0x714] sm:$0xf]
        %v875 = vld [vmem:[%s353 + $0x718] sm:$0xf]
        %v876 = vld [vmem:[%s353 + $0x71c] sm:$0xf]
        %v877 = vld [vmem:[%s353 + $0x720] sm:$0xf]
        %v878 = vld [vmem:[%s353 + $0x724] sm:$0xf]
        %v879 = vld [vmem:[%s353 + $0x728] sm:$0xf]
        %v880 = vld [vmem:[%s353 + $0x72c] sm:$0xf]
        %v881 = vld [vmem:[%s353 + $0x730] sm:$0xf]
        %v882 = vld [vmem:[%s353 + $0x734] sm:$0xf]
        %v883 = vld [vmem:[%s353 + $0x738] sm:$0xf]
        %v884 = vld [vmem:[%s353 + $0x73c] sm:$0xf]
        %v885 = vld [vmem:[%s353 + $0x740] sm:$0xf]
        %v886 = vld [vmem:[%s353 + $0x744] sm:$0xf]
        %v887 = vld [vmem:[%s353 + $0x748] sm:$0xf]
        %v888 = vld [vmem:[%s353 + $0x74c] sm:$0xf]
        %v889 = vld [vmem:[%s353 + $0x750] sm:$0xf]
        %v890 = vld [vmem:[%s353 + $0x754] sm:$0xf]
        %v891 = vld [vmem:[%s353 + $0x758] sm:$0xf]
        %v892 = vld [vmem:[%s353 + $0x75c] sm:$0xf]
        %v893 = vld [vmem:[%s353 + $0x760] sm:$0xf]
        %v894 = vld [vmem:[%s353 + $0x764] sm:$0xf]
        %v895 = vld [vmem:[%s353 + $0x768] sm:$0xf]
        %v896 = vld [vmem:[%s353 + $0x76c] sm:$0xf]
        %v897 = vld [vmem:[%s353 + $0x770] sm:$0xf]
        %v898 = vld [vmem:[%s353 + $0x774] sm:$0xf]
        %v899 = vld [vmem:[%s353 + $0x778] sm:$0xf]
        %v900 = vld [vmem:[%s353 + $0x77c] sm:$0xf]
        %v901 = vld [vmem:[%s353 + $0x780] sm:$0xf]
        %v902 = vld [vmem:[%s353 + $0x784] sm:$0xf]
        %v903 = vld [vmem:[%s353 + $0x788] sm:$0xf]
        %v904 = vld [vmem:[%s353 + $0x78c] sm:$0xf]
        %v905 = vld [vmem:[%s353 + $0x790] sm:$0xf]
        %v906 = vld [vmem:[%s353 + $0x794] sm:$0xf]
        %v907 = vld [vmem:[%s353 + $0x798] sm:$0xf]
        %v908 = vld [vmem:[%s353 + $0x79c] sm:$0xf]
        %v909 = vld [vmem:[%s353 + $0x7a0] sm:$0xf]
        %v910 = vld [vmem:[%s353 + $0x7a4] sm:$0xf]
        %v911 = vld [vmem:[%s353 + $0x7a8] sm:$0xf]
        %v912 = vld [vmem:[%s353 + $0x7ac] sm:$0xf]
        %v913 = vld [vmem:[%s353 + $0x7b0] sm:$0xf]
        %v914 = vld [vmem:[%s353 + $0x7b4] sm:$0xf]
        %v915 = vld [vmem:[%s353 + $0x7b8] sm:$0xf]
        %v916 = vld [vmem:[%s353 + $0x7bc] sm:$0xf]
        %v917 = vld [vmem:[%s353 + $0x7c0] sm:$0xf]
        %v918 = vld [vmem:[%s353 + $0x7c4] sm:$0xf]
        %v919 = vld [vmem:[%s353 + $0x7c8] sm:$0xf]
        %v920 = vld [vmem:[%s353 + $0x7cc] sm:$0xf]
        %v921 = vld [vmem:[%s353 + $0x7d0] sm:$0xf]
        %v922 = vld [vmem:[%s353 + $0x7d4] sm:$0xf]
        %v923 = vld [vmem:[%s353 + $0x7d8] sm:$0xf]
        %v924 = vld [vmem:[%s353 + $0x7dc] sm:$0xf]
        %v925 = vld [vmem:[%s353 + $0x7e0] sm:$0xf]
        %v926 = vld [vmem:[%s353 + $0x7e4] sm:$0xf]
        %v927 = vld [vmem:[%s353 + $0x7e8] sm:$0xf]
        %v928 = vld [vmem:[%s353 + $0x7ec] sm:$0xf]
        %v929 = vld [vmem:[%s353 + $0x7f0] sm:$0xf]
        %v930 = vld [vmem:[%s353 + $0x7f4] sm:$0xf]
        %v931 = vld [vmem:[%s353 + $0x7f8] sm:$0xf]
        %v932 = vld [vmem:[%s353 + $0x7fc] sm:$0xf]
        %v933 = vld [vmem:[%s353 + $0x800] sm:$0xf]
        %v934 = vld [vmem:[%s353 + $0x804] sm:$0xf]
        %v935 = vld [vmem:[%s353 + $0x808] sm:$0xf]
        %v936 = vld [vmem:[%s353 + $0x80c] sm:$0xf]
        %v937 = vld [vmem:[%s353 + $0x810] sm:$0xf]
        %v938 = vld [vmem:[%s353 + $0x814] sm:$0xf]
        %v939 = vld [vmem:[%s353 + $0x818] sm:$0xf]
        %v940 = vld [vmem:[%s353 + $0x81c] sm:$0xf]
        %v941 = vld [vmem:[%s353 + $0x820] sm:$0xf]
        %v942 = vld [vmem:[%s353 + $0x824] sm:$0xf]
        %v943 = vld [vmem:[%s353 + $0x828] sm:$0xf]
        %v944 = vld [vmem:[%s353 + $0x82c] sm:$0xf]
        %v945 = vld [vmem:[%s353 + $0x830] sm:$0xf]
        %v946 = vld [vmem:[%s353 + $0x834] sm:$0xf]
        %v947 = vld [vmem:[%s353 + $0x838] sm:$0xf]
        %v948 = vld [vmem:[%s353 + $0x83c] sm:$0xf]
        %v949 = vld [vmem:[%s353 + $0x840] sm:$0xf]
        %v950 = vld [vmem:[%s353 + $0x844] sm:$0xf]
        %v951 = vld [vmem:[%s353 + $0x848] sm:$0xf]
        %v952 = vld [vmem:[%s353 + $0x84c] sm:$0xf]
        %v953 = vld [vmem:[%s353 + $0x850] sm:$0xf]
        %v954 = vld [vmem:[%s353 + $0x854] sm:$0xf]
        %v955 = vld [vmem:[%s353 + $0x858] sm:$0xf]
        %v956 = vld [vmem:[%s353 + $0x85c] sm:$0xf]
        %v957 = vld [vmem:[%s353 + $0x860] sm:$0xf]
        %v958 = vld [vmem:[%s353 + $0x864] sm:$0xf]
        %v959 = vld [vmem:[%s353 + $0x868] sm:$0xf]
        %v960 = vld [vmem:[%s353 + $0x86c] sm:$0xf]
        %v961 = vld [vmem:[%s353 + $0x870] sm:$0xf]
        %v962 = vld [vmem:[%s353 + $0x874] sm:$0xf]
        %v963 = vld [vmem:[%s353 + $0x878] sm:$0xf]
        %v964 = vld [vmem:[%s353 + $0x87c] sm:$0xf]
        %v965 = vld [vmem:[%s353 + $0x880] sm:$0xf]
        %v966 = vld [vmem:[%s353 + $0x884] sm:$0xf]
        %v967 = vld [vmem:[%s353 + $0x888] sm:$0xf]
        %v968 = vld [vmem:[%s353 + $0x88c] sm:$0xf]
        %v969 = vld [vmem:[%s353 + $0x890] sm:$0xf]
        %v970 = vld [vmem:[%s353 + $0x894] sm:$0xf]
        %v971 = vld [vmem:[%s353 + $0x898] sm:$0xf]
        %v972 = vld [vmem:[%s353 + $0x89c] sm:$0xf]
        %v973 = vld [vmem:[%s353 + $0x8a0] sm:$0xf]
        %v974 = vld [vmem:[%s353 + $0x8a4] sm:$0xf]
        %v975 = vld [vmem:[%s353 + $0x8a8] sm:$0xf]
        %v976 = vld [vmem:[%s353 + $0x8ac] sm:$0xf]
        %v977 = vld [vmem:[%s353 + $0x8b0] sm:$0xf]
        %v978 = vld [vmem:[%s353 + $0x8b4] sm:$0xf]
        %v979 = vld [vmem:[%s353 + $0x8b8] sm:$0xf]
        %v980 = vld [vmem:[%s353 + $0x8bc] sm:$0xf]
        %v981 = vld [vmem:[%s353 + $0x8c0] sm:$0xf]
        %v982 = vld [vmem:[%s353 + $0x8c4] sm:$0xf]
        %v983 = vld [vmem:[%s353 + $0x8c8] sm:$0xf]
        %v984 = vld [vmem:[%s353 + $0x8cc] sm:$0xf]
        %v985 = vld [vmem:[%s353 + $0x8d0] sm:$0xf]
        %v986 = vld [vmem:[%s353 + $0x8d4] sm:$0xf]
        %v987 = vld [vmem:[%s353 + $0x8d8] sm:$0xf]
        %v988 = vld [vmem:[%s353 + $0x8dc] sm:$0xf]
        %v989 = vld [vmem:[%s353 + $0x8e0] sm:$0xf]
        %v990 = vld [vmem:[%s353 + $0x8e4] sm:$0xf]
        %v991 = vld [vmem:[%s353 + $0x8e8] sm:$0xf]
        %v992 = vld [vmem:[%s353 + $0x8ec] sm:$0xf]
        %v993 = vld [vmem:[%s353 + $0x8f0] sm:$0xf]
        %v994 = vld [vmem:[%s353 + $0x8f4] sm:$0xf]
        %v995 = vld [vmem:[%s353 + $0x8f8] sm:$0xf]
        %v996 = vld [vmem:[%s353 + $0x8fc] sm:$0xf]
        %v997 = vld [vmem:[%s353 + $0x900] sm:$0xf]
        %v998 = vld [vmem:[%s353 + $0x904] sm:$0xf]
        %v999 = vld [vmem:[%s353 + $0x908] sm:$0xf]
        %v1000 = vld [vmem:[%s353 + $0x90c] sm:$0xf]
        %v1001 = vld [vmem:[%s353 + $0x910] sm:$0xf]
        %v1002 = vld [vmem:[%s353 + $0x914] sm:$0xf]
        %v1003 = vld [vmem:[%s353 + $0x918] sm:$0xf]
        %v1004 = vld [vmem:[%s353 + $0x91c] sm:$0xf]
        %v1005 = vld [vmem:[%s353 + $0x920] sm:$0xf]
        %v1006 = vld [vmem:[%s353 + $0x924] sm:$0xf]
        %v1007 = vld [vmem:[%s353 + $0x928] sm:$0xf]
        %v1008 = vld [vmem:[%s353 + $0x92c] sm:$0xf]
        %v1009 = vld [vmem:[%s353 + $0x930] sm:$0xf]
        %v1010 = vld [vmem:[%s353 + $0x934] sm:$0xf]
        %v1011 = vld [vmem:[%s353 + $0x938] sm:$0xf]
        %v1012 = vld [vmem:[%s353 + $0x93c] sm:$0xf]
        %v1013 = vld [vmem:[%s353 + $0x940] sm:$0xf]
        %v1014 = vld [vmem:[%s353 + $0x944] sm:$0xf]
        %v1015 = vld [vmem:[%s353 + $0x948] sm:$0xf]
        %v1016 = vld [vmem:[%s353 + $0x94c] sm:$0xf]
        %v1017 = vld [vmem:[%s353 + $0x950] sm:$0xf]
        %v1018 = vld [vmem:[%s353 + $0x954] sm:$0xf]
        %v1019 = vld [vmem:[%s353 + $0x958] sm:$0xf]
        %v1020 = vld [vmem:[%s353 + $0x95c] sm:$0xf]
        %v1021 = vld [vmem:[%s353 + $0x960] sm:$0xf]
        %v1022 = vld [vmem:[%s353 + $0x964] sm:$0xf]
        %v1023 = vld [vmem:[%s353 + $0x968] sm:$0xf]
        %v1024 = vld [vmem:[%s353 + $0x96c] sm:$0xf]
        %v1025 = vld [vmem:[%s353 + $0x970] sm:$0xf]
        %v1026 = vld [vmem:[%s353 + $0x974] sm:$0xf]
        %v1027 = vld [vmem:[%s353 + $0x978] sm:$0xf]
        %v1028 = vld [vmem:[%s353 + $0x97c] sm:$0xf]
        %v1029 = vld [vmem:[%s353 + $0x980] sm:$0xf]
        %v1030 = vld [vmem:[%s353 + $0x984] sm:$0xf]
        %v1031 = vld [vmem:[%s353 + $0x988] sm:$0xf]
        %v1032 = vld [vmem:[%s353 + $0x98c] sm:$0xf]
        %v1033 = vld [vmem:[%s353 + $0x990] sm:$0xf]
        %v1034 = vld [vmem:[%s353 + $0x994] sm:$0xf]
        %v1035 = vld [vmem:[%s353 + $0x998] sm:$0xf]
        %v1036 = vld [vmem:[%s353 + $0x99c] sm:$0xf]
        %v1037 = vld [vmem:[%s353 + $0x9a0] sm:$0xf]
        %v1038 = vld [vmem:[%s353 + $0x9a4] sm:$0xf]
        %v1039 = vld [vmem:[%s353 + $0x9a8] sm:$0xf]
        %v1040 = vld [vmem:[%s353 + $0x9ac] sm:$0xf]
        %v1041 = vld [vmem:[%s353 + $0x9b0] sm:$0xf]
        %v1042 = vld [vmem:[%s353 + $0x9b4] sm:$0xf]
        %v1043 = vld [vmem:[%s353 + $0x9b8] sm:$0xf]
        %v1044 = vld [vmem:[%s353 + $0x9bc] sm:$0xf]
        %v1045 = vld [vmem:[%s353 + $0x9c0] sm:$0xf]
        %v1046 = vld [vmem:[%s353 + $0x9c4] sm:$0xf]
        %v1047 = vld [vmem:[%s353 + $0x9c8] sm:$0xf]
        %v1048 = vld [vmem:[%s353 + $0x9cc] sm:$0xf]
        %v1049 = vld [vmem:[%s353 + $0x9d0] sm:$0xf]
        %v1050 = vld [vmem:[%s353 + $0x9d4] sm:$0xf]
        %v1051 = vld [vmem:[%s353 + $0x9d8] sm:$0xf]
        %v1052 = vld [vmem:[%s353 + $0x9dc] sm:$0xf]
        %v1053 = vld [vmem:[%s353 + $0x9e0] sm:$0xf]
        %v1054 = vld [vmem:[%s353 + $0x9e4] sm:$0xf]
        %v1055 = vld [vmem:[%s353 + $0x9e8] sm:$0xf]
        %v1056 = vld [vmem:[%s353 + $0x9ec] sm:$0xf]
        %v1057 = vld [vmem:[%s353 + $0x9f0] sm:$0xf]
        %v1058 = vld [vmem:[%s353 + $0x9f4] sm:$0xf]
        %v1059 = vld [vmem:[%s353 + $0x9f8] sm:$0xf]
        %v1060 = vld [vmem:[%s353 + $0x9fc] sm:$0xf]
        %v1061 = vld [vmem:[%s353 + $0xa00] sm:$0xf]
        %v1062 = vld [vmem:[%s353 + $0xa04] sm:$0xf]
        %v1063 = vld [vmem:[%s353 + $0xa08] sm:$0xf]
        %v1064 = vld [vmem:[%s353 + $0xa0c] sm:$0xf]
        %v1065 = vld [vmem:[%s353 + $0xa10] sm:$0xf]
        %v1066 = vld [vmem:[%s353 + $0xa14] sm:$0xf]
        %v1067 = vld [vmem:[%s353 + $0xa18] sm:$0xf]
        %v1068 = vld [vmem:[%s353 + $0xa1c] sm:$0xf]
        %v1069 = vld [vmem:[%s353 + $0xa20] sm:$0xf]
        %v1070 = vld [vmem:[%s353 + $0xa24] sm:$0xf]
        %v1071 = vld [vmem:[%s353 + $0xa28] sm:$0xf]
        %v1072 = vld [vmem:[%s353 + $0xa2c] sm:$0xf]
        %v1073 = vld [vmem:[%s353 + $0xa30] sm:$0xf]
        %v1074 = vld [vmem:[%s353 + $0xa34] sm:$0xf]
        %v1075 = vld [vmem:[%s353 + $0xa38] sm:$0xf]
        %v1076 = vld [vmem:[%s353 + $0xa3c] sm:$0xf]
        %v1077 = vld [vmem:[%s353 + $0xa40] sm:$0xf]
        %v1078 = vld [vmem:[%s353 + $0xa44] sm:$0xf]
        %v1079 = vld [vmem:[%s353 + $0xa48] sm:$0xf]
        %v1080 = vld [vmem:[%s353 + $0xa4c] sm:$0xf]
        %v1081 = vld [vmem:[%s353 + $0xa50] sm:$0xf]
        %v1082 = vld [vmem:[%s353 + $0xa54] sm:$0xf]
        %v1083 = vld [vmem:[%s353 + $0xa58] sm:$0xf]
        %v1084 = vld [vmem:[%s353 + $0xa5c] sm:$0xf]
        %v1085 = vld [vmem:[%s353 + $0xa60] sm:$0xf]
        %v1086 = vld [vmem:[%s353 + $0xa64] sm:$0xf]
        %v1087 = vld [vmem:[%s353 + $0xa68] sm:$0xf]
        %v1088 = vld [vmem:[%s353 + $0xa6c] sm:$0xf]
        %v1089 = vld [vmem:[%s353 + $0xa70] sm:$0xf]
        %v1090 = vld [vmem:[%s353 + $0xa74] sm:$0xf]
        %v1091 = vld [vmem:[%s353 + $0xa78] sm:$0xf]
        %v1092 = vld [vmem:[%s353 + $0xa7c] sm:$0xf]
        %v1093 = vld [vmem:[%s353 + $0xa80] sm:$0xf]
        %v1094 = vld [vmem:[%s353 + $0xa84] sm:$0xf]
        %v1095 = vld [vmem:[%s353 + $0xa88] sm:$0xf]
        %v1096 = vld [vmem:[%s353 + $0xa8c] sm:$0xf]
        %v1097 = vld [vmem:[%s353 + $0xa90] sm:$0xf]
        %v1098 = vld [vmem:[%s353 + $0xa94] sm:$0xf]
        %v1099 = vld [vmem:[%s353 + $0xa98] sm:$0xf]
        %v1100 = vld [vmem:[%s353 + $0xa9c] sm:$0xf]
        %v1101 = vld [vmem:[%s353 + $0xaa0] sm:$0xf]
        %v1102 = vld [vmem:[%s353 + $0xaa4] sm:$0xf]
        %v1103 = vld [vmem:[%s353 + $0xaa8] sm:$0xf]
        %v1104 = vld [vmem:[%s353 + $0xaac] sm:$0xf]
        %v1105 = vld [vmem:[%s353 + $0xab0] sm:$0xf]
        %v1106 = vld [vmem:[%s353 + $0xab4] sm:$0xf]
        %v1107 = vld [vmem:[%s353 + $0xab8] sm:$0xf]
        %v1108 = vld [vmem:[%s353 + $0xabc] sm:$0xf]
        %v1109 = vld [vmem:[%s353 + $0xac0] sm:$0xf]
        %v1110 = vld [vmem:[%s353 + $0xac4] sm:$0xf]
        %v1111 = vld [vmem:[%s353 + $0xac8] sm:$0xf]
        %v1112 = vld [vmem:[%s353 + $0xacc] sm:$0xf]
        %v1113 = vld [vmem:[%s353 + $0xad0] sm:$0xf]
        %v1114 = vld [vmem:[%s353 + $0xad4] sm:$0xf]
        %v1115 = vld [vmem:[%s353 + $0xad8] sm:$0xf]
        %v1116 = vld [vmem:[%s353 + $0xadc] sm:$0xf]
        %v1117 = vld [vmem:[%s353 + $0xae0] sm:$0xf]
        %v1118 = vld [vmem:[%s353 + $0xae4] sm:$0xf]
        %v1119 = vld [vmem:[%s353 + $0xae8] sm:$0xf]
        %v1120 = vld [vmem:[%s353 + $0xaec] sm:$0xf]
        %v1121 = vld [vmem:[%s353 + $0xaf0] sm:$0xf]
        %v1122 = vld [vmem:[%s353 + $0xaf4] sm:$0xf]
        %v1123 = vld [vmem:[%s353 + $0xaf8] sm:$0xf]
        %v1124 = vld [vmem:[%s353 + $0xafc] sm:$0xf]
        %v1125 = vld [vmem:[%s353 + $0xb00] sm:$0xf]
        %v1126 = vld [vmem:[%s353 + $0xb04] sm:$0xf]
        %v1127 = vld [vmem:[%s353 + $0xb08] sm:$0xf]
        %v1128 = vld [vmem:[%s353 + $0xb0c] sm:$0xf]
        %v1129 = vld [vmem:[%s353 + $0xb10] sm:$0xf]
        %v1130 = vld [vmem:[%s353 + $0xb14] sm:$0xf]
        %v1131 = vld [vmem:[%s353 + $0xb18] sm:$0xf]
        %v1132 = vld [vmem:[%s353 + $0xb1c] sm:$0xf]
        %v1133 = vld [vmem:[%s353 + $0xb20] sm:$0xf]
        %v1134 = vld [vmem:[%s353 + $0xb24] sm:$0xf]
        %v1135 = vld [vmem:[%s353 + $0xb28] sm:$0xf]
        %v1136 = vld [vmem:[%s353 + $0xb2c] sm:$0xf]
        %v1137 = vld [vmem:[%s353 + $0xb30] sm:$0xf]
        %v1138 = vld [vmem:[%s353 + $0xb34] sm:$0xf]
        %v1139 = vld [vmem:[%s353 + $0xb38] sm:$0xf]
        %v1140 = vld [vmem:[%s353 + $0xb3c] sm:$0xf]
        %v1141 = vld [vmem:[%s353 + $0xb40] sm:$0xf]
        %v1142 = vld [vmem:[%s353 + $0xb44] sm:$0xf]
        %v1143 = vld [vmem:[%s353 + $0xb48] sm:$0xf]
        %v1144 = vld [vmem:[%s353 + $0xb4c] sm:$0xf]
        %v1145 = vld [vmem:[%s353 + $0xb50] sm:$0xf]
        %v1146 = vld [vmem:[%s353 + $0xb54] sm:$0xf]
        %v1147 = vld [vmem:[%s353 + $0xb58] sm:$0xf]
        %v1148 = vld [vmem:[%s353 + $0xb5c] sm:$0xf]
        %v1149 = vld [vmem:[%s353 + $0xb60] sm:$0xf]
        %v1150 = vld [vmem:[%s353 + $0xb64] sm:$0xf]
        %v1151 = vld [vmem:[%s353 + $0xb68] sm:$0xf]
        %v1152 = vld [vmem:[%s353 + $0xb6c] sm:$0xf]
        %v1153 = vld [vmem:[%s353 + $0xb70] sm:$0xf]
        %v1154 = vld [vmem:[%s353 + $0xb74] sm:$0xf]
        %v1155 = vld [vmem:[%s353 + $0xb78] sm:$0xf]
        %v1156 = vld [vmem:[%s353 + $0xb7c] sm:$0xf]
        %v1157 = vld [vmem:[%s353 + $0xb80] sm:$0xf]
        %v1158 = vld [vmem:[%s353 + $0xb84] sm:$0xf]
        %v1159 = vld [vmem:[%s353 + $0xb88] sm:$0xf]
        %v1160 = vld [vmem:[%s353 + $0xb8c] sm:$0xf]
        %v1161 = vld [vmem:[%s353 + $0xb90] sm:$0xf]
        %v1162 = vld [vmem:[%s353 + $0xb94] sm:$0xf]
        %v1163 = vld [vmem:[%s353 + $0xb98] sm:$0xf]
        %v1164 = vld [vmem:[%s353 + $0xb9c] sm:$0xf]
        %v1165 = vld [vmem:[%s353 + $0xba0] sm:$0xf]
        %v1166 = vld [vmem:[%s353 + $0xba4] sm:$0xf]
        %v1167 = vld [vmem:[%s353 + $0xba8] sm:$0xf]
        %v1168 = vld [vmem:[%s353 + $0xbac] sm:$0xf]
        %v1169 = vld [vmem:[%s353 + $0xbb0] sm:$0xf]
        %v1170 = vld [vmem:[%s353 + $0xbb4] sm:$0xf]
        %v1171 = vld [vmem:[%s353 + $0xbb8] sm:$0xf]
        %v1172 = vld [vmem:[%s353 + $0xbbc] sm:$0xf]
        %v1173 = vld [vmem:[%s353 + $0xbc0] sm:$0xf]
        %v1174 = vld [vmem:[%s353 + $0xbc4] sm:$0xf]
        %v1175 = vld [vmem:[%s353 + $0xbc8] sm:$0xf]
        %v1176 = vld [vmem:[%s353 + $0xbcc] sm:$0xf]
        %v1177 = vld [vmem:[%s353 + $0xbd0] sm:$0xf]
        %v1178 = vld [vmem:[%s353 + $0xbd4] sm:$0xf]
        %v1179 = vld [vmem:[%s353 + $0xbd8] sm:$0xf]
        %v1180 = vld [vmem:[%s353 + $0xbdc] sm:$0xf]
        %v1181 = vld [vmem:[%s353 + $0xbe0] sm:$0xf]
        %v1182 = vld [vmem:[%s353 + $0xbe4] sm:$0xf]
        %v1183 = vld [vmem:[%s353 + $0xbe8] sm:$0xf]
        %v1184 = vld [vmem:[%s353 + $0xbec] sm:$0xf]
        %v1185 = vld [vmem:[%s353 + $0xbf0] sm:$0xf]
        %v1186 = vld [vmem:[%s353 + $0xbf4] sm:$0xf]
        %v1187 = vld [vmem:[%s353 + $0xbf8] sm:$0xf]
        %v1188 = vld [vmem:[%s353 + $0xbfc] sm:$0xf]
        %v1189 = vld [vmem:[%s353 + $0xc00] sm:$0xf]
        %v1190 = vld [vmem:[%s353 + $0xc04] sm:$0xf]
        %v1191 = vld [vmem:[%s353 + $0xc08] sm:$0xf]
        %v1192 = vld [vmem:[%s353 + $0xc0c] sm:$0xf]
        %v1193 = vld [vmem:[%s353 + $0xc10] sm:$0xf]
        %v1194 = vld [vmem:[%s353 + $0xc14] sm:$0xf]
        %v1195 = vld [vmem:[%s353 + $0xc18] sm:$0xf]
        %v1196 = vld [vmem:[%s353 + $0xc1c] sm:$0xf]
        %v1197 = vld [vmem:[%s353 + $0xc20] sm:$0xf]
        %v1198 = vld [vmem:[%s353 + $0xc24] sm:$0xf]
        %v1199 = vld [vmem:[%s353 + $0xc28] sm:$0xf]
        %v1200 = vld [vmem:[%s353 + $0xc2c] sm:$0xf]
        %v1201 = vld [vmem:[%s353 + $0xc30] sm:$0xf]
        %v1202 = vld [vmem:[%s353 + $0xc34] sm:$0xf]
        %v1203 = vld [vmem:[%s353 + $0xc38] sm:$0xf]
        %v1204 = vld [vmem:[%s353 + $0xc3c] sm:$0xf]
        %v1205 = vld [vmem:[%s353 + $0xc40] sm:$0xf]
        %v1206 = vld [vmem:[%s353 + $0xc44] sm:$0xf]
        %v1207 = vld [vmem:[%s353 + $0xc48] sm:$0xf]
        %v1208 = vld [vmem:[%s353 + $0xc4c] sm:$0xf]
        %v1209 = vld [vmem:[%s353 + $0xc50] sm:$0xf]
        %v1210 = vld [vmem:[%s353 + $0xc54] sm:$0xf]
        %v1211 = vld [vmem:[%s353 + $0xc58] sm:$0xf]
        %v1212 = vld [vmem:[%s353 + $0xc5c] sm:$0xf]
        %v1213 = vld [vmem:[%s353 + $0xc60] sm:$0xf]
        %v1214 = vld [vmem:[%s353 + $0xc64] sm:$0xf]
        %v1215 = vld [vmem:[%s353 + $0xc68] sm:$0xf]
        %v1216 = vld [vmem:[%s353 + $0xc6c] sm:$0xf]
        %v1217 = vld [vmem:[%s353 + $0xc70] sm:$0xf]
        %v1218 = vld [vmem:[%s353 + $0xc74] sm:$0xf]
        %v1219 = vld [vmem:[%s353 + $0xc78] sm:$0xf]
        %v1220 = vld [vmem:[%s353 + $0xc7c] sm:$0xf]
        %v1221 = vld [vmem:[%s353 + $0xc80] sm:$0xf]
        %v1222 = vld [vmem:[%s353 + $0xc84] sm:$0xf]
        %v1223 = vld [vmem:[%s353 + $0xc88] sm:$0xf]
        %v1224 = vld [vmem:[%s353 + $0xc8c] sm:$0xf]
        %v1225 = vld [vmem:[%s353 + $0xc90] sm:$0xf]
        %v1226 = vld [vmem:[%s353 + $0xc94] sm:$0xf]
        %v1227 = vld [vmem:[%s353 + $0xc98] sm:$0xf]
        %v1228 = vld [vmem:[%s353 + $0xc9c] sm:$0xf]
        %v1229 = vld [vmem:[%s353 + $0xca0] sm:$0xf]
        %v1230 = vld [vmem:[%s353 + $0xca4] sm:$0xf]
        %v1231 = vld [vmem:[%s353 + $0xca8] sm:$0xf]
        %v1232 = vld [vmem:[%s353 + $0xcac] sm:$0xf]
        %v1233 = vld [vmem:[%s353 + $0xcb0] sm:$0xf]
        %v1234 = vld [vmem:[%s353 + $0xcb4] sm:$0xf]
        %v1235 = vld [vmem:[%s353 + $0xcb8] sm:$0xf]
        %v1236 = vld [vmem:[%s353 + $0xcbc] sm:$0xf]
        %v1237 = vld [vmem:[%s353 + $0xcc0] sm:$0xf]
        %v1238 = vld [vmem:[%s353 + $0xcc4] sm:$0xf]
        %v1239 = vld [vmem:[%s353 + $0xcc8] sm:$0xf]
        %v1240 = vld [vmem:[%s353 + $0xccc] sm:$0xf]
        %v1241 = vld [vmem:[%s353 + $0xcd0] sm:$0xf]
        %v1242 = vld [vmem:[%s353 + $0xcd4] sm:$0xf]
        %v1243 = vld [vmem:[%s353 + $0xcd8] sm:$0xf]
        %v1244 = vld [vmem:[%s353 + $0xcdc] sm:$0xf]
        %v1245 = vld [vmem:[%s353 + $0xce0] sm:$0xf]
        %v1246 = vld [vmem:[%s353 + $0xce4] sm:$0xf]
        %v1247 = vld [vmem:[%s353 + $0xce8] sm:$0xf]
        %v1248 = vld [vmem:[%s353 + $0xcec] sm:$0xf]
        %v1249 = vld [vmem:[%s353 + $0xcf0] sm:$0xf]
        %v1250 = vld [vmem:[%s353 + $0xcf4] sm:$0xf]
        %v1251 = vld [vmem:[%s353 + $0xcf8] sm:$0xf]
        %v1252 = vld [vmem:[%s353 + $0xcfc] sm:$0xf]
        %v1253 = vld [vmem:[%s353 + $0xd00] sm:$0xf]
        %v1254 = vld [vmem:[%s353 + $0xd04] sm:$0xf]
        %v1255 = vld [vmem:[%s353 + $0xd08] sm:$0xf]
        %v1256 = vld [vmem:[%s353 + $0xd0c] sm:$0xf]
        %v1257 = vld [vmem:[%s353 + $0xd10] sm:$0xf]
        %v1258 = vld [vmem:[%s353 + $0xd14] sm:$0xf]
        %v1259 = vld [vmem:[%s353 + $0xd18] sm:$0xf]
        %v1260 = vld [vmem:[%s353 + $0xd1c] sm:$0xf]
        %v1261 = vld [vmem:[%s353 + $0xd20] sm:$0xf]
        %v1262 = vld [vmem:[%s353 + $0xd24] sm:$0xf]
        %v1263 = vld [vmem:[%s353 + $0xd28] sm:$0xf]
        %v1264 = vld [vmem:[%s353 + $0xd2c] sm:$0xf]
        %v1265 = vld [vmem:[%s353 + $0xd30] sm:$0xf]
        %v1266 = vld [vmem:[%s353 + $0xd34] sm:$0xf]
        %v1267 = vld [vmem:[%s353 + $0xd38] sm:$0xf]
        %v1268 = vld [vmem:[%s353 + $0xd3c] sm:$0xf]
        %v1269 = vld [vmem:[%s353 + $0xd40] sm:$0xf]
        %v1270 = vld [vmem:[%s353 + $0xd44] sm:$0xf]
        %v1271 = vld [vmem:[%s353 + $0xd48] sm:$0xf]
        %v1272 = vld [vmem:[%s353 + $0xd4c] sm:$0xf]
        %v1273 = vld [vmem:[%s353 + $0xd50] sm:$0xf]
        %v1274 = vld [vmem:[%s353 + $0xd54] sm:$0xf]
        %v1275 = vld [vmem:[%s353 + $0xd58] sm:$0xf]
        %v1276 = vld [vmem:[%s353 + $0xd5c] sm:$0xf]
        %v1277 = vld [vmem:[%s353 + $0xd60] sm:$0xf]
        %v1278 = vld [vmem:[%s353 + $0xd64] sm:$0xf]
        %v1279 = vld [vmem:[%s353 + $0xd68] sm:$0xf]
        %v1280 = vld [vmem:[%s353 + $0xd6c] sm:$0xf]
        %v1281 = vld [vmem:[%s353 + $0xd70] sm:$0xf]
        %v1282 = vld [vmem:[%s353 + $0xd74] sm:$0xf]
        %v1283 = vld [vmem:[%s353 + $0xd78] sm:$0xf]
        %v1284 = vld [vmem:[%s353 + $0xd7c] sm:$0xf]
        %v1285 = vld [vmem:[%s353 + $0xd80] sm:$0xf]
        %v1286 = vld [vmem:[%s353 + $0xd84] sm:$0xf]
        %v1287 = vld [vmem:[%s353 + $0xd88] sm:$0xf]
        %v1288 = vld [vmem:[%s353 + $0xd8c] sm:$0xf]
        %v1289 = vld [vmem:[%s353 + $0xd90] sm:$0xf]
        %v1290 = vld [vmem:[%s353 + $0xd94] sm:$0xf]
        %v1291 = vld [vmem:[%s353 + $0xd98] sm:$0xf]
        %v1292 = vld [vmem:[%s353 + $0xd9c] sm:$0xf]
        %v1293 = vld [vmem:[%s353 + $0xda0] sm:$0xf]
        %v1294 = vld [vmem:[%s353 + $0xda4] sm:$0xf]
        %v1295 = vld [vmem:[%s353 + $0xda8] sm:$0xf]
        %v1296 = vld [vmem:[%s353 + $0xdac] sm:$0xf]
        %v1297 = vld [vmem:[%s353 + $0xdb0] sm:$0xf]
        %v1298 = vld [vmem:[%s353 + $0xdb4] sm:$0xf]
        %v1299 = vld [vmem:[%s353 + $0xdb8] sm:$0xf]
        %v1300 = vld [vmem:[%s353 + $0xdbc] sm:$0xf]
        %v1301 = vld [vmem:[%s353 + $0xdc0] sm:$0xf]
        %v1302 = vld [vmem:[%s353 + $0xdc4] sm:$0xf]
        %v1303 = vld [vmem:[%s353 + $0xdc8] sm:$0xf]
        %v1304 = vld [vmem:[%s353 + $0xdcc] sm:$0xf]
        %v1305 = vld [vmem:[%s353 + $0xdd0] sm:$0xf]
        %v1306 = vld [vmem:[%s353 + $0xdd4] sm:$0xf]
        %v1307 = vld [vmem:[%s353 + $0xdd8] sm:$0xf]
        %v1308 = vld [vmem:[%s353 + $0xddc] sm:$0xf]
        %v1309 = vld [vmem:[%s353 + $0xde0] sm:$0xf]
        %v1310 = vld [vmem:[%s353 + $0xde4] sm:$0xf]
        %v1311 = vld [vmem:[%s353 + $0xde8] sm:$0xf]
        %v1312 = vld [vmem:[%s353 + $0xdec] sm:$0xf]
        %v1313 = vld [vmem:[%s353 + $0xdf0] sm:$0xf]
        %v1314 = vld [vmem:[%s353 + $0xdf4] sm:$0xf]
        %v1315 = vld [vmem:[%s353 + $0xdf8] sm:$0xf]
        %v1316 = vld [vmem:[%s353 + $0xdfc] sm:$0xf]
        %v1317 = vld [vmem:[%s353 + $0xe00] sm:$0xf]
        %v1318 = vld [vmem:[%s353 + $0xe04] sm:$0xf]
        %v1319 = vld [vmem:[%s353 + $0xe08] sm:$0xf]
        %v1320 = vld [vmem:[%s353 + $0xe0c] sm:$0xf]
        %v1321 = vld [vmem:[%s353 + $0xe10] sm:$0xf]
        %v1322 = vld [vmem:[%s353 + $0xe14] sm:$0xf]
        %v1323 = vld [vmem:[%s353 + $0xe18] sm:$0xf]
        %v1324 = vld [vmem:[%s353 + $0xe1c] sm:$0xf]
        %v1325 = vld [vmem:[%s353 + $0xe20] sm:$0xf]
        %v1326 = vld [vmem:[%s353 + $0xe24] sm:$0xf]
        %v1327 = vld [vmem:[%s353 + $0xe28] sm:$0xf]
        %v1328 = vld [vmem:[%s353 + $0xe2c] sm:$0xf]
        %v1329 = vld [vmem:[%s353 + $0xe30] sm:$0xf]
        %v1330 = vld [vmem:[%s353 + $0xe34] sm:$0xf]
        %v1331 = vld [vmem:[%s353 + $0xe38] sm:$0xf]
        %v1332 = vld [vmem:[%s353 + $0xe3c] sm:$0xf]
        %v1333 = vld [vmem:[%s353 + $0xe40] sm:$0xf]
        %v1334 = vld [vmem:[%s353 + $0xe44] sm:$0xf]
        %v1335 = vld [vmem:[%s353 + $0xe48] sm:$0xf]
        %v1336 = vld [vmem:[%s353 + $0xe4c] sm:$0xf]
        %v1337 = vld [vmem:[%s353 + $0xe50] sm:$0xf]
        %v1338 = vld [vmem:[%s353 + $0xe54] sm:$0xf]
        %v1339 = vld [vmem:[%s353 + $0xe58] sm:$0xf]
        %v1340 = vld [vmem:[%s353 + $0xe5c] sm:$0xf]
        %v1341 = vld [vmem:[%s353 + $0xe60] sm:$0xf]
        %v1342 = vld [vmem:[%s353 + $0xe64] sm:$0xf]
        %v1343 = vld [vmem:[%s353 + $0xe68] sm:$0xf]
        %v1344 = vld [vmem:[%s353 + $0xe6c] sm:$0xf]
        %v1345 = vld [vmem:[%s353 + $0xe70] sm:$0xf]
        %v1346 = vld [vmem:[%s353 + $0xe74] sm:$0xf]
        %v1347 = vld [vmem:[%s353 + $0xe78] sm:$0xf]
        %v1348 = vld [vmem:[%s353 + $0xe7c] sm:$0xf]
        %v1349 = vld [vmem:[%s353 + $0xe80] sm:$0xf]
        %v1350 = vld [vmem:[%s353 + $0xe84] sm:$0xf]
        %v1351 = vld [vmem:[%s353 + $0xe88] sm:$0xf]
        %v1352 = vld [vmem:[%s353 + $0xe8c] sm:$0xf]
        %v1353 = vld [vmem:[%s353 + $0xe90] sm:$0xf]
        %v1354 = vld [vmem:[%s353 + $0xe94] sm:$0xf]
        %v1355 = vld [vmem:[%s353 + $0xe98] sm:$0xf]
        %v1356 = vld [vmem:[%s353 + $0xe9c] sm:$0xf]
        %v1357 = vld [vmem:[%s353 + $0xea0] sm:$0xf]
        %v1358 = vld [vmem:[%s353 + $0xea4] sm:$0xf]
        %v1359 = vld [vmem:[%s353 + $0xea8] sm:$0xf]
        %v1360 = vld [vmem:[%s353 + $0xeac] sm:$0xf]
        %v1361 = vld [vmem:[%s353 + $0xeb0] sm:$0xf]
        %v1362 = vld [vmem:[%s353 + $0xeb4] sm:$0xf]
        %v1363 = vld [vmem:[%s353 + $0xeb8] sm:$0xf]
        %v1364 = vld [vmem:[%s353 + $0xebc] sm:$0xf]
        %v1365 = vld [vmem:[%s353 + $0xec0] sm:$0xf]
        %v1366 = vld [vmem:[%s353 + $0xec4] sm:$0xf]
        %v1367 = vld [vmem:[%s353 + $0xec8] sm:$0xf]
        %v1368 = vld [vmem:[%s353 + $0xecc] sm:$0xf]
        %v1369 = vld [vmem:[%s353 + $0xed0] sm:$0xf]
        %v1370 = vld [vmem:[%s353 + $0xed4] sm:$0xf]
        %v1371 = vld [vmem:[%s353 + $0xed8] sm:$0xf]
        %v1372 = vld [vmem:[%s353 + $0xedc] sm:$0xf]
        %v1373 = vld [vmem:[%s353 + $0xee0] sm:$0xf]
        %v1374 = vld [vmem:[%s353 + $0xee4] sm:$0xf]
        %v1375 = vld [vmem:[%s353 + $0xee8] sm:$0xf]
        %v1376 = vld [vmem:[%s353 + $0xeec] sm:$0xf]
        %v1377 = vld [vmem:[%s353 + $0xef0] sm:$0xf]
        %v1378 = vld [vmem:[%s353 + $0xef4] sm:$0xf]
        %v1379 = vld [vmem:[%s353 + $0xef8] sm:$0xf]
        %v1380 = vld [vmem:[%s353 + $0xefc] sm:$0xf]
        %v1381 = vld [vmem:[%s353 + $0xf00] sm:$0xf]
        %v1382 = vld [vmem:[%s353 + $0xf04] sm:$0xf]
        %v1383 = vld [vmem:[%s353 + $0xf08] sm:$0xf]
        %v1384 = vld [vmem:[%s353 + $0xf0c] sm:$0xf]
        %v1385 = vld [vmem:[%s353 + $0xf10] sm:$0xf]
        %v1386 = vld [vmem:[%s353 + $0xf14] sm:$0xf]
        %v1387 = vld [vmem:[%s353 + $0xf18] sm:$0xf]
        %v1388 = vld [vmem:[%s353 + $0xf1c] sm:$0xf]
        %v1389 = vld [vmem:[%s353 + $0xf20] sm:$0xf]
        %v1390 = vld [vmem:[%s353 + $0xf24] sm:$0xf]
        %v1391 = vld [vmem:[%s353 + $0xf28] sm:$0xf]
        %v1392 = vld [vmem:[%s353 + $0xf2c] sm:$0xf]
        %v1393 = vld [vmem:[%s353 + $0xf30] sm:$0xf]
        %v1394 = vld [vmem:[%s353 + $0xf34] sm:$0xf]
        %v1395 = vld [vmem:[%s353 + $0xf38] sm:$0xf]
        %v1396 = vld [vmem:[%s353 + $0xf3c] sm:$0xf]
        %v1397 = vld [vmem:[%s353 + $0xf40] sm:$0xf]
        %v1398 = vld [vmem:[%s353 + $0xf44] sm:$0xf]
        %v1399 = vld [vmem:[%s353 + $0xf48] sm:$0xf]
        %v1400 = vld [vmem:[%s353 + $0xf4c] sm:$0xf]
        %v1401 = vld [vmem:[%s353 + $0xf50] sm:$0xf]
        %v1402 = vld [vmem:[%s353 + $0xf54] sm:$0xf]
        %v1403 = vld [vmem:[%s353 + $0xf58] sm:$0xf]
        %v1404 = vld [vmem:[%s353 + $0xf5c] sm:$0xf]
        %v1405 = vld [vmem:[%s353 + $0xf60] sm:$0xf]
        %v1406 = vld [vmem:[%s353 + $0xf64] sm:$0xf]
        %v1407 = vld [vmem:[%s353 + $0xf68] sm:$0xf]
        %v1408 = vld [vmem:[%s353 + $0xf6c] sm:$0xf]
        %v1409 = vld [vmem:[%s353 + $0xf70] sm:$0xf]
        %v1410 = vld [vmem:[%s353 + $0xf74] sm:$0xf]
        %v1411 = vld [vmem:[%s353 + $0xf78] sm:$0xf]
        %v1412 = vld [vmem:[%s353 + $0xf7c] sm:$0xf]
        %v1413 = vld [vmem:[%s353 + $0xf80] sm:$0xf]
        %v1414 = vld [vmem:[%s353 + $0xf84] sm:$0xf]
        %v1415 = vld [vmem:[%s353 + $0xf88] sm:$0xf]
        %v1416 = vld [vmem:[%s353 + $0xf8c] sm:$0xf]
        %v1417 = vld [vmem:[%s353 + $0xf90] sm:$0xf]
        %v1418 = vld [vmem:[%s353 + $0xf94] sm:$0xf]
        %v1419 = vld [vmem:[%s353 + $0xf98] sm:$0xf]
        %v1420 = vld [vmem:[%s353 + $0xf9c] sm:$0xf]
        %v1421 = vld [vmem:[%s353 + $0xfa0] sm:$0xf]
        %v1422 = vld [vmem:[%s353 + $0xfa4] sm:$0xf]
        %v1423 = vld [vmem:[%s353 + $0xfa8] sm:$0xf]
        %v1424 = vld [vmem:[%s353 + $0xfac] sm:$0xf]
        %v1425 = vld [vmem:[%s353 + $0xfb0] sm:$0xf]
        %v1426 = vld [vmem:[%s353 + $0xfb4] sm:$0xf]
        %v1427 = vld [vmem:[%s353 + $0xfb8] sm:$0xf]
        %v1428 = vld [vmem:[%s353 + $0xfbc] sm:$0xf]
        %v1429 = vld [vmem:[%s353 + $0xfc0] sm:$0xf]
        %v1430 = vld [vmem:[%s353 + $0xfc4] sm:$0xf]
        %v1431 = vld [vmem:[%s353 + $0xfc8] sm:$0xf]
        %v1432 = vld [vmem:[%s353 + $0xfcc] sm:$0xf]
        %v1433 = vld [vmem:[%s353 + $0xfd0] sm:$0xf]
        %v1434 = vld [vmem:[%s353 + $0xfd4] sm:$0xf]
        %v1435 = vld [vmem:[%s353 + $0xfd8] sm:$0xf]
        %v1436 = vld [vmem:[%s353 + $0xfdc] sm:$0xf]
        %v1437 = vld [vmem:[%s353 + $0xfe0] sm:$0xf]
        %v1438 = vld [vmem:[%s353 + $0xfe4] sm:$0xf]
        %v1439 = vld [vmem:[%s353 + $0xfe8] sm:$0xf]
        %v1440 = vld [vmem:[%s353 + $0xfec] sm:$0xf]
        %v1441 = vld [vmem:[%s353 + $0xff0] sm:$0xf]
        %v1442 = vld [vmem:[%s353 + $0xff4] sm:$0xf]
        %v1443 = vld [vmem:[%s353 + $0xff8] sm:$0xf]
        %v1444 = vld [vmem:[%s353 + $0xffc] sm:$0xf]
        %v1445 = vld [vmem:[%s362] sm:$0xf]
        %v1446 = vld [vmem:[%s362 + $0x4] sm:$0xf]
        %v1447 = vld [vmem:[%s362 + $0x8] sm:$0xf]
        %v1448 = vld [vmem:[%s362 + $0xc] sm:$0xf]
        %v1449 = vld [vmem:[%s362 + $0x10] sm:$0xf]
        %v1450 = vld [vmem:[%s362 + $0x14] sm:$0xf]
        %v1451 = vld [vmem:[%s362 + $0x18] sm:$0xf]
        %v1452 = vld [vmem:[%s362 + $0x1c] sm:$0xf]
        %v1453 = vld [vmem:[%s362 + $0x20] sm:$0xf]
        %v1454 = vld [vmem:[%s362 + $0x24] sm:$0xf]
        %v1455 = vld [vmem:[%s362 + $0x28] sm:$0xf]
        %v1456 = vld [vmem:[%s362 + $0x2c] sm:$0xf]
        %v1457 = vld [vmem:[%s362 + $0x30] sm:$0xf]
        %v1458 = vld [vmem:[%s362 + $0x34] sm:$0xf]
        %v1459 = vld [vmem:[%s362 + $0x38] sm:$0xf]
        %v1460 = vld [vmem:[%s362 + $0x3c] sm:$0xf]
        %v1461 = vld [vmem:[%s362 + $0x40] sm:$0xf]
        %v1462 = vld [vmem:[%s362 + $0x44] sm:$0xf]
        %v1463 = vld [vmem:[%s362 + $0x48] sm:$0xf]
        %v1464 = vld [vmem:[%s362 + $0x4c] sm:$0xf]
        %v1465 = vld [vmem:[%s362 + $0x50] sm:$0xf]
        %v1466 = vld [vmem:[%s362 + $0x54] sm:$0xf]
        %v1467 = vld [vmem:[%s362 + $0x58] sm:$0xf]
        %v1468 = vld [vmem:[%s362 + $0x5c] sm:$0xf]
        %v1469 = vld [vmem:[%s362 + $0x60] sm:$0xf]
        %v1470 = vld [vmem:[%s362 + $0x64] sm:$0xf]
        %v1471 = vld [vmem:[%s362 + $0x68] sm:$0xf]
        %v1472 = vld [vmem:[%s362 + $0x6c] sm:$0xf]
        %v1473 = vld [vmem:[%s362 + $0x70] sm:$0xf]
        %v1474 = vld [vmem:[%s362 + $0x74] sm:$0xf]
        %v1475 = vld [vmem:[%s362 + $0x78] sm:$0xf]
        %v1476 = vld [vmem:[%s362 + $0x7c] sm:$0xf]
        %v1477 = vld [vmem:[%s362 + $0x80] sm:$0xf]
        %v1478 = vld [vmem:[%s362 + $0x84] sm:$0xf]
        %v1479 = vld [vmem:[%s362 + $0x88] sm:$0xf]
        %v1480 = vld [vmem:[%s362 + $0x8c] sm:$0xf]
        %v1481 = vld [vmem:[%s362 + $0x90] sm:$0xf]
        %v1482 = vld [vmem:[%s362 + $0x94] sm:$0xf]
        %v1483 = vld [vmem:[%s362 + $0x98] sm:$0xf]
        %v1484 = vld [vmem:[%s362 + $0x9c] sm:$0xf]
        %v1485 = vld [vmem:[%s362 + $0xa0] sm:$0xf]
        %v1486 = vld [vmem:[%s362 + $0xa4] sm:$0xf]
        %v1487 = vld [vmem:[%s362 + $0xa8] sm:$0xf]
        %v1488 = vld [vmem:[%s362 + $0xac] sm:$0xf]
        %v1489 = vld [vmem:[%s362 + $0xb0] sm:$0xf]
        %v1490 = vld [vmem:[%s362 + $0xb4] sm:$0xf]
        %v1491 = vld [vmem:[%s362 + $0xb8] sm:$0xf]
        %v1492 = vld [vmem:[%s362 + $0xbc] sm:$0xf]
        %v1493 = vld [vmem:[%s362 + $0xc0] sm:$0xf]
        %v1494 = vld [vmem:[%s362 + $0xc4] sm:$0xf]
        %v1495 = vld [vmem:[%s362 + $0xc8] sm:$0xf]
        %v1496 = vld [vmem:[%s362 + $0xcc] sm:$0xf]
        %v1497 = vld [vmem:[%s362 + $0xd0] sm:$0xf]
        %v1498 = vld [vmem:[%s362 + $0xd4] sm:$0xf]
        %v1499 = vld [vmem:[%s362 + $0xd8] sm:$0xf]
        %v1500 = vld [vmem:[%s362 + $0xdc] sm:$0xf]
        %v1501 = vld [vmem:[%s362 + $0xe0] sm:$0xf]
        %v1502 = vld [vmem:[%s362 + $0xe4] sm:$0xf]
        %v1503 = vld [vmem:[%s362 + $0xe8] sm:$0xf]
        %v1504 = vld [vmem:[%s362 + $0xec] sm:$0xf]
        %v1505 = vld [vmem:[%s362 + $0xf0] sm:$0xf]
        %v1506 = vld [vmem:[%s362 + $0xf4] sm:$0xf]
        %v1507 = vld [vmem:[%s362 + $0xf8] sm:$0xf]
        %v1508 = vld [vmem:[%s362 + $0xfc] sm:$0xf]
        %v1509 = vld [vmem:[%s362 + $0x100] sm:$0xf]
        %v1510 = vld [vmem:[%s362 + $0x104] sm:$0xf]
        %v1511 = vld [vmem:[%s362 + $0x108] sm:$0xf]
        %v1512 = vld [vmem:[%s362 + $0x10c] sm:$0xf]
        %v1513 = vld [vmem:[%s362 + $0x110] sm:$0xf]
        %v1514 = vld [vmem:[%s362 + $0x114] sm:$0xf]
        %v1515 = vld [vmem:[%s362 + $0x118] sm:$0xf]
        %v1516 = vld [vmem:[%s362 + $0x11c] sm:$0xf]
        %v1517 = vld [vmem:[%s362 + $0x120] sm:$0xf]
        %v1518 = vld [vmem:[%s362 + $0x124] sm:$0xf]
        %v1519 = vld [vmem:[%s362 + $0x128] sm:$0xf]
        %v1520 = vld [vmem:[%s362 + $0x12c] sm:$0xf]
        %v1521 = vld [vmem:[%s362 + $0x130] sm:$0xf]
        %v1522 = vld [vmem:[%s362 + $0x134] sm:$0xf]
        %v1523 = vld [vmem:[%s362 + $0x138] sm:$0xf]
        %v1524 = vld [vmem:[%s362 + $0x13c] sm:$0xf]
        %v1525 = vld [vmem:[%s362 + $0x140] sm:$0xf]
        %v1526 = vld [vmem:[%s362 + $0x144] sm:$0xf]
        %v1527 = vld [vmem:[%s362 + $0x148] sm:$0xf]
        %v1528 = vld [vmem:[%s362 + $0x14c] sm:$0xf]
        %v1529 = vld [vmem:[%s362 + $0x150] sm:$0xf]
        %v1530 = vld [vmem:[%s362 + $0x154] sm:$0xf]
        %v1531 = vld [vmem:[%s362 + $0x158] sm:$0xf]
        %v1532 = vld [vmem:[%s362 + $0x15c] sm:$0xf]
        %v1533 = vld [vmem:[%s362 + $0x160] sm:$0xf]
        %v1534 = vld [vmem:[%s362 + $0x164] sm:$0xf]
        %v1535 = vld [vmem:[%s362 + $0x168] sm:$0xf]
        %v1536 = vld [vmem:[%s362 + $0x16c] sm:$0xf]
        %v1537 = vld [vmem:[%s362 + $0x170] sm:$0xf]
        %v1538 = vld [vmem:[%s362 + $0x174] sm:$0xf]
        %v1539 = vld [vmem:[%s362 + $0x178] sm:$0xf]
        %v1540 = vld [vmem:[%s362 + $0x17c] sm:$0xf]
        %v1541 = vld [vmem:[%s362 + $0x180] sm:$0xf]
        %v1542 = vld [vmem:[%s362 + $0x184] sm:$0xf]
        %v1543 = vld [vmem:[%s362 + $0x188] sm:$0xf]
        %v1544 = vld [vmem:[%s362 + $0x18c] sm:$0xf]
        %v1545 = vld [vmem:[%s362 + $0x190] sm:$0xf]
        %v1546 = vld [vmem:[%s362 + $0x194] sm:$0xf]
        %v1547 = vld [vmem:[%s362 + $0x198] sm:$0xf]
        %v1548 = vld [vmem:[%s362 + $0x19c] sm:$0xf]
        %v1549 = vld [vmem:[%s362 + $0x1a0] sm:$0xf]
        %v1550 = vld [vmem:[%s362 + $0x1a4] sm:$0xf]
        %v1551 = vld [vmem:[%s362 + $0x1a8] sm:$0xf]
        %v1552 = vld [vmem:[%s362 + $0x1ac] sm:$0xf]
        %v1553 = vld [vmem:[%s362 + $0x1b0] sm:$0xf]
        %v1554 = vld [vmem:[%s362 + $0x1b4] sm:$0xf]
        %v1555 = vld [vmem:[%s362 + $0x1b8] sm:$0xf]
        %v1556 = vld [vmem:[%s362 + $0x1bc] sm:$0xf]
        %v1557 = vld [vmem:[%s362 + $0x1c0] sm:$0xf]
        %v1558 = vld [vmem:[%s362 + $0x1c4] sm:$0xf]
        %v1559 = vld [vmem:[%s362 + $0x1c8] sm:$0xf]
        %v1560 = vld [vmem:[%s362 + $0x1cc] sm:$0xf]
        %v1561 = vld [vmem:[%s362 + $0x1d0] sm:$0xf]
        %v1562 = vld [vmem:[%s362 + $0x1d4] sm:$0xf]
        %v1563 = vld [vmem:[%s362 + $0x1d8] sm:$0xf]
        %v1564 = vld [vmem:[%s362 + $0x1dc] sm:$0xf]
        %v1565 = vld [vmem:[%s362 + $0x1e0] sm:$0xf]
        %v1566 = vld [vmem:[%s362 + $0x1e4] sm:$0xf]
        %v1567 = vld [vmem:[%s362 + $0x1e8] sm:$0xf]
        %v1568 = vld [vmem:[%s362 + $0x1ec] sm:$0xf]
        %v1569 = vld [vmem:[%s362 + $0x1f0] sm:$0xf]
        %v1570 = vld [vmem:[%s362 + $0x1f4] sm:$0xf]
        %v1571 = vld [vmem:[%s362 + $0x1f8] sm:$0xf]
        %v1572 = vld [vmem:[%s362 + $0x1fc] sm:$0xf]
        %v1573 = vld [vmem:[%s362 + $0x200] sm:$0xf]
        %v1574 = vld [vmem:[%s362 + $0x204] sm:$0xf]
        %v1575 = vld [vmem:[%s362 + $0x208] sm:$0xf]
        %v1576 = vld [vmem:[%s362 + $0x20c] sm:$0xf]
        %v1577 = vld [vmem:[%s362 + $0x210] sm:$0xf]
        %v1578 = vld [vmem:[%s362 + $0x214] sm:$0xf]
        %v1579 = vld [vmem:[%s362 + $0x218] sm:$0xf]
        %v1580 = vld [vmem:[%s362 + $0x21c] sm:$0xf]
        %v1581 = vld [vmem:[%s362 + $0x220] sm:$0xf]
        %v1582 = vld [vmem:[%s362 + $0x224] sm:$0xf]
        %v1583 = vld [vmem:[%s362 + $0x228] sm:$0xf]
        %v1584 = vld [vmem:[%s362 + $0x22c] sm:$0xf]
        %v1585 = vld [vmem:[%s362 + $0x230] sm:$0xf]
        %v1586 = vld [vmem:[%s362 + $0x234] sm:$0xf]
        %v1587 = vld [vmem:[%s362 + $0x238] sm:$0xf]
        %v1588 = vld [vmem:[%s362 + $0x23c] sm:$0xf]
        %v1589 = vld [vmem:[%s362 + $0x240] sm:$0xf]
        %v1590 = vld [vmem:[%s362 + $0x244] sm:$0xf]
        %v1591 = vld [vmem:[%s362 + $0x248] sm:$0xf]
        %v1592 = vld [vmem:[%s362 + $0x24c] sm:$0xf]
        %v1593 = vld [vmem:[%s362 + $0x250] sm:$0xf]
        %v1594 = vld [vmem:[%s362 + $0x254] sm:$0xf]
        %v1595 = vld [vmem:[%s362 + $0x258] sm:$0xf]
        %v1596 = vld [vmem:[%s362 + $0x25c] sm:$0xf]
        %v1597 = vld [vmem:[%s362 + $0x260] sm:$0xf]
        %v1598 = vld [vmem:[%s362 + $0x264] sm:$0xf]
        %v1599 = vld [vmem:[%s362 + $0x268] sm:$0xf]
        %v1600 = vld [vmem:[%s362 + $0x26c] sm:$0xf]
        %v1601 = vld [vmem:[%s362 + $0x270] sm:$0xf]
        %v1602 = vld [vmem:[%s362 + $0x274] sm:$0xf]
        %v1603 = vld [vmem:[%s362 + $0x278] sm:$0xf]
        %v1604 = vld [vmem:[%s362 + $0x27c] sm:$0xf]
        %v1605 = vld [vmem:[%s362 + $0x280] sm:$0xf]
        %v1606 = vld [vmem:[%s362 + $0x284] sm:$0xf]
        %v1607 = vld [vmem:[%s362 + $0x288] sm:$0xf]
        %v1608 = vld [vmem:[%s362 + $0x28c] sm:$0xf]
        %v1609 = vld [vmem:[%s362 + $0x290] sm:$0xf]
        %v1610 = vld [vmem:[%s362 + $0x294] sm:$0xf]
        %v1611 = vld [vmem:[%s362 + $0x298] sm:$0xf]
        %v1612 = vld [vmem:[%s362 + $0x29c] sm:$0xf]
        %v1613 = vld [vmem:[%s362 + $0x2a0] sm:$0xf]
        %v1614 = vld [vmem:[%s362 + $0x2a4] sm:$0xf]
        %v1615 = vld [vmem:[%s362 + $0x2a8] sm:$0xf]
        %v1616 = vld [vmem:[%s362 + $0x2ac] sm:$0xf]
        %v1617 = vld [vmem:[%s362 + $0x2b0] sm:$0xf]
        %v1618 = vld [vmem:[%s362 + $0x2b4] sm:$0xf]
        %v1619 = vld [vmem:[%s362 + $0x2b8] sm:$0xf]
        %v1620 = vld [vmem:[%s362 + $0x2bc] sm:$0xf]
        %v1621 = vld [vmem:[%s362 + $0x2c0] sm:$0xf]
        %v1622 = vld [vmem:[%s362 + $0x2c4] sm:$0xf]
        %v1623 = vld [vmem:[%s362 + $0x2c8] sm:$0xf]
        %v1624 = vld [vmem:[%s362 + $0x2cc] sm:$0xf]
        %v1625 = vld [vmem:[%s362 + $0x2d0] sm:$0xf]
        %v1626 = vld [vmem:[%s362 + $0x2d4] sm:$0xf]
        %v1627 = vld [vmem:[%s362 + $0x2d8] sm:$0xf]
        %v1628 = vld [vmem:[%s362 + $0x2dc] sm:$0xf]
        %v1629 = vld [vmem:[%s362 + $0x2e0] sm:$0xf]
        %v1630 = vld [vmem:[%s362 + $0x2e4] sm:$0xf]
        %v1631 = vld [vmem:[%s362 + $0x2e8] sm:$0xf]
        %v1632 = vld [vmem:[%s362 + $0x2ec] sm:$0xf]
        %v1633 = vld [vmem:[%s362 + $0x2f0] sm:$0xf]
        %v1634 = vld [vmem:[%s362 + $0x2f4] sm:$0xf]
        %v1635 = vld [vmem:[%s362 + $0x2f8] sm:$0xf]
        %v1636 = vld [vmem:[%s362 + $0x2fc] sm:$0xf]
        %v1637 = vld [vmem:[%s362 + $0x300] sm:$0xf]
        %v1638 = vld [vmem:[%s362 + $0x304] sm:$0xf]
        %v1639 = vld [vmem:[%s362 + $0x308] sm:$0xf]
        %v1640 = vld [vmem:[%s362 + $0x30c] sm:$0xf]
        %v1641 = vld [vmem:[%s362 + $0x310] sm:$0xf]
        %v1642 = vld [vmem:[%s362 + $0x314] sm:$0xf]
        %v1643 = vld [vmem:[%s362 + $0x318] sm:$0xf]
        %v1644 = vld [vmem:[%s362 + $0x31c] sm:$0xf]
        %v1645 = vld [vmem:[%s362 + $0x320] sm:$0xf]
        %v1646 = vld [vmem:[%s362 + $0x324] sm:$0xf]
        %v1647 = vld [vmem:[%s362 + $0x328] sm:$0xf]
        %v1648 = vld [vmem:[%s362 + $0x32c] sm:$0xf]
        %v1649 = vld [vmem:[%s362 + $0x330] sm:$0xf]
        %v1650 = vld [vmem:[%s362 + $0x334] sm:$0xf]
        %v1651 = vld [vmem:[%s362 + $0x338] sm:$0xf]
        %v1652 = vld [vmem:[%s362 + $0x33c] sm:$0xf]
        %v1653 = vld [vmem:[%s362 + $0x340] sm:$0xf]
        %v1654 = vld [vmem:[%s362 + $0x344] sm:$0xf]
        %v1655 = vld [vmem:[%s362 + $0x348] sm:$0xf]
        %v1656 = vld [vmem:[%s362 + $0x34c] sm:$0xf]
        %v1657 = vld [vmem:[%s362 + $0x350] sm:$0xf]
        %v1658 = vld [vmem:[%s362 + $0x354] sm:$0xf]
        %v1659 = vld [vmem:[%s362 + $0x358] sm:$0xf]
        %v1660 = vld [vmem:[%s362 + $0x35c] sm:$0xf]
        %v1661 = vld [vmem:[%s362 + $0x360] sm:$0xf]
        %v1662 = vld [vmem:[%s362 + $0x364] sm:$0xf]
        %v1663 = vld [vmem:[%s362 + $0x368] sm:$0xf]
        %v1664 = vld [vmem:[%s362 + $0x36c] sm:$0xf]
        %v1665 = vld [vmem:[%s362 + $0x370] sm:$0xf]
        %v1666 = vld [vmem:[%s362 + $0x374] sm:$0xf]
        %v1667 = vld [vmem:[%s362 + $0x378] sm:$0xf]
        %v1668 = vld [vmem:[%s362 + $0x37c] sm:$0xf]
        %v1669 = vld [vmem:[%s362 + $0x380] sm:$0xf]
        %v1670 = vld [vmem:[%s362 + $0x384] sm:$0xf]
        %v1671 = vld [vmem:[%s362 + $0x388] sm:$0xf]
        %v1672 = vld [vmem:[%s362 + $0x38c] sm:$0xf]
        %v1673 = vld [vmem:[%s362 + $0x390] sm:$0xf]
        %v1674 = vld [vmem:[%s362 + $0x394] sm:$0xf]
        %v1675 = vld [vmem:[%s362 + $0x398] sm:$0xf]
        %v1676 = vld [vmem:[%s362 + $0x39c] sm:$0xf]
        %v1677 = vld [vmem:[%s362 + $0x3a0] sm:$0xf]
        %v1678 = vld [vmem:[%s362 + $0x3a4] sm:$0xf]
        %v1679 = vld [vmem:[%s362 + $0x3a8] sm:$0xf]
        %v1680 = vld [vmem:[%s362 + $0x3ac] sm:$0xf]
        %v1681 = vld [vmem:[%s362 + $0x3b0] sm:$0xf]
        %v1682 = vld [vmem:[%s362 + $0x3b4] sm:$0xf]
        %v1683 = vld [vmem:[%s362 + $0x3b8] sm:$0xf]
        %v1684 = vld [vmem:[%s362 + $0x3bc] sm:$0xf]
        %v1685 = vld [vmem:[%s362 + $0x3c0] sm:$0xf]
        %v1686 = vld [vmem:[%s362 + $0x3c4] sm:$0xf]
        %v1687 = vld [vmem:[%s362 + $0x3c8] sm:$0xf]
        %v1688 = vld [vmem:[%s362 + $0x3cc] sm:$0xf]
        %v1689 = vld [vmem:[%s362 + $0x3d0] sm:$0xf]
        %v1690 = vld [vmem:[%s362 + $0x3d4] sm:$0xf]
        %v1691 = vld [vmem:[%s362 + $0x3d8] sm:$0xf]
        %v1692 = vld [vmem:[%s362 + $0x3dc] sm:$0xf]
        %v1693 = vld [vmem:[%s362 + $0x3e0] sm:$0xf]
        %v1694 = vld [vmem:[%s362 + $0x3e4] sm:$0xf]
        %v1695 = vld [vmem:[%s362 + $0x3e8] sm:$0xf]
        %v1696 = vld [vmem:[%s362 + $0x3ec] sm:$0xf]
        %v1697 = vld [vmem:[%s362 + $0x3f0] sm:$0xf]
        %v1698 = vld [vmem:[%s362 + $0x3f4] sm:$0xf]
        %v1699 = vld [vmem:[%s362 + $0x3f8] sm:$0xf]
        %v1700 = vld [vmem:[%s362 + $0x3fc] sm:$0xf]
        %v1701 = vld [vmem:[%s362 + $0x400] sm:$0xf]
        %v1702 = vld [vmem:[%s362 + $0x404] sm:$0xf]
        %v1703 = vld [vmem:[%s362 + $0x408] sm:$0xf]
        %v1704 = vld [vmem:[%s362 + $0x40c] sm:$0xf]
        %v1705 = vld [vmem:[%s362 + $0x410] sm:$0xf]
        %v1706 = vld [vmem:[%s362 + $0x414] sm:$0xf]
        %v1707 = vld [vmem:[%s362 + $0x418] sm:$0xf]
        %v1708 = vld [vmem:[%s362 + $0x41c] sm:$0xf]
        %v1709 = vld [vmem:[%s362 + $0x420] sm:$0xf]
        %v1710 = vld [vmem:[%s362 + $0x424] sm:$0xf]
        %v1711 = vld [vmem:[%s362 + $0x428] sm:$0xf]
        %v1712 = vld [vmem:[%s362 + $0x42c] sm:$0xf]
        %v1713 = vld [vmem:[%s362 + $0x430] sm:$0xf]
        %v1714 = vld [vmem:[%s362 + $0x434] sm:$0xf]
        %v1715 = vld [vmem:[%s362 + $0x438] sm:$0xf]
        %v1716 = vld [vmem:[%s362 + $0x43c] sm:$0xf]
        %v1717 = vld [vmem:[%s362 + $0x440] sm:$0xf]
        %v1718 = vld [vmem:[%s362 + $0x444] sm:$0xf]
        %v1719 = vld [vmem:[%s362 + $0x448] sm:$0xf]
        %v1720 = vld [vmem:[%s362 + $0x44c] sm:$0xf]
        %v1721 = vld [vmem:[%s362 + $0x450] sm:$0xf]
        %v1722 = vld [vmem:[%s362 + $0x454] sm:$0xf]
        %v1723 = vld [vmem:[%s362 + $0x458] sm:$0xf]
        %v1724 = vld [vmem:[%s362 + $0x45c] sm:$0xf]
        %v1725 = vld [vmem:[%s362 + $0x460] sm:$0xf]
        %v1726 = vld [vmem:[%s362 + $0x464] sm:$0xf]
        %v1727 = vld [vmem:[%s362 + $0x468] sm:$0xf]
        %v1728 = vld [vmem:[%s362 + $0x46c] sm:$0xf]
        %v1729 = vld [vmem:[%s362 + $0x470] sm:$0xf]
        %v1730 = vld [vmem:[%s362 + $0x474] sm:$0xf]
        %v1731 = vld [vmem:[%s362 + $0x478] sm:$0xf]
        %v1732 = vld [vmem:[%s362 + $0x47c] sm:$0xf]
        %v1733 = vld [vmem:[%s362 + $0x480] sm:$0xf]
        %v1734 = vld [vmem:[%s362 + $0x484] sm:$0xf]
        %v1735 = vld [vmem:[%s362 + $0x488] sm:$0xf]
        %v1736 = vld [vmem:[%s362 + $0x48c] sm:$0xf]
        %v1737 = vld [vmem:[%s362 + $0x490] sm:$0xf]
        %v1738 = vld [vmem:[%s362 + $0x494] sm:$0xf]
        %v1739 = vld [vmem:[%s362 + $0x498] sm:$0xf]
        %v1740 = vld [vmem:[%s362 + $0x49c] sm:$0xf]
        %v1741 = vld [vmem:[%s362 + $0x4a0] sm:$0xf]
        %v1742 = vld [vmem:[%s362 + $0x4a4] sm:$0xf]
        %v1743 = vld [vmem:[%s362 + $0x4a8] sm:$0xf]
        %v1744 = vld [vmem:[%s362 + $0x4ac] sm:$0xf]
        %v1745 = vld [vmem:[%s362 + $0x4b0] sm:$0xf]
        %v1746 = vld [vmem:[%s362 + $0x4b4] sm:$0xf]
        %v1747 = vld [vmem:[%s362 + $0x4b8] sm:$0xf]
        %v1748 = vld [vmem:[%s362 + $0x4bc] sm:$0xf]
        %v1749 = vld [vmem:[%s362 + $0x4c0] sm:$0xf]
        %v1750 = vld [vmem:[%s362 + $0x4c4] sm:$0xf]
        %v1751 = vld [vmem:[%s362 + $0x4c8] sm:$0xf]
        %v1752 = vld [vmem:[%s362 + $0x4cc] sm:$0xf]
        %v1753 = vld [vmem:[%s362 + $0x4d0] sm:$0xf]
        %v1754 = vld [vmem:[%s362 + $0x4d4] sm:$0xf]
        %v1755 = vld [vmem:[%s362 + $0x4d8] sm:$0xf]
        %v1756 = vld [vmem:[%s362 + $0x4dc] sm:$0xf]
        %v1757 = vld [vmem:[%s362 + $0x4e0] sm:$0xf]
        %v1758 = vld [vmem:[%s362 + $0x4e4] sm:$0xf]
        %v1759 = vld [vmem:[%s362 + $0x4e8] sm:$0xf]
        %v1760 = vld [vmem:[%s362 + $0x4ec] sm:$0xf]
        %v1761 = vld [vmem:[%s362 + $0x4f0] sm:$0xf]
        %v1762 = vld [vmem:[%s362 + $0x4f4] sm:$0xf]
        %v1763 = vld [vmem:[%s362 + $0x4f8] sm:$0xf]
        %v1764 = vld [vmem:[%s362 + $0x4fc] sm:$0xf]
        %v1765 = vld [vmem:[%s362 + $0x500] sm:$0xf]
        %v1766 = vld [vmem:[%s362 + $0x504] sm:$0xf]
        %v1767 = vld [vmem:[%s362 + $0x508] sm:$0xf]
        %v1768 = vld [vmem:[%s362 + $0x50c] sm:$0xf]
        %v1769 = vld [vmem:[%s362 + $0x510] sm:$0xf]
        %v1770 = vld [vmem:[%s362 + $0x514] sm:$0xf]
        %v1771 = vld [vmem:[%s362 + $0x518] sm:$0xf]
        %v1772 = vld [vmem:[%s362 + $0x51c] sm:$0xf]
        %v1773 = vld [vmem:[%s362 + $0x520] sm:$0xf]
        %v1774 = vld [vmem:[%s362 + $0x524] sm:$0xf]
        %v1775 = vld [vmem:[%s362 + $0x528] sm:$0xf]
        %v1776 = vld [vmem:[%s362 + $0x52c] sm:$0xf]
        %v1777 = vld [vmem:[%s362 + $0x530] sm:$0xf]
        %v1778 = vld [vmem:[%s362 + $0x534] sm:$0xf]
        %v1779 = vld [vmem:[%s362 + $0x538] sm:$0xf]
        %v1780 = vld [vmem:[%s362 + $0x53c] sm:$0xf]
        %v1781 = vld [vmem:[%s362 + $0x540] sm:$0xf]
        %v1782 = vld [vmem:[%s362 + $0x544] sm:$0xf]
        %v1783 = vld [vmem:[%s362 + $0x548] sm:$0xf]
        %v1784 = vld [vmem:[%s362 + $0x54c] sm:$0xf]
        %v1785 = vld [vmem:[%s362 + $0x550] sm:$0xf]
        %v1786 = vld [vmem:[%s362 + $0x554] sm:$0xf]
        %v1787 = vld [vmem:[%s362 + $0x558] sm:$0xf]
        %v1788 = vld [vmem:[%s362 + $0x55c] sm:$0xf]
        %v1789 = vld [vmem:[%s362 + $0x560] sm:$0xf]
        %v1790 = vld [vmem:[%s362 + $0x564] sm:$0xf]
        %v1791 = vld [vmem:[%s362 + $0x568] sm:$0xf]
        %v1792 = vld [vmem:[%s362 + $0x56c] sm:$0xf]
        %v1793 = vld [vmem:[%s362 + $0x570] sm:$0xf]
        %v1794 = vld [vmem:[%s362 + $0x574] sm:$0xf]
        %v1795 = vld [vmem:[%s362 + $0x578] sm:$0xf]
        %v1796 = vld [vmem:[%s362 + $0x57c] sm:$0xf]
        %v1797 = vld [vmem:[%s362 + $0x580] sm:$0xf]
        %v1798 = vld [vmem:[%s362 + $0x584] sm:$0xf]
        %v1799 = vld [vmem:[%s362 + $0x588] sm:$0xf]
        %v1800 = vld [vmem:[%s362 + $0x58c] sm:$0xf]
        %v1801 = vld [vmem:[%s362 + $0x590] sm:$0xf]
        %v1802 = vld [vmem:[%s362 + $0x594] sm:$0xf]
        %v1803 = vld [vmem:[%s362 + $0x598] sm:$0xf]
        %v1804 = vld [vmem:[%s362 + $0x59c] sm:$0xf]
        %v1805 = vld [vmem:[%s362 + $0x5a0] sm:$0xf]
        %v1806 = vld [vmem:[%s362 + $0x5a4] sm:$0xf]
        %v1807 = vld [vmem:[%s362 + $0x5a8] sm:$0xf]
        %v1808 = vld [vmem:[%s362 + $0x5ac] sm:$0xf]
        %v1809 = vld [vmem:[%s362 + $0x5b0] sm:$0xf]
        %v1810 = vld [vmem:[%s362 + $0x5b4] sm:$0xf]
        %v1811 = vld [vmem:[%s362 + $0x5b8] sm:$0xf]
        %v1812 = vld [vmem:[%s362 + $0x5bc] sm:$0xf]
        %v1813 = vld [vmem:[%s362 + $0x5c0] sm:$0xf]
        %v1814 = vld [vmem:[%s362 + $0x5c4] sm:$0xf]
        %v1815 = vld [vmem:[%s362 + $0x5c8] sm:$0xf]
        %v1816 = vld [vmem:[%s362 + $0x5cc] sm:$0xf]
        %v1817 = vld [vmem:[%s362 + $0x5d0] sm:$0xf]
        %v1818 = vld [vmem:[%s362 + $0x5d4] sm:$0xf]
        %v1819 = vld [vmem:[%s362 + $0x5d8] sm:$0xf]
        %v1820 = vld [vmem:[%s362 + $0x5dc] sm:$0xf]
        %v1821 = vld [vmem:[%s362 + $0x5e0] sm:$0xf]
        %v1822 = vld [vmem:[%s362 + $0x5e4] sm:$0xf]
        %v1823 = vld [vmem:[%s362 + $0x5e8] sm:$0xf]
        %v1824 = vld [vmem:[%s362 + $0x5ec] sm:$0xf]
        %v1825 = vld [vmem:[%s362 + $0x5f0] sm:$0xf]
        %v1826 = vld [vmem:[%s362 + $0x5f4] sm:$0xf]
        %v1827 = vld [vmem:[%s362 + $0x5f8] sm:$0xf]
        %v1828 = vld [vmem:[%s362 + $0x5fc] sm:$0xf]
        %v1829 = vld [vmem:[%s362 + $0x600] sm:$0xf]
        %v1830 = vld [vmem:[%s362 + $0x604] sm:$0xf]
        %v1831 = vld [vmem:[%s362 + $0x608] sm:$0xf]
        %v1832 = vld [vmem:[%s362 + $0x60c] sm:$0xf]
        %v1833 = vld [vmem:[%s362 + $0x610] sm:$0xf]
        %v1834 = vld [vmem:[%s362 + $0x614] sm:$0xf]
        %v1835 = vld [vmem:[%s362 + $0x618] sm:$0xf]
        %v1836 = vld [vmem:[%s362 + $0x61c] sm:$0xf]
        %v1837 = vld [vmem:[%s362 + $0x620] sm:$0xf]
        %v1838 = vld [vmem:[%s362 + $0x624] sm:$0xf]
        %v1839 = vld [vmem:[%s362 + $0x628] sm:$0xf]
        %v1840 = vld [vmem:[%s362 + $0x62c] sm:$0xf]
        %v1841 = vld [vmem:[%s362 + $0x630] sm:$0xf]
        %v1842 = vld [vmem:[%s362 + $0x634] sm:$0xf]
        %v1843 = vld [vmem:[%s362 + $0x638] sm:$0xf]
        %v1844 = vld [vmem:[%s362 + $0x63c] sm:$0xf]
        %v1845 = vld [vmem:[%s362 + $0x640] sm:$0xf]
        %v1846 = vld [vmem:[%s362 + $0x644] sm:$0xf]
        %v1847 = vld [vmem:[%s362 + $0x648] sm:$0xf]
        %v1848 = vld [vmem:[%s362 + $0x64c] sm:$0xf]
        %v1849 = vld [vmem:[%s362 + $0x650] sm:$0xf]
        %v1850 = vld [vmem:[%s362 + $0x654] sm:$0xf]
        %v1851 = vld [vmem:[%s362 + $0x658] sm:$0xf]
        %v1852 = vld [vmem:[%s362 + $0x65c] sm:$0xf]
        %v1853 = vld [vmem:[%s362 + $0x660] sm:$0xf]
        %v1854 = vld [vmem:[%s362 + $0x664] sm:$0xf]
        %v1855 = vld [vmem:[%s362 + $0x668] sm:$0xf]
        %v1856 = vld [vmem:[%s362 + $0x66c] sm:$0xf]
        %v1857 = vld [vmem:[%s362 + $0x670] sm:$0xf]
        %v1858 = vld [vmem:[%s362 + $0x674] sm:$0xf]
        %v1859 = vld [vmem:[%s362 + $0x678] sm:$0xf]
        %v1860 = vld [vmem:[%s362 + $0x67c] sm:$0xf]
        %v1861 = vld [vmem:[%s362 + $0x680] sm:$0xf]
        %v1862 = vld [vmem:[%s362 + $0x684] sm:$0xf]
        %v1863 = vld [vmem:[%s362 + $0x688] sm:$0xf]
        %v1864 = vld [vmem:[%s362 + $0x68c] sm:$0xf]
        %v1865 = vld [vmem:[%s362 + $0x690] sm:$0xf]
        %v1866 = vld [vmem:[%s362 + $0x694] sm:$0xf]
        %v1867 = vld [vmem:[%s362 + $0x698] sm:$0xf]
        %v1868 = vld [vmem:[%s362 + $0x69c] sm:$0xf]
        %v1869 = vld [vmem:[%s362 + $0x6a0] sm:$0xf]
        %v1870 = vld [vmem:[%s362 + $0x6a4] sm:$0xf]
        %v1871 = vld [vmem:[%s362 + $0x6a8] sm:$0xf]
        %v1872 = vld [vmem:[%s362 + $0x6ac] sm:$0xf]
        %v1873 = vld [vmem:[%s362 + $0x6b0] sm:$0xf]
        %v1874 = vld [vmem:[%s362 + $0x6b4] sm:$0xf]
        %v1875 = vld [vmem:[%s362 + $0x6b8] sm:$0xf]
        %v1876 = vld [vmem:[%s362 + $0x6bc] sm:$0xf]
        %v1877 = vld [vmem:[%s362 + $0x6c0] sm:$0xf]
        %v1878 = vld [vmem:[%s362 + $0x6c4] sm:$0xf]
        %v1879 = vld [vmem:[%s362 + $0x6c8] sm:$0xf]
        %v1880 = vld [vmem:[%s362 + $0x6cc] sm:$0xf]
        %v1881 = vld [vmem:[%s362 + $0x6d0] sm:$0xf]
        %v1882 = vld [vmem:[%s362 + $0x6d4] sm:$0xf]
        %v1883 = vld [vmem:[%s362 + $0x6d8] sm:$0xf]
        %v1884 = vld [vmem:[%s362 + $0x6dc] sm:$0xf]
        %v1885 = vld [vmem:[%s362 + $0x6e0] sm:$0xf]
        %v1886 = vld [vmem:[%s362 + $0x6e4] sm:$0xf]
        %v1887 = vld [vmem:[%s362 + $0x6e8] sm:$0xf]
        %v1888 = vld [vmem:[%s362 + $0x6ec] sm:$0xf]
        %v1889 = vld [vmem:[%s362 + $0x6f0] sm:$0xf]
        %v1890 = vld [vmem:[%s362 + $0x6f4] sm:$0xf]
        %v1891 = vld [vmem:[%s362 + $0x6f8] sm:$0xf]
        %v1892 = vld [vmem:[%s362 + $0x6fc] sm:$0xf]
        %v1893 = vld [vmem:[%s362 + $0x700] sm:$0xf]
        %v1894 = vld [vmem:[%s362 + $0x704] sm:$0xf]
        %v1895 = vld [vmem:[%s362 + $0x708] sm:$0xf]
        %v1896 = vld [vmem:[%s362 + $0x70c] sm:$0xf]
        %v1897 = vld [vmem:[%s362 + $0x710] sm:$0xf]
        %v1898 = vld [vmem:[%s362 + $0x714] sm:$0xf]
        %v1899 = vld [vmem:[%s362 + $0x718] sm:$0xf]
        %v1900 = vld [vmem:[%s362 + $0x71c] sm:$0xf]
        %v1901 = vld [vmem:[%s362 + $0x720] sm:$0xf]
        %v1902 = vld [vmem:[%s362 + $0x724] sm:$0xf]
        %v1903 = vld [vmem:[%s362 + $0x728] sm:$0xf]
        %v1904 = vld [vmem:[%s362 + $0x72c] sm:$0xf]
        %v1905 = vld [vmem:[%s362 + $0x730] sm:$0xf]
        %v1906 = vld [vmem:[%s362 + $0x734] sm:$0xf]
        %v1907 = vld [vmem:[%s362 + $0x738] sm:$0xf]
        %v1908 = vld [vmem:[%s362 + $0x73c] sm:$0xf]
        %v1909 = vld [vmem:[%s362 + $0x740] sm:$0xf]
        %v1910 = vld [vmem:[%s362 + $0x744] sm:$0xf]
        %v1911 = vld [vmem:[%s362 + $0x748] sm:$0xf]
        %v1912 = vld [vmem:[%s362 + $0x74c] sm:$0xf]
        %v1913 = vld [vmem:[%s362 + $0x750] sm:$0xf]
        %v1914 = vld [vmem:[%s362 + $0x754] sm:$0xf]
        %v1915 = vld [vmem:[%s362 + $0x758] sm:$0xf]
        %v1916 = vld [vmem:[%s362 + $0x75c] sm:$0xf]
        %v1917 = vld [vmem:[%s362 + $0x760] sm:$0xf]
        %v1918 = vld [vmem:[%s362 + $0x764] sm:$0xf]
        %v1919 = vld [vmem:[%s362 + $0x768] sm:$0xf]
        %v1920 = vld [vmem:[%s362 + $0x76c] sm:$0xf]
        %v1921 = vld [vmem:[%s362 + $0x770] sm:$0xf]
        %v1922 = vld [vmem:[%s362 + $0x774] sm:$0xf]
        %v1923 = vld [vmem:[%s362 + $0x778] sm:$0xf]
        %v1924 = vld [vmem:[%s362 + $0x77c] sm:$0xf]
        %v1925 = vld [vmem:[%s362 + $0x780] sm:$0xf]
        %v1926 = vld [vmem:[%s362 + $0x784] sm:$0xf]
        %v1927 = vld [vmem:[%s362 + $0x788] sm:$0xf]
        %v1928 = vld [vmem:[%s362 + $0x78c] sm:$0xf]
        %v1929 = vld [vmem:[%s362 + $0x790] sm:$0xf]
        %v1930 = vld [vmem:[%s362 + $0x794] sm:$0xf]
        %v1931 = vld [vmem:[%s362 + $0x798] sm:$0xf]
        %v1932 = vld [vmem:[%s362 + $0x79c] sm:$0xf]
        %v1933 = vld [vmem:[%s362 + $0x7a0] sm:$0xf]
        %v1934 = vld [vmem:[%s362 + $0x7a4] sm:$0xf]
        %v1935 = vld [vmem:[%s362 + $0x7a8] sm:$0xf]
        %v1936 = vld [vmem:[%s362 + $0x7ac] sm:$0xf]
        %v1937 = vld [vmem:[%s362 + $0x7b0] sm:$0xf]
        %v1938 = vld [vmem:[%s362 + $0x7b4] sm:$0xf]
        %v1939 = vld [vmem:[%s362 + $0x7b8] sm:$0xf]
        %v1940 = vld [vmem:[%s362 + $0x7bc] sm:$0xf]
        %v1941 = vld [vmem:[%s362 + $0x7c0] sm:$0xf]
        %v1942 = vld [vmem:[%s362 + $0x7c4] sm:$0xf]
        %v1943 = vld [vmem:[%s362 + $0x7c8] sm:$0xf]
        %v1944 = vld [vmem:[%s362 + $0x7cc] sm:$0xf]
        %v1945 = vld [vmem:[%s362 + $0x7d0] sm:$0xf]
        %v1946 = vld [vmem:[%s362 + $0x7d4] sm:$0xf]
        %v1947 = vld [vmem:[%s362 + $0x7d8] sm:$0xf]
        %v1948 = vld [vmem:[%s362 + $0x7dc] sm:$0xf]
        %v1949 = vld [vmem:[%s362 + $0x7e0] sm:$0xf]
        %v1950 = vld [vmem:[%s362 + $0x7e4] sm:$0xf]
        %v1951 = vld [vmem:[%s362 + $0x7e8] sm:$0xf]
        %v1952 = vld [vmem:[%s362 + $0x7ec] sm:$0xf]
        %v1953 = vld [vmem:[%s362 + $0x7f0] sm:$0xf]
        %v1954 = vld [vmem:[%s362 + $0x7f4] sm:$0xf]
        %v1955 = vld [vmem:[%s362 + $0x7f8] sm:$0xf]
        %v1956 = vld [vmem:[%s362 + $0x7fc] sm:$0xf]
        %v1957 = vld [vmem:[%s362 + $0x800] sm:$0xf]
        %v1958 = vld [vmem:[%s362 + $0x804] sm:$0xf]
        %v1959 = vld [vmem:[%s362 + $0x808] sm:$0xf]
        %v1960 = vld [vmem:[%s362 + $0x80c] sm:$0xf]
        %v1961 = vld [vmem:[%s362 + $0x810] sm:$0xf]
        %v1962 = vld [vmem:[%s362 + $0x814] sm:$0xf]
        %v1963 = vld [vmem:[%s362 + $0x818] sm:$0xf]
        %v1964 = vld [vmem:[%s362 + $0x81c] sm:$0xf]
        %v1965 = vld [vmem:[%s362 + $0x820] sm:$0xf]
        %v1966 = vld [vmem:[%s362 + $0x824] sm:$0xf]
        %v1967 = vld [vmem:[%s362 + $0x828] sm:$0xf]
        %v1968 = vld [vmem:[%s362 + $0x82c] sm:$0xf]
        %v1969 = vld [vmem:[%s362 + $0x830] sm:$0xf]
        %v1970 = vld [vmem:[%s362 + $0x834] sm:$0xf]
        %v1971 = vld [vmem:[%s362 + $0x838] sm:$0xf]
        %v1972 = vld [vmem:[%s362 + $0x83c] sm:$0xf]
        %v1973 = vld [vmem:[%s362 + $0x840] sm:$0xf]
        %v1974 = vld [vmem:[%s362 + $0x844] sm:$0xf]
        %v1975 = vld [vmem:[%s362 + $0x848] sm:$0xf]
        %v1976 = vld [vmem:[%s362 + $0x84c] sm:$0xf]
        %v1977 = vld [vmem:[%s362 + $0x850] sm:$0xf]
        %v1978 = vld [vmem:[%s362 + $0x854] sm:$0xf]
        %v1979 = vld [vmem:[%s362 + $0x858] sm:$0xf]
        %v1980 = vld [vmem:[%s362 + $0x85c] sm:$0xf]
        %v1981 = vld [vmem:[%s362 + $0x860] sm:$0xf]
        %v1982 = vld [vmem:[%s362 + $0x864] sm:$0xf]
        %v1983 = vld [vmem:[%s362 + $0x868] sm:$0xf]
        %v1984 = vld [vmem:[%s362 + $0x86c] sm:$0xf]
        %v1985 = vld [vmem:[%s362 + $0x870] sm:$0xf]
        %v1986 = vld [vmem:[%s362 + $0x874] sm:$0xf]
        %v1987 = vld [vmem:[%s362 + $0x878] sm:$0xf]
        %v1988 = vld [vmem:[%s362 + $0x87c] sm:$0xf]
        %v1989 = vld [vmem:[%s362 + $0x880] sm:$0xf]
        %v1990 = vld [vmem:[%s362 + $0x884] sm:$0xf]
        %v1991 = vld [vmem:[%s362 + $0x888] sm:$0xf]
        %v1992 = vld [vmem:[%s362 + $0x88c] sm:$0xf]
        %v1993 = vld [vmem:[%s362 + $0x890] sm:$0xf]
        %v1994 = vld [vmem:[%s362 + $0x894] sm:$0xf]
        %v1995 = vld [vmem:[%s362 + $0x898] sm:$0xf]
        %v1996 = vld [vmem:[%s362 + $0x89c] sm:$0xf]
        %v1997 = vld [vmem:[%s362 + $0x8a0] sm:$0xf]
        %v1998 = vld [vmem:[%s362 + $0x8a4] sm:$0xf]
        %v1999 = vld [vmem:[%s362 + $0x8a8] sm:$0xf]
        %v2000 = vld [vmem:[%s362 + $0x8ac] sm:$0xf]
        %v2001 = vld [vmem:[%s362 + $0x8b0] sm:$0xf]
        %v2002 = vld [vmem:[%s362 + $0x8b4] sm:$0xf]
        %v2003 = vld [vmem:[%s362 + $0x8b8] sm:$0xf]
        %v2004 = vld [vmem:[%s362 + $0x8bc] sm:$0xf]
        %v2005 = vld [vmem:[%s362 + $0x8c0] sm:$0xf]
        %v2006 = vld [vmem:[%s362 + $0x8c4] sm:$0xf]
        %v2007 = vld [vmem:[%s362 + $0x8c8] sm:$0xf]
        %v2008 = vld [vmem:[%s362 + $0x8cc] sm:$0xf]
        %v2009 = vld [vmem:[%s362 + $0x8d0] sm:$0xf]
        %v2010 = vld [vmem:[%s362 + $0x8d4] sm:$0xf]
        %v2011 = vld [vmem:[%s362 + $0x8d8] sm:$0xf]
        %v2012 = vld [vmem:[%s362 + $0x8dc] sm:$0xf]
        %v2013 = vld [vmem:[%s362 + $0x8e0] sm:$0xf]
        %v2014 = vld [vmem:[%s362 + $0x8e4] sm:$0xf]
        %v2015 = vld [vmem:[%s362 + $0x8e8] sm:$0xf]
        %v2016 = vld [vmem:[%s362 + $0x8ec] sm:$0xf]
        %v2017 = vld [vmem:[%s362 + $0x8f0] sm:$0xf]
        %v2018 = vld [vmem:[%s362 + $0x8f4] sm:$0xf]
        %v2019 = vld [vmem:[%s362 + $0x8f8] sm:$0xf]
        %v2020 = vld [vmem:[%s362 + $0x8fc] sm:$0xf]
        %v2021 = vld [vmem:[%s362 + $0x900] sm:$0xf]
        %v2022 = vld [vmem:[%s362 + $0x904] sm:$0xf]
        %v2023 = vld [vmem:[%s362 + $0x908] sm:$0xf]
        %v2024 = vld [vmem:[%s362 + $0x90c] sm:$0xf]
        %v2025 = vld [vmem:[%s362 + $0x910] sm:$0xf]
        %v2026 = vld [vmem:[%s362 + $0x914] sm:$0xf]
        %v2027 = vld [vmem:[%s362 + $0x918] sm:$0xf]
        %v2028 = vld [vmem:[%s362 + $0x91c] sm:$0xf]
        %v2029 = vld [vmem:[%s362 + $0x920] sm:$0xf]
        %v2030 = vld [vmem:[%s362 + $0x924] sm:$0xf]
        %v2031 = vld [vmem:[%s362 + $0x928] sm:$0xf]
        %v2032 = vld [vmem:[%s362 + $0x92c] sm:$0xf]
        %v2033 = vld [vmem:[%s362 + $0x930] sm:$0xf]
        %v2034 = vld [vmem:[%s362 + $0x934] sm:$0xf]
        %v2035 = vld [vmem:[%s362 + $0x938] sm:$0xf]
        %v2036 = vld [vmem:[%s362 + $0x93c] sm:$0xf]
        %v2037 = vld [vmem:[%s362 + $0x940] sm:$0xf]
        %v2038 = vld [vmem:[%s362 + $0x944] sm:$0xf]
        %v2039 = vld [vmem:[%s362 + $0x948] sm:$0xf]
        %v2040 = vld [vmem:[%s362 + $0x94c] sm:$0xf]
        %v2041 = vld [vmem:[%s362 + $0x950] sm:$0xf]
        %v2042 = vld [vmem:[%s362 + $0x954] sm:$0xf]
        %v2043 = vld [vmem:[%s362 + $0x958] sm:$0xf]
        %v2044 = vld [vmem:[%s362 + $0x95c] sm:$0xf]
        %v2045 = vld [vmem:[%s362 + $0x960] sm:$0xf]
        %v2046 = vld [vmem:[%s362 + $0x964] sm:$0xf]
        %v2047 = vld [vmem:[%s362 + $0x968] sm:$0xf]
        %v2048 = vld [vmem:[%s362 + $0x96c] sm:$0xf]
        %v2049 = vld [vmem:[%s362 + $0x970] sm:$0xf]
        %v2050 = vld [vmem:[%s362 + $0x974] sm:$0xf]
        %v2051 = vld [vmem:[%s362 + $0x978] sm:$0xf]
        %v2052 = vld [vmem:[%s362 + $0x97c] sm:$0xf]
        %v2053 = vld [vmem:[%s362 + $0x980] sm:$0xf]
        %v2054 = vld [vmem:[%s362 + $0x984] sm:$0xf]
        %v2055 = vld [vmem:[%s362 + $0x988] sm:$0xf]
        %v2056 = vld [vmem:[%s362 + $0x98c] sm:$0xf]
        %v2057 = vld [vmem:[%s362 + $0x990] sm:$0xf]
        %v2058 = vld [vmem:[%s362 + $0x994] sm:$0xf]
        %v2059 = vld [vmem:[%s362 + $0x998] sm:$0xf]
        %v2060 = vld [vmem:[%s362 + $0x99c] sm:$0xf]
        %v2061 = vld [vmem:[%s362 + $0x9a0] sm:$0xf]
        %v2062 = vld [vmem:[%s362 + $0x9a4] sm:$0xf]
        %v2063 = vld [vmem:[%s362 + $0x9a8] sm:$0xf]
        %v2064 = vld [vmem:[%s362 + $0x9ac] sm:$0xf]
        %v2065 = vld [vmem:[%s362 + $0x9b0] sm:$0xf]
        %v2066 = vld [vmem:[%s362 + $0x9b4] sm:$0xf]
        %v2067 = vld [vmem:[%s362 + $0x9b8] sm:$0xf]
        %v2068 = vld [vmem:[%s362 + $0x9bc] sm:$0xf]
        %v2069 = vld [vmem:[%s362 + $0x9c0] sm:$0xf]
        %v2070 = vld [vmem:[%s362 + $0x9c4] sm:$0xf]
        %v2071 = vld [vmem:[%s362 + $0x9c8] sm:$0xf]
        %v2072 = vld [vmem:[%s362 + $0x9cc] sm:$0xf]
        %v2073 = vld [vmem:[%s362 + $0x9d0] sm:$0xf]
        %v2074 = vld [vmem:[%s362 + $0x9d4] sm:$0xf]
        %v2075 = vld [vmem:[%s362 + $0x9d8] sm:$0xf]
        %v2076 = vld [vmem:[%s362 + $0x9dc] sm:$0xf]
        %v2077 = vld [vmem:[%s362 + $0x9e0] sm:$0xf]
        %v2078 = vld [vmem:[%s362 + $0x9e4] sm:$0xf]
        %v2079 = vld [vmem:[%s362 + $0x9e8] sm:$0xf]
        %v2080 = vld [vmem:[%s362 + $0x9ec] sm:$0xf]
        %v2081 = vld [vmem:[%s362 + $0x9f0] sm:$0xf]
        %v2082 = vld [vmem:[%s362 + $0x9f4] sm:$0xf]
        %v2083 = vld [vmem:[%s362 + $0x9f8] sm:$0xf]
        %v2084 = vld [vmem:[%s362 + $0x9fc] sm:$0xf]
        %v2085 = vld [vmem:[%s362 + $0xa00] sm:$0xf]
        %v2086 = vld [vmem:[%s362 + $0xa04] sm:$0xf]
        %v2087 = vld [vmem:[%s362 + $0xa08] sm:$0xf]
        %v2088 = vld [vmem:[%s362 + $0xa0c] sm:$0xf]
        %v2089 = vld [vmem:[%s362 + $0xa10] sm:$0xf]
        %v2090 = vld [vmem:[%s362 + $0xa14] sm:$0xf]
        %v2091 = vld [vmem:[%s362 + $0xa18] sm:$0xf]
        %v2092 = vld [vmem:[%s362 + $0xa1c] sm:$0xf]
        %v2093 = vld [vmem:[%s362 + $0xa20] sm:$0xf]
        %v2094 = vld [vmem:[%s362 + $0xa24] sm:$0xf]
        %v2095 = vld [vmem:[%s362 + $0xa28] sm:$0xf]
        %v2096 = vld [vmem:[%s362 + $0xa2c] sm:$0xf]
        %v2097 = vld [vmem:[%s362 + $0xa30] sm:$0xf]
        %v2098 = vld [vmem:[%s362 + $0xa34] sm:$0xf]
        %v2099 = vld [vmem:[%s362 + $0xa38] sm:$0xf]
        %v2100 = vld [vmem:[%s362 + $0xa3c] sm:$0xf]
        %v2101 = vld [vmem:[%s362 + $0xa40] sm:$0xf]
        %v2102 = vld [vmem:[%s362 + $0xa44] sm:$0xf]
        %v2103 = vld [vmem:[%s362 + $0xa48] sm:$0xf]
        %v2104 = vld [vmem:[%s362 + $0xa4c] sm:$0xf]
        %v2105 = vld [vmem:[%s362 + $0xa50] sm:$0xf]
        %v2106 = vld [vmem:[%s362 + $0xa54] sm:$0xf]
        %v2107 = vld [vmem:[%s362 + $0xa58] sm:$0xf]
        %v2108 = vld [vmem:[%s362 + $0xa5c] sm:$0xf]
        %v2109 = vld [vmem:[%s362 + $0xa60] sm:$0xf]
        %v2110 = vld [vmem:[%s362 + $0xa64] sm:$0xf]
        %v2111 = vld [vmem:[%s362 + $0xa68] sm:$0xf]
        %v2112 = vld [vmem:[%s362 + $0xa6c] sm:$0xf]
        %v2113 = vld [vmem:[%s362 + $0xa70] sm:$0xf]
        %v2114 = vld [vmem:[%s362 + $0xa74] sm:$0xf]
        %v2115 = vld [vmem:[%s362 + $0xa78] sm:$0xf]
        %v2116 = vld [vmem:[%s362 + $0xa7c] sm:$0xf]
        %v2117 = vld [vmem:[%s362 + $0xa80] sm:$0xf]
        %v2118 = vld [vmem:[%s362 + $0xa84] sm:$0xf]
        %v2119 = vld [vmem:[%s362 + $0xa88] sm:$0xf]
        %v2120 = vld [vmem:[%s362 + $0xa8c] sm:$0xf]
        %v2121 = vld [vmem:[%s362 + $0xa90] sm:$0xf]
        %v2122 = vld [vmem:[%s362 + $0xa94] sm:$0xf]
        %v2123 = vld [vmem:[%s362 + $0xa98] sm:$0xf]
        %v2124 = vld [vmem:[%s362 + $0xa9c] sm:$0xf]
        %v2125 = vld [vmem:[%s362 + $0xaa0] sm:$0xf]
        %v2126 = vld [vmem:[%s362 + $0xaa4] sm:$0xf]
        %v2127 = vld [vmem:[%s362 + $0xaa8] sm:$0xf]
        %v2128 = vld [vmem:[%s362 + $0xaac] sm:$0xf]
        %v2129 = vld [vmem:[%s362 + $0xab0] sm:$0xf]
        %v2130 = vld [vmem:[%s362 + $0xab4] sm:$0xf]
        %v2131 = vld [vmem:[%s362 + $0xab8] sm:$0xf]
        %v2132 = vld [vmem:[%s362 + $0xabc] sm:$0xf]
        %v2133 = vld [vmem:[%s362 + $0xac0] sm:$0xf]
        %v2134 = vld [vmem:[%s362 + $0xac4] sm:$0xf]
        %v2135 = vld [vmem:[%s362 + $0xac8] sm:$0xf]
        %v2136 = vld [vmem:[%s362 + $0xacc] sm:$0xf]
        %v2137 = vld [vmem:[%s362 + $0xad0] sm:$0xf]
        %v2138 = vld [vmem:[%s362 + $0xad4] sm:$0xf]
        %v2139 = vld [vmem:[%s362 + $0xad8] sm:$0xf]
        %v2140 = vld [vmem:[%s362 + $0xadc] sm:$0xf]
        %v2141 = vld [vmem:[%s362 + $0xae0] sm:$0xf]
        %v2142 = vld [vmem:[%s362 + $0xae4] sm:$0xf]
        %v2143 = vld [vmem:[%s362 + $0xae8] sm:$0xf]
        %v2144 = vld [vmem:[%s362 + $0xaec] sm:$0xf]
        %v2145 = vld [vmem:[%s362 + $0xaf0] sm:$0xf]
        %v2146 = vld [vmem:[%s362 + $0xaf4] sm:$0xf]
        %v2147 = vld [vmem:[%s362 + $0xaf8] sm:$0xf]
        %v2148 = vld [vmem:[%s362 + $0xafc] sm:$0xf]
        %v2149 = vld [vmem:[%s362 + $0xb00] sm:$0xf]
        %v2150 = vld [vmem:[%s362 + $0xb04] sm:$0xf]
        %v2151 = vld [vmem:[%s362 + $0xb08] sm:$0xf]
        %v2152 = vld [vmem:[%s362 + $0xb0c] sm:$0xf]
        %v2153 = vld [vmem:[%s362 + $0xb10] sm:$0xf]
        %v2154 = vld [vmem:[%s362 + $0xb14] sm:$0xf]
        %v2155 = vld [vmem:[%s362 + $0xb18] sm:$0xf]
        %v2156 = vld [vmem:[%s362 + $0xb1c] sm:$0xf]
        %v2157 = vld [vmem:[%s362 + $0xb20] sm:$0xf]
        %v2158 = vld [vmem:[%s362 + $0xb24] sm:$0xf]
        %v2159 = vld [vmem:[%s362 + $0xb28] sm:$0xf]
        %v2160 = vld [vmem:[%s362 + $0xb2c] sm:$0xf]
        %v2161 = vld [vmem:[%s362 + $0xb30] sm:$0xf]
        %v2162 = vld [vmem:[%s362 + $0xb34] sm:$0xf]
        %v2163 = vld [vmem:[%s362 + $0xb38] sm:$0xf]
        %v2164 = vld [vmem:[%s362 + $0xb3c] sm:$0xf]
        %v2165 = vld [vmem:[%s362 + $0xb40] sm:$0xf]
        %v2166 = vld [vmem:[%s362 + $0xb44] sm:$0xf]
        %v2167 = vld [vmem:[%s362 + $0xb48] sm:$0xf]
        %v2168 = vld [vmem:[%s362 + $0xb4c] sm:$0xf]
        %v2169 = vld [vmem:[%s362 + $0xb50] sm:$0xf]
        %v2170 = vld [vmem:[%s362 + $0xb54] sm:$0xf]
        %v2171 = vld [vmem:[%s362 + $0xb58] sm:$0xf]
        %v2172 = vld [vmem:[%s362 + $0xb5c] sm:$0xf]
        %v2173 = vld [vmem:[%s362 + $0xb60] sm:$0xf]
        %v2174 = vld [vmem:[%s362 + $0xb64] sm:$0xf]
        %v2175 = vld [vmem:[%s362 + $0xb68] sm:$0xf]
        %v2176 = vld [vmem:[%s362 + $0xb6c] sm:$0xf]
        %v2177 = vld [vmem:[%s362 + $0xb70] sm:$0xf]
        %v2178 = vld [vmem:[%s362 + $0xb74] sm:$0xf]
        %v2179 = vld [vmem:[%s362 + $0xb78] sm:$0xf]
        %v2180 = vld [vmem:[%s362 + $0xb7c] sm:$0xf]
        %v2181 = vld [vmem:[%s362 + $0xb80] sm:$0xf]
        %v2182 = vld [vmem:[%s362 + $0xb84] sm:$0xf]
        %v2183 = vld [vmem:[%s362 + $0xb88] sm:$0xf]
        %v2184 = vld [vmem:[%s362 + $0xb8c] sm:$0xf]
        %v2185 = vld [vmem:[%s362 + $0xb90] sm:$0xf]
        %v2186 = vld [vmem:[%s362 + $0xb94] sm:$0xf]
        %v2187 = vld [vmem:[%s362 + $0xb98] sm:$0xf]
        %v2188 = vld [vmem:[%s362 + $0xb9c] sm:$0xf]
        %v2189 = vld [vmem:[%s362 + $0xba0] sm:$0xf]
        %v2190 = vld [vmem:[%s362 + $0xba4] sm:$0xf]
        %v2191 = vld [vmem:[%s362 + $0xba8] sm:$0xf]
        %v2192 = vld [vmem:[%s362 + $0xbac] sm:$0xf]
        %v2193 = vld [vmem:[%s362 + $0xbb0] sm:$0xf]
        %v2194 = vld [vmem:[%s362 + $0xbb4] sm:$0xf]
        %v2195 = vld [vmem:[%s362 + $0xbb8] sm:$0xf]
        %v2196 = vld [vmem:[%s362 + $0xbbc] sm:$0xf]
        %v2197 = vld [vmem:[%s362 + $0xbc0] sm:$0xf]
        %v2198 = vld [vmem:[%s362 + $0xbc4] sm:$0xf]
        %v2199 = vld [vmem:[%s362 + $0xbc8] sm:$0xf]
        %v2200 = vld [vmem:[%s362 + $0xbcc] sm:$0xf]
        %v2201 = vld [vmem:[%s362 + $0xbd0] sm:$0xf]
        %v2202 = vld [vmem:[%s362 + $0xbd4] sm:$0xf]
        %v2203 = vld [vmem:[%s362 + $0xbd8] sm:$0xf]
        %v2204 = vld [vmem:[%s362 + $0xbdc] sm:$0xf]
        %v2205 = vld [vmem:[%s362 + $0xbe0] sm:$0xf]
        %v2206 = vld [vmem:[%s362 + $0xbe4] sm:$0xf]
        %v2207 = vld [vmem:[%s362 + $0xbe8] sm:$0xf]
        %v2208 = vld [vmem:[%s362 + $0xbec] sm:$0xf]
        %v2209 = vld [vmem:[%s362 + $0xbf0] sm:$0xf]
        %v2210 = vld [vmem:[%s362 + $0xbf4] sm:$0xf]
        %v2211 = vld [vmem:[%s362 + $0xbf8] sm:$0xf]
        %v2212 = vld [vmem:[%s362 + $0xbfc] sm:$0xf]
        %v2213 = vld [vmem:[%s362 + $0xc00] sm:$0xf]
        %v2214 = vld [vmem:[%s362 + $0xc04] sm:$0xf]
        %v2215 = vld [vmem:[%s362 + $0xc08] sm:$0xf]
        %v2216 = vld [vmem:[%s362 + $0xc0c] sm:$0xf]
        %v2217 = vld [vmem:[%s362 + $0xc10] sm:$0xf]
        %v2218 = vld [vmem:[%s362 + $0xc14] sm:$0xf]
        %v2219 = vld [vmem:[%s362 + $0xc18] sm:$0xf]
        %v2220 = vld [vmem:[%s362 + $0xc1c] sm:$0xf]
        %v2221 = vld [vmem:[%s362 + $0xc20] sm:$0xf]
        %v2222 = vld [vmem:[%s362 + $0xc24] sm:$0xf]
        %v2223 = vld [vmem:[%s362 + $0xc28] sm:$0xf]
        %v2224 = vld [vmem:[%s362 + $0xc2c] sm:$0xf]
        %v2225 = vld [vmem:[%s362 + $0xc30] sm:$0xf]
        %v2226 = vld [vmem:[%s362 + $0xc34] sm:$0xf]
        %v2227 = vld [vmem:[%s362 + $0xc38] sm:$0xf]
        %v2228 = vld [vmem:[%s362 + $0xc3c] sm:$0xf]
        %v2229 = vld [vmem:[%s362 + $0xc40] sm:$0xf]
        %v2230 = vld [vmem:[%s362 + $0xc44] sm:$0xf]
        %v2231 = vld [vmem:[%s362 + $0xc48] sm:$0xf]
        %v2232 = vld [vmem:[%s362 + $0xc4c] sm:$0xf]
        %v2233 = vld [vmem:[%s362 + $0xc50] sm:$0xf]
        %v2234 = vld [vmem:[%s362 + $0xc54] sm:$0xf]
        %v2235 = vld [vmem:[%s362 + $0xc58] sm:$0xf]
        %v2236 = vld [vmem:[%s362 + $0xc5c] sm:$0xf]
        %v2237 = vld [vmem:[%s362 + $0xc60] sm:$0xf]
        %v2238 = vld [vmem:[%s362 + $0xc64] sm:$0xf]
        %v2239 = vld [vmem:[%s362 + $0xc68] sm:$0xf]
        %v2240 = vld [vmem:[%s362 + $0xc6c] sm:$0xf]
        %v2241 = vld [vmem:[%s362 + $0xc70] sm:$0xf]
        %v2242 = vld [vmem:[%s362 + $0xc74] sm:$0xf]
        %v2243 = vld [vmem:[%s362 + $0xc78] sm:$0xf]
        %v2244 = vld [vmem:[%s362 + $0xc7c] sm:$0xf]
        %v2245 = vld [vmem:[%s362 + $0xc80] sm:$0xf]
        %v2246 = vld [vmem:[%s362 + $0xc84] sm:$0xf]
        %v2247 = vld [vmem:[%s362 + $0xc88] sm:$0xf]
        %v2248 = vld [vmem:[%s362 + $0xc8c] sm:$0xf]
        %v2249 = vld [vmem:[%s362 + $0xc90] sm:$0xf]
        %v2250 = vld [vmem:[%s362 + $0xc94] sm:$0xf]
        %v2251 = vld [vmem:[%s362 + $0xc98] sm:$0xf]
        %v2252 = vld [vmem:[%s362 + $0xc9c] sm:$0xf]
        %v2253 = vld [vmem:[%s362 + $0xca0] sm:$0xf]
        %v2254 = vld [vmem:[%s362 + $0xca4] sm:$0xf]
        %v2255 = vld [vmem:[%s362 + $0xca8] sm:$0xf]
        %v2256 = vld [vmem:[%s362 + $0xcac] sm:$0xf]
        %v2257 = vld [vmem:[%s362 + $0xcb0] sm:$0xf]
        %v2258 = vld [vmem:[%s362 + $0xcb4] sm:$0xf]
        %v2259 = vld [vmem:[%s362 + $0xcb8] sm:$0xf]
        %v2260 = vld [vmem:[%s362 + $0xcbc] sm:$0xf]
        %v2261 = vld [vmem:[%s362 + $0xcc0] sm:$0xf]
        %v2262 = vld [vmem:[%s362 + $0xcc4] sm:$0xf]
        %v2263 = vld [vmem:[%s362 + $0xcc8] sm:$0xf]
        %v2264 = vld [vmem:[%s362 + $0xccc] sm:$0xf]
        %v2265 = vld [vmem:[%s362 + $0xcd0] sm:$0xf]
        %v2266 = vld [vmem:[%s362 + $0xcd4] sm:$0xf]
        %v2267 = vld [vmem:[%s362 + $0xcd8] sm:$0xf]
        %v2268 = vld [vmem:[%s362 + $0xcdc] sm:$0xf]
        %v2269 = vld [vmem:[%s362 + $0xce0] sm:$0xf]
        %v2270 = vld [vmem:[%s362 + $0xce4] sm:$0xf]
        %v2271 = vld [vmem:[%s362 + $0xce8] sm:$0xf]
        %v2272 = vld [vmem:[%s362 + $0xcec] sm:$0xf]
        %v2273 = vld [vmem:[%s362 + $0xcf0] sm:$0xf]
        %v2274 = vld [vmem:[%s362 + $0xcf4] sm:$0xf]
        %v2275 = vld [vmem:[%s362 + $0xcf8] sm:$0xf]
        %v2276 = vld [vmem:[%s362 + $0xcfc] sm:$0xf]
        %v2277 = vld [vmem:[%s362 + $0xd00] sm:$0xf]
        %v2278 = vld [vmem:[%s362 + $0xd04] sm:$0xf]
        %v2279 = vld [vmem:[%s362 + $0xd08] sm:$0xf]
        %v2280 = vld [vmem:[%s362 + $0xd0c] sm:$0xf]
        %v2281 = vld [vmem:[%s362 + $0xd10] sm:$0xf]
        %v2282 = vld [vmem:[%s362 + $0xd14] sm:$0xf]
        %v2283 = vld [vmem:[%s362 + $0xd18] sm:$0xf]
        %v2284 = vld [vmem:[%s362 + $0xd1c] sm:$0xf]
        %v2285 = vld [vmem:[%s362 + $0xd20] sm:$0xf]
        %v2286 = vld [vmem:[%s362 + $0xd24] sm:$0xf]
        %v2287 = vld [vmem:[%s362 + $0xd28] sm:$0xf]
        %v2288 = vld [vmem:[%s362 + $0xd2c] sm:$0xf]
        %v2289 = vld [vmem:[%s362 + $0xd30] sm:$0xf]
        %v2290 = vld [vmem:[%s362 + $0xd34] sm:$0xf]
        %v2291 = vld [vmem:[%s362 + $0xd38] sm:$0xf]
        %v2292 = vld [vmem:[%s362 + $0xd3c] sm:$0xf]
        %v2293 = vld [vmem:[%s362 + $0xd40] sm:$0xf]
        %v2294 = vld [vmem:[%s362 + $0xd44] sm:$0xf]
        %v2295 = vld [vmem:[%s362 + $0xd48] sm:$0xf]
        %v2296 = vld [vmem:[%s362 + $0xd4c] sm:$0xf]
        %v2297 = vld [vmem:[%s362 + $0xd50] sm:$0xf]
        %v2298 = vld [vmem:[%s362 + $0xd54] sm:$0xf]
        %v2299 = vld [vmem:[%s362 + $0xd58] sm:$0xf]
        %v2300 = vld [vmem:[%s362 + $0xd5c] sm:$0xf]
        %v2301 = vld [vmem:[%s362 + $0xd60] sm:$0xf]
        %v2302 = vld [vmem:[%s362 + $0xd64] sm:$0xf]
        %v2303 = vld [vmem:[%s362 + $0xd68] sm:$0xf]
        %v2304 = vld [vmem:[%s362 + $0xd6c] sm:$0xf]
        %v2305 = vld [vmem:[%s362 + $0xd70] sm:$0xf]
        %v2306 = vld [vmem:[%s362 + $0xd74] sm:$0xf]
        %v2307 = vld [vmem:[%s362 + $0xd78] sm:$0xf]
        %v2308 = vld [vmem:[%s362 + $0xd7c] sm:$0xf]
        %v2309 = vld [vmem:[%s362 + $0xd80] sm:$0xf]
        %v2310 = vld [vmem:[%s362 + $0xd84] sm:$0xf]
        %v2311 = vld [vmem:[%s362 + $0xd88] sm:$0xf]
        %v2312 = vld [vmem:[%s362 + $0xd8c] sm:$0xf]
        %v2313 = vld [vmem:[%s362 + $0xd90] sm:$0xf]
        %v2314 = vld [vmem:[%s362 + $0xd94] sm:$0xf]
        %v2315 = vld [vmem:[%s362 + $0xd98] sm:$0xf]
        %v2316 = vld [vmem:[%s362 + $0xd9c] sm:$0xf]
        %v2317 = vld [vmem:[%s362 + $0xda0] sm:$0xf]
        %v2318 = vld [vmem:[%s362 + $0xda4] sm:$0xf]
        %v2319 = vld [vmem:[%s362 + $0xda8] sm:$0xf]
        %v2320 = vld [vmem:[%s362 + $0xdac] sm:$0xf]
        %v2321 = vld [vmem:[%s362 + $0xdb0] sm:$0xf]
        %v2322 = vld [vmem:[%s362 + $0xdb4] sm:$0xf]
        %v2323 = vld [vmem:[%s362 + $0xdb8] sm:$0xf]
        %v2324 = vld [vmem:[%s362 + $0xdbc] sm:$0xf]
        %v2325 = vld [vmem:[%s362 + $0xdc0] sm:$0xf]
        %v2326 = vld [vmem:[%s362 + $0xdc4] sm:$0xf]
        %v2327 = vld [vmem:[%s362 + $0xdc8] sm:$0xf]
        %v2328 = vld [vmem:[%s362 + $0xdcc] sm:$0xf]
        %v2329 = vld [vmem:[%s362 + $0xdd0] sm:$0xf]
        %v2330 = vld [vmem:[%s362 + $0xdd4] sm:$0xf]
        %v2331 = vld [vmem:[%s362 + $0xdd8] sm:$0xf]
        %v2332 = vld [vmem:[%s362 + $0xddc] sm:$0xf]
        %v2333 = vld [vmem:[%s362 + $0xde0] sm:$0xf]
        %v2334 = vld [vmem:[%s362 + $0xde4] sm:$0xf]
        %v2335 = vld [vmem:[%s362 + $0xde8] sm:$0xf]
        %v2336 = vld [vmem:[%s362 + $0xdec] sm:$0xf]
        %v2337 = vld [vmem:[%s362 + $0xdf0] sm:$0xf]
        %v2338 = vld [vmem:[%s362 + $0xdf4] sm:$0xf]
        %v2339 = vld [vmem:[%s362 + $0xdf8] sm:$0xf]
        %v2340 = vld [vmem:[%s362 + $0xdfc] sm:$0xf]
        %v2341 = vld [vmem:[%s362 + $0xe00] sm:$0xf]
        %v2342 = vld [vmem:[%s362 + $0xe04] sm:$0xf]
        %v2343 = vld [vmem:[%s362 + $0xe08] sm:$0xf]
        %v2344 = vld [vmem:[%s362 + $0xe0c] sm:$0xf]
        %v2345 = vld [vmem:[%s362 + $0xe10] sm:$0xf]
        %v2346 = vld [vmem:[%s362 + $0xe14] sm:$0xf]
        %v2347 = vld [vmem:[%s362 + $0xe18] sm:$0xf]
        %v2348 = vld [vmem:[%s362 + $0xe1c] sm:$0xf]
        %v2349 = vld [vmem:[%s362 + $0xe20] sm:$0xf]
        %v2350 = vld [vmem:[%s362 + $0xe24] sm:$0xf]
        %v2351 = vld [vmem:[%s362 + $0xe28] sm:$0xf]
        %v2352 = vld [vmem:[%s362 + $0xe2c] sm:$0xf]
        %v2353 = vld [vmem:[%s362 + $0xe30] sm:$0xf]
        %v2354 = vld [vmem:[%s362 + $0xe34] sm:$0xf]
        %v2355 = vld [vmem:[%s362 + $0xe38] sm:$0xf]
        %v2356 = vld [vmem:[%s362 + $0xe3c] sm:$0xf]
        %v2357 = vld [vmem:[%s362 + $0xe40] sm:$0xf]
        %v2358 = vld [vmem:[%s362 + $0xe44] sm:$0xf]
        %v2359 = vld [vmem:[%s362 + $0xe48] sm:$0xf]
        %v2360 = vld [vmem:[%s362 + $0xe4c] sm:$0xf]
        %v2361 = vld [vmem:[%s362 + $0xe50] sm:$0xf]
        %v2362 = vld [vmem:[%s362 + $0xe54] sm:$0xf]
        %v2363 = vld [vmem:[%s362 + $0xe58] sm:$0xf]
        %v2364 = vld [vmem:[%s362 + $0xe5c] sm:$0xf]
        %v2365 = vld [vmem:[%s362 + $0xe60] sm:$0xf]
        %v2366 = vld [vmem:[%s362 + $0xe64] sm:$0xf]
        %v2367 = vld [vmem:[%s362 + $0xe68] sm:$0xf]
        %v2368 = vld [vmem:[%s362 + $0xe6c] sm:$0xf]
        %v2369 = vld [vmem:[%s362 + $0xe70] sm:$0xf]
        %v2370 = vld [vmem:[%s362 + $0xe74] sm:$0xf]
        %v2371 = vld [vmem:[%s362 + $0xe78] sm:$0xf]
        %v2372 = vld [vmem:[%s362 + $0xe7c] sm:$0xf]
        %v2373 = vld [vmem:[%s362 + $0xe80] sm:$0xf]
        %v2374 = vld [vmem:[%s362 + $0xe84] sm:$0xf]
        %v2375 = vld [vmem:[%s362 + $0xe88] sm:$0xf]
        %v2376 = vld [vmem:[%s362 + $0xe8c] sm:$0xf]
        %v2377 = vld [vmem:[%s362 + $0xe90] sm:$0xf]
        %v2378 = vld [vmem:[%s362 + $0xe94] sm:$0xf]
        %v2379 = vld [vmem:[%s362 + $0xe98] sm:$0xf]
        %v2380 = vld [vmem:[%s362 + $0xe9c] sm:$0xf]
        %v2381 = vld [vmem:[%s362 + $0xea0] sm:$0xf]
        %v2382 = vld [vmem:[%s362 + $0xea4] sm:$0xf]
        %v2383 = vld [vmem:[%s362 + $0xea8] sm:$0xf]
        %v2384 = vld [vmem:[%s362 + $0xeac] sm:$0xf]
        %v2385 = vld [vmem:[%s362 + $0xeb0] sm:$0xf]
        %v2386 = vld [vmem:[%s362 + $0xeb4] sm:$0xf]
        %v2387 = vld [vmem:[%s362 + $0xeb8] sm:$0xf]
        %v2388 = vld [vmem:[%s362 + $0xebc] sm:$0xf]
        %v2389 = vld [vmem:[%s362 + $0xec0] sm:$0xf]
        %v2390 = vld [vmem:[%s362 + $0xec4] sm:$0xf]
        %v2391 = vld [vmem:[%s362 + $0xec8] sm:$0xf]
        %v2392 = vld [vmem:[%s362 + $0xecc] sm:$0xf]
        %v2393 = vld [vmem:[%s362 + $0xed0] sm:$0xf]
        %v2394 = vld [vmem:[%s362 + $0xed4] sm:$0xf]
        %v2395 = vld [vmem:[%s362 + $0xed8] sm:$0xf]
        %v2396 = vld [vmem:[%s362 + $0xedc] sm:$0xf]
        %v2397 = vld [vmem:[%s362 + $0xee0] sm:$0xf]
        %v2398 = vld [vmem:[%s362 + $0xee4] sm:$0xf]
        %v2399 = vld [vmem:[%s362 + $0xee8] sm:$0xf]
        %v2400 = vld [vmem:[%s362 + $0xeec] sm:$0xf]
        %v2401 = vld [vmem:[%s362 + $0xef0] sm:$0xf]
        %v2402 = vld [vmem:[%s362 + $0xef4] sm:$0xf]
        %v2403 = vld [vmem:[%s362 + $0xef8] sm:$0xf]
        %v2404 = vld [vmem:[%s362 + $0xefc] sm:$0xf]
        %v2405 = vld [vmem:[%s362 + $0xf00] sm:$0xf]
        %v2406 = vld [vmem:[%s362 + $0xf04] sm:$0xf]
        %v2407 = vld [vmem:[%s362 + $0xf08] sm:$0xf]
        %v2408 = vld [vmem:[%s362 + $0xf0c] sm:$0xf]
        %v2409 = vld [vmem:[%s362 + $0xf10] sm:$0xf]
        %v2410 = vld [vmem:[%s362 + $0xf14] sm:$0xf]
        %v2411 = vld [vmem:[%s362 + $0xf18] sm:$0xf]
        %v2412 = vld [vmem:[%s362 + $0xf1c] sm:$0xf]
        %v2413 = vld [vmem:[%s362 + $0xf20] sm:$0xf]
        %v2414 = vld [vmem:[%s362 + $0xf24] sm:$0xf]
        %v2415 = vld [vmem:[%s362 + $0xf28] sm:$0xf]
        %v2416 = vld [vmem:[%s362 + $0xf2c] sm:$0xf]
        %v2417 = vld [vmem:[%s362 + $0xf30] sm:$0xf]
        %v2418 = vld [vmem:[%s362 + $0xf34] sm:$0xf]
        %v2419 = vld [vmem:[%s362 + $0xf38] sm:$0xf]
        %v2420 = vld [vmem:[%s362 + $0xf3c] sm:$0xf]
        %v2421 = vld [vmem:[%s362 + $0xf40] sm:$0xf]
        %v2422 = vld [vmem:[%s362 + $0xf44] sm:$0xf]
        %v2423 = vld [vmem:[%s362 + $0xf48] sm:$0xf]
        %v2424 = vld [vmem:[%s362 + $0xf4c] sm:$0xf]
        %v2425 = vld [vmem:[%s362 + $0xf50] sm:$0xf]
        %v2426 = vld [vmem:[%s362 + $0xf54] sm:$0xf]
        %v2427 = vld [vmem:[%s362 + $0xf58] sm:$0xf]
        %v2428 = vld [vmem:[%s362 + $0xf5c] sm:$0xf]
        %v2429 = vld [vmem:[%s362 + $0xf60] sm:$0xf]
        %v2430 = vld [vmem:[%s362 + $0xf64] sm:$0xf]
        %v2431 = vld [vmem:[%s362 + $0xf68] sm:$0xf]
        %v2432 = vld [vmem:[%s362 + $0xf6c] sm:$0xf]
        %v2433 = vld [vmem:[%s362 + $0xf70] sm:$0xf]
        %v2434 = vld [vmem:[%s362 + $0xf74] sm:$0xf]
        %v2435 = vld [vmem:[%s362 + $0xf78] sm:$0xf]
        %v2436 = vld [vmem:[%s362 + $0xf7c] sm:$0xf]
        %v2437 = vld [vmem:[%s362 + $0xf80] sm:$0xf]
        %v2438 = vld [vmem:[%s362 + $0xf84] sm:$0xf]
        %v2439 = vld [vmem:[%s362 + $0xf88] sm:$0xf]
        %v2440 = vld [vmem:[%s362 + $0xf8c] sm:$0xf]
        %v2441 = vld [vmem:[%s362 + $0xf90] sm:$0xf]
        %v2442 = vld [vmem:[%s362 + $0xf94] sm:$0xf]
        %v2443 = vld [vmem:[%s362 + $0xf98] sm:$0xf]
        %v2444 = vld [vmem:[%s362 + $0xf9c] sm:$0xf]
        %v2445 = vld [vmem:[%s362 + $0xfa0] sm:$0xf]
        %v2446 = vld [vmem:[%s362 + $0xfa4] sm:$0xf]
        %v2447 = vld [vmem:[%s362 + $0xfa8] sm:$0xf]
        %v2448 = vld [vmem:[%s362 + $0xfac] sm:$0xf]
        %v2449 = vld [vmem:[%s362 + $0xfb0] sm:$0xf]
        %v2450 = vld [vmem:[%s362 + $0xfb4] sm:$0xf]
        %v2451 = vld [vmem:[%s362 + $0xfb8] sm:$0xf]
        %v2452 = vld [vmem:[%s362 + $0xfbc] sm:$0xf]
        %v2453 = vld [vmem:[%s362 + $0xfc0] sm:$0xf]
        %v2454 = vld [vmem:[%s362 + $0xfc4] sm:$0xf]
        %v2455 = vld [vmem:[%s362 + $0xfc8] sm:$0xf]
        %v2456 = vld [vmem:[%s362 + $0xfcc] sm:$0xf]
        %v2457 = vld [vmem:[%s362 + $0xfd0] sm:$0xf]
        %v2458 = vld [vmem:[%s362 + $0xfd4] sm:$0xf]
        %v2459 = vld [vmem:[%s362 + $0xfd8] sm:$0xf]
        %v2460 = vld [vmem:[%s362 + $0xfdc] sm:$0xf]
        %v2461 = vld [vmem:[%s362 + $0xfe0] sm:$0xf]
        %v2462 = vld [vmem:[%s362 + $0xfe4] sm:$0xf]
        %v2463 = vld [vmem:[%s362 + $0xfe8] sm:$0xf]
        %v2464 = vld [vmem:[%s362 + $0xfec] sm:$0xf]
        %v2465 = vld [vmem:[%s362 + $0xff0] sm:$0xf]
        %v2466 = vld [vmem:[%s362 + $0xff4] sm:$0xf]
        %v2467 = vld [vmem:[%s362 + $0xff8] sm:$0xf]
        %v2468 = vld [vmem:[%s362 + $0xffc] sm:$0xf]
        %v2469 = vld [vmem:[#allocation11] sm:$0xff]
        %v2470 = vld [vmem:[#allocation11 + $0x8] sm:$0xff]
        %v2471 = vld [vmem:[#allocation11 + $0x10] sm:$0xff]
        %v2472 = vld [vmem:[#allocation11 + $0x18] sm:$0xff]
        %v2473 = vld [vmem:[#allocation11 + $0x20] sm:$0xff]
        %v2474 = vld [vmem:[#allocation11 + $0x28] sm:$0xff]
        %v2475 = vld [vmem:[#allocation11 + $0x30] sm:$0xff]
        %v2476 = vld [vmem:[#allocation11 + $0x38] sm:$0xff]
        %v2477 = vld [vmem:[#allocation11 + $0x40] sm:$0xff]
        %v2478 = vld [vmem:[#allocation11 + $0x48] sm:$0xff]
        %v2479 = vld [vmem:[#allocation11 + $0x50] sm:$0xff]
        %v2480 = vld [vmem:[#allocation11 + $0x58] sm:$0xff]
        %v2481 = vld [vmem:[#allocation11 + $0x60] sm:$0xff]
        %v2482 = vld [vmem:[#allocation11 + $0x68] sm:$0xff]
        %v2483 = vld [vmem:[#allocation11 + $0x70] sm:$0xff]
        %v2484 = vld [vmem:[#allocation11 + $0x78] sm:$0xff]
        %v2485 = vld [vmem:[#allocation11 + $0x80] sm:$0xff]
        %v2486 = vld [vmem:[#allocation11 + $0x88] sm:$0xff]
        %v2487 = vld [vmem:[#allocation11 + $0x90] sm:$0xff]
        %v2488 = vld [vmem:[#allocation11 + $0x98] sm:$0xff]
        %v2489 = vld [vmem:[#allocation11 + $0xa0] sm:$0xff]
        %v2490 = vld [vmem:[#allocation11 + $0xa8] sm:$0xff]
        %v2491 = vld [vmem:[#allocation11 + $0xb0] sm:$0xff]
        %v2492 = vld [vmem:[#allocation11 + $0xb8] sm:$0xff]
        %v2493 = vld [vmem:[#allocation11 + $0xc0] sm:$0xff]
        %v2494 = vld [vmem:[#allocation11 + $0xc8] sm:$0xff]
        %v2495 = vld [vmem:[#allocation11 + $0xd0] sm:$0xff]
        %v2496 = vld [vmem:[#allocation11 + $0xd8] sm:$0xff]
        %v2497 = vld [vmem:[#allocation11 + $0xe0] sm:$0xff]
        %v2498 = vld [vmem:[#allocation11 + $0xe8] sm:$0xff]
        %v2499 = vld [vmem:[#allocation11 + $0xf0] sm:$0xff]
        %v2500 = vld [vmem:[#allocation11 + $0xf8] sm:$0xff]
        %v2501 = vld [vmem:[#allocation11 + $0x100] sm:$0xff]
        %v2502 = vld [vmem:[#allocation11 + $0x108] sm:$0xff]
        %v2503 = vld [vmem:[#allocation11 + $0x110] sm:$0xff]
        %v2504 = vld [vmem:[#allocation11 + $0x118] sm:$0xff]
        %v2505 = vld [vmem:[#allocation11 + $0x120] sm:$0xff]
        %v2506 = vld [vmem:[#allocation11 + $0x128] sm:$0xff]
        %v2507 = vld [vmem:[#allocation11 + $0x130] sm:$0xff]
        %v2508 = vld [vmem:[#allocation11 + $0x138] sm:$0xff]
        %v2509 = vld [vmem:[#allocation11 + $0x140] sm:$0xff]
        %v2510 = vld [vmem:[#allocation11 + $0x148] sm:$0xff]
        %v2511 = vld [vmem:[#allocation11 + $0x150] sm:$0xff]
        %v2512 = vld [vmem:[#allocation11 + $0x158] sm:$0xff]
        %v2513 = vld [vmem:[#allocation11 + $0x160] sm:$0xff]
        %v2514 = vld [vmem:[#allocation11 + $0x168] sm:$0xff]
        %v2515 = vld [vmem:[#allocation11 + $0x170] sm:$0xff]
        %v2516 = vld [vmem:[#allocation11 + $0x178] sm:$0xff]
        %v2517 = vld [vmem:[#allocation11 + $0x180] sm:$0xff]
        %v2518 = vld [vmem:[#allocation11 + $0x188] sm:$0xff]
        %v2519 = vld [vmem:[#allocation11 + $0x190] sm:$0xff]
        %v2520 = vld [vmem:[#allocation11 + $0x198] sm:$0xff]
        %v2521 = vld [vmem:[#allocation11 + $0x1a0] sm:$0xff]
        %v2522 = vld [vmem:[#allocation11 + $0x1a8] sm:$0xff]
        %v2523 = vld [vmem:[#allocation11 + $0x1b0] sm:$0xff]
        %v2524 = vld [vmem:[#allocation11 + $0x1b8] sm:$0xff]
        %v2525 = vld [vmem:[#allocation11 + $0x1c0] sm:$0xff]
        %v2526 = vld [vmem:[#allocation11 + $0x1c8] sm:$0xff]
        %v2527 = vld [vmem:[#allocation11 + $0x1d0] sm:$0xff]
        %v2528 = vld [vmem:[#allocation11 + $0x1d8] sm:$0xff]
        %v2529 = vld [vmem:[#allocation11 + $0x1e0] sm:$0xff]
        %v2530 = vld [vmem:[#allocation11 + $0x1e8] sm:$0xff]
        %v2531 = vld [vmem:[#allocation11 + $0x1f0] sm:$0xff]
        %v2532 = vld [vmem:[#allocation11 + $0x1f8] sm:$0xff]
        %v2533 = vld [vmem:[#allocation11 + $0x200] sm:$0xff]
        %v2534 = vld [vmem:[#allocation11 + $0x208] sm:$0xff]
        %v2535 = vld [vmem:[#allocation11 + $0x210] sm:$0xff]
        %v2536 = vld [vmem:[#allocation11 + $0x218] sm:$0xff]
        %v2537 = vld [vmem:[#allocation11 + $0x220] sm:$0xff]
        %v2538 = vld [vmem:[#allocation11 + $0x228] sm:$0xff]
        %v2539 = vld [vmem:[#allocation11 + $0x230] sm:$0xff]
        %v2540 = vld [vmem:[#allocation11 + $0x238] sm:$0xff]
        %v2541 = vld [vmem:[#allocation11 + $0x240] sm:$0xff]
        %v2542 = vld [vmem:[#allocation11 + $0x248] sm:$0xff]
        %v2543 = vld [vmem:[#allocation11 + $0x250] sm:$0xff]
        %v2544 = vld [vmem:[#allocation11 + $0x258] sm:$0xff]
        %v2545 = vld [vmem:[#allocation11 + $0x260] sm:$0xff]
        %v2546 = vld [vmem:[#allocation11 + $0x268] sm:$0xff]
        %v2547 = vld [vmem:[#allocation11 + $0x270] sm:$0xff]
        %v2548 = vld [vmem:[#allocation11 + $0x278] sm:$0xff]
        %v2549 = vld [vmem:[#allocation11 + $0x280] sm:$0xff]
        %v2550 = vld [vmem:[#allocation11 + $0x288] sm:$0xff]
        %v2551 = vld [vmem:[#allocation11 + $0x290] sm:$0xff]
        %v2552 = vld [vmem:[#allocation11 + $0x298] sm:$0xff]
        %v2553 = vld [vmem:[#allocation11 + $0x2a0] sm:$0xff]
        %v2554 = vld [vmem:[#allocation11 + $0x2a8] sm:$0xff]
        %v2555 = vld [vmem:[#allocation11 + $0x2b0] sm:$0xff]
        %v2556 = vld [vmem:[#allocation11 + $0x2b8] sm:$0xff]
        %v2557 = vld [vmem:[#allocation11 + $0x2c0] sm:$0xff]
        %v2558 = vld [vmem:[#allocation11 + $0x2c8] sm:$0xff]
        %v2559 = vld [vmem:[#allocation11 + $0x2d0] sm:$0xff]
        %v2560 = vld [vmem:[#allocation11 + $0x2d8] sm:$0xff]
        %v2561 = vld [vmem:[#allocation11 + $0x2e0] sm:$0xff]
        %v2562 = vld [vmem:[#allocation11 + $0x2e8] sm:$0xff]
        %v2563 = vld [vmem:[#allocation11 + $0x2f0] sm:$0xff]
        %v2564 = vld [vmem:[#allocation11 + $0x2f8] sm:$0xff]
        %v2565 = vld [vmem:[#allocation11 + $0x300] sm:$0xff]
        %v2566 = vld [vmem:[#allocation11 + $0x308] sm:$0xff]
        %v2567 = vld [vmem:[#allocation11 + $0x310] sm:$0xff]
        %v2568 = vld [vmem:[#allocation11 + $0x318] sm:$0xff]
        %v2569 = vld [vmem:[#allocation11 + $0x320] sm:$0xff]
        %v2570 = vld [vmem:[#allocation11 + $0x328] sm:$0xff]
        %v2571 = vld [vmem:[#allocation11 + $0x330] sm:$0xff]
        %v2572 = vld [vmem:[#allocation11 + $0x338] sm:$0xff]
        %v2573 = vld [vmem:[#allocation11 + $0x340] sm:$0xff]
        %v2574 = vld [vmem:[#allocation11 + $0x348] sm:$0xff]
        %v2575 = vld [vmem:[#allocation11 + $0x350] sm:$0xff]
        %v2576 = vld [vmem:[#allocation11 + $0x358] sm:$0xff]
        %v2577 = vld [vmem:[#allocation11 + $0x360] sm:$0xff]
        %v2578 = vld [vmem:[#allocation11 + $0x368] sm:$0xff]
        %v2579 = vld [vmem:[#allocation11 + $0x370] sm:$0xff]
        %v2580 = vld [vmem:[#allocation11 + $0x378] sm:$0xff]
        %v2581 = vld [vmem:[#allocation11 + $0x380] sm:$0xff]
        %v2582 = vld [vmem:[#allocation11 + $0x388] sm:$0xff]
        %v2583 = vld [vmem:[#allocation11 + $0x390] sm:$0xff]
        %v2584 = vld [vmem:[#allocation11 + $0x398] sm:$0xff]
        %v2585 = vld [vmem:[#allocation11 + $0x3a0] sm:$0xff]
        %v2586 = vld [vmem:[#allocation11 + $0x3a8] sm:$0xff]
        %v2587 = vld [vmem:[#allocation11 + $0x3b0] sm:$0xff]
        %v2588 = vld [vmem:[#allocation11 + $0x3b8] sm:$0xff]
        %v2589 = vld [vmem:[#allocation11 + $0x3c0] sm:$0xff]
        %v2590 = vld [vmem:[#allocation11 + $0x3c8] sm:$0xff]
        %v2591 = vld [vmem:[#allocation11 + $0x3d0] sm:$0xff]
        %v2592 = vld [vmem:[#allocation11 + $0x3d8] sm:$0xff]
        %v2593 = vld [vmem:[#allocation11 + $0x3e0] sm:$0xff]
        %v2594 = vld [vmem:[#allocation11 + $0x3e8] sm:$0xff]
        %v2595 = vld [vmem:[#allocation11 + $0x3f0] sm:$0xff]
        %v2596 = vld [vmem:[#allocation11 + $0x3f8] sm:$0xff]
        %v2599 = vunpack.c.l.b16 %v419
        %v2600 = vunpack.c.l.b16 %v420
        %v2601 = vpack.c.b16 %v2600, %v2599
        %v3627 = vunpack.c.l.b16 %v421
        %v3628 = vunpack.c.l.b16 %v422
        %v3629 = vunpack.c.l.b16 %v423
        %v3630 = vunpack.c.l.b16 %v424
        %v3631 = vunpack.c.l.b16 %v425
        %v3632 = vunpack.c.l.b16 %v426
        %v3633 = vunpack.c.l.b16 %v427
        %v3634 = vunpack.c.l.b16 %v428
        %v3635 = vunpack.c.l.b16 %v429
        %v3636 = vunpack.c.l.b16 %v430
        %v3637 = vunpack.c.l.b16 %v431
        %v3638 = vunpack.c.l.b16 %v432
        %v3639 = vunpack.c.l.b16 %v433
        %v3640 = vunpack.c.l.b16 %v434
        %v3641 = vunpack.c.l.b16 %v435
        %v3642 = vunpack.c.l.b16 %v436
        %v3643 = vunpack.c.l.b16 %v437
        %v3644 = vunpack.c.l.b16 %v438
        %v3645 = vunpack.c.l.b16 %v439
        %v3646 = vunpack.c.l.b16 %v440
        %v3647 = vunpack.c.l.b16 %v441
        %v3648 = vunpack.c.l.b16 %v442
        %v3649 = vunpack.c.l.b16 %v443
        %v3650 = vunpack.c.l.b16 %v444
        %v3651 = vunpack.c.l.b16 %v445
        %v3652 = vunpack.c.l.b16 %v446
        %v3653 = vunpack.c.l.b16 %v447
        %v3654 = vunpack.c.l.b16 %v448
        %v3655 = vunpack.c.l.b16 %v449
        %v3656 = vunpack.c.l.b16 %v450
        %v3657 = vunpack.c.l.b16 %v451
        %v3658 = vunpack.c.l.b16 %v452
        %v3659 = vunpack.c.l.b16 %v453
        %v3660 = vunpack.c.l.b16 %v454
        %v3661 = vunpack.c.l.b16 %v455
        %v3662 = vunpack.c.l.b16 %v456
        %v3663 = vunpack.c.l.b16 %v457
        %v3664 = vunpack.c.l.b16 %v458
        %v3665 = vunpack.c.l.b16 %v459
        %v3666 = vunpack.c.l.b16 %v460
        %v3667 = vunpack.c.l.b16 %v461
        %v3668 = vunpack.c.l.b16 %v462
        %v3669 = vunpack.c.l.b16 %v463
        %v3670 = vunpack.c.l.b16 %v464
        %v3671 = vunpack.c.l.b16 %v465
        %v3672 = vunpack.c.l.b16 %v466
        %v3673 = vunpack.c.l.b16 %v467
        %v3674 = vunpack.c.l.b16 %v468
        %v3675 = vunpack.c.l.b16 %v469
        %v3676 = vunpack.c.l.b16 %v470
        %v3677 = vunpack.c.l.b16 %v471
        %v3678 = vunpack.c.l.b16 %v472
        %v3679 = vunpack.c.l.b16 %v473
        %v3680 = vunpack.c.l.b16 %v474
        %v3681 = vunpack.c.l.b16 %v475
        %v3682 = vunpack.c.l.b16 %v476
        %v3683 = vunpack.c.l.b16 %v477
        %v3684 = vunpack.c.l.b16 %v478
        %v3685 = vunpack.c.l.b16 %v479
        %v3686 = vunpack.c.l.b16 %v480
        %v3687 = vunpack.c.l.b16 %v481
        %v3688 = vunpack.c.l.b16 %v482
        %v3689 = vunpack.c.l.b16 %v483
        %v3690 = vunpack.c.l.b16 %v484
        %v3691 = vunpack.c.l.b16 %v485
        %v3692 = vunpack.c.l.b16 %v486
        %v3693 = vunpack.c.l.b16 %v487
        %v3694 = vunpack.c.l.b16 %v488
        %v3695 = vunpack.c.l.b16 %v489
        %v3696 = vunpack.c.l.b16 %v490
        %v3697 = vunpack.c.l.b16 %v491
        %v3698 = vunpack.c.l.b16 %v492
        %v3699 = vunpack.c.l.b16 %v493
        %v3700 = vunpack.c.l.b16 %v494
        %v3701 = vunpack.c.l.b16 %v495
        %v3702 = vunpack.c.l.b16 %v496
        %v3703 = vunpack.c.l.b16 %v497
        %v3704 = vunpack.c.l.b16 %v498
        %v3705 = vunpack.c.l.b16 %v499
        %v3706 = vunpack.c.l.b16 %v500
        %v3707 = vunpack.c.l.b16 %v501
        %v3708 = vunpack.c.l.b16 %v502
        %v3709 = vunpack.c.l.b16 %v503
        %v3710 = vunpack.c.l.b16 %v504
        %v3711 = vunpack.c.l.b16 %v505
        %v3712 = vunpack.c.l.b16 %v506
        %v3713 = vunpack.c.l.b16 %v507
        %v3714 = vunpack.c.l.b16 %v508
        %v3715 = vunpack.c.l.b16 %v509
        %v3716 = vunpack.c.l.b16 %v510
        %v3717 = vunpack.c.l.b16 %v511
        %v3718 = vunpack.c.l.b16 %v512
        %v3719 = vunpack.c.l.b16 %v513
        %v3720 = vunpack.c.l.b16 %v514
        %v3721 = vunpack.c.l.b16 %v515
        %v3722 = vunpack.c.l.b16 %v516
        %v3723 = vunpack.c.l.b16 %v517
        %v3724 = vunpack.c.l.b16 %v518
        %v3725 = vunpack.c.l.b16 %v519
        %v3726 = vunpack.c.l.b16 %v520
        %v3727 = vunpack.c.l.b16 %v521
        %v3728 = vunpack.c.l.b16 %v522
        %v3729 = vunpack.c.l.b16 %v523
        %v3730 = vunpack.c.l.b16 %v524
        %v3731 = vunpack.c.l.b16 %v525
        %v3732 = vunpack.c.l.b16 %v526
        %v3733 = vunpack.c.l.b16 %v527
        %v3734 = vunpack.c.l.b16 %v528
        %v3735 = vunpack.c.l.b16 %v529
        %v3736 = vunpack.c.l.b16 %v530
        %v3737 = vunpack.c.l.b16 %v531
        %v3738 = vunpack.c.l.b16 %v532
        %v3739 = vunpack.c.l.b16 %v533
        %v3740 = vunpack.c.l.b16 %v534
        %v3741 = vunpack.c.l.b16 %v535
        %v3742 = vunpack.c.l.b16 %v536
        %v3743 = vunpack.c.l.b16 %v537
        %v3744 = vunpack.c.l.b16 %v538
        %v3745 = vunpack.c.l.b16 %v539
        %v3746 = vunpack.c.l.b16 %v540
        %v3747 = vunpack.c.l.b16 %v541
        %v3748 = vunpack.c.l.b16 %v542
        %v3749 = vunpack.c.l.b16 %v543
        %v3750 = vunpack.c.l.b16 %v544
        %v3751 = vunpack.c.l.b16 %v545
        %v3752 = vunpack.c.l.b16 %v546
        %v3753 = vunpack.c.l.b16 %v547
        %v3754 = vunpack.c.l.b16 %v548
        %v3755 = vunpack.c.l.b16 %v549
        %v3756 = vunpack.c.l.b16 %v550
        %v3757 = vunpack.c.l.b16 %v551
        %v3758 = vunpack.c.l.b16 %v552
        %v3759 = vunpack.c.l.b16 %v553
        %v3760 = vunpack.c.l.b16 %v554
        %v3761 = vunpack.c.l.b16 %v555
        %v3762 = vunpack.c.l.b16 %v556
        %v3763 = vunpack.c.l.b16 %v557
        %v3764 = vunpack.c.l.b16 %v558
        %v3765 = vunpack.c.l.b16 %v559
        %v3766 = vunpack.c.l.b16 %v560
        %v3767 = vunpack.c.l.b16 %v561
        %v3768 = vunpack.c.l.b16 %v562
        %v3769 = vunpack.c.l.b16 %v563
        %v3770 = vunpack.c.l.b16 %v564
        %v3771 = vunpack.c.l.b16 %v565
        %v3772 = vunpack.c.l.b16 %v566
        %v3773 = vunpack.c.l.b16 %v567
        %v3774 = vunpack.c.l.b16 %v568
        %v3775 = vunpack.c.l.b16 %v569
        %v3776 = vunpack.c.l.b16 %v570
        %v3777 = vunpack.c.l.b16 %v571
        %v3778 = vunpack.c.l.b16 %v572
        %v3779 = vunpack.c.l.b16 %v573
        %v3780 = vunpack.c.l.b16 %v574
        %v3781 = vunpack.c.l.b16 %v575
        %v3782 = vunpack.c.l.b16 %v576
        %v3783 = vunpack.c.l.b16 %v577
        %v3784 = vunpack.c.l.b16 %v578
        %v3785 = vunpack.c.l.b16 %v579
        %v3786 = vunpack.c.l.b16 %v580
        %v3787 = vunpack.c.l.b16 %v581
        %v3788 = vunpack.c.l.b16 %v582
        %v3789 = vunpack.c.l.b16 %v583
        %v3790 = vunpack.c.l.b16 %v584
        %v3791 = vunpack.c.l.b16 %v585
        %v3792 = vunpack.c.l.b16 %v586
        %v3793 = vunpack.c.l.b16 %v587
        %v3794 = vunpack.c.l.b16 %v588
        %v3795 = vunpack.c.l.b16 %v589
        %v3796 = vunpack.c.l.b16 %v590
        %v3797 = vunpack.c.l.b16 %v591
        %v3798 = vunpack.c.l.b16 %v592
        %v3799 = vunpack.c.l.b16 %v593
        %v3800 = vunpack.c.l.b16 %v594
        %v3801 = vunpack.c.l.b16 %v595
        %v3802 = vunpack.c.l.b16 %v596
        %v3803 = vunpack.c.l.b16 %v597
        %v3804 = vunpack.c.l.b16 %v598
        %v3805 = vunpack.c.l.b16 %v599
        %v3806 = vunpack.c.l.b16 %v600
        %v3807 = vunpack.c.l.b16 %v601
        %v3808 = vunpack.c.l.b16 %v602
        %v3809 = vunpack.c.l.b16 %v603
        %v3810 = vunpack.c.l.b16 %v604
        %v3811 = vunpack.c.l.b16 %v605
        %v3812 = vunpack.c.l.b16 %v606
        %v3813 = vunpack.c.l.b16 %v607
        %v3814 = vunpack.c.l.b16 %v608
        %v3815 = vunpack.c.l.b16 %v609
        %v3816 = vunpack.c.l.b16 %v610
        %v3817 = vunpack.c.l.b16 %v611
        %v3818 = vunpack.c.l.b16 %v612
        %v3819 = vunpack.c.l.b16 %v613
        %v3820 = vunpack.c.l.b16 %v614
        %v3821 = vunpack.c.l.b16 %v615
        %v3822 = vunpack.c.l.b16 %v616
        %v3823 = vunpack.c.l.b16 %v617
        %v3824 = vunpack.c.l.b16 %v618
        %v3825 = vunpack.c.l.b16 %v619
        %v3826 = vunpack.c.l.b16 %v620
        %v3827 = vunpack.c.l.b16 %v621
        %v3828 = vunpack.c.l.b16 %v622
        %v3829 = vunpack.c.l.b16 %v623
        %v3830 = vunpack.c.l.b16 %v624
        %v3831 = vunpack.c.l.b16 %v625
        %v3832 = vunpack.c.l.b16 %v626
        %v3833 = vunpack.c.l.b16 %v627
        %v3834 = vunpack.c.l.b16 %v628
        %v3835 = vunpack.c.l.b16 %v629
        %v3836 = vunpack.c.l.b16 %v630
        %v3837 = vunpack.c.l.b16 %v631
        %v3838 = vunpack.c.l.b16 %v632
        %v3839 = vunpack.c.l.b16 %v633
        %v3840 = vunpack.c.l.b16 %v634
        %v3841 = vunpack.c.l.b16 %v635
        %v3842 = vunpack.c.l.b16 %v636
        %v3843 = vunpack.c.l.b16 %v637
        %v3844 = vunpack.c.l.b16 %v638
        %v3845 = vunpack.c.l.b16 %v639
        %v3846 = vunpack.c.l.b16 %v640
        %v3847 = vunpack.c.l.b16 %v641
        %v3848 = vunpack.c.l.b16 %v642
        %v3849 = vunpack.c.l.b16 %v643
        %v3850 = vunpack.c.l.b16 %v644
        %v3851 = vunpack.c.l.b16 %v645
        %v3852 = vunpack.c.l.b16 %v646
        %v3853 = vunpack.c.l.b16 %v647
        %v3854 = vunpack.c.l.b16 %v648
        %v3855 = vunpack.c.l.b16 %v649
        %v3856 = vunpack.c.l.b16 %v650
        %v3857 = vunpack.c.l.b16 %v651
        %v3858 = vunpack.c.l.b16 %v652
        %v3859 = vunpack.c.l.b16 %v653
        %v3860 = vunpack.c.l.b16 %v654
        %v3861 = vunpack.c.l.b16 %v655
        %v3862 = vunpack.c.l.b16 %v656
        %v3863 = vunpack.c.l.b16 %v657
        %v3864 = vunpack.c.l.b16 %v658
        %v3865 = vunpack.c.l.b16 %v659
        %v3866 = vunpack.c.l.b16 %v660
        %v3867 = vunpack.c.l.b16 %v661
        %v3868 = vunpack.c.l.b16 %v662
        %v3869 = vunpack.c.l.b16 %v663
        %v3870 = vunpack.c.l.b16 %v664
        %v3871 = vunpack.c.l.b16 %v665
        %v3872 = vunpack.c.l.b16 %v666
        %v3873 = vunpack.c.l.b16 %v667
        %v3874 = vunpack.c.l.b16 %v668
        %v3875 = vunpack.c.l.b16 %v669
        %v3876 = vunpack.c.l.b16 %v670
        %v3877 = vunpack.c.l.b16 %v671
        %v3878 = vunpack.c.l.b16 %v672
        %v3879 = vunpack.c.l.b16 %v673
        %v3880 = vunpack.c.l.b16 %v674
        %v3881 = vunpack.c.l.b16 %v675
        %v3882 = vunpack.c.l.b16 %v676
        %v3883 = vunpack.c.l.b16 %v677
        %v3884 = vunpack.c.l.b16 %v678
        %v3885 = vunpack.c.l.b16 %v679
        %v3886 = vunpack.c.l.b16 %v680
        %v3887 = vunpack.c.l.b16 %v681
        %v3888 = vunpack.c.l.b16 %v682
        %v3889 = vunpack.c.l.b16 %v683
        %v3890 = vunpack.c.l.b16 %v684
        %v3891 = vunpack.c.l.b16 %v685
        %v3892 = vunpack.c.l.b16 %v686
        %v3893 = vunpack.c.l.b16 %v687
        %v3894 = vunpack.c.l.b16 %v688
        %v3895 = vunpack.c.l.b16 %v689
        %v3896 = vunpack.c.l.b16 %v690
        %v3897 = vunpack.c.l.b16 %v691
        %v3898 = vunpack.c.l.b16 %v692
        %v3899 = vunpack.c.l.b16 %v693
        %v3900 = vunpack.c.l.b16 %v694
        %v3901 = vunpack.c.l.b16 %v695
        %v3902 = vunpack.c.l.b16 %v696
        %v3903 = vunpack.c.l.b16 %v697
        %v3904 = vunpack.c.l.b16 %v698
        %v3905 = vunpack.c.l.b16 %v699
        %v3906 = vunpack.c.l.b16 %v700
        %v3907 = vunpack.c.l.b16 %v701
        %v3908 = vunpack.c.l.b16 %v702
        %v3909 = vunpack.c.l.b16 %v703
        %v3910 = vunpack.c.l.b16 %v704
        %v3911 = vunpack.c.l.b16 %v705
        %v3912 = vunpack.c.l.b16 %v706
        %v3913 = vunpack.c.l.b16 %v707
        %v3914 = vunpack.c.l.b16 %v708
        %v3915 = vunpack.c.l.b16 %v709
        %v3916 = vunpack.c.l.b16 %v710
        %v3917 = vunpack.c.l.b16 %v711
        %v3918 = vunpack.c.l.b16 %v712
        %v3919 = vunpack.c.l.b16 %v713
        %v3920 = vunpack.c.l.b16 %v714
        %v3921 = vunpack.c.l.b16 %v715
        %v3922 = vunpack.c.l.b16 %v716
        %v3923 = vunpack.c.l.b16 %v717
        %v3924 = vunpack.c.l.b16 %v718
        %v3925 = vunpack.c.l.b16 %v719
        %v3926 = vunpack.c.l.b16 %v720
        %v3927 = vunpack.c.l.b16 %v721
        %v3928 = vunpack.c.l.b16 %v722
        %v3929 = vunpack.c.l.b16 %v723
        %v3930 = vunpack.c.l.b16 %v724
        %v3931 = vunpack.c.l.b16 %v725
        %v3932 = vunpack.c.l.b16 %v726
        %v3933 = vunpack.c.l.b16 %v727
        %v3934 = vunpack.c.l.b16 %v728
        %v3935 = vunpack.c.l.b16 %v729
        %v3936 = vunpack.c.l.b16 %v730
        %v3937 = vunpack.c.l.b16 %v731
        %v3938 = vunpack.c.l.b16 %v732
        %v3939 = vunpack.c.l.b16 %v733
        %v3940 = vunpack.c.l.b16 %v734
        %v3941 = vunpack.c.l.b16 %v735
        %v3942 = vunpack.c.l.b16 %v736
        %v3943 = vunpack.c.l.b16 %v737
        %v3944 = vunpack.c.l.b16 %v738
        %v3945 = vunpack.c.l.b16 %v739
        %v3946 = vunpack.c.l.b16 %v740
        %v3947 = vunpack.c.l.b16 %v741
        %v3948 = vunpack.c.l.b16 %v742
        %v3949 = vunpack.c.l.b16 %v743
        %v3950 = vunpack.c.l.b16 %v744
        %v3951 = vunpack.c.l.b16 %v745
        %v3952 = vunpack.c.l.b16 %v746
        %v3953 = vunpack.c.l.b16 %v747
        %v3954 = vunpack.c.l.b16 %v748
        %v3955 = vunpack.c.l.b16 %v749
        %v3956 = vunpack.c.l.b16 %v750
        %v3957 = vunpack.c.l.b16 %v751
        %v3958 = vunpack.c.l.b16 %v752
        %v3959 = vunpack.c.l.b16 %v753
        %v3960 = vunpack.c.l.b16 %v754
        %v3961 = vunpack.c.l.b16 %v755
        %v3962 = vunpack.c.l.b16 %v756
        %v3963 = vunpack.c.l.b16 %v757
        %v3964 = vunpack.c.l.b16 %v758
        %v3965 = vunpack.c.l.b16 %v759
        %v3966 = vunpack.c.l.b16 %v760
        %v3967 = vunpack.c.l.b16 %v761
        %v3968 = vunpack.c.l.b16 %v762
        %v3969 = vunpack.c.l.b16 %v763
        %v3970 = vunpack.c.l.b16 %v764
        %v3971 = vunpack.c.l.b16 %v765
        %v3972 = vunpack.c.l.b16 %v766
        %v3973 = vunpack.c.l.b16 %v767
        %v3974 = vunpack.c.l.b16 %v768
        %v3975 = vunpack.c.l.b16 %v769
        %v3976 = vunpack.c.l.b16 %v770
        %v3977 = vunpack.c.l.b16 %v771
        %v3978 = vunpack.c.l.b16 %v772
        %v3979 = vunpack.c.l.b16 %v773
        %v3980 = vunpack.c.l.b16 %v774
        %v3981 = vunpack.c.l.b16 %v775
        %v3982 = vunpack.c.l.b16 %v776
        %v3983 = vunpack.c.l.b16 %v777
        %v3984 = vunpack.c.l.b16 %v778
        %v3985 = vunpack.c.l.b16 %v779
        %v3986 = vunpack.c.l.b16 %v780
        %v3987 = vunpack.c.l.b16 %v781
        %v3988 = vunpack.c.l.b16 %v782
        %v3989 = vunpack.c.l.b16 %v783
        %v3990 = vunpack.c.l.b16 %v784
        %v3991 = vunpack.c.l.b16 %v785
        %v3992 = vunpack.c.l.b16 %v786
        %v3993 = vunpack.c.l.b16 %v787
        %v3994 = vunpack.c.l.b16 %v788
        %v3995 = vunpack.c.l.b16 %v789
        %v3996 = vunpack.c.l.b16 %v790
        %v3997 = vunpack.c.l.b16 %v791
        %v3998 = vunpack.c.l.b16 %v792
        %v3999 = vunpack.c.l.b16 %v793
        %v4000 = vunpack.c.l.b16 %v794
        %v4001 = vunpack.c.l.b16 %v795
        %v4002 = vunpack.c.l.b16 %v796
        %v4003 = vunpack.c.l.b16 %v797
        %v4004 = vunpack.c.l.b16 %v798
        %v4005 = vunpack.c.l.b16 %v799
        %v4006 = vunpack.c.l.b16 %v800
        %v4007 = vunpack.c.l.b16 %v801
        %v4008 = vunpack.c.l.b16 %v802
        %v4009 = vunpack.c.l.b16 %v803
        %v4010 = vunpack.c.l.b16 %v804
        %v4011 = vunpack.c.l.b16 %v805
        %v4012 = vunpack.c.l.b16 %v806
        %v4013 = vunpack.c.l.b16 %v807
        %v4014 = vunpack.c.l.b16 %v808
        %v4015 = vunpack.c.l.b16 %v809
        %v4016 = vunpack.c.l.b16 %v810
        %v4017 = vunpack.c.l.b16 %v811
        %v4018 = vunpack.c.l.b16 %v812
        %v4019 = vunpack.c.l.b16 %v813
        %v4020 = vunpack.c.l.b16 %v814
        %v4021 = vunpack.c.l.b16 %v815
        %v4022 = vunpack.c.l.b16 %v816
        %v4023 = vunpack.c.l.b16 %v817
        %v4024 = vunpack.c.l.b16 %v818
        %v4025 = vunpack.c.l.b16 %v819
        %v4026 = vunpack.c.l.b16 %v820
        %v4027 = vunpack.c.l.b16 %v821
        %v4028 = vunpack.c.l.b16 %v822
        %v4029 = vunpack.c.l.b16 %v823
        %v4030 = vunpack.c.l.b16 %v824
        %v4031 = vunpack.c.l.b16 %v825
        %v4032 = vunpack.c.l.b16 %v826
        %v4033 = vunpack.c.l.b16 %v827
        %v4034 = vunpack.c.l.b16 %v828
        %v4035 = vunpack.c.l.b16 %v829
        %v4036 = vunpack.c.l.b16 %v830
        %v4037 = vunpack.c.l.b16 %v831
        %v4038 = vunpack.c.l.b16 %v832
        %v4039 = vunpack.c.l.b16 %v833
        %v4040 = vunpack.c.l.b16 %v834
        %v4041 = vunpack.c.l.b16 %v835
        %v4042 = vunpack.c.l.b16 %v836
        %v4043 = vunpack.c.l.b16 %v837
        %v4044 = vunpack.c.l.b16 %v838
        %v4045 = vunpack.c.l.b16 %v839
        %v4046 = vunpack.c.l.b16 %v840
        %v4047 = vunpack.c.l.b16 %v841
        %v4048 = vunpack.c.l.b16 %v842
        %v4049 = vunpack.c.l.b16 %v843
        %v4050 = vunpack.c.l.b16 %v844
        %v4051 = vunpack.c.l.b16 %v845
        %v4052 = vunpack.c.l.b16 %v846
        %v4053 = vunpack.c.l.b16 %v847
        %v4054 = vunpack.c.l.b16 %v848
        %v4055 = vunpack.c.l.b16 %v849
        %v4056 = vunpack.c.l.b16 %v850
        %v4057 = vunpack.c.l.b16 %v851
        %v4058 = vunpack.c.l.b16 %v852
        %v4059 = vunpack.c.l.b16 %v853
        %v4060 = vunpack.c.l.b16 %v854
        %v4061 = vunpack.c.l.b16 %v855
        %v4062 = vunpack.c.l.b16 %v856
        %v4063 = vunpack.c.l.b16 %v857
        %v4064 = vunpack.c.l.b16 %v858
        %v4065 = vunpack.c.l.b16 %v859
        %v4066 = vunpack.c.l.b16 %v860
        %v4067 = vunpack.c.l.b16 %v861
        %v4068 = vunpack.c.l.b16 %v862
        %v4069 = vunpack.c.l.b16 %v863
        %v4070 = vunpack.c.l.b16 %v864
        %v4071 = vunpack.c.l.b16 %v865
        %v4072 = vunpack.c.l.b16 %v866
        %v4073 = vunpack.c.l.b16 %v867
        %v4074 = vunpack.c.l.b16 %v868
        %v4075 = vunpack.c.l.b16 %v869
        %v4076 = vunpack.c.l.b16 %v870
        %v4077 = vunpack.c.l.b16 %v871
        %v4078 = vunpack.c.l.b16 %v872
        %v4079 = vunpack.c.l.b16 %v873
        %v4080 = vunpack.c.l.b16 %v874
        %v4081 = vunpack.c.l.b16 %v875
        %v4082 = vunpack.c.l.b16 %v876
        %v4083 = vunpack.c.l.b16 %v877
        %v4084 = vunpack.c.l.b16 %v878
        %v4085 = vunpack.c.l.b16 %v879
        %v4086 = vunpack.c.l.b16 %v880
        %v4087 = vunpack.c.l.b16 %v881
        %v4088 = vunpack.c.l.b16 %v882
        %v4089 = vunpack.c.l.b16 %v883
        %v4090 = vunpack.c.l.b16 %v884
        %v4091 = vunpack.c.l.b16 %v885
        %v4092 = vunpack.c.l.b16 %v886
        %v4093 = vunpack.c.l.b16 %v887
        %v4094 = vunpack.c.l.b16 %v888
        %v4095 = vunpack.c.l.b16 %v889
        %v4096 = vunpack.c.l.b16 %v890
        %v4097 = vunpack.c.l.b16 %v891
        %v4098 = vunpack.c.l.b16 %v892
        %v4099 = vunpack.c.l.b16 %v893
        %v4100 = vunpack.c.l.b16 %v894
        %v4101 = vunpack.c.l.b16 %v895
        %v4102 = vunpack.c.l.b16 %v896
        %v4103 = vunpack.c.l.b16 %v897
        %v4104 = vunpack.c.l.b16 %v898
        %v4105 = vunpack.c.l.b16 %v899
        %v4106 = vunpack.c.l.b16 %v900
        %v4107 = vunpack.c.l.b16 %v901
        %v4108 = vunpack.c.l.b16 %v902
        %v4109 = vunpack.c.l.b16 %v903
        %v4110 = vunpack.c.l.b16 %v904
        %v4111 = vunpack.c.l.b16 %v905
        %v4112 = vunpack.c.l.b16 %v906
        %v4113 = vunpack.c.l.b16 %v907
        %v4114 = vunpack.c.l.b16 %v908
        %v4115 = vunpack.c.l.b16 %v909
        %v4116 = vunpack.c.l.b16 %v910
        %v4117 = vunpack.c.l.b16 %v911
        %v4118 = vunpack.c.l.b16 %v912
        %v4119 = vunpack.c.l.b16 %v913
        %v4120 = vunpack.c.l.b16 %v914
        %v4121 = vunpack.c.l.b16 %v915
        %v4122 = vunpack.c.l.b16 %v916
        %v4123 = vunpack.c.l.b16 %v917
        %v4124 = vunpack.c.l.b16 %v918
        %v4125 = vunpack.c.l.b16 %v919
        %v4126 = vunpack.c.l.b16 %v920
        %v4127 = vunpack.c.l.b16 %v921
        %v4128 = vunpack.c.l.b16 %v922
        %v4129 = vunpack.c.l.b16 %v923
        %v4130 = vunpack.c.l.b16 %v924
        %v4131 = vunpack.c.l.b16 %v925
        %v4132 = vunpack.c.l.b16 %v926
        %v4133 = vunpack.c.l.b16 %v927
        %v4134 = vunpack.c.l.b16 %v928
        %v4135 = vunpack.c.l.b16 %v929
        %v4136 = vunpack.c.l.b16 %v930
        %v4137 = vunpack.c.l.b16 %v931
        %v4138 = vunpack.c.l.b16 %v932
        %v4139 = vunpack.c.l.b16 %v933
        %v4140 = vunpack.c.l.b16 %v934
        %v4141 = vunpack.c.l.b16 %v935
        %v4142 = vunpack.c.l.b16 %v936
        %v4143 = vunpack.c.l.b16 %v937
        %v4144 = vunpack.c.l.b16 %v938
        %v4145 = vunpack.c.l.b16 %v939
        %v4146 = vunpack.c.l.b16 %v940
        %v4147 = vunpack.c.l.b16 %v941
        %v4148 = vunpack.c.l.b16 %v942
        %v4149 = vunpack.c.l.b16 %v943
        %v4150 = vunpack.c.l.b16 %v944
        %v4151 = vunpack.c.l.b16 %v945
        %v4152 = vunpack.c.l.b16 %v946
        %v4153 = vunpack.c.l.b16 %v947
        %v4154 = vunpack.c.l.b16 %v948
        %v4155 = vunpack.c.l.b16 %v949
        %v4156 = vunpack.c.l.b16 %v950
        %v4157 = vunpack.c.l.b16 %v951
        %v4158 = vunpack.c.l.b16 %v952
        %v4159 = vunpack.c.l.b16 %v953
        %v4160 = vunpack.c.l.b16 %v954
        %v4161 = vunpack.c.l.b16 %v955
        %v4162 = vunpack.c.l.b16 %v956
        %v4163 = vunpack.c.l.b16 %v957
        %v4164 = vunpack.c.l.b16 %v958
        %v4165 = vunpack.c.l.b16 %v959
        %v4166 = vunpack.c.l.b16 %v960
        %v4167 = vunpack.c.l.b16 %v961
        %v4168 = vunpack.c.l.b16 %v962
        %v4169 = vunpack.c.l.b16 %v963
        %v4170 = vunpack.c.l.b16 %v964
        %v4171 = vunpack.c.l.b16 %v965
        %v4172 = vunpack.c.l.b16 %v966
        %v4173 = vunpack.c.l.b16 %v967
        %v4174 = vunpack.c.l.b16 %v968
        %v4175 = vunpack.c.l.b16 %v969
        %v4176 = vunpack.c.l.b16 %v970
        %v4177 = vunpack.c.l.b16 %v971
        %v4178 = vunpack.c.l.b16 %v972
        %v4179 = vunpack.c.l.b16 %v973
        %v4180 = vunpack.c.l.b16 %v974
        %v4181 = vunpack.c.l.b16 %v975
        %v4182 = vunpack.c.l.b16 %v976
        %v4183 = vunpack.c.l.b16 %v977
        %v4184 = vunpack.c.l.b16 %v978
        %v4185 = vunpack.c.l.b16 %v979
        %v4186 = vunpack.c.l.b16 %v980
        %v4187 = vunpack.c.l.b16 %v981
        %v4188 = vunpack.c.l.b16 %v982
        %v4189 = vunpack.c.l.b16 %v983
        %v4190 = vunpack.c.l.b16 %v984
        %v4191 = vunpack.c.l.b16 %v985
        %v4192 = vunpack.c.l.b16 %v986
        %v4193 = vunpack.c.l.b16 %v987
        %v4194 = vunpack.c.l.b16 %v988
        %v4195 = vunpack.c.l.b16 %v989
        %v4196 = vunpack.c.l.b16 %v990
        %v4197 = vunpack.c.l.b16 %v991
        %v4198 = vunpack.c.l.b16 %v992
        %v4199 = vunpack.c.l.b16 %v993
        %v4200 = vunpack.c.l.b16 %v994
        %v4201 = vunpack.c.l.b16 %v995
        %v4202 = vunpack.c.l.b16 %v996
        %v4203 = vunpack.c.l.b16 %v997
        %v4204 = vunpack.c.l.b16 %v998
        %v4205 = vunpack.c.l.b16 %v999
        %v4206 = vunpack.c.l.b16 %v1000
        %v4207 = vunpack.c.l.b16 %v1001
        %v4208 = vunpack.c.l.b16 %v1002
        %v4209 = vunpack.c.l.b16 %v1003
        %v4210 = vunpack.c.l.b16 %v1004
        %v4211 = vunpack.c.l.b16 %v1005
        %v4212 = vunpack.c.l.b16 %v1006
        %v4213 = vunpack.c.l.b16 %v1007
        %v4214 = vunpack.c.l.b16 %v1008
        %v4215 = vunpack.c.l.b16 %v1009
        %v4216 = vunpack.c.l.b16 %v1010
        %v4217 = vunpack.c.l.b16 %v1011
        %v4218 = vunpack.c.l.b16 %v1012
        %v4219 = vunpack.c.l.b16 %v1013
        %v4220 = vunpack.c.l.b16 %v1014
        %v4221 = vunpack.c.l.b16 %v1015
        %v4222 = vunpack.c.l.b16 %v1016
        %v4223 = vunpack.c.l.b16 %v1017
        %v4224 = vunpack.c.l.b16 %v1018
        %v4225 = vunpack.c.l.b16 %v1019
        %v4226 = vunpack.c.l.b16 %v1020
        %v4227 = vunpack.c.l.b16 %v1021
        %v4228 = vunpack.c.l.b16 %v1022
        %v4229 = vunpack.c.l.b16 %v1023
        %v4230 = vunpack.c.l.b16 %v1024
        %v4231 = vunpack.c.l.b16 %v1025
        %v4232 = vunpack.c.l.b16 %v1026
        %v4233 = vunpack.c.l.b16 %v1027
        %v4234 = vunpack.c.l.b16 %v1028
        %v4235 = vunpack.c.l.b16 %v1029
        %v4236 = vunpack.c.l.b16 %v1030
        %v4237 = vunpack.c.l.b16 %v1031
        %v4238 = vunpack.c.l.b16 %v1032
        %v4239 = vunpack.c.l.b16 %v1033
        %v4240 = vunpack.c.l.b16 %v1034
        %v4241 = vunpack.c.l.b16 %v1035
        %v4242 = vunpack.c.l.b16 %v1036
        %v4243 = vunpack.c.l.b16 %v1037
        %v4244 = vunpack.c.l.b16 %v1038
        %v4245 = vunpack.c.l.b16 %v1039
        %v4246 = vunpack.c.l.b16 %v1040
        %v4247 = vunpack.c.l.b16 %v1041
        %v4248 = vunpack.c.l.b16 %v1042
        %v4249 = vunpack.c.l.b16 %v1043
        %v4250 = vunpack.c.l.b16 %v1044
        %v4251 = vunpack.c.l.b16 %v1045
        %v4252 = vunpack.c.l.b16 %v1046
        %v4253 = vunpack.c.l.b16 %v1047
        %v4254 = vunpack.c.l.b16 %v1048
        %v4255 = vunpack.c.l.b16 %v1049
        %v4256 = vunpack.c.l.b16 %v1050
        %v4257 = vunpack.c.l.b16 %v1051
        %v4258 = vunpack.c.l.b16 %v1052
        %v4259 = vunpack.c.l.b16 %v1053
        %v4260 = vunpack.c.l.b16 %v1054
        %v4261 = vunpack.c.l.b16 %v1055
        %v4262 = vunpack.c.l.b16 %v1056
        %v4263 = vunpack.c.l.b16 %v1057
        %v4264 = vunpack.c.l.b16 %v1058
        %v4265 = vunpack.c.l.b16 %v1059
        %v4266 = vunpack.c.l.b16 %v1060
        %v4267 = vunpack.c.l.b16 %v1061
        %v4268 = vunpack.c.l.b16 %v1062
        %v4269 = vunpack.c.l.b16 %v1063
        %v4270 = vunpack.c.l.b16 %v1064
        %v4271 = vunpack.c.l.b16 %v1065
        %v4272 = vunpack.c.l.b16 %v1066
        %v4273 = vunpack.c.l.b16 %v1067
        %v4274 = vunpack.c.l.b16 %v1068
        %v4275 = vunpack.c.l.b16 %v1069
        %v4276 = vunpack.c.l.b16 %v1070
        %v4277 = vunpack.c.l.b16 %v1071
        %v4278 = vunpack.c.l.b16 %v1072
        %v4279 = vunpack.c.l.b16 %v1073
        %v4280 = vunpack.c.l.b16 %v1074
        %v4281 = vunpack.c.l.b16 %v1075
        %v4282 = vunpack.c.l.b16 %v1076
        %v4283 = vunpack.c.l.b16 %v1077
        %v4284 = vunpack.c.l.b16 %v1078
        %v4285 = vunpack.c.l.b16 %v1079
        %v4286 = vunpack.c.l.b16 %v1080
        %v4287 = vunpack.c.l.b16 %v1081
        %v4288 = vunpack.c.l.b16 %v1082
        %v4289 = vunpack.c.l.b16 %v1083
        %v4290 = vunpack.c.l.b16 %v1084
        %v4291 = vunpack.c.l.b16 %v1085
        %v4292 = vunpack.c.l.b16 %v1086
        %v4293 = vunpack.c.l.b16 %v1087
        %v4294 = vunpack.c.l.b16 %v1088
        %v4295 = vunpack.c.l.b16 %v1089
        %v4296 = vunpack.c.l.b16 %v1090
        %v4297 = vunpack.c.l.b16 %v1091
        %v4298 = vunpack.c.l.b16 %v1092
        %v4299 = vunpack.c.l.b16 %v1093
        %v4300 = vunpack.c.l.b16 %v1094
        %v4301 = vunpack.c.l.b16 %v1095
        %v4302 = vunpack.c.l.b16 %v1096
        %v4303 = vunpack.c.l.b16 %v1097
        %v4304 = vunpack.c.l.b16 %v1098
        %v4305 = vunpack.c.l.b16 %v1099
        %v4306 = vunpack.c.l.b16 %v1100
        %v4307 = vunpack.c.l.b16 %v1101
        %v4308 = vunpack.c.l.b16 %v1102
        %v4309 = vunpack.c.l.b16 %v1103
        %v4310 = vunpack.c.l.b16 %v1104
        %v4311 = vunpack.c.l.b16 %v1105
        %v4312 = vunpack.c.l.b16 %v1106
        %v4313 = vunpack.c.l.b16 %v1107
        %v4314 = vunpack.c.l.b16 %v1108
        %v4315 = vunpack.c.l.b16 %v1109
        %v4316 = vunpack.c.l.b16 %v1110
        %v4317 = vunpack.c.l.b16 %v1111
        %v4318 = vunpack.c.l.b16 %v1112
        %v4319 = vunpack.c.l.b16 %v1113
        %v4320 = vunpack.c.l.b16 %v1114
        %v4321 = vunpack.c.l.b16 %v1115
        %v4322 = vunpack.c.l.b16 %v1116
        %v4323 = vunpack.c.l.b16 %v1117
        %v4324 = vunpack.c.l.b16 %v1118
        %v4325 = vunpack.c.l.b16 %v1119
        %v4326 = vunpack.c.l.b16 %v1120
        %v4327 = vunpack.c.l.b16 %v1121
        %v4328 = vunpack.c.l.b16 %v1122
        %v4329 = vunpack.c.l.b16 %v1123
        %v4330 = vunpack.c.l.b16 %v1124
        %v4331 = vunpack.c.l.b16 %v1125
        %v4332 = vunpack.c.l.b16 %v1126
        %v4333 = vunpack.c.l.b16 %v1127
        %v4334 = vunpack.c.l.b16 %v1128
        %v4335 = vunpack.c.l.b16 %v1129
        %v4336 = vunpack.c.l.b16 %v1130
        %v4337 = vunpack.c.l.b16 %v1131
        %v4338 = vunpack.c.l.b16 %v1132
        %v4339 = vunpack.c.l.b16 %v1133
        %v4340 = vunpack.c.l.b16 %v1134
        %v4341 = vunpack.c.l.b16 %v1135
        %v4342 = vunpack.c.l.b16 %v1136
        %v4343 = vunpack.c.l.b16 %v1137
        %v4344 = vunpack.c.l.b16 %v1138
        %v4345 = vunpack.c.l.b16 %v1139
        %v4346 = vunpack.c.l.b16 %v1140
        %v4347 = vunpack.c.l.b16 %v1141
        %v4348 = vunpack.c.l.b16 %v1142
        %v4349 = vunpack.c.l.b16 %v1143
        %v4350 = vunpack.c.l.b16 %v1144
        %v4351 = vunpack.c.l.b16 %v1145
        %v4352 = vunpack.c.l.b16 %v1146
        %v4353 = vunpack.c.l.b16 %v1147
        %v4354 = vunpack.c.l.b16 %v1148
        %v4355 = vunpack.c.l.b16 %v1149
        %v4356 = vunpack.c.l.b16 %v1150
        %v4357 = vunpack.c.l.b16 %v1151
        %v4358 = vunpack.c.l.b16 %v1152
        %v4359 = vunpack.c.l.b16 %v1153
        %v4360 = vunpack.c.l.b16 %v1154
        %v4361 = vunpack.c.l.b16 %v1155
        %v4362 = vunpack.c.l.b16 %v1156
        %v4363 = vunpack.c.l.b16 %v1157
        %v4364 = vunpack.c.l.b16 %v1158
        %v4365 = vunpack.c.l.b16 %v1159
        %v4366 = vunpack.c.l.b16 %v1160
        %v4367 = vunpack.c.l.b16 %v1161
        %v4368 = vunpack.c.l.b16 %v1162
        %v4369 = vunpack.c.l.b16 %v1163
        %v4370 = vunpack.c.l.b16 %v1164
        %v4371 = vunpack.c.l.b16 %v1165
        %v4372 = vunpack.c.l.b16 %v1166
        %v4373 = vunpack.c.l.b16 %v1167
        %v4374 = vunpack.c.l.b16 %v1168
        %v4375 = vunpack.c.l.b16 %v1169
        %v4376 = vunpack.c.l.b16 %v1170
        %v4377 = vunpack.c.l.b16 %v1171
        %v4378 = vunpack.c.l.b16 %v1172
        %v4379 = vunpack.c.l.b16 %v1173
        %v4380 = vunpack.c.l.b16 %v1174
        %v4381 = vunpack.c.l.b16 %v1175
        %v4382 = vunpack.c.l.b16 %v1176
        %v4383 = vunpack.c.l.b16 %v1177
        %v4384 = vunpack.c.l.b16 %v1178
        %v4385 = vunpack.c.l.b16 %v1179
        %v4386 = vunpack.c.l.b16 %v1180
        %v4387 = vunpack.c.l.b16 %v1181
        %v4388 = vunpack.c.l.b16 %v1182
        %v4389 = vunpack.c.l.b16 %v1183
        %v4390 = vunpack.c.l.b16 %v1184
        %v4391 = vunpack.c.l.b16 %v1185
        %v4392 = vunpack.c.l.b16 %v1186
        %v4393 = vunpack.c.l.b16 %v1187
        %v4394 = vunpack.c.l.b16 %v1188
        %v4395 = vunpack.c.l.b16 %v1189
        %v4396 = vunpack.c.l.b16 %v1190
        %v4397 = vunpack.c.l.b16 %v1191
        %v4398 = vunpack.c.l.b16 %v1192
        %v4399 = vunpack.c.l.b16 %v1193
        %v4400 = vunpack.c.l.b16 %v1194
        %v4401 = vunpack.c.l.b16 %v1195
        %v4402 = vunpack.c.l.b16 %v1196
        %v4403 = vunpack.c.l.b16 %v1197
        %v4404 = vunpack.c.l.b16 %v1198
        %v4405 = vunpack.c.l.b16 %v1199
        %v4406 = vunpack.c.l.b16 %v1200
        %v4407 = vunpack.c.l.b16 %v1201
        %v4408 = vunpack.c.l.b16 %v1202
        %v4409 = vunpack.c.l.b16 %v1203
        %v4410 = vunpack.c.l.b16 %v1204
        %v4411 = vunpack.c.l.b16 %v1205
        %v4412 = vunpack.c.l.b16 %v1206
        %v4413 = vunpack.c.l.b16 %v1207
        %v4414 = vunpack.c.l.b16 %v1208
        %v4415 = vunpack.c.l.b16 %v1209
        %v4416 = vunpack.c.l.b16 %v1210
        %v4417 = vunpack.c.l.b16 %v1211
        %v4418 = vunpack.c.l.b16 %v1212
        %v4419 = vunpack.c.l.b16 %v1213
        %v4420 = vunpack.c.l.b16 %v1214
        %v4421 = vunpack.c.l.b16 %v1215
        %v4422 = vunpack.c.l.b16 %v1216
        %v4423 = vunpack.c.l.b16 %v1217
        %v4424 = vunpack.c.l.b16 %v1218
        %v4425 = vunpack.c.l.b16 %v1219
        %v4426 = vunpack.c.l.b16 %v1220
        %v4427 = vunpack.c.l.b16 %v1221
        %v4428 = vunpack.c.l.b16 %v1222
        %v4429 = vunpack.c.l.b16 %v1223
        %v4430 = vunpack.c.l.b16 %v1224
        %v4431 = vunpack.c.l.b16 %v1225
        %v4432 = vunpack.c.l.b16 %v1226
        %v4433 = vunpack.c.l.b16 %v1227
        %v4434 = vunpack.c.l.b16 %v1228
        %v4435 = vunpack.c.l.b16 %v1229
        %v4436 = vunpack.c.l.b16 %v1230
        %v4437 = vunpack.c.l.b16 %v1231
        %v4438 = vunpack.c.l.b16 %v1232
        %v4439 = vunpack.c.l.b16 %v1233
        %v4440 = vunpack.c.l.b16 %v1234
        %v4441 = vunpack.c.l.b16 %v1235
        %v4442 = vunpack.c.l.b16 %v1236
        %v4443 = vunpack.c.l.b16 %v1237
        %v4444 = vunpack.c.l.b16 %v1238
        %v4445 = vunpack.c.l.b16 %v1239
        %v4446 = vunpack.c.l.b16 %v1240
        %v4447 = vunpack.c.l.b16 %v1241
        %v4448 = vunpack.c.l.b16 %v1242
        %v4449 = vunpack.c.l.b16 %v1243
        %v4450 = vunpack.c.l.b16 %v1244
        %v4451 = vunpack.c.l.b16 %v1245
        %v4452 = vunpack.c.l.b16 %v1246
        %v4453 = vunpack.c.l.b16 %v1247
        %v4454 = vunpack.c.l.b16 %v1248
        %v4455 = vunpack.c.l.b16 %v1249
        %v4456 = vunpack.c.l.b16 %v1250
        %v4457 = vunpack.c.l.b16 %v1251
        %v4458 = vunpack.c.l.b16 %v1252
        %v4459 = vunpack.c.l.b16 %v1253
        %v4460 = vunpack.c.l.b16 %v1254
        %v4461 = vunpack.c.l.b16 %v1255
        %v4462 = vunpack.c.l.b16 %v1256
        %v4463 = vunpack.c.l.b16 %v1257
        %v4464 = vunpack.c.l.b16 %v1258
        %v4465 = vunpack.c.l.b16 %v1259
        %v4466 = vunpack.c.l.b16 %v1260
        %v4467 = vunpack.c.l.b16 %v1261
        %v4468 = vunpack.c.l.b16 %v1262
        %v4469 = vunpack.c.l.b16 %v1263
        %v4470 = vunpack.c.l.b16 %v1264
        %v4471 = vunpack.c.l.b16 %v1265
        %v4472 = vunpack.c.l.b16 %v1266
        %v4473 = vunpack.c.l.b16 %v1267
        %v4474 = vunpack.c.l.b16 %v1268
        %v4475 = vunpack.c.l.b16 %v1269
        %v4476 = vunpack.c.l.b16 %v1270
        %v4477 = vunpack.c.l.b16 %v1271
        %v4478 = vunpack.c.l.b16 %v1272
        %v4479 = vunpack.c.l.b16 %v1273
        %v4480 = vunpack.c.l.b16 %v1274
        %v4481 = vunpack.c.l.b16 %v1275
        %v4482 = vunpack.c.l.b16 %v1276
        %v4483 = vunpack.c.l.b16 %v1277
        %v4484 = vunpack.c.l.b16 %v1278
        %v4485 = vunpack.c.l.b16 %v1279
        %v4486 = vunpack.c.l.b16 %v1280
        %v4487 = vunpack.c.l.b16 %v1281
        %v4488 = vunpack.c.l.b16 %v1282
        %v4489 = vunpack.c.l.b16 %v1283
        %v4490 = vunpack.c.l.b16 %v1284
        %v4491 = vunpack.c.l.b16 %v1285
        %v4492 = vunpack.c.l.b16 %v1286
        %v4493 = vunpack.c.l.b16 %v1287
        %v4494 = vunpack.c.l.b16 %v1288
        %v4495 = vunpack.c.l.b16 %v1289
        %v4496 = vunpack.c.l.b16 %v1290
        %v4497 = vunpack.c.l.b16 %v1291
        %v4498 = vunpack.c.l.b16 %v1292
        %v4499 = vunpack.c.l.b16 %v1293
        %v4500 = vunpack.c.l.b16 %v1294
        %v4501 = vunpack.c.l.b16 %v1295
        %v4502 = vunpack.c.l.b16 %v1296
        %v4503 = vunpack.c.l.b16 %v1297
        %v4504 = vunpack.c.l.b16 %v1298
        %v4505 = vunpack.c.l.b16 %v1299
        %v4506 = vunpack.c.l.b16 %v1300
        %v4507 = vunpack.c.l.b16 %v1301
        %v4508 = vunpack.c.l.b16 %v1302
        %v4509 = vunpack.c.l.b16 %v1303
        %v4510 = vunpack.c.l.b16 %v1304
        %v4511 = vunpack.c.l.b16 %v1305
        %v4512 = vunpack.c.l.b16 %v1306
        %v4513 = vunpack.c.l.b16 %v1307
        %v4514 = vunpack.c.l.b16 %v1308
        %v4515 = vunpack.c.l.b16 %v1309
        %v4516 = vunpack.c.l.b16 %v1310
        %v4517 = vunpack.c.l.b16 %v1311
        %v4518 = vunpack.c.l.b16 %v1312
        %v4519 = vunpack.c.l.b16 %v1313
        %v4520 = vunpack.c.l.b16 %v1314
        %v4521 = vunpack.c.l.b16 %v1315
        %v4522 = vunpack.c.l.b16 %v1316
        %v4523 = vunpack.c.l.b16 %v1317
        %v4524 = vunpack.c.l.b16 %v1318
        %v4525 = vunpack.c.l.b16 %v1319
        %v4526 = vunpack.c.l.b16 %v1320
        %v4527 = vunpack.c.l.b16 %v1321
        %v4528 = vunpack.c.l.b16 %v1322
        %v4529 = vunpack.c.l.b16 %v1323
        %v4530 = vunpack.c.l.b16 %v1324
        %v4531 = vunpack.c.l.b16 %v1325
        %v4532 = vunpack.c.l.b16 %v1326
        %v4533 = vunpack.c.l.b16 %v1327
        %v4534 = vunpack.c.l.b16 %v1328
        %v4535 = vunpack.c.l.b16 %v1329
        %v4536 = vunpack.c.l.b16 %v1330
        %v4537 = vunpack.c.l.b16 %v1331
        %v4538 = vunpack.c.l.b16 %v1332
        %v4539 = vunpack.c.l.b16 %v1333
        %v4540 = vunpack.c.l.b16 %v1334
        %v4541 = vunpack.c.l.b16 %v1335
        %v4542 = vunpack.c.l.b16 %v1336
        %v4543 = vunpack.c.l.b16 %v1337
        %v4544 = vunpack.c.l.b16 %v1338
        %v4545 = vunpack.c.l.b16 %v1339
        %v4546 = vunpack.c.l.b16 %v1340
        %v4547 = vunpack.c.l.b16 %v1341
        %v4548 = vunpack.c.l.b16 %v1342
        %v4549 = vunpack.c.l.b16 %v1343
        %v4550 = vunpack.c.l.b16 %v1344
        %v4551 = vunpack.c.l.b16 %v1345
        %v4552 = vunpack.c.l.b16 %v1346
        %v4553 = vunpack.c.l.b16 %v1347
        %v4554 = vunpack.c.l.b16 %v1348
        %v4555 = vunpack.c.l.b16 %v1349
        %v4556 = vunpack.c.l.b16 %v1350
        %v4557 = vunpack.c.l.b16 %v1351
        %v4558 = vunpack.c.l.b16 %v1352
        %v4559 = vunpack.c.l.b16 %v1353
        %v4560 = vunpack.c.l.b16 %v1354
        %v4561 = vunpack.c.l.b16 %v1355
        %v4562 = vunpack.c.l.b16 %v1356
        %v4563 = vunpack.c.l.b16 %v1357
        %v4564 = vunpack.c.l.b16 %v1358
        %v4565 = vunpack.c.l.b16 %v1359
        %v4566 = vunpack.c.l.b16 %v1360
        %v4567 = vunpack.c.l.b16 %v1361
        %v4568 = vunpack.c.l.b16 %v1362
        %v4569 = vunpack.c.l.b16 %v1363
        %v4570 = vunpack.c.l.b16 %v1364
        %v4571 = vunpack.c.l.b16 %v1365
        %v4572 = vunpack.c.l.b16 %v1366
        %v4573 = vunpack.c.l.b16 %v1367
        %v4574 = vunpack.c.l.b16 %v1368
        %v4575 = vunpack.c.l.b16 %v1369
        %v4576 = vunpack.c.l.b16 %v1370
        %v4577 = vunpack.c.l.b16 %v1371
        %v4578 = vunpack.c.l.b16 %v1372
        %v4579 = vunpack.c.l.b16 %v1373
        %v4580 = vunpack.c.l.b16 %v1374
        %v4581 = vunpack.c.l.b16 %v1375
        %v4582 = vunpack.c.l.b16 %v1376
        %v4583 = vunpack.c.l.b16 %v1377
        %v4584 = vunpack.c.l.b16 %v1378
        %v4585 = vunpack.c.l.b16 %v1379
        %v4586 = vunpack.c.l.b16 %v1380
        %v4587 = vunpack.c.l.b16 %v1381
        %v4588 = vunpack.c.l.b16 %v1382
        %v4589 = vunpack.c.l.b16 %v1383
        %v4590 = vunpack.c.l.b16 %v1384
        %v4591 = vunpack.c.l.b16 %v1385
        %v4592 = vunpack.c.l.b16 %v1386
        %v4593 = vunpack.c.l.b16 %v1387
        %v4594 = vunpack.c.l.b16 %v1388
        %v4595 = vunpack.c.l.b16 %v1389
        %v4596 = vunpack.c.l.b16 %v1390
        %v4597 = vunpack.c.l.b16 %v1391
        %v4598 = vunpack.c.l.b16 %v1392
        %v4599 = vunpack.c.l.b16 %v1393
        %v4600 = vunpack.c.l.b16 %v1394
        %v4601 = vunpack.c.l.b16 %v1395
        %v4602 = vunpack.c.l.b16 %v1396
        %v4603 = vunpack.c.l.b16 %v1397
        %v4604 = vunpack.c.l.b16 %v1398
        %v4605 = vunpack.c.l.b16 %v1399
        %v4606 = vunpack.c.l.b16 %v1400
        %v4607 = vunpack.c.l.b16 %v1401
        %v4608 = vunpack.c.l.b16 %v1402
        %v4609 = vunpack.c.l.b16 %v1403
        %v4610 = vunpack.c.l.b16 %v1404
        %v4611 = vunpack.c.l.b16 %v1405
        %v4612 = vunpack.c.l.b16 %v1406
        %v4613 = vunpack.c.l.b16 %v1407
        %v4614 = vunpack.c.l.b16 %v1408
        %v4615 = vunpack.c.l.b16 %v1409
        %v4616 = vunpack.c.l.b16 %v1410
        %v4617 = vunpack.c.l.b16 %v1411
        %v4618 = vunpack.c.l.b16 %v1412
        %v4619 = vunpack.c.l.b16 %v1413
        %v4620 = vunpack.c.l.b16 %v1414
        %v4621 = vunpack.c.l.b16 %v1415
        %v4622 = vunpack.c.l.b16 %v1416
        %v4623 = vunpack.c.l.b16 %v1417
        %v4624 = vunpack.c.l.b16 %v1418
        %v4625 = vunpack.c.l.b16 %v1419
        %v4626 = vunpack.c.l.b16 %v1420
        %v4627 = vunpack.c.l.b16 %v1421
        %v4628 = vunpack.c.l.b16 %v1422
        %v4629 = vunpack.c.l.b16 %v1423
        %v4630 = vunpack.c.l.b16 %v1424
        %v4631 = vunpack.c.l.b16 %v1425
        %v4632 = vunpack.c.l.b16 %v1426
        %v4633 = vunpack.c.l.b16 %v1427
        %v4634 = vunpack.c.l.b16 %v1428
        %v4635 = vunpack.c.l.b16 %v1429
        %v4636 = vunpack.c.l.b16 %v1430
        %v4637 = vunpack.c.l.b16 %v1431
        %v4638 = vunpack.c.l.b16 %v1432
        %v4639 = vunpack.c.l.b16 %v1433
        %v4640 = vunpack.c.l.b16 %v1434
        %v4641 = vunpack.c.l.b16 %v1435
        %v4642 = vunpack.c.l.b16 %v1436
        %v4643 = vunpack.c.l.b16 %v1437
        %v4644 = vunpack.c.l.b16 %v1438
        %v4645 = vunpack.c.l.b16 %v1439
        %v4646 = vunpack.c.l.b16 %v1440
        %v4647 = vunpack.c.l.b16 %v1441
        %v4648 = vunpack.c.l.b16 %v1442
        %v4649 = vunpack.c.l.b16 %v1443
        %v4650 = vunpack.c.l.b16 %v1444
        %v4651 = vpack.c.b16 %v3628, %v3627
        %v4652 = vpack.c.b16 %v3630, %v3629
        %v4653 = vpack.c.b16 %v3632, %v3631
        %v4654 = vpack.c.b16 %v3634, %v3633
        %v4655 = vpack.c.b16 %v3636, %v3635
        %v4656 = vpack.c.b16 %v3638, %v3637
        %v4657 = vpack.c.b16 %v3640, %v3639
        %v4658 = vpack.c.b16 %v3642, %v3641
        %v4659 = vpack.c.b16 %v3644, %v3643
        %v4660 = vpack.c.b16 %v3646, %v3645
        %v4661 = vpack.c.b16 %v3648, %v3647
        %v4662 = vpack.c.b16 %v3650, %v3649
        %v4663 = vpack.c.b16 %v3652, %v3651
        %v4664 = vpack.c.b16 %v3654, %v3653
        %v4665 = vpack.c.b16 %v3656, %v3655
        %v4666 = vpack.c.b16 %v3658, %v3657
        %v4667 = vpack.c.b16 %v3660, %v3659
        %v4668 = vpack.c.b16 %v3662, %v3661
        %v4669 = vpack.c.b16 %v3664, %v3663
        %v4670 = vpack.c.b16 %v3666, %v3665
        %v4671 = vpack.c.b16 %v3668, %v3667
        %v4672 = vpack.c.b16 %v3670, %v3669
        %v4673 = vpack.c.b16 %v3672, %v3671
        %v4674 = vpack.c.b16 %v3674, %v3673
        %v4675 = vpack.c.b16 %v3676, %v3675
        %v4676 = vpack.c.b16 %v3678, %v3677
        %v4677 = vpack.c.b16 %v3680, %v3679
        %v4678 = vpack.c.b16 %v3682, %v3681
        %v4679 = vpack.c.b16 %v3684, %v3683
        %v4680 = vpack.c.b16 %v3686, %v3685
        %v4681 = vpack.c.b16 %v3688, %v3687
        %v4682 = vpack.c.b16 %v3690, %v3689
        %v4683 = vpack.c.b16 %v3692, %v3691
        %v4684 = vpack.c.b16 %v3694, %v3693
        %v4685 = vpack.c.b16 %v3696, %v3695
        %v4686 = vpack.c.b16 %v3698, %v3697
        %v4687 = vpack.c.b16 %v3700, %v3699
        %v4688 = vpack.c.b16 %v3702, %v3701
        %v4689 = vpack.c.b16 %v3704, %v3703
        %v4690 = vpack.c.b16 %v3706, %v3705
        %v4691 = vpack.c.b16 %v3708, %v3707
        %v4692 = vpack.c.b16 %v3710, %v3709
        %v4693 = vpack.c.b16 %v3712, %v3711
        %v4694 = vpack.c.b16 %v3714, %v3713
        %v4695 = vpack.c.b16 %v3716, %v3715
        %v4696 = vpack.c.b16 %v3718, %v3717
        %v4697 = vpack.c.b16 %v3720, %v3719
        %v4698 = vpack.c.b16 %v3722, %v3721
        %v4699 = vpack.c.b16 %v3724, %v3723
        %v4700 = vpack.c.b16 %v3726, %v3725
        %v4701 = vpack.c.b16 %v3728, %v3727
        %v4702 = vpack.c.b16 %v3730, %v3729
        %v4703 = vpack.c.b16 %v3732, %v3731
        %v4704 = vpack.c.b16 %v3734, %v3733
        %v4705 = vpack.c.b16 %v3736, %v3735
        %v4706 = vpack.c.b16 %v3738, %v3737
        %v4707 = vpack.c.b16 %v3740, %v3739
        %v4708 = vpack.c.b16 %v3742, %v3741
        %v4709 = vpack.c.b16 %v3744, %v3743
        %v4710 = vpack.c.b16 %v3746, %v3745
        %v4711 = vpack.c.b16 %v3748, %v3747
        %v4712 = vpack.c.b16 %v3750, %v3749
        %v4713 = vpack.c.b16 %v3752, %v3751
        %v4714 = vpack.c.b16 %v3754, %v3753
        %v4715 = vpack.c.b16 %v3756, %v3755
        %v4716 = vpack.c.b16 %v3758, %v3757
        %v4717 = vpack.c.b16 %v3760, %v3759
        %v4718 = vpack.c.b16 %v3762, %v3761
        %v4719 = vpack.c.b16 %v3764, %v3763
        %v4720 = vpack.c.b16 %v3766, %v3765
        %v4721 = vpack.c.b16 %v3768, %v3767
        %v4722 = vpack.c.b16 %v3770, %v3769
        %v4723 = vpack.c.b16 %v3772, %v3771
        %v4724 = vpack.c.b16 %v3774, %v3773
        %v4725 = vpack.c.b16 %v3776, %v3775
        %v4726 = vpack.c.b16 %v3778, %v3777
        %v4727 = vpack.c.b16 %v3780, %v3779
        %v4728 = vpack.c.b16 %v3782, %v3781
        %v4729 = vpack.c.b16 %v3784, %v3783
        %v4730 = vpack.c.b16 %v3786, %v3785
        %v4731 = vpack.c.b16 %v3788, %v3787
        %v4732 = vpack.c.b16 %v3790, %v3789
        %v4733 = vpack.c.b16 %v3792, %v3791
        %v4734 = vpack.c.b16 %v3794, %v3793
        %v4735 = vpack.c.b16 %v3796, %v3795
        %v4736 = vpack.c.b16 %v3798, %v3797
        %v4737 = vpack.c.b16 %v3800, %v3799
        %v4738 = vpack.c.b16 %v3802, %v3801
        %v4739 = vpack.c.b16 %v3804, %v3803
        %v4740 = vpack.c.b16 %v3806, %v3805
        %v4741 = vpack.c.b16 %v3808, %v3807
        %v4742 = vpack.c.b16 %v3810, %v3809
        %v4743 = vpack.c.b16 %v3812, %v3811
        %v4744 = vpack.c.b16 %v3814, %v3813
        %v4745 = vpack.c.b16 %v3816, %v3815
        %v4746 = vpack.c.b16 %v3818, %v3817
        %v4747 = vpack.c.b16 %v3820, %v3819
        %v4748 = vpack.c.b16 %v3822, %v3821
        %v4749 = vpack.c.b16 %v3824, %v3823
        %v4750 = vpack.c.b16 %v3826, %v3825
        %v4751 = vpack.c.b16 %v3828, %v3827
        %v4752 = vpack.c.b16 %v3830, %v3829
        %v4753 = vpack.c.b16 %v3832, %v3831
        %v4754 = vpack.c.b16 %v3834, %v3833
        %v4755 = vpack.c.b16 %v3836, %v3835
        %v4756 = vpack.c.b16 %v3838, %v3837
        %v4757 = vpack.c.b16 %v3840, %v3839
        %v4758 = vpack.c.b16 %v3842, %v3841
        %v4759 = vpack.c.b16 %v3844, %v3843
        %v4760 = vpack.c.b16 %v3846, %v3845
        %v4761 = vpack.c.b16 %v3848, %v3847
        %v4762 = vpack.c.b16 %v3850, %v3849
        %v4763 = vpack.c.b16 %v3852, %v3851
        %v4764 = vpack.c.b16 %v3854, %v3853
        %v4765 = vpack.c.b16 %v3856, %v3855
        %v4766 = vpack.c.b16 %v3858, %v3857
        %v4767 = vpack.c.b16 %v3860, %v3859
        %v4768 = vpack.c.b16 %v3862, %v3861
        %v4769 = vpack.c.b16 %v3864, %v3863
        %v4770 = vpack.c.b16 %v3866, %v3865
        %v4771 = vpack.c.b16 %v3868, %v3867
        %v4772 = vpack.c.b16 %v3870, %v3869
        %v4773 = vpack.c.b16 %v3872, %v3871
        %v4774 = vpack.c.b16 %v3874, %v3873
        %v4775 = vpack.c.b16 %v3876, %v3875
        %v4776 = vpack.c.b16 %v3878, %v3877
        %v4777 = vpack.c.b16 %v3880, %v3879
        %v4778 = vpack.c.b16 %v3882, %v3881
        %v4779 = vpack.c.b16 %v3884, %v3883
        %v4780 = vpack.c.b16 %v3886, %v3885
        %v4781 = vpack.c.b16 %v3888, %v3887
        %v4782 = vpack.c.b16 %v3890, %v3889
        %v4783 = vpack.c.b16 %v3892, %v3891
        %v4784 = vpack.c.b16 %v3894, %v3893
        %v4785 = vpack.c.b16 %v3896, %v3895
        %v4786 = vpack.c.b16 %v3898, %v3897
        %v4787 = vpack.c.b16 %v3900, %v3899
        %v4788 = vpack.c.b16 %v3902, %v3901
        %v4789 = vpack.c.b16 %v3904, %v3903
        %v4790 = vpack.c.b16 %v3906, %v3905
        %v4791 = vpack.c.b16 %v3908, %v3907
        %v4792 = vpack.c.b16 %v3910, %v3909
        %v4793 = vpack.c.b16 %v3912, %v3911
        %v4794 = vpack.c.b16 %v3914, %v3913
        %v4795 = vpack.c.b16 %v3916, %v3915
        %v4796 = vpack.c.b16 %v3918, %v3917
        %v4797 = vpack.c.b16 %v3920, %v3919
        %v4798 = vpack.c.b16 %v3922, %v3921
        %v4799 = vpack.c.b16 %v3924, %v3923
        %v4800 = vpack.c.b16 %v3926, %v3925
        %v4801 = vpack.c.b16 %v3928, %v3927
        %v4802 = vpack.c.b16 %v3930, %v3929
        %v4803 = vpack.c.b16 %v3932, %v3931
        %v4804 = vpack.c.b16 %v3934, %v3933
        %v4805 = vpack.c.b16 %v3936, %v3935
        %v4806 = vpack.c.b16 %v3938, %v3937
        %v4807 = vpack.c.b16 %v3940, %v3939
        %v4808 = vpack.c.b16 %v3942, %v3941
        %v4809 = vpack.c.b16 %v3944, %v3943
        %v4810 = vpack.c.b16 %v3946, %v3945
        %v4811 = vpack.c.b16 %v3948, %v3947
        %v4812 = vpack.c.b16 %v3950, %v3949
        %v4813 = vpack.c.b16 %v3952, %v3951
        %v4814 = vpack.c.b16 %v3954, %v3953
        %v4815 = vpack.c.b16 %v3956, %v3955
        %v4816 = vpack.c.b16 %v3958, %v3957
        %v4817 = vpack.c.b16 %v3960, %v3959
        %v4818 = vpack.c.b16 %v3962, %v3961
        %v4819 = vpack.c.b16 %v3964, %v3963
        %v4820 = vpack.c.b16 %v3966, %v3965
        %v4821 = vpack.c.b16 %v3968, %v3967
        %v4822 = vpack.c.b16 %v3970, %v3969
        %v4823 = vpack.c.b16 %v3972, %v3971
        %v4824 = vpack.c.b16 %v3974, %v3973
        %v4825 = vpack.c.b16 %v3976, %v3975
        %v4826 = vpack.c.b16 %v3978, %v3977
        %v4827 = vpack.c.b16 %v3980, %v3979
        %v4828 = vpack.c.b16 %v3982, %v3981
        %v4829 = vpack.c.b16 %v3984, %v3983
        %v4830 = vpack.c.b16 %v3986, %v3985
        %v4831 = vpack.c.b16 %v3988, %v3987
        %v4832 = vpack.c.b16 %v3990, %v3989
        %v4833 = vpack.c.b16 %v3992, %v3991
        %v4834 = vpack.c.b16 %v3994, %v3993
        %v4835 = vpack.c.b16 %v3996, %v3995
        %v4836 = vpack.c.b16 %v3998, %v3997
        %v4837 = vpack.c.b16 %v4000, %v3999
        %v4838 = vpack.c.b16 %v4002, %v4001
        %v4839 = vpack.c.b16 %v4004, %v4003
        %v4840 = vpack.c.b16 %v4006, %v4005
        %v4841 = vpack.c.b16 %v4008, %v4007
        %v4842 = vpack.c.b16 %v4010, %v4009
        %v4843 = vpack.c.b16 %v4012, %v4011
        %v4844 = vpack.c.b16 %v4014, %v4013
        %v4845 = vpack.c.b16 %v4016, %v4015
        %v4846 = vpack.c.b16 %v4018, %v4017
        %v4847 = vpack.c.b16 %v4020, %v4019
        %v4848 = vpack.c.b16 %v4022, %v4021
        %v4849 = vpack.c.b16 %v4024, %v4023
        %v4850 = vpack.c.b16 %v4026, %v4025
        %v4851 = vpack.c.b16 %v4028, %v4027
        %v4852 = vpack.c.b16 %v4030, %v4029
        %v4853 = vpack.c.b16 %v4032, %v4031
        %v4854 = vpack.c.b16 %v4034, %v4033
        %v4855 = vpack.c.b16 %v4036, %v4035
        %v4856 = vpack.c.b16 %v4038, %v4037
        %v4857 = vpack.c.b16 %v4040, %v4039
        %v4858 = vpack.c.b16 %v4042, %v4041
        %v4859 = vpack.c.b16 %v4044, %v4043
        %v4860 = vpack.c.b16 %v4046, %v4045
        %v4861 = vpack.c.b16 %v4048, %v4047
        %v4862 = vpack.c.b16 %v4050, %v4049
        %v4863 = vpack.c.b16 %v4052, %v4051
        %v4864 = vpack.c.b16 %v4054, %v4053
        %v4865 = vpack.c.b16 %v4056, %v4055
        %v4866 = vpack.c.b16 %v4058, %v4057
        %v4867 = vpack.c.b16 %v4060, %v4059
        %v4868 = vpack.c.b16 %v4062, %v4061
        %v4869 = vpack.c.b16 %v4064, %v4063
        %v4870 = vpack.c.b16 %v4066, %v4065
        %v4871 = vpack.c.b16 %v4068, %v4067
        %v4872 = vpack.c.b16 %v4070, %v4069
        %v4873 = vpack.c.b16 %v4072, %v4071
        %v4874 = vpack.c.b16 %v4074, %v4073
        %v4875 = vpack.c.b16 %v4076, %v4075
        %v4876 = vpack.c.b16 %v4078, %v4077
        %v4877 = vpack.c.b16 %v4080, %v4079
        %v4878 = vpack.c.b16 %v4082, %v4081
        %v4879 = vpack.c.b16 %v4084, %v4083
        %v4880 = vpack.c.b16 %v4086, %v4085
        %v4881 = vpack.c.b16 %v4088, %v4087
        %v4882 = vpack.c.b16 %v4090, %v4089
        %v4883 = vpack.c.b16 %v4092, %v4091
        %v4884 = vpack.c.b16 %v4094, %v4093
        %v4885 = vpack.c.b16 %v4096, %v4095
        %v4886 = vpack.c.b16 %v4098, %v4097
        %v4887 = vpack.c.b16 %v4100, %v4099
        %v4888 = vpack.c.b16 %v4102, %v4101
        %v4889 = vpack.c.b16 %v4104, %v4103
        %v4890 = vpack.c.b16 %v4106, %v4105
        %v4891 = vpack.c.b16 %v4108, %v4107
        %v4892 = vpack.c.b16 %v4110, %v4109
        %v4893 = vpack.c.b16 %v4112, %v4111
        %v4894 = vpack.c.b16 %v4114, %v4113
        %v4895 = vpack.c.b16 %v4116, %v4115
        %v4896 = vpack.c.b16 %v4118, %v4117
        %v4897 = vpack.c.b16 %v4120, %v4119
        %v4898 = vpack.c.b16 %v4122, %v4121
        %v4899 = vpack.c.b16 %v4124, %v4123
        %v4900 = vpack.c.b16 %v4126, %v4125
        %v4901 = vpack.c.b16 %v4128, %v4127
        %v4902 = vpack.c.b16 %v4130, %v4129
        %v4903 = vpack.c.b16 %v4132, %v4131
        %v4904 = vpack.c.b16 %v4134, %v4133
        %v4905 = vpack.c.b16 %v4136, %v4135
        %v4906 = vpack.c.b16 %v4138, %v4137
        %v4907 = vpack.c.b16 %v4140, %v4139
        %v4908 = vpack.c.b16 %v4142, %v4141
        %v4909 = vpack.c.b16 %v4144, %v4143
        %v4910 = vpack.c.b16 %v4146, %v4145
        %v4911 = vpack.c.b16 %v4148, %v4147
        %v4912 = vpack.c.b16 %v4150, %v4149
        %v4913 = vpack.c.b16 %v4152, %v4151
        %v4914 = vpack.c.b16 %v4154, %v4153
        %v4915 = vpack.c.b16 %v4156, %v4155
        %v4916 = vpack.c.b16 %v4158, %v4157
        %v4917 = vpack.c.b16 %v4160, %v4159
        %v4918 = vpack.c.b16 %v4162, %v4161
        %v4919 = vpack.c.b16 %v4164, %v4163
        %v4920 = vpack.c.b16 %v4166, %v4165
        %v4921 = vpack.c.b16 %v4168, %v4167
        %v4922 = vpack.c.b16 %v4170, %v4169
        %v4923 = vpack.c.b16 %v4172, %v4171
        %v4924 = vpack.c.b16 %v4174, %v4173
        %v4925 = vpack.c.b16 %v4176, %v4175
        %v4926 = vpack.c.b16 %v4178, %v4177
        %v4927 = vpack.c.b16 %v4180, %v4179
        %v4928 = vpack.c.b16 %v4182, %v4181
        %v4929 = vpack.c.b16 %v4184, %v4183
        %v4930 = vpack.c.b16 %v4186, %v4185
        %v4931 = vpack.c.b16 %v4188, %v4187
        %v4932 = vpack.c.b16 %v4190, %v4189
        %v4933 = vpack.c.b16 %v4192, %v4191
        %v4934 = vpack.c.b16 %v4194, %v4193
        %v4935 = vpack.c.b16 %v4196, %v4195
        %v4936 = vpack.c.b16 %v4198, %v4197
        %v4937 = vpack.c.b16 %v4200, %v4199
        %v4938 = vpack.c.b16 %v4202, %v4201
        %v4939 = vpack.c.b16 %v4204, %v4203
        %v4940 = vpack.c.b16 %v4206, %v4205
        %v4941 = vpack.c.b16 %v4208, %v4207
        %v4942 = vpack.c.b16 %v4210, %v4209
        %v4943 = vpack.c.b16 %v4212, %v4211
        %v4944 = vpack.c.b16 %v4214, %v4213
        %v4945 = vpack.c.b16 %v4216, %v4215
        %v4946 = vpack.c.b16 %v4218, %v4217
        %v4947 = vpack.c.b16 %v4220, %v4219
        %v4948 = vpack.c.b16 %v4222, %v4221
        %v4949 = vpack.c.b16 %v4224, %v4223
        %v4950 = vpack.c.b16 %v4226, %v4225
        %v4951 = vpack.c.b16 %v4228, %v4227
        %v4952 = vpack.c.b16 %v4230, %v4229
        %v4953 = vpack.c.b16 %v4232, %v4231
        %v4954 = vpack.c.b16 %v4234, %v4233
        %v4955 = vpack.c.b16 %v4236, %v4235
        %v4956 = vpack.c.b16 %v4238, %v4237
        %v4957 = vpack.c.b16 %v4240, %v4239
        %v4958 = vpack.c.b16 %v4242, %v4241
        %v4959 = vpack.c.b16 %v4244, %v4243
        %v4960 = vpack.c.b16 %v4246, %v4245
        %v4961 = vpack.c.b16 %v4248, %v4247
        %v4962 = vpack.c.b16 %v4250, %v4249
        %v4963 = vpack.c.b16 %v4252, %v4251
        %v4964 = vpack.c.b16 %v4254, %v4253
        %v4965 = vpack.c.b16 %v4256, %v4255
        %v4966 = vpack.c.b16 %v4258, %v4257
        %v4967 = vpack.c.b16 %v4260, %v4259
        %v4968 = vpack.c.b16 %v4262, %v4261
        %v4969 = vpack.c.b16 %v4264, %v4263
        %v4970 = vpack.c.b16 %v4266, %v4265
        %v4971 = vpack.c.b16 %v4268, %v4267
        %v4972 = vpack.c.b16 %v4270, %v4269
        %v4973 = vpack.c.b16 %v4272, %v4271
        %v4974 = vpack.c.b16 %v4274, %v4273
        %v4975 = vpack.c.b16 %v4276, %v4275
        %v4976 = vpack.c.b16 %v4278, %v4277
        %v4977 = vpack.c.b16 %v4280, %v4279
        %v4978 = vpack.c.b16 %v4282, %v4281
        %v4979 = vpack.c.b16 %v4284, %v4283
        %v4980 = vpack.c.b16 %v4286, %v4285
        %v4981 = vpack.c.b16 %v4288, %v4287
        %v4982 = vpack.c.b16 %v4290, %v4289
        %v4983 = vpack.c.b16 %v4292, %v4291
        %v4984 = vpack.c.b16 %v4294, %v4293
        %v4985 = vpack.c.b16 %v4296, %v4295
        %v4986 = vpack.c.b16 %v4298, %v4297
        %v4987 = vpack.c.b16 %v4300, %v4299
        %v4988 = vpack.c.b16 %v4302, %v4301
        %v4989 = vpack.c.b16 %v4304, %v4303
        %v4990 = vpack.c.b16 %v4306, %v4305
        %v4991 = vpack.c.b16 %v4308, %v4307
        %v4992 = vpack.c.b16 %v4310, %v4309
        %v4993 = vpack.c.b16 %v4312, %v4311
        %v4994 = vpack.c.b16 %v4314, %v4313
        %v4995 = vpack.c.b16 %v4316, %v4315
        %v4996 = vpack.c.b16 %v4318, %v4317
        %v4997 = vpack.c.b16 %v4320, %v4319
        %v4998 = vpack.c.b16 %v4322, %v4321
        %v4999 = vpack.c.b16 %v4324, %v4323
        %v5000 = vpack.c.b16 %v4326, %v4325
        %v5001 = vpack.c.b16 %v4328, %v4327
        %v5002 = vpack.c.b16 %v4330, %v4329
        %v5003 = vpack.c.b16 %v4332, %v4331
        %v5004 = vpack.c.b16 %v4334, %v4333
        %v5005 = vpack.c.b16 %v4336, %v4335
        %v5006 = vpack.c.b16 %v4338, %v4337
        %v5007 = vpack.c.b16 %v4340, %v4339
        %v5008 = vpack.c.b16 %v4342, %v4341
        %v5009 = vpack.c.b16 %v4344, %v4343
        %v5010 = vpack.c.b16 %v4346, %v4345
        %v5011 = vpack.c.b16 %v4348, %v4347
        %v5012 = vpack.c.b16 %v4350, %v4349
        %v5013 = vpack.c.b16 %v4352, %v4351
        %v5014 = vpack.c.b16 %v4354, %v4353
        %v5015 = vpack.c.b16 %v4356, %v4355
        %v5016 = vpack.c.b16 %v4358, %v4357
        %v5017 = vpack.c.b16 %v4360, %v4359
        %v5018 = vpack.c.b16 %v4362, %v4361
        %v5019 = vpack.c.b16 %v4364, %v4363
        %v5020 = vpack.c.b16 %v4366, %v4365
        %v5021 = vpack.c.b16 %v4368, %v4367
        %v5022 = vpack.c.b16 %v4370, %v4369
        %v5023 = vpack.c.b16 %v4372, %v4371
        %v5024 = vpack.c.b16 %v4374, %v4373
        %v5025 = vpack.c.b16 %v4376, %v4375
        %v5026 = vpack.c.b16 %v4378, %v4377
        %v5027 = vpack.c.b16 %v4380, %v4379
        %v5028 = vpack.c.b16 %v4382, %v4381
        %v5029 = vpack.c.b16 %v4384, %v4383
        %v5030 = vpack.c.b16 %v4386, %v4385
        %v5031 = vpack.c.b16 %v4388, %v4387
        %v5032 = vpack.c.b16 %v4390, %v4389
        %v5033 = vpack.c.b16 %v4392, %v4391
        %v5034 = vpack.c.b16 %v4394, %v4393
        %v5035 = vpack.c.b16 %v4396, %v4395
        %v5036 = vpack.c.b16 %v4398, %v4397
        %v5037 = vpack.c.b16 %v4400, %v4399
        %v5038 = vpack.c.b16 %v4402, %v4401
        %v5039 = vpack.c.b16 %v4404, %v4403
        %v5040 = vpack.c.b16 %v4406, %v4405
        %v5041 = vpack.c.b16 %v4408, %v4407
        %v5042 = vpack.c.b16 %v4410, %v4409
        %v5043 = vpack.c.b16 %v4412, %v4411
        %v5044 = vpack.c.b16 %v4414, %v4413
        %v5045 = vpack.c.b16 %v4416, %v4415
        %v5046 = vpack.c.b16 %v4418, %v4417
        %v5047 = vpack.c.b16 %v4420, %v4419
        %v5048 = vpack.c.b16 %v4422, %v4421
        %v5049 = vpack.c.b16 %v4424, %v4423
        %v5050 = vpack.c.b16 %v4426, %v4425
        %v5051 = vpack.c.b16 %v4428, %v4427
        %v5052 = vpack.c.b16 %v4430, %v4429
        %v5053 = vpack.c.b16 %v4432, %v4431
        %v5054 = vpack.c.b16 %v4434, %v4433
        %v5055 = vpack.c.b16 %v4436, %v4435
        %v5056 = vpack.c.b16 %v4438, %v4437
        %v5057 = vpack.c.b16 %v4440, %v4439
        %v5058 = vpack.c.b16 %v4442, %v4441
        %v5059 = vpack.c.b16 %v4444, %v4443
        %v5060 = vpack.c.b16 %v4446, %v4445
        %v5061 = vpack.c.b16 %v4448, %v4447
        %v5062 = vpack.c.b16 %v4450, %v4449
        %v5063 = vpack.c.b16 %v4452, %v4451
        %v5064 = vpack.c.b16 %v4454, %v4453
        %v5065 = vpack.c.b16 %v4456, %v4455
        %v5066 = vpack.c.b16 %v4458, %v4457
        %v5067 = vpack.c.b16 %v4460, %v4459
        %v5068 = vpack.c.b16 %v4462, %v4461
        %v5069 = vpack.c.b16 %v4464, %v4463
        %v5070 = vpack.c.b16 %v4466, %v4465
        %v5071 = vpack.c.b16 %v4468, %v4467
        %v5072 = vpack.c.b16 %v4470, %v4469
        %v5073 = vpack.c.b16 %v4472, %v4471
        %v5074 = vpack.c.b16 %v4474, %v4473
        %v5075 = vpack.c.b16 %v4476, %v4475
        %v5076 = vpack.c.b16 %v4478, %v4477
        %v5077 = vpack.c.b16 %v4480, %v4479
        %v5078 = vpack.c.b16 %v4482, %v4481
        %v5079 = vpack.c.b16 %v4484, %v4483
        %v5080 = vpack.c.b16 %v4486, %v4485
        %v5081 = vpack.c.b16 %v4488, %v4487
        %v5082 = vpack.c.b16 %v4490, %v4489
        %v5083 = vpack.c.b16 %v4492, %v4491
        %v5084 = vpack.c.b16 %v4494, %v4493
        %v5085 = vpack.c.b16 %v4496, %v4495
        %v5086 = vpack.c.b16 %v4498, %v4497
        %v5087 = vpack.c.b16 %v4500, %v4499
        %v5088 = vpack.c.b16 %v4502, %v4501
        %v5089 = vpack.c.b16 %v4504, %v4503
        %v5090 = vpack.c.b16 %v4506, %v4505
        %v5091 = vpack.c.b16 %v4508, %v4507
        %v5092 = vpack.c.b16 %v4510, %v4509
        %v5093 = vpack.c.b16 %v4512, %v4511
        %v5094 = vpack.c.b16 %v4514, %v4513
        %v5095 = vpack.c.b16 %v4516, %v4515
        %v5096 = vpack.c.b16 %v4518, %v4517
        %v5097 = vpack.c.b16 %v4520, %v4519
        %v5098 = vpack.c.b16 %v4522, %v4521
        %v5099 = vpack.c.b16 %v4524, %v4523
        %v5100 = vpack.c.b16 %v4526, %v4525
        %v5101 = vpack.c.b16 %v4528, %v4527
        %v5102 = vpack.c.b16 %v4530, %v4529
        %v5103 = vpack.c.b16 %v4532, %v4531
        %v5104 = vpack.c.b16 %v4534, %v4533
        %v5105 = vpack.c.b16 %v4536, %v4535
        %v5106 = vpack.c.b16 %v4538, %v4537
        %v5107 = vpack.c.b16 %v4540, %v4539
        %v5108 = vpack.c.b16 %v4542, %v4541
        %v5109 = vpack.c.b16 %v4544, %v4543
        %v5110 = vpack.c.b16 %v4546, %v4545
        %v5111 = vpack.c.b16 %v4548, %v4547
        %v5112 = vpack.c.b16 %v4550, %v4549
        %v5113 = vpack.c.b16 %v4552, %v4551
        %v5114 = vpack.c.b16 %v4554, %v4553
        %v5115 = vpack.c.b16 %v4556, %v4555
        %v5116 = vpack.c.b16 %v4558, %v4557
        %v5117 = vpack.c.b16 %v4560, %v4559
        %v5118 = vpack.c.b16 %v4562, %v4561
        %v5119 = vpack.c.b16 %v4564, %v4563
        %v5120 = vpack.c.b16 %v4566, %v4565
        %v5121 = vpack.c.b16 %v4568, %v4567
        %v5122 = vpack.c.b16 %v4570, %v4569
        %v5123 = vpack.c.b16 %v4572, %v4571
        %v5124 = vpack.c.b16 %v4574, %v4573
        %v5125 = vpack.c.b16 %v4576, %v4575
        %v5126 = vpack.c.b16 %v4578, %v4577
        %v5127 = vpack.c.b16 %v4580, %v4579
        %v5128 = vpack.c.b16 %v4582, %v4581
        %v5129 = vpack.c.b16 %v4584, %v4583
        %v5130 = vpack.c.b16 %v4586, %v4585
        %v5131 = vpack.c.b16 %v4588, %v4587
        %v5132 = vpack.c.b16 %v4590, %v4589
        %v5133 = vpack.c.b16 %v4592, %v4591
        %v5134 = vpack.c.b16 %v4594, %v4593
        %v5135 = vpack.c.b16 %v4596, %v4595
        %v5136 = vpack.c.b16 %v4598, %v4597
        %v5137 = vpack.c.b16 %v4600, %v4599
        %v5138 = vpack.c.b16 %v4602, %v4601
        %v5139 = vpack.c.b16 %v4604, %v4603
        %v5140 = vpack.c.b16 %v4606, %v4605
        %v5141 = vpack.c.b16 %v4608, %v4607
        %v5142 = vpack.c.b16 %v4610, %v4609
        %v5143 = vpack.c.b16 %v4612, %v4611
        %v5144 = vpack.c.b16 %v4614, %v4613
        %v5145 = vpack.c.b16 %v4616, %v4615
        %v5146 = vpack.c.b16 %v4618, %v4617
        %v5147 = vpack.c.b16 %v4620, %v4619
        %v5148 = vpack.c.b16 %v4622, %v4621
        %v5149 = vpack.c.b16 %v4624, %v4623
        %v5150 = vpack.c.b16 %v4626, %v4625
        %v5151 = vpack.c.b16 %v4628, %v4627
        %v5152 = vpack.c.b16 %v4630, %v4629
        %v5153 = vpack.c.b16 %v4632, %v4631
        %v5154 = vpack.c.b16 %v4634, %v4633
        %v5155 = vpack.c.b16 %v4636, %v4635
        %v5156 = vpack.c.b16 %v4638, %v4637
        %v5157 = vpack.c.b16 %v4640, %v4639
        %v5158 = vpack.c.b16 %v4642, %v4641
        %v5159 = vpack.c.b16 %v4644, %v4643
        %v5160 = vpack.c.b16 %v4646, %v4645
        %v5161 = vpack.c.b16 %v4648, %v4647
        %v5162 = vpack.c.b16 %v4650, %v4649
        %5675 = vmatprep.subr.bf16.mxu0 0
        %5676 = vmatpush1.bf16.xpose.msra.mxu0 %v4651
        %5677 = vmatprep.subr.bf16.mxu0 0
        %5678 = vmatpush1.bf16.xpose.msra.mxu0 %v4652
        %5679 = vmatprep.subr.bf16.mxu0 0
        %5680 = vmatpush1.bf16.xpose.msra.mxu0 %v4653
        %5681 = vmatprep.subr.bf16.mxu0 0
        %5682 = vmatpush1.bf16.xpose.msra.mxu0 %v4654
        %5683 = vmatprep.subr.bf16.mxu0 0
        %5684 = vmatpush1.bf16.xpose.msra.mxu0 %v4655
        %5685 = vmatprep.subr.bf16.mxu0 0
        %5686 = vmatpush1.bf16.xpose.msra.mxu0 %v4656
        %5687 = vmatprep.subr.bf16.mxu0 0
        %5688 = vmatpush1.bf16.xpose.msra.mxu0 %v4657
        %5689 = vmatprep.subr.bf16.mxu0 0
        %5690 = vmatpush1.bf16.xpose.msra.mxu0 %v4658
        %5691 = vmatprep.subr.bf16.mxu0 0
        %5692 = vmatpush1.bf16.xpose.msra.mxu0 %v4659
        %5693 = vmatprep.subr.bf16.mxu0 0
        %5694 = vmatpush1.bf16.xpose.msra.mxu0 %v4660
        %5695 = vmatprep.subr.bf16.mxu0 0
        %5696 = vmatpush1.bf16.xpose.msra.mxu0 %v4661
        %5697 = vmatprep.subr.bf16.mxu0 0
        %5698 = vmatpush1.bf16.xpose.msra.mxu0 %v4662
        %5699 = vmatprep.subr.bf16.mxu0 0
        %5700 = vmatpush1.bf16.xpose.msra.mxu0 %v4663
        %5701 = vmatprep.subr.bf16.mxu0 0
        %5702 = vmatpush1.bf16.xpose.msra.mxu0 %v4664
        %5703 = vmatprep.subr.bf16.mxu0 0
        %5704 = vmatpush1.bf16.xpose.msra.mxu0 %v4665
        %5705 = vmatprep.subr.bf16.mxu0 0
        %5706 = vmatpush1.bf16.xpose.msra.mxu0 %v4666
        %5707 = vmatprep.mubr.bf16.mxu0 0
        %5708 = vmatmul.mubr.bf16.gmra.mrb[0].mxu0 %v2601
        %v5709 = vpop.f32.mrb[0].mxu0
        %v5710 = vadd.f32 %v2469, %v5709
        %v5711 = vpop.f32.mrb[0].mxu0
        %v5712 = vadd.f32 %v2470, %v5711
        %v5713 = vpop.f32.mrb[0].mxu0
        %v5714 = vadd.f32 %v2533, %v5713
        %v5715 = vpop.f32.mrb[0].mxu0
        %v5716 = vadd.f32 %v2534, %v5715
        %5717 = vdwg.mxu0
        %5718 = vmatprep.subr.bf16.mxu0 0
        %5719 = vmatpush1.bf16.xpose.msra.mxu0 %v4667
        %5720 = vmatprep.subr.bf16.mxu0 0
        %5721 = vmatpush1.bf16.xpose.msra.mxu0 %v4668
        %5722 = vmatprep.subr.bf16.mxu0 0
        %5723 = vmatpush1.bf16.xpose.msra.mxu0 %v4669
        %5724 = vmatprep.subr.bf16.mxu0 0
        %5725 = vmatpush1.bf16.xpose.msra.mxu0 %v4670
        %5726 = vmatprep.subr.bf16.mxu0 0
        %5727 = vmatpush1.bf16.xpose.msra.mxu0 %v4671
        %5728 = vmatprep.subr.bf16.mxu0 0
        %5729 = vmatpush1.bf16.xpose.msra.mxu0 %v4672
        %5730 = vmatprep.subr.bf16.mxu0 0
        %5731 = vmatpush1.bf16.xpose.msra.mxu0 %v4673
        %5732 = vmatprep.subr.bf16.mxu0 0
        %5733 = vmatpush1.bf16.xpose.msra.mxu0 %v4674
        %5734 = vmatprep.subr.bf16.mxu0 0
        %5735 = vmatpush1.bf16.xpose.msra.mxu0 %v4675
        %5736 = vmatprep.subr.bf16.mxu0 0
        %5737 = vmatpush1.bf16.xpose.msra.mxu0 %v4676
        %5738 = vmatprep.subr.bf16.mxu0 0
        %5739 = vmatpush1.bf16.xpose.msra.mxu0 %v4677
        %5740 = vmatprep.subr.bf16.mxu0 0
        %5741 = vmatpush1.bf16.xpose.msra.mxu0 %v4678
        %5742 = vmatprep.subr.bf16.mxu0 0
        %5743 = vmatpush1.bf16.xpose.msra.mxu0 %v4679
        %5744 = vmatprep.subr.bf16.mxu0 0
        %5745 = vmatpush1.bf16.xpose.msra.mxu0 %v4680
        %5746 = vmatprep.subr.bf16.mxu0 0
        %5747 = vmatpush1.bf16.xpose.msra.mxu0 %v4681
        %5748 = vmatprep.subr.bf16.mxu0 0
        %5749 = vmatpush1.bf16.xpose.msra.mxu0 %v4682
        %5750 = vmatprep.mubr.bf16.mxu0 0
        %5751 = vmatmul.mubr.bf16.gmra.mrb[0].mxu0 %v2601
        %v5752 = vpop.f32.mrb[0].mxu0
        %v5753 = vadd.f32 %v2471, %v5752
        %v5754 = vpop.f32.mrb[0].mxu0
        %v5755 = vadd.f32 %v2472, %v5754
        %v5756 = vpop.f32.mrb[0].mxu0
        %v5757 = vadd.f32 %v2535, %v5756
        %v5758 = vpop.f32.mrb[0].mxu0
        %v5759 = vadd.f32 %v2536, %v5758
        %5760 = vdwg.mxu0
        %5761 = vmatprep.subr.bf16.mxu0 0
        %5762 = vmatpush1.bf16.xpose.msra.mxu0 %v4683
        %5763 = vmatprep.subr.bf16.mxu0 0
        %5764 = vmatpush1.bf16.xpose.msra.mxu0 %v4684
        %5765 = vmatprep.subr.bf16.mxu0 0
        %5766 = vmatpush1.bf16.xpose.msra.mxu0 %v4685
        %5767 = vmatprep.subr.bf16.mxu0 0
        %5768 = vmatpush1.bf16.xpose.msra.mxu0 %v4686
        %5769 = vmatprep.subr.bf16.mxu0 0
        %5770 = vmatpush1.bf16.xpose.msra.mxu0 %v4687
        %5771 = vmatprep.subr.bf16.mxu0 0
        %5772 = vmatpush1.bf16.xpose.msra.mxu0 %v4688
        %5773 = vmatprep.subr.bf16.mxu0 0
        %5774 = vmatpush1.bf16.xpose.msra.mxu0 %v4689
        %5775 = vmatprep.subr.bf16.mxu0 0
        %5776 = vmatpush1.bf16.xpose.msra.mxu0 %v4690
        %5777 = vmatprep.subr.bf16.mxu0 0
        %5778 = vmatpush1.bf16.xpose.msra.mxu0 %v4691
        %5779 = vmatprep.subr.bf16.mxu0 0
        %5780 = vmatpush1.bf16.xpose.msra.mxu0 %v4692
        %5781 = vmatprep.subr.bf16.mxu0 0
        %5782 = vmatpush1.bf16.xpose.msra.mxu0 %v4693
        %5783 = vmatprep.subr.bf16.mxu0 0
        %5784 = vmatpush1.bf16.xpose.msra.mxu0 %v4694
        %5785 = vmatprep.subr.bf16.mxu0 0
        %5786 = vmatpush1.bf16.xpose.msra.mxu0 %v4695
        %5787 = vmatprep.subr.bf16.mxu0 0
        %5788 = vmatpush1.bf16.xpose.msra.mxu0 %v4696
        %5789 = vmatprep.subr.bf16.mxu0 0
        %5790 = vmatpush1.bf16.xpose.msra.mxu0 %v4697
        %5791 = vmatprep.subr.bf16.mxu0 0
        %5792 = vmatpush1.bf16.xpose.msra.mxu0 %v4698
        %5793 = vmatprep.mubr.bf16.mxu0 0
        %5794 = vmatmul.mubr.bf16.gmra.mrb[0].mxu0 %v2601
        %v5795 = vpop.f32.mrb[0].mxu0
        %v5796 = vadd.f32 %v2473, %v5795
        %v5797 = vpop.f32.mrb[0].mxu0
        %v5798 = vadd.f32 %v2474, %v5797
        %v5799 = vpop.f32.mrb[0].mxu0
        %v5800 = vadd.f32 %v2537, %v5799
        %v5801 = vpop.f32.mrb[0].mxu0
        %v5802 = vadd.f32 %v2538, %v5801
        %5803 = vdwg.mxu0
        %5804 = vmatprep.subr.bf16.mxu0 0
        %5805 = vmatpush1.bf16.xpose.msra.mxu0 %v4699
        %5806 = vmatprep.subr.bf16.mxu0 0
        %5807 = vmatpush1.bf16.xpose.msra.mxu0 %v4700
        %5808 = vmatprep.subr.bf16.mxu0 0
        %5809 = vmatpush1.bf16.xpose.msra.mxu0 %v4701
        %5810 = vmatprep.subr.bf16.mxu0 0
        %5811 = vmatpush1.bf16.xpose.msra.mxu0 %v4702
        %5812 = vmatprep.subr.bf16.mxu0 0
        %5813 = vmatpush1.bf16.xpose.msra.mxu0 %v4703
        %5814 = vmatprep.subr.bf16.mxu0 0
        %5815 = vmatpush1.bf16.xpose.msra.mxu0 %v4704
        %5816 = vmatprep.subr.bf16.mxu0 0
        %5817 = vmatpush1.bf16.xpose.msra.mxu0 %v4705
        %5818 = vmatprep.subr.bf16.mxu0 0
        %5819 = vmatpush1.bf16.xpose.msra.mxu0 %v4706
        %5820 = vmatprep.subr.bf16.mxu0 0
        %5821 = vmatpush1.bf16.xpose.msra.mxu0 %v4707
        %5822 = vmatprep.subr.bf16.mxu0 0
        %5823 = vmatpush1.bf16.xpose.msra.mxu0 %v4708
        %5824 = vmatprep.subr.bf16.mxu0 0
        %5825 = vmatpush1.bf16.xpose.msra.mxu0 %v4709
        %5826 = vmatprep.subr.bf16.mxu0 0
        %5827 = vmatpush1.bf16.xpose.msra.mxu0 %v4710
        %5828 = vmatprep.subr.bf16.mxu0 0
        %5829 = vmatpush1.bf16.xpose.msra.mxu0 %v4711
        %5830 = vmatprep.subr.bf16.mxu0 0
        %5831 = vmatpush1.bf16.xpose.msra.mxu0 %v4712
        %5832 = vmatprep.subr.bf16.mxu0 0
        %5833 = vmatpush1.bf16.xpose.msra.mxu0 %v4713
        %5834 = vmatprep.subr.bf16.mxu0 0
        %5835 = vmatpush1.bf16.xpose.msra.mxu0 %v4714
        %5836 = vmatprep.mubr.bf16.mxu0 0
        %5837 = vmatmul.mubr.bf16.gmra.mrb[0].mxu0 %v2601
        %v5838 = vpop.f32.mrb[0].mxu0
        %v5839 = vadd.f32 %v2475, %v5838
        %v5840 = vpop.f32.mrb[0].mxu0
        %v5841 = vadd.f32 %v2476, %v5840
        %v5842 = vpop.f32.mrb[0].mxu0
        %v5843 = vadd.f32 %v2539, %v5842
        %v5844 = vpop.f32.mrb[0].mxu0
        %v5845 = vadd.f32 %v2540, %v5844
        %5846 = vdwg.mxu0
        %5847 = vmatprep.subr.bf16.mxu0 0
        %5848 = vmatpush1.bf16.xpose.msra.mxu0 %v4715
        %5849 = vmatprep.subr.bf16.mxu0 0
        %5850 = vmatpush1.bf16.xpose.msra.mxu0 %v4716
        %5851 = vmatprep.subr.bf16.mxu0 0
        %5852 = vmatpush1.bf16.xpose.msra.mxu0 %v4717
        %5853 = vmatprep.subr.bf16.mxu0 0
        %5854 = vmatpush1.bf16.xpose.msra.mxu0 %v4718
        %5855 = vmatprep.subr.bf16.mxu0 0
        %5856 = vmatpush1.bf16.xpose.msra.mxu0 %v4719
        %5857 = vmatprep.subr.bf16.mxu0 0
        %5858 = vmatpush1.bf16.xpose.msra.mxu0 %v4720
        %5859 = vmatprep.subr.bf16.mxu0 0
        %5860 = vmatpush1.bf16.xpose.msra.mxu0 %v4721
        %5861 = vmatprep.subr.bf16.mxu0 0
        %5862 = vmatpush1.bf16.xpose.msra.mxu0 %v4722
        %5863 = vmatprep.subr.bf16.mxu0 0
        %5864 = vmatpush1.bf16.xpose.msra.mxu0 %v4723
        %5865 = vmatprep.subr.bf16.mxu0 0
        %5866 = vmatpush1.bf16.xpose.msra.mxu0 %v4724
        %5867 = vmatprep.subr.bf16.mxu0 0
        %5868 = vmatpush1.bf16.xpose.msra.mxu0 %v4725
        %5869 = vmatprep.subr.bf16.mxu0 0
        %5870 = vmatpush1.bf16.xpose.msra.mxu0 %v4726
        %5871 = vmatprep.subr.bf16.mxu0 0
        %5872 = vmatpush1.bf16.xpose.msra.mxu0 %v4727
        %5873 = vmatprep.subr.bf16.mxu0 0
        %5874 = vmatpush1.bf16.xpose.msra.mxu0 %v4728
        %5875 = vmatprep.subr.bf16.mxu0 0
        %5876 = vmatpush1.bf16.xpose.msra.mxu0 %v4729
        %5877 = vmatprep.subr.bf16.mxu0 0
        %5878 = vmatpush1.bf16.xpose.msra.mxu0 %v4730
        %5879 = vmatprep.mubr.bf16.mxu0 0
        %5880 = vmatmul.mubr.bf16.gmra.mrb[0].mxu0 %v2601
        %v5881 = vpop.f32.mrb[0].mxu0
        %v5882 = vadd.f32 %v2477, %v5881
        %v5883 = vpop.f32.mrb[0].mxu0
        %v5884 = vadd.f32 %v2478, %v5883
        %v5885 = vpop.f32.mrb[0].mxu0
        %v5886 = vadd.f32 %v2541, %v5885
        %v5887 = vpop.f32.mrb[0].mxu0
        %v5888 = vadd.f32 %v2542, %v5887
        %5889 = vdwg.mxu0
        %5890 = vmatprep.subr.bf16.mxu0 0
        %5891 = vmatpush1.bf16.xpose.msra.mxu0 %v4731
        %5892 = vmatprep.subr.bf16.mxu0 0
        %5893 = vmatpush1.bf16.xpose.msra.mxu0 %v4732
        %5894 = vmatprep.subr.bf16.mxu0 0
        %5895 = vmatpush1.bf16.xpose.msra.mxu0 %v4733
        %5896 = vmatprep.subr.bf16.mxu0 0
        %5897 = vmatpush1.bf16.xpose.msra.mxu0 %v4734
        %5898 = vmatprep.subr.bf16.mxu0 0
        %5899 = vmatpush1.bf16.xpose.msra.mxu0 %v4735
        %5900 = vmatprep.subr.bf16.mxu0 0
        %5901 = vmatpush1.bf16.xpose.msra.mxu0 %v4736
        %5902 = vmatprep.subr.bf16.mxu0 0
        %5903 = vmatpush1.bf16.xpose.msra.mxu0 %v4737
        %5904 = vmatprep.subr.bf16.mxu0 0
        %5905 = vmatpush1.bf16.xpose.msra.mxu0 %v4738
        %5906 = vmatprep.subr.bf16.mxu0 0
        %5907 = vmatpush1.bf16.xpose.msra.mxu0 %v4739
        %5908 = vmatprep.subr.bf16.mxu0 0
        %5909 = vmatpush1.bf16.xpose.msra.mxu0 %v4740
        %5910 = vmatprep.subr.bf16.mxu0 0
        %5911 = vmatpush1.bf16.xpose.msra.mxu0 %v4741
        %5912 = vmatprep.subr.bf16.mxu0 0
        %5913 = vmatpush1.bf16.xpose.msra.mxu0 %v4742
        %5914 = vmatprep.subr.bf16.mxu0 0
        %5915 = vmatpush1.bf16.xpose.msra.mxu0 %v4743
        %5916 = vmatprep.subr.bf16.mxu0 0
        %5917 = vmatpush1.bf16.xpose.msra.mxu0 %v4744
        %5918 = vmatprep.subr.bf16.mxu0 0
        %5919 = vmatpush1.bf16.xpose.msra.mxu0 %v4745
        %5920 = vmatprep.subr.bf16.mxu0 0
        %5921 = vmatpush1.bf16.xpose.msra.mxu0 %v4746
        %5922 = vmatprep.mubr.bf16.mxu0 0
        %5923 = vmatmul.mubr.bf16.gmra.mrb[0].mxu0 %v2601
        %v5924 = vpop.f32.mrb[0].mxu0
        %v5925 = vadd.f32 %v2479, %v5924
        %v5926 = vpop.f32.mrb[0].mxu0
        %v5927 = vadd.f32 %v2480, %v5926
        %v5928 = vpop.f32.mrb[0].mxu0
        %v5929 = vadd.f32 %v2543, %v5928
        %v5930 = vpop.f32.mrb[0].mxu0
        %v5931 = vadd.f32 %v2544, %v5930
        %5932 = vdwg.mxu0
        %5933 = vmatprep.subr.bf16.mxu0 0
        %5934 = vmatpush1.bf16.xpose.msra.mxu0 %v4747
        %5935 = vmatprep.subr.bf16.mxu0 0
        %5936 = vmatpush1.bf16.xpose.msra.mxu0 %v4748
        %5937 = vmatprep.subr.bf16.mxu0 0
        %5938 = vmatpush1.bf16.xpose.msra.mxu0 %v4749
        %5939 = vmatprep.subr.bf16.mxu0 0
        %5940 = vmatpush1.bf16.xpose.msra.mxu0 %v4750
        %5941 = vmatprep.subr.bf16.mxu0 0
        %5942 = vmatpush1.bf16.xpose.msra.mxu0 %v4751
        %5943 = vmatprep.subr.bf16.mxu0 0
        %5944 = vmatpush1.bf16.xpose.msra.mxu0 %v4752
        %5945 = vmatprep.subr.bf16.mxu0 0
        %5946 = vmatpush1.bf16.xpose.msra.mxu0 %v4753
        %5947 = vmatprep.subr.bf16.mxu0 0
        %5948 = vmatpush1.bf16.xpose.msra.mxu0 %v4754
        %5949 = vmatprep.subr.bf16.mxu0 0
        %5950 = vmatpush1.bf16.xpose.msra.mxu0 %v4755
        %5951 = vmatprep.subr.bf16.mxu0 0
        %5952 = vmatpush1.bf16.xpose.msra.mxu0 %v4756
        %5953 = vmatprep.subr.bf16.mxu0 0
        %5954 = vmatpush1.bf16.xpose.msra.mxu0 %v4757
        %5955 = vmatprep.subr.bf16.mxu0 0
        %5956 = vmatpush1.bf16.xpose.msra.mxu0 %v4758
        %5957 = vmatprep.subr.bf16.mxu0 0
        %5958 = vmatpush1.bf16.xpose.msra.mxu0 %v4759
        %5959 = vmatprep.subr.bf16.mxu0 0
        %5960 = vmatpush1.bf16.xpose.msra.mxu0 %v4760
        %5961 = vmatprep.subr.bf16.mxu0 0
        %5962 = vmatpush1.bf16.xpose.msra.mxu0 %v4761
        %5963 = vmatprep.subr.bf16.mxu0 0
        %5964 = vmatpush1.bf16.xpose.msra.mxu0 %v4762
        %5965 = vmatprep.mubr.bf16.mxu0 0
        %5966 = vmatmul.mubr.bf16.gmra.mrb[0].mxu0 %v2601
        %v5967 = vpop.f32.mrb[0].mxu0
        %v5968 = vadd.f32 %v2481, %v5967
        %v5969 = vpop.f32.mrb[0].mxu0
        %v5970 = vadd.f32 %v2482, %v5969
        %v5971 = vpop.f32.mrb[0].mxu0
        %v5972 = vadd.f32 %v2545, %v5971
        %v5973 = vpop.f32.mrb[0].mxu0
        %v5974 = vadd.f32 %v2546, %v5973
        %5975 = vdwg.mxu0
        %5976 = vmatprep.subr.bf16.mxu0 0
        %5977 = vmatpush1.bf16.xpose.msra.mxu0 %v4763
        %5978 = vmatprep.subr.bf16.mxu0 0
        %5979 = vmatpush1.bf16.xpose.msra.mxu0 %v4764
        %5980 = vmatprep.subr.bf16.mxu0 0
        %5981 = vmatpush1.bf16.xpose.msra.mxu0 %v4765
        %5982 = vmatprep.subr.bf16.mxu0 0
        %5983 = vmatpush1.bf16.xpose.msra.mxu0 %v4766
        %5984 = vmatprep.subr.bf16.mxu0 0
        %5985 = vmatpush1.bf16.xpose.msra.mxu0 %v4767
        %5986 = vmatprep.subr.bf16.mxu0 0
        %5987 = vmatpush1.bf16.xpose.msra.mxu0 %v4768
        %5988 = vmatprep.subr.bf16.mxu0 0
        %5989 = vmatpush1.bf16.xpose.msra.mxu0 %v4769
        %5990 = vmatprep.subr.bf16.mxu0 0
        %5991 = vmatpush1.bf16.xpose.msra.mxu0 %v4770
        %5992 = vmatprep.subr.bf16.mxu0 0
        %5993 = vmatpush1.bf16.xpose.msra.mxu0 %v4771
        %5994 = vmatprep.subr.bf16.mxu0 0
        %5995 = vmatpush1.bf16.xpose.msra.mxu0 %v4772
        %5996 = vmatprep.subr.bf16.mxu0 0
        %5997 = vmatpush1.bf16.xpose.msra.mxu0 %v4773
        %5998 = vmatprep.subr.bf16.mxu0 0
        %5999 = vmatpush1.bf16.xpose.msra.mxu0 %v4774
        %6000 = vmatprep.subr.bf16.mxu0 0
        %6001 = vmatpush1.bf16.xpose.msra.mxu0 %v4775
        %6002 = vmatprep.subr.bf16.mxu0 0
        %6003 = vmatpush1.bf16.xpose.msra.mxu0 %v4776
        %6004 = vmatprep.subr.bf16.mxu0 0
        %6005 = vmatpush1.bf16.xpose.msra.mxu0 %v4777
        %6006 = vmatprep.subr.bf16.mxu0 0
        %6007 = vmatpush1.bf16.xpose.msra.mxu0 %v4778
        %6008 = vmatprep.mubr.bf16.mxu0 0
        %6009 = vmatmul.mubr.bf16.gmra.mrb[0].mxu0 %v2601
        %v6010 = vpop.f32.mrb[0].mxu0
        %v6011 = vadd.f32 %v2483, %v6010
        %v6012 = vpop.f32.mrb[0].mxu0
        %v6013 = vadd.f32 %v2484, %v6012
        %v6014 = vpop.f32.mrb[0].mxu0
        %v6015 = vadd.f32 %v2547, %v6014
        %v6016 = vpop.f32.mrb[0].mxu0
        %v6017 = vadd.f32 %v2548, %v6016
        %6018 = vdwg.mxu0
        %6019 = vmatprep.subr.bf16.mxu0 0
        %6020 = vmatpush1.bf16.xpose.msra.mxu0 %v4779
        %6021 = vmatprep.subr.bf16.mxu0 0
        %6022 = vmatpush1.bf16.xpose.msra.mxu0 %v4780
        %6023 = vmatprep.subr.bf16.mxu0 0
        %6024 = vmatpush1.bf16.xpose.msra.mxu0 %v4781
        %6025 = vmatprep.subr.bf16.mxu0 0
        %6026 = vmatpush1.bf16.xpose.msra.mxu0 %v4782
        %6027 = vmatprep.subr.bf16.mxu0 0
        %6028 = vmatpush1.bf16.xpose.msra.mxu0 %v4783
        %6029 = vmatprep.subr.bf16.mxu0 0
        %6030 = vmatpush1.bf16.xpose.msra.mxu0 %v4784
        %6031 = vmatprep.subr.bf16.mxu0 0
        %6032 = vmatpush1.bf16.xpose.msra.mxu0 %v4785
        %6033 = vmatprep.subr.bf16.mxu0 0
        %6034 = vmatpush1.bf16.xpose.msra.mxu0 %v4786
        %6035 = vmatprep.subr.bf16.mxu0 0
        %6036 = vmatpush1.bf16.xpose.msra.mxu0 %v4787
        %6037 = vmatprep.subr.bf16.mxu0 0
        %6038 = vmatpush1.bf16.xpose.msra.mxu0 %v4788
        %6039 = vmatprep.subr.bf16.mxu0 0
        %6040 = vmatpush1.bf16.xpose.msra.mxu0 %v4789
        %6041 = vmatprep.subr.bf16.mxu0 0
        %6042 = vmatpush1.bf16.xpose.msra.mxu0 %v4790
        %6043 = vmatprep.subr.bf16.mxu0 0
        %6044 = vmatpush1.bf16.xpose.msra.mxu0 %v4791
        %6045 = vmatprep.subr.bf16.mxu0 0
        %6046 = vmatpush1.bf16.xpose.msra.mxu0 %v4792
        %6047 = vmatprep.subr.bf16.mxu0 0
        %6048 = vmatpush1.bf16.xpose.msra.mxu0 %v4793
        %6049 = vmatprep.subr.bf16.mxu0 0
        %6050 = vmatpush1.bf16.xpose.msra.mxu0 %v4794
        %6051 = vmatprep.mubr.bf16.mxu0 0
        %6052 = vmatmul.mubr.bf16.gmra.mrb[0].mxu0 %v2601
        %v6053 = vpop.f32.mrb[0].mxu0
        %v6054 = vadd.f32 %v2485, %v6053
        %v6055 = vpop.f32.mrb[0].mxu0
        %v6056 = vadd.f32 %v2486, %v6055
        %v6057 = vpop.f32.mrb[0].mxu0
        %v6058 = vadd.f32 %v2549, %v6057
        %v6059 = vpop.f32.mrb[0].mxu0
        %v6060 = vadd.f32 %v2550, %v6059
        %6061 = vdwg.mxu0
        %6062 = vmatprep.subr.bf16.mxu0 0
        %6063 = vmatpush1.bf16.xpose.msra.mxu0 %v4795
        %6064 = vmatprep.subr.bf16.mxu0 0
        %6065 = vmatpush1.bf16.xpose.msra.mxu0 %v4796
        %6066 = vmatprep.subr.bf16.mxu0 0
        %6067 = vmatpush1.bf16.xpose.msra.mxu0 %v4797
        %6068 = vmatprep.subr.bf16.mxu0 0
        %6069 = vmatpush1.bf16.xpose.msra.mxu0 %v4798
        %6070 = vmatprep.subr.bf16.mxu0 0
        %6071 = vmatpush1.bf16.xpose.msra.mxu0 %v4799
        %6072 = vmatprep.subr.bf16.mxu0 0
        %6073 = vmatpush1.bf16.xpose.msra.mxu0 %v4800
        %6074 = vmatprep.subr.bf16.mxu0 0
        %6075 = vmatpush1.bf16.xpose.msra.mxu0 %v4801
        %6076 = vmatprep.subr.bf16.mxu0 0
        %6077 = vmatpush1.bf16.xpose.msra.mxu0 %v4802
        %6078 = vmatprep.subr.bf16.mxu0 0
        %6079 = vmatpush1.bf16.xpose.msra.mxu0 %v4803
        %6080 = vmatprep.subr.bf16.mxu0 0
        %6081 = vmatpush1.bf16.xpose.msra.mxu0 %v4804
        %6082 = vmatprep.subr.bf16.mxu0 0
        %6083 = vmatpush1.bf16.xpose.msra.mxu0 %v4805
        %6084 = vmatprep.subr.bf16.mxu0 0
        %6085 = vmatpush1.bf16.xpose.msra.mxu0 %v4806
        %6086 = vmatprep.subr.bf16.mxu0 0
        %6087 = vmatpush1.bf16.xpose.msra.mxu0 %v4807
        %6088 = vmatprep.subr.bf16.mxu0 0
        %6089 = vmatpush1.bf16.xpose.msra.mxu0 %v4808
        %6090 = vmatprep.subr.bf16.mxu0 0
        %6091 = vmatpush1.bf16.xpose.msra.mxu0 %v4809
        %6092 = vmatprep.subr.bf16.mxu0 0
        %6093 = vmatpush1.bf16.xpose.msra.mxu0 %v4810
        %6094 = vmatprep.mubr.bf16.mxu0 0
        %6095 = vmatmul.mubr.bf16.gmra.mrb[0].mxu0 %v2601
        %v6096 = vpop.f32.mrb[0].mxu0
        %v6097 = vadd.f32 %v2487, %v6096
        %v6098 = vpop.f32.mrb[0].mxu0
        %v6099 = vadd.f32 %v2488, %v6098
        %v6100 = vpop.f32.mrb[0].mxu0
        %v6101 = vadd.f32 %v2551, %v6100
        %v6102 = vpop.f32.mrb[0].mxu0
        %v6103 = vadd.f32 %v2552, %v6102
        %6104 = vdwg.mxu0
        %6105 = vmatprep.subr.bf16.mxu0 0
        %6106 = vmatpush1.bf16.xpose.msra.mxu0 %v4811
        %6107 = vmatprep.subr.bf16.mxu0 0
        %6108 = vmatpush1.bf16.xpose.msra.mxu0 %v4812
        %6109 = vmatprep.subr.bf16.mxu0 0
        %6110 = vmatpush1.bf16.xpose.msra.mxu0 %v4813
        %6111 = vmatprep.subr.bf16.mxu0 0
        %6112 = vmatpush1.bf16.xpose.msra.mxu0 %v4814
        %6113 = vmatprep.subr.bf16.mxu0 0
        %6114 = vmatpush1.bf16.xpose.msra.mxu0 %v4815
        %6115 = vmatprep.subr.bf16.mxu0 0
        %6116 = vmatpush1.bf16.xpose.msra.mxu0 %v4816
        %6117 = vmatprep.subr.bf16.mxu0 0
        %6118 = vmatpush1.bf16.xpose.msra.mxu0 %v4817
        %6119 = vmatprep.subr.bf16.mxu0 0
        %6120 = vmatpush1.bf16.xpose.msra.mxu0 %v4818
        %6121 = vmatprep.subr.bf16.mxu0 0
        %6122 = vmatpush1.bf16.xpose.msra.mxu0 %v4819
        %6123 = vmatprep.subr.bf16.mxu0 0
        %6124 = vmatpush1.bf16.xpose.msra.mxu0 %v4820
        %6125 = vmatprep.subr.bf16.mxu0 0
        %6126 = vmatpush1.bf16.xpose.msra.mxu0 %v4821
        %6127 = vmatprep.subr.bf16.mxu0 0
        %6128 = vmatpush1.bf16.xpose.msra.mxu0 %v4822
        %6129 = vmatprep.subr.bf16.mxu0 0
        %6130 = vmatpush1.bf16.xpose.msra.mxu0 %v4823
        %6131 = vmatprep.subr.bf16.mxu0 0
        %6132 = vmatpush1.bf16.xpose.msra.mxu0 %v4824
        %6133 = vmatprep.subr.bf16.mxu0 0
        %6134 = vmatpush1.bf16.xpose.msra.mxu0 %v4825
        %6135 = vmatprep.subr.bf16.mxu0 0
        %6136 = vmatpush1.bf16.xpose.msra.mxu0 %v4826
        %6137 = vmatprep.mubr.bf16.mxu0 0
        %6138 = vmatmul.mubr.bf16.gmra.mrb[0].mxu0 %v2601
        %v6139 = vpop.f32.mrb[0].mxu0
        %v6140 = vadd.f32 %v2489, %v6139
        %v6141 = vpop.f32.mrb[0].mxu0
        %v6142 = vadd.f32 %v2490, %v6141
        %v6143 = vpop.f32.mrb[0].mxu0
        %v6144 = vadd.f32 %v2553, %v6143
        %v6145 = vpop.f32.mrb[0].mxu0
        %v6146 = vadd.f32 %v2554, %v6145
        %6147 = vdwg.mxu0
        %6148 = vmatprep.subr.bf16.mxu0 0
        %6149 = vmatpush1.bf16.xpose.msra.mxu0 %v4827
        %6150 = vmatprep.subr.bf16.mxu0 0
        %6151 = vmatpush1.bf16.xpose.msra.mxu0 %v4828
        %6152 = vmatprep.subr.bf16.mxu0 0
        %6153 = vmatpush1.bf16.xpose.msra.mxu0 %v4829
        %6154 = vmatprep.subr.bf16.mxu0 0
        %6155 = vmatpush1.bf16.xpose.msra.mxu0 %v4830
        %6156 = vmatprep.subr.bf16.mxu0 0
        %6157 = vmatpush1.bf16.xpose.msra.mxu0 %v4831
        %6158 = vmatprep.subr.bf16.mxu0 0
        %6159 = vmatpush1.bf16.xpose.msra.mxu0 %v4832
        %6160 = vmatprep.subr.bf16.mxu0 0
        %6161 = vmatpush1.bf16.xpose.msra.mxu0 %v4833
        %6162 = vmatprep.subr.bf16.mxu0 0
        %6163 = vmatpush1.bf16.xpose.msra.mxu0 %v4834
        %6164 = vmatprep.subr.bf16.mxu0 0
        %6165 = vmatpush1.bf16.xpose.msra.mxu0 %v4835
        %6166 = vmatprep.subr.bf16.mxu0 0
        %6167 = vmatpush1.bf16.xpose.msra.mxu0 %v4836
        %6168 = vmatprep.subr.bf16.mxu0 0
        %6169 = vmatpush1.bf16.xpose.msra.mxu0 %v4837
        %6170 = vmatprep.subr.bf16.mxu0 0
        %6171 = vmatpush1.bf16.xpose.msra.mxu0 %v4838
        %6172 = vmatprep.subr.bf16.mxu0 0
        %6173 = vmatpush1.bf16.xpose.msra.mxu0 %v4839
        %6174 = vmatprep.subr.bf16.mxu0 0
        %6175 = vmatpush1.bf16.xpose.msra.mxu0 %v4840
        %6176 = vmatprep.subr.bf16.mxu0 0
        %6177 = vmatpush1.bf16.xpose.msra.mxu0 %v4841
        %6178 = vmatprep.subr.bf16.mxu0 0
        %6179 = vmatpush1.bf16.xpose.msra.mxu0 %v4842
        %6180 = vmatprep.mubr.bf16.mxu0 0
        %6181 = vmatmul.mubr.bf16.gmra.mrb[0].mxu0 %v2601
        %v6182 = vpop.f32.mrb[0].mxu0
        %v6183 = vadd.f32 %v2491, %v6182
        %v6184 = vpop.f32.mrb[0].mxu0
        %v6185 = vadd.f32 %v2492, %v6184
        %v6186 = vpop.f32.mrb[0].mxu0
        %v6187 = vadd.f32 %v2555, %v6186
        %v6188 = vpop.f32.mrb[0].mxu0
        %v6189 = vadd.f32 %v2556, %v6188
        %6190 = vdwg.mxu0
        %6191 = vmatprep.subr.bf16.mxu0 0
        %6192 = vmatpush1.bf16.xpose.msra.mxu0 %v4843
        %6193 = vmatprep.subr.bf16.mxu0 0
        %6194 = vmatpush1.bf16.xpose.msra.mxu0 %v4844
        %6195 = vmatprep.subr.bf16.mxu0 0
        %6196 = vmatpush1.bf16.xpose.msra.mxu0 %v4845
        %6197 = vmatprep.subr.bf16.mxu0 0
        %6198 = vmatpush1.bf16.xpose.msra.mxu0 %v4846
        %6199 = vmatprep.subr.bf16.mxu0 0
        %6200 = vmatpush1.bf16.xpose.msra.mxu0 %v4847
        %6201 = vmatprep.subr.bf16.mxu0 0
        %6202 = vmatpush1.bf16.xpose.msra.mxu0 %v4848
        %6203 = vmatprep.subr.bf16.mxu0 0
        %6204 = vmatpush1.bf16.xpose.msra.mxu0 %v4849
        %6205 = vmatprep.subr.bf16.mxu0 0
        %6206 = vmatpush1.bf16.xpose.msra.mxu0 %v4850
        %6207 = vmatprep.subr.bf16.mxu0 0
        %6208 = vmatpush1.bf16.xpose.msra.mxu0 %v4851
        %6209 = vmatprep.subr.bf16.mxu0 0
        %6210 = vmatpush1.bf16.xpose.msra.mxu0 %v4852
        %6211 = vmatprep.subr.bf16.mxu0 0
        %6212 = vmatpush1.bf16.xpose.msra.mxu0 %v4853
        %6213 = vmatprep.subr.bf16.mxu0 0
        %6214 = vmatpush1.bf16.xpose.msra.mxu0 %v4854
        %6215 = vmatprep.subr.bf16.mxu0 0
        %6216 = vmatpush1.bf16.xpose.msra.mxu0 %v4855
        %6217 = vmatprep.subr.bf16.mxu0 0
        %6218 = vmatpush1.bf16.xpose.msra.mxu0 %v4856
        %6219 = vmatprep.subr.bf16.mxu0 0
        %6220 = vmatpush1.bf16.xpose.msra.mxu0 %v4857
        %6221 = vmatprep.subr.bf16.mxu0 0
        %6222 = vmatpush1.bf16.xpose.msra.mxu0 %v4858
        %6223 = vmatprep.mubr.bf16.mxu0 0
        %6224 = vmatmul.mubr.bf16.gmra.mrb[0].mxu0 %v2601
        %v6225 = vpop.f32.mrb[0].mxu0
        %v6226 = vadd.f32 %v2493, %v6225
        %v6227 = vpop.f32.mrb[0].mxu0
        %v6228 = vadd.f32 %v2494, %v6227
        %v6229 = vpop.f32.mrb[0].mxu0
        %v6230 = vadd.f32 %v2557, %v6229
        %v6231 = vpop.f32.mrb[0].mxu0
        %v6232 = vadd.f32 %v2558, %v6231
        %6233 = vdwg.mxu0
        %6234 = vmatprep.subr.bf16.mxu0 0
        %6235 = vmatpush1.bf16.xpose.msra.mxu0 %v4859
        %6236 = vmatprep.subr.bf16.mxu0 0
        %6237 = vmatpush1.bf16.xpose.msra.mxu0 %v4860
        %6238 = vmatprep.subr.bf16.mxu0 0
        %6239 = vmatpush1.bf16.xpose.msra.mxu0 %v4861
        %6240 = vmatprep.subr.bf16.mxu0 0
        %6241 = vmatpush1.bf16.xpose.msra.mxu0 %v4862
        %6242 = vmatprep.subr.bf16.mxu0 0
        %6243 = vmatpush1.bf16.xpose.msra.mxu0 %v4863
        %6244 = vmatprep.subr.bf16.mxu0 0
        %6245 = vmatpush1.bf16.xpose.msra.mxu0 %v4864
        %6246 = vmatprep.subr.bf16.mxu0 0
        %6247 = vmatpush1.bf16.xpose.msra.mxu0 %v4865
        %6248 = vmatprep.subr.bf16.mxu0 0
        %6249 = vmatpush1.bf16.xpose.msra.mxu0 %v4866
        %6250 = vmatprep.subr.bf16.mxu0 0
        %6251 = vmatpush1.bf16.xpose.msra.mxu0 %v4867
        %6252 = vmatprep.subr.bf16.mxu0 0
        %6253 = vmatpush1.bf16.xpose.msra.mxu0 %v4868
        %6254 = vmatprep.subr.bf16.mxu0 0
        %6255 = vmatpush1.bf16.xpose.msra.mxu0 %v4869
        %6256 = vmatprep.subr.bf16.mxu0 0
        %6257 = vmatpush1.bf16.xpose.msra.mxu0 %v4870
        %6258 = vmatprep.subr.bf16.mxu0 0
        %6259 = vmatpush1.bf16.xpose.msra.mxu0 %v4871
        %6260 = vmatprep.subr.bf16.mxu0 0
        %6261 = vmatpush1.bf16.xpose.msra.mxu0 %v4872
        %6262 = vmatprep.subr.bf16.mxu0 0
        %6263 = vmatpush1.bf16.xpose.msra.mxu0 %v4873
        %6264 = vmatprep.subr.bf16.mxu0 0
        %6265 = vmatpush1.bf16.xpose.msra.mxu0 %v4874
        %6266 = vmatprep.mubr.bf16.mxu0 0
        %6267 = vmatmul.mubr.bf16.gmra.mrb[0].mxu0 %v2601
        %v6268 = vpop.f32.mrb[0].mxu0
        %v6269 = vadd.f32 %v2495, %v6268
        %v6270 = vpop.f32.mrb[0].mxu0
        %v6271 = vadd.f32 %v2496, %v6270
        %v6272 = vpop.f32.mrb[0].mxu0
        %v6273 = vadd.f32 %v2559, %v6272
        %v6274 = vpop.f32.mrb[0].mxu0
        %v6275 = vadd.f32 %v2560, %v6274
        %6276 = vdwg.mxu0
        %6277 = vmatprep.subr.bf16.mxu0 0
        %6278 = vmatpush1.bf16.xpose.msra.mxu0 %v4875
        %6279 = vmatprep.subr.bf16.mxu0 0
        %6280 = vmatpush1.bf16.xpose.msra.mxu0 %v4876
        %6281 = vmatprep.subr.bf16.mxu0 0
        %6282 = vmatpush1.bf16.xpose.msra.mxu0 %v4877
        %6283 = vmatprep.subr.bf16.mxu0 0
        %6284 = vmatpush1.bf16.xpose.msra.mxu0 %v4878
        %6285 = vmatprep.subr.bf16.mxu0 0
        %6286 = vmatpush1.bf16.xpose.msra.mxu0 %v4879
        %6287 = vmatprep.subr.bf16.mxu0 0
        %6288 = vmatpush1.bf16.xpose.msra.mxu0 %v4880
        %6289 = vmatprep.subr.bf16.mxu0 0
        %6290 = vmatpush1.bf16.xpose.msra.mxu0 %v4881
        %6291 = vmatprep.subr.bf16.mxu0 0
        %6292 = vmatpush1.bf16.xpose.msra.mxu0 %v4882
        %6293 = vmatprep.subr.bf16.mxu0 0
        %6294 = vmatpush1.bf16.xpose.msra.mxu0 %v4883
        %6295 = vmatprep.subr.bf16.mxu0 0
        %6296 = vmatpush1.bf16.xpose.msra.mxu0 %v4884
        %6297 = vmatprep.subr.bf16.mxu0 0
        %6298 = vmatpush1.bf16.xpose.msra.mxu0 %v4885
        %6299 = vmatprep.subr.bf16.mxu0 0
        %6300 = vmatpush1.bf16.xpose.msra.mxu0 %v4886
        %6301 = vmatprep.subr.bf16.mxu0 0
        %6302 = vmatpush1.bf16.xpose.msra.mxu0 %v4887
        %6303 = vmatprep.subr.bf16.mxu0 0
        %6304 = vmatpush1.bf16.xpose.msra.mxu0 %v4888
        %6305 = vmatprep.subr.bf16.mxu0 0
        %6306 = vmatpush1.bf16.xpose.msra.mxu0 %v4889
        %6307 = vmatprep.subr.bf16.mxu0 0
        %6308 = vmatpush1.bf16.xpose.msra.mxu0 %v4890
        %6309 = vmatprep.mubr.bf16.mxu0 0
        %6310 = vmatmul.mubr.bf16.gmra.mrb[0].mxu0 %v2601
        %v6311 = vpop.f32.mrb[0].mxu0
        %v6312 = vadd.f32 %v2497, %v6311
        %v6313 = vpop.f32.mrb[0].mxu0
        %v6314 = vadd.f32 %v2498, %v6313
        %v6315 = vpop.f32.mrb[0].mxu0
        %v6316 = vadd.f32 %v2561, %v6315
        %v6317 = vpop.f32.mrb[0].mxu0
        %v6318 = vadd.f32 %v2562, %v6317
        %6319 = vdwg.mxu0
        %6320 = vmatprep.subr.bf16.mxu0 0
        %6321 = vmatpush1.bf16.xpose.msra.mxu0 %v4891
        %6322 = vmatprep.subr.bf16.mxu0 0
        %6323 = vmatpush1.bf16.xpose.msra.mxu0 %v4892
        %6324 = vmatprep.subr.bf16.mxu0 0
        %6325 = vmatpush1.bf16.xpose.msra.mxu0 %v4893
        %6326 = vmatprep.subr.bf16.mxu0 0
        %6327 = vmatpush1.bf16.xpose.msra.mxu0 %v4894
        %6328 = vmatprep.subr.bf16.mxu0 0
        %6329 = vmatpush1.bf16.xpose.msra.mxu0 %v4895
        %6330 = vmatprep.subr.bf16.mxu0 0
        %6331 = vmatpush1.bf16.xpose.msra.mxu0 %v4896
        %6332 = vmatprep.subr.bf16.mxu0 0
        %6333 = vmatpush1.bf16.xpose.msra.mxu0 %v4897
        %6334 = vmatprep.subr.bf16.mxu0 0
        %6335 = vmatpush1.bf16.xpose.msra.mxu0 %v4898
        %6336 = vmatprep.subr.bf16.mxu0 0
        %6337 = vmatpush1.bf16.xpose.msra.mxu0 %v4899
        %6338 = vmatprep.subr.bf16.mxu0 0
        %6339 = vmatpush1.bf16.xpose.msra.mxu0 %v4900
        %6340 = vmatprep.subr.bf16.mxu0 0
        %6341 = vmatpush1.bf16.xpose.msra.mxu0 %v4901
        %6342 = vmatprep.subr.bf16.mxu0 0
        %6343 = vmatpush1.bf16.xpose.msra.mxu0 %v4902
        %6344 = vmatprep.subr.bf16.mxu0 0
        %6345 = vmatpush1.bf16.xpose.msra.mxu0 %v4903
        %6346 = vmatprep.subr.bf16.mxu0 0
        %6347 = vmatpush1.bf16.xpose.msra.mxu0 %v4904
        %6348 = vmatprep.subr.bf16.mxu0 0
        %6349 = vmatpush1.bf16.xpose.msra.mxu0 %v4905
        %6350 = vmatprep.subr.bf16.mxu0 0
        %6351 = vmatpush1.bf16.xpose.msra.mxu0 %v4906
        %6352 = vmatprep.mubr.bf16.mxu0 0
        %6353 = vmatmul.mubr.bf16.gmra.mrb[0].mxu0 %v2601
        %v6354 = vpop.f32.mrb[0].mxu0
        %v6355 = vadd.f32 %v2499, %v6354
        %v6356 = vpop.f32.mrb[0].mxu0
        %v6357 = vadd.f32 %v2500, %v6356
        %v6358 = vpop.f32.mrb[0].mxu0
        %v6359 = vadd.f32 %v2563, %v6358
        %v6360 = vpop.f32.mrb[0].mxu0
        %v6361 = vadd.f32 %v2564, %v6360
        %6362 = vdwg.mxu0
        %6363 = vmatprep.subr.bf16.mxu0 0
        %6364 = vmatpush1.bf16.xpose.msra.mxu0 %v4907
        %6365 = vmatprep.subr.bf16.mxu0 0
        %6366 = vmatpush1.bf16.xpose.msra.mxu0 %v4908
        %6367 = vmatprep.subr.bf16.mxu0 0
        %6368 = vmatpush1.bf16.xpose.msra.mxu0 %v4909
        %6369 = vmatprep.subr.bf16.mxu0 0
        %6370 = vmatpush1.bf16.xpose.msra.mxu0 %v4910
        %6371 = vmatprep.subr.bf16.mxu0 0
        %6372 = vmatpush1.bf16.xpose.msra.mxu0 %v4911
        %6373 = vmatprep.subr.bf16.mxu0 0
        %6374 = vmatpush1.bf16.xpose.msra.mxu0 %v4912
        %6375 = vmatprep.subr.bf16.mxu0 0
        %6376 = vmatpush1.bf16.xpose.msra.mxu0 %v4913
        %6377 = vmatprep.subr.bf16.mxu0 0
        %6378 = vmatpush1.bf16.xpose.msra.mxu0 %v4914
        %6379 = vmatprep.subr.bf16.mxu0 0
        %6380 = vmatpush1.bf16.xpose.msra.mxu0 %v4915
        %6381 = vmatprep.subr.bf16.mxu0 0
        %6382 = vmatpush1.bf16.xpose.msra.mxu0 %v4916
        %6383 = vmatprep.subr.bf16.mxu0 0
        %6384 = vmatpush1.bf16.xpose.msra.mxu0 %v4917
        %6385 = vmatprep.subr.bf16.mxu0 0
        %6386 = vmatpush1.bf16.xpose.msra.mxu0 %v4918
        %6387 = vmatprep.subr.bf16.mxu0 0
        %6388 = vmatpush1.bf16.xpose.msra.mxu0 %v4919
        %6389 = vmatprep.subr.bf16.mxu0 0
        %6390 = vmatpush1.bf16.xpose.msra.mxu0 %v4920
        %6391 = vmatprep.subr.bf16.mxu0 0
        %6392 = vmatpush1.bf16.xpose.msra.mxu0 %v4921
        %6393 = vmatprep.subr.bf16.mxu0 0
        %6394 = vmatpush1.bf16.xpose.msra.mxu0 %v4922
        %6395 = vmatprep.mubr.bf16.mxu0 0
        %6396 = vmatmul.mubr.bf16.gmra.mrb[0].mxu0 %v2601
        %v6397 = vpop.f32.mrb[0].mxu0
        %v6398 = vadd.f32 %v2501, %v6397
        %v6399 = vpop.f32.mrb[0].mxu0
        %v6400 = vadd.f32 %v2502, %v6399
        %v6401 = vpop.f32.mrb[0].mxu0
        %v6402 = vadd.f32 %v2565, %v6401
        %v6403 = vpop.f32.mrb[0].mxu0
        %v6404 = vadd.f32 %v2566, %v6403
        %6405 = vdwg.mxu0
        %6406 = vmatprep.subr.bf16.mxu0 0
        %6407 = vmatpush1.bf16.xpose.msra.mxu0 %v4923
        %6408 = vmatprep.subr.bf16.mxu0 0
        %6409 = vmatpush1.bf16.xpose.msra.mxu0 %v4924
        %6410 = vmatprep.subr.bf16.mxu0 0
        %6411 = vmatpush1.bf16.xpose.msra.mxu0 %v4925
        %6412 = vmatprep.subr.bf16.mxu0 0
        %6413 = vmatpush1.bf16.xpose.msra.mxu0 %v4926
        %6414 = vmatprep.subr.bf16.mxu0 0
        %6415 = vmatpush1.bf16.xpose.msra.mxu0 %v4927
        %6416 = vmatprep.subr.bf16.mxu0 0
        %6417 = vmatpush1.bf16.xpose.msra.mxu0 %v4928
        %6418 = vmatprep.subr.bf16.mxu0 0
        %6419 = vmatpush1.bf16.xpose.msra.mxu0 %v4929
        %6420 = vmatprep.subr.bf16.mxu0 0
        %6421 = vmatpush1.bf16.xpose.msra.mxu0 %v4930
        %6422 = vmatprep.subr.bf16.mxu0 0
        %6423 = vmatpush1.bf16.xpose.msra.mxu0 %v4931
        %6424 = vmatprep.subr.bf16.mxu0 0
        %6425 = vmatpush1.bf16.xpose.msra.mxu0 %v4932
        %6426 = vmatprep.subr.bf16.mxu0 0
        %6427 = vmatpush1.bf16.xpose.msra.mxu0 %v4933
        %6428 = vmatprep.subr.bf16.mxu0 0
        %6429 = vmatpush1.bf16.xpose.msra.mxu0 %v4934
        %6430 = vmatprep.subr.bf16.mxu0 0
        %6431 = vmatpush1.bf16.xpose.msra.mxu0 %v4935
        %6432 = vmatprep.subr.bf16.mxu0 0
        %6433 = vmatpush1.bf16.xpose.msra.mxu0 %v4936
        %6434 = vmatprep.subr.bf16.mxu0 0
        %6435 = vmatpush1.bf16.xpose.msra.mxu0 %v4937
        %6436 = vmatprep.subr.bf16.mxu0 0
        %6437 = vmatpush1.bf16.xpose.msra.mxu0 %v4938
        %6438 = vmatprep.mubr.bf16.mxu0 0
        %6439 = vmatmul.mubr.bf16.gmra.mrb[0].mxu0 %v2601
        %v6440 = vpop.f32.mrb[0].mxu0
        %v6441 = vadd.f32 %v2503, %v6440
        %v6442 = vpop.f32.mrb[0].mxu0
        %v6443 = vadd.f32 %v2504, %v6442
        %v6444 = vpop.f32.mrb[0].mxu0
        %v6445 = vadd.f32 %v2567, %v6444
        %v6446 = vpop.f32.mrb[0].mxu0
        %v6447 = vadd.f32 %v2568, %v6446
        %6448 = vdwg.mxu0
        %6449 = vmatprep.subr.bf16.mxu0 0
        %6450 = vmatpush1.bf16.xpose.msra.mxu0 %v4939
        %6451 = vmatprep.subr.bf16.mxu0 0
        %6452 = vmatpush1.bf16.xpose.msra.mxu0 %v4940
        %6453 = vmatprep.subr.bf16.mxu0 0
        %6454 = vmatpush1.bf16.xpose.msra.mxu0 %v4941
        %6455 = vmatprep.subr.bf16.mxu0 0
        %6456 = vmatpush1.bf16.xpose.msra.mxu0 %v4942
        %6457 = vmatprep.subr.bf16.mxu0 0
        %6458 = vmatpush1.bf16.xpose.msra.mxu0 %v4943
        %6459 = vmatprep.subr.bf16.mxu0 0
        %6460 = vmatpush1.bf16.xpose.msra.mxu0 %v4944
        %6461 = vmatprep.subr.bf16.mxu0 0
        %6462 = vmatpush1.bf16.xpose.msra.mxu0 %v4945
        %6463 = vmatprep.subr.bf16.mxu0 0
        %6464 = vmatpush1.bf16.xpose.msra.mxu0 %v4946
        %6465 = vmatprep.subr.bf16.mxu0 0
        %6466 = vmatpush1.bf16.xpose.msra.mxu0 %v4947
        %6467 = vmatprep.subr.bf16.mxu0 0
        %6468 = vmatpush1.bf16.xpose.msra.mxu0 %v4948
        %6469 = vmatprep.subr.bf16.mxu0 0
        %6470 = vmatpush1.bf16.xpose.msra.mxu0 %v4949
        %6471 = vmatprep.subr.bf16.mxu0 0
        %6472 = vmatpush1.bf16.xpose.msra.mxu0 %v4950
        %6473 = vmatprep.subr.bf16.mxu0 0
        %6474 = vmatpush1.bf16.xpose.msra.mxu0 %v4951
        %6475 = vmatprep.subr.bf16.mxu0 0
        %6476 = vmatpush1.bf16.xpose.msra.mxu0 %v4952
        %6477 = vmatprep.subr.bf16.mxu0 0
        %6478 = vmatpush1.bf16.xpose.msra.mxu0 %v4953
        %6479 = vmatprep.subr.bf16.mxu0 0
        %6480 = vmatpush1.bf16.xpose.msra.mxu0 %v4954
        %6481 = vmatprep.mubr.bf16.mxu0 0
        %6482 = vmatmul.mubr.bf16.gmra.mrb[0].mxu0 %v2601
        %v6483 = vpop.f32.mrb[0].mxu0
        %v6484 = vadd.f32 %v2505, %v6483
        %v6485 = vpop.f32.mrb[0].mxu0
        %v6486 = vadd.f32 %v2506, %v6485
        %v6487 = vpop.f32.mrb[0].mxu0
        %v6488 = vadd.f32 %v2569, %v6487
        %v6489 = vpop.f32.mrb[0].mxu0
        %v6490 = vadd.f32 %v2570, %v6489
        %6491 = vdwg.mxu0
        %6492 = vmatprep.subr.bf16.mxu0 0
        %6493 = vmatpush1.bf16.xpose.msra.mxu0 %v4955
        %6494 = vmatprep.subr.bf16.mxu0 0
        %6495 = vmatpush1.bf16.xpose.msra.mxu0 %v4956
        %6496 = vmatprep.subr.bf16.mxu0 0
        %6497 = vmatpush1.bf16.xpose.msra.mxu0 %v4957
        %6498 = vmatprep.subr.bf16.mxu0 0
        %6499 = vmatpush1.bf16.xpose.msra.mxu0 %v4958
        %6500 = vmatprep.subr.bf16.mxu0 0
        %6501 = vmatpush1.bf16.xpose.msra.mxu0 %v4959
        %6502 = vmatprep.subr.bf16.mxu0 0
        %6503 = vmatpush1.bf16.xpose.msra.mxu0 %v4960
        %6504 = vmatprep.subr.bf16.mxu0 0
        %6505 = vmatpush1.bf16.xpose.msra.mxu0 %v4961
        %6506 = vmatprep.subr.bf16.mxu0 0
        %6507 = vmatpush1.bf16.xpose.msra.mxu0 %v4962
        %6508 = vmatprep.subr.bf16.mxu0 0
        %6509 = vmatpush1.bf16.xpose.msra.mxu0 %v4963
        %6510 = vmatprep.subr.bf16.mxu0 0
        %6511 = vmatpush1.bf16.xpose.msra.mxu0 %v4964
        %6512 = vmatprep.subr.bf16.mxu0 0
        %6513 = vmatpush1.bf16.xpose.msra.mxu0 %v4965
        %6514 = vmatprep.subr.bf16.mxu0 0
        %6515 = vmatpush1.bf16.xpose.msra.mxu0 %v4966
        %6516 = vmatprep.subr.bf16.mxu0 0
        %6517 = vmatpush1.bf16.xpose.msra.mxu0 %v4967
        %6518 = vmatprep.subr.bf16.mxu0 0
        %6519 = vmatpush1.bf16.xpose.msra.mxu0 %v4968
        %6520 = vmatprep.subr.bf16.mxu0 0
        %6521 = vmatpush1.bf16.xpose.msra.mxu0 %v4969
        %6522 = vmatprep.subr.bf16.mxu0 0
        %6523 = vmatpush1.bf16.xpose.msra.mxu0 %v4970
        %6524 = vmatprep.mubr.bf16.mxu0 0
        %6525 = vmatmul.mubr.bf16.gmra.mrb[0].mxu0 %v2601
        %v6526 = vpop.f32.mrb[0].mxu0
        %v6527 = vadd.f32 %v2507, %v6526
        %v6528 = vpop.f32.mrb[0].mxu0
        %v6529 = vadd.f32 %v2508, %v6528
        %v6530 = vpop.f32.mrb[0].mxu0
        %v6531 = vadd.f32 %v2571, %v6530
        %v6532 = vpop.f32.mrb[0].mxu0
        %v6533 = vadd.f32 %v2572, %v6532
        %6534 = vdwg.mxu0
        %6535 = vmatprep.subr.bf16.mxu0 0
        %6536 = vmatpush1.bf16.xpose.msra.mxu0 %v4971
        %6537 = vmatprep.subr.bf16.mxu0 0
        %6538 = vmatpush1.bf16.xpose.msra.mxu0 %v4972
        %6539 = vmatprep.subr.bf16.mxu0 0
        %6540 = vmatpush1.bf16.xpose.msra.mxu0 %v4973
        %6541 = vmatprep.subr.bf16.mxu0 0
        %6542 = vmatpush1.bf16.xpose.msra.mxu0 %v4974
        %6543 = vmatprep.subr.bf16.mxu0 0
        %6544 = vmatpush1.bf16.xpose.msra.mxu0 %v4975
        %6545 = vmatprep.subr.bf16.mxu0 0
        %6546 = vmatpush1.bf16.xpose.msra.mxu0 %v4976
        %6547 = vmatprep.subr.bf16.mxu0 0
        %6548 = vmatpush1.bf16.xpose.msra.mxu0 %v4977
        %6549 = vmatprep.subr.bf16.mxu0 0
        %6550 = vmatpush1.bf16.xpose.msra.mxu0 %v4978
        %6551 = vmatprep.subr.bf16.mxu0 0
        %6552 = vmatpush1.bf16.xpose.msra.mxu0 %v4979
        %6553 = vmatprep.subr.bf16.mxu0 0
        %6554 = vmatpush1.bf16.xpose.msra.mxu0 %v4980
        %6555 = vmatprep.subr.bf16.mxu0 0
        %6556 = vmatpush1.bf16.xpose.msra.mxu0 %v4981
        %6557 = vmatprep.subr.bf16.mxu0 0
        %6558 = vmatpush1.bf16.xpose.msra.mxu0 %v4982
        %6559 = vmatprep.subr.bf16.mxu0 0
        %6560 = vmatpush1.bf16.xpose.msra.mxu0 %v4983
        %6561 = vmatprep.subr.bf16.mxu0 0
        %6562 = vmatpush1.bf16.xpose.msra.mxu0 %v4984
        %6563 = vmatprep.subr.bf16.mxu0 0
        %6564 = vmatpush1.bf16.xpose.msra.mxu0 %v4985
        %6565 = vmatprep.subr.bf16.mxu0 0
        %6566 = vmatpush1.bf16.xpose.msra.mxu0 %v4986
        %6567 = vmatprep.mubr.bf16.mxu0 0
        %6568 = vmatmul.mubr.bf16.gmra.mrb[0].mxu0 %v2601
        %v6569 = vpop.f32.mrb[0].mxu0
        %v6570 = vadd.f32 %v2509, %v6569
        %v6571 = vpop.f32.mrb[0].mxu0
        %v6572 = vadd.f32 %v2510, %v6571
        %v6573 = vpop.f32.mrb[0].mxu0
        %v6574 = vadd.f32 %v2573, %v6573
        %v6575 = vpop.f32.mrb[0].mxu0
        %v6576 = vadd.f32 %v2574, %v6575
        %6577 = vdwg.mxu0
        %6578 = vmatprep.subr.bf16.mxu0 0
        %6579 = vmatpush1.bf16.xpose.msra.mxu0 %v4987
        %6580 = vmatprep.subr.bf16.mxu0 0
        %6581 = vmatpush1.bf16.xpose.msra.mxu0 %v4988
        %6582 = vmatprep.subr.bf16.mxu0 0
        %6583 = vmatpush1.bf16.xpose.msra.mxu0 %v4989
        %6584 = vmatprep.subr.bf16.mxu0 0
        %6585 = vmatpush1.bf16.xpose.msra.mxu0 %v4990
        %6586 = vmatprep.subr.bf16.mxu0 0
        %6587 = vmatpush1.bf16.xpose.msra.mxu0 %v4991
        %6588 = vmatprep.subr.bf16.mxu0 0
        %6589 = vmatpush1.bf16.xpose.msra.mxu0 %v4992
        %6590 = vmatprep.subr.bf16.mxu0 0
        %6591 = vmatpush1.bf16.xpose.msra.mxu0 %v4993
        %6592 = vmatprep.subr.bf16.mxu0 0
        %6593 = vmatpush1.bf16.xpose.msra.mxu0 %v4994
        %6594 = vmatprep.subr.bf16.mxu0 0
        %6595 = vmatpush1.bf16.xpose.msra.mxu0 %v4995
        %6596 = vmatprep.subr.bf16.mxu0 0
        %6597 = vmatpush1.bf16.xpose.msra.mxu0 %v4996
        %6598 = vmatprep.subr.bf16.mxu0 0
        %6599 = vmatpush1.bf16.xpose.msra.mxu0 %v4997
        %6600 = vmatprep.subr.bf16.mxu0 0
        %6601 = vmatpush1.bf16.xpose.msra.mxu0 %v4998
        %6602 = vmatprep.subr.bf16.mxu0 0
        %6603 = vmatpush1.bf16.xpose.msra.mxu0 %v4999
        %6604 = vmatprep.subr.bf16.mxu0 0
        %6605 = vmatpush1.bf16.xpose.msra.mxu0 %v5000
        %6606 = vmatprep.subr.bf16.mxu0 0
        %6607 = vmatpush1.bf16.xpose.msra.mxu0 %v5001
        %6608 = vmatprep.subr.bf16.mxu0 0
        %6609 = vmatpush1.bf16.xpose.msra.mxu0 %v5002
        %6610 = vmatprep.mubr.bf16.mxu0 0
        %6611 = vmatmul.mubr.bf16.gmra.mrb[0].mxu0 %v2601
        %v6612 = vpop.f32.mrb[0].mxu0
        %v6613 = vadd.f32 %v2511, %v6612
        %v6614 = vpop.f32.mrb[0].mxu0
        %v6615 = vadd.f32 %v2512, %v6614
        %v6616 = vpop.f32.mrb[0].mxu0
        %v6617 = vadd.f32 %v2575, %v6616
        %v6618 = vpop.f32.mrb[0].mxu0
        %v6619 = vadd.f32 %v2576, %v6618
        %6620 = vdwg.mxu0
        %6621 = vmatprep.subr.bf16.mxu0 0
        %6622 = vmatpush1.bf16.xpose.msra.mxu0 %v5003
        %6623 = vmatprep.subr.bf16.mxu0 0
        %6624 = vmatpush1.bf16.xpose.msra.mxu0 %v5004
        %6625 = vmatprep.subr.bf16.mxu0 0
        %6626 = vmatpush1.bf16.xpose.msra.mxu0 %v5005
        %6627 = vmatprep.subr.bf16.mxu0 0
        %6628 = vmatpush1.bf16.xpose.msra.mxu0 %v5006
        %6629 = vmatprep.subr.bf16.mxu0 0
        %6630 = vmatpush1.bf16.xpose.msra.mxu0 %v5007
        %6631 = vmatprep.subr.bf16.mxu0 0
        %6632 = vmatpush1.bf16.xpose.msra.mxu0 %v5008
        %6633 = vmatprep.subr.bf16.mxu0 0
        %6634 = vmatpush1.bf16.xpose.msra.mxu0 %v5009
        %6635 = vmatprep.subr.bf16.mxu0 0
        %6636 = vmatpush1.bf16.xpose.msra.mxu0 %v5010
        %6637 = vmatprep.subr.bf16.mxu0 0
        %6638 = vmatpush1.bf16.xpose.msra.mxu0 %v5011
        %6639 = vmatprep.subr.bf16.mxu0 0
        %6640 = vmatpush1.bf16.xpose.msra.mxu0 %v5012
        %6641 = vmatprep.subr.bf16.mxu0 0
        %6642 = vmatpush1.bf16.xpose.msra.mxu0 %v5013
        %6643 = vmatprep.subr.bf16.mxu0 0
        %6644 = vmatpush1.bf16.xpose.msra.mxu0 %v5014
        %6645 = vmatprep.subr.bf16.mxu0 0
        %6646 = vmatpush1.bf16.xpose.msra.mxu0 %v5015
        %6647 = vmatprep.subr.bf16.mxu0 0
        %6648 = vmatpush1.bf16.xpose.msra.mxu0 %v5016
        %6649 = vmatprep.subr.bf16.mxu0 0
        %6650 = vmatpush1.bf16.xpose.msra.mxu0 %v5017
        %6651 = vmatprep.subr.bf16.mxu0 0
        %6652 = vmatpush1.bf16.xpose.msra.mxu0 %v5018
        %6653 = vmatprep.mubr.bf16.mxu0 0
        %6654 = vmatmul.mubr.bf16.gmra.mrb[0].mxu0 %v2601
        %v6655 = vpop.f32.mrb[0].mxu0
        %v6656 = vadd.f32 %v2513, %v6655
        %v6657 = vpop.f32.mrb[0].mxu0
        %v6658 = vadd.f32 %v2514, %v6657
        %v6659 = vpop.f32.mrb[0].mxu0
        %v6660 = vadd.f32 %v2577, %v6659
        %v6661 = vpop.f32.mrb[0].mxu0
        %v6662 = vadd.f32 %v2578, %v6661
        %6663 = vdwg.mxu0
        %6664 = vmatprep.subr.bf16.mxu0 0
        %6665 = vmatpush1.bf16.xpose.msra.mxu0 %v5019
        %6666 = vmatprep.subr.bf16.mxu0 0
        %6667 = vmatpush1.bf16.xpose.msra.mxu0 %v5020
        %6668 = vmatprep.subr.bf16.mxu0 0
        %6669 = vmatpush1.bf16.xpose.msra.mxu0 %v5021
        %6670 = vmatprep.subr.bf16.mxu0 0
        %6671 = vmatpush1.bf16.xpose.msra.mxu0 %v5022
        %6672 = vmatprep.subr.bf16.mxu0 0
        %6673 = vmatpush1.bf16.xpose.msra.mxu0 %v5023
        %6674 = vmatprep.subr.bf16.mxu0 0
        %6675 = vmatpush1.bf16.xpose.msra.mxu0 %v5024
        %6676 = vmatprep.subr.bf16.mxu0 0
        %6677 = vmatpush1.bf16.xpose.msra.mxu0 %v5025
        %6678 = vmatprep.subr.bf16.mxu0 0
        %6679 = vmatpush1.bf16.xpose.msra.mxu0 %v5026
        %6680 = vmatprep.subr.bf16.mxu0 0
        %6681 = vmatpush1.bf16.xpose.msra.mxu0 %v5027
        %6682 = vmatprep.subr.bf16.mxu0 0
        %6683 = vmatpush1.bf16.xpose.msra.mxu0 %v5028
        %6684 = vmatprep.subr.bf16.mxu0 0
        %6685 = vmatpush1.bf16.xpose.msra.mxu0 %v5029
        %6686 = vmatprep.subr.bf16.mxu0 0
        %6687 = vmatpush1.bf16.xpose.msra.mxu0 %v5030
        %6688 = vmatprep.subr.bf16.mxu0 0
        %6689 = vmatpush1.bf16.xpose.msra.mxu0 %v5031
        %6690 = vmatprep.subr.bf16.mxu0 0
        %6691 = vmatpush1.bf16.xpose.msra.mxu0 %v5032
        %6692 = vmatprep.subr.bf16.mxu0 0
        %6693 = vmatpush1.bf16.xpose.msra.mxu0 %v5033
        %6694 = vmatprep.subr.bf16.mxu0 0
        %6695 = vmatpush1.bf16.xpose.msra.mxu0 %v5034
        %6696 = vmatprep.mubr.bf16.mxu0 0
        %6697 = vmatmul.mubr.bf16.gmra.mrb[0].mxu0 %v2601
        %v6698 = vpop.f32.mrb[0].mxu0
        %v6699 = vadd.f32 %v2515, %v6698
        %v6700 = vpop.f32.mrb[0].mxu0
        %v6701 = vadd.f32 %v2516, %v6700
        %v6702 = vpop.f32.mrb[0].mxu0
        %v6703 = vadd.f32 %v2579, %v6702
        %v6704 = vpop.f32.mrb[0].mxu0
        %v6705 = vadd.f32 %v2580, %v6704
        %6706 = vdwg.mxu0
        %6707 = vmatprep.subr.bf16.mxu0 0
        %6708 = vmatpush1.bf16.xpose.msra.mxu0 %v5035
        %6709 = vmatprep.subr.bf16.mxu0 0
        %6710 = vmatpush1.bf16.xpose.msra.mxu0 %v5036
        %6711 = vmatprep.subr.bf16.mxu0 0
        %6712 = vmatpush1.bf16.xpose.msra.mxu0 %v5037
        %6713 = vmatprep.subr.bf16.mxu0 0
        %6714 = vmatpush1.bf16.xpose.msra.mxu0 %v5038
        %6715 = vmatprep.subr.bf16.mxu0 0
        %6716 = vmatpush1.bf16.xpose.msra.mxu0 %v5039
        %6717 = vmatprep.subr.bf16.mxu0 0
        %6718 = vmatpush1.bf16.xpose.msra.mxu0 %v5040
        %6719 = vmatprep.subr.bf16.mxu0 0
        %6720 = vmatpush1.bf16.xpose.msra.mxu0 %v5041
        %6721 = vmatprep.subr.bf16.mxu0 0
        %6722 = vmatpush1.bf16.xpose.msra.mxu0 %v5042
        %6723 = vmatprep.subr.bf16.mxu0 0
        %6724 = vmatpush1.bf16.xpose.msra.mxu0 %v5043
        %6725 = vmatprep.subr.bf16.mxu0 0
        %6726 = vmatpush1.bf16.xpose.msra.mxu0 %v5044
        %6727 = vmatprep.subr.bf16.mxu0 0
        %6728 = vmatpush1.bf16.xpose.msra.mxu0 %v5045
        %6729 = vmatprep.subr.bf16.mxu0 0
        %6730 = vmatpush1.bf16.xpose.msra.mxu0 %v5046
        %6731 = vmatprep.subr.bf16.mxu0 0
        %6732 = vmatpush1.bf16.xpose.msra.mxu0 %v5047
        %6733 = vmatprep.subr.bf16.mxu0 0
        %6734 = vmatpush1.bf16.xpose.msra.mxu0 %v5048
        %6735 = vmatprep.subr.bf16.mxu0 0
        %6736 = vmatpush1.bf16.xpose.msra.mxu0 %v5049
        %6737 = vmatprep.subr.bf16.mxu0 0
        %6738 = vmatpush1.bf16.xpose.msra.mxu0 %v5050
        %6739 = vmatprep.mubr.bf16.mxu0 0
        %6740 = vmatmul.mubr.bf16.gmra.mrb[0].mxu0 %v2601
        %v6741 = vpop.f32.mrb[0].mxu0
        %v6742 = vadd.f32 %v2517, %v6741
        %v6743 = vpop.f32.mrb[0].mxu0
        %v6744 = vadd.f32 %v2518, %v6743
        %v6745 = vpop.f32.mrb[0].mxu0
        %v6746 = vadd.f32 %v2581, %v6745
        %v6747 = vpop.f32.mrb[0].mxu0
        %v6748 = vadd.f32 %v2582, %v6747
        %6749 = vdwg.mxu0
        %6750 = vmatprep.subr.bf16.mxu0 0
        %6751 = vmatpush1.bf16.xpose.msra.mxu0 %v5051
        %6752 = vmatprep.subr.bf16.mxu0 0
        %6753 = vmatpush1.bf16.xpose.msra.mxu0 %v5052
        %6754 = vmatprep.subr.bf16.mxu0 0
        %6755 = vmatpush1.bf16.xpose.msra.mxu0 %v5053
        %6756 = vmatprep.subr.bf16.mxu0 0
        %6757 = vmatpush1.bf16.xpose.msra.mxu0 %v5054
        %6758 = vmatprep.subr.bf16.mxu0 0
        %6759 = vmatpush1.bf16.xpose.msra.mxu0 %v5055
        %6760 = vmatprep.subr.bf16.mxu0 0
        %6761 = vmatpush1.bf16.xpose.msra.mxu0 %v5056
        %6762 = vmatprep.subr.bf16.mxu0 0
        %6763 = vmatpush1.bf16.xpose.msra.mxu0 %v5057
        %6764 = vmatprep.subr.bf16.mxu0 0
        %6765 = vmatpush1.bf16.xpose.msra.mxu0 %v5058
        %6766 = vmatprep.subr.bf16.mxu0 0
        %6767 = vmatpush1.bf16.xpose.msra.mxu0 %v5059
        %6768 = vmatprep.subr.bf16.mxu0 0
        %6769 = vmatpush1.bf16.xpose.msra.mxu0 %v5060
        %6770 = vmatprep.subr.bf16.mxu0 0
        %6771 = vmatpush1.bf16.xpose.msra.mxu0 %v5061
        %6772 = vmatprep.subr.bf16.mxu0 0
        %6773 = vmatpush1.bf16.xpose.msra.mxu0 %v5062
        %6774 = vmatprep.subr.bf16.mxu0 0
        %6775 = vmatpush1.bf16.xpose.msra.mxu0 %v5063
        %6776 = vmatprep.subr.bf16.mxu0 0
        %6777 = vmatpush1.bf16.xpose.msra.mxu0 %v5064
        %6778 = vmatprep.subr.bf16.mxu0 0
        %6779 = vmatpush1.bf16.xpose.msra.mxu0 %v5065
        %6780 = vmatprep.subr.bf16.mxu0 0
        %6781 = vmatpush1.bf16.xpose.msra.mxu0 %v5066
        %6782 = vmatprep.mubr.bf16.mxu0 0
        %6783 = vmatmul.mubr.bf16.gmra.mrb[0].mxu0 %v2601
        %v6784 = vpop.f32.mrb[0].mxu0
        %v6785 = vadd.f32 %v2519, %v6784
        %v6786 = vpop.f32.mrb[0].mxu0
        %v6787 = vadd.f32 %v2520, %v6786
        %v6788 = vpop.f32.mrb[0].mxu0
        %v6789 = vadd.f32 %v2583, %v6788
        %v6790 = vpop.f32.mrb[0].mxu0
        %v6791 = vadd.f32 %v2584, %v6790
        %6792 = vdwg.mxu0
        %6793 = vmatprep.subr.bf16.mxu0 0
        %6794 = vmatpush1.bf16.xpose.msra.mxu0 %v5067
        %6795 = vmatprep.subr.bf16.mxu0 0
        %6796 = vmatpush1.bf16.xpose.msra.mxu0 %v5068
        %6797 = vmatprep.subr.bf16.mxu0 0
        %6798 = vmatpush1.bf16.xpose.msra.mxu0 %v5069
        %6799 = vmatprep.subr.bf16.mxu0 0
        %6800 = vmatpush1.bf16.xpose.msra.mxu0 %v5070
        %6801 = vmatprep.subr.bf16.mxu0 0
        %6802 = vmatpush1.bf16.xpose.msra.mxu0 %v5071
        %6803 = vmatprep.subr.bf16.mxu0 0
        %6804 = vmatpush1.bf16.xpose.msra.mxu0 %v5072
        %6805 = vmatprep.subr.bf16.mxu0 0
        %6806 = vmatpush1.bf16.xpose.msra.mxu0 %v5073
        %6807 = vmatprep.subr.bf16.mxu0 0
        %6808 = vmatpush1.bf16.xpose.msra.mxu0 %v5074
        %6809 = vmatprep.subr.bf16.mxu0 0
        %6810 = vmatpush1.bf16.xpose.msra.mxu0 %v5075
        %6811 = vmatprep.subr.bf16.mxu0 0
        %6812 = vmatpush1.bf16.xpose.msra.mxu0 %v5076
        %6813 = vmatprep.subr.bf16.mxu0 0
        %6814 = vmatpush1.bf16.xpose.msra.mxu0 %v5077
        %6815 = vmatprep.subr.bf16.mxu0 0
        %6816 = vmatpush1.bf16.xpose.msra.mxu0 %v5078
        %6817 = vmatprep.subr.bf16.mxu0 0
        %6818 = vmatpush1.bf16.xpose.msra.mxu0 %v5079
        %6819 = vmatprep.subr.bf16.mxu0 0
        %6820 = vmatpush1.bf16.xpose.msra.mxu0 %v5080
        %6821 = vmatprep.subr.bf16.mxu0 0
        %6822 = vmatpush1.bf16.xpose.msra.mxu0 %v5081
        %6823 = vmatprep.subr.bf16.mxu0 0
        %6824 = vmatpush1.bf16.xpose.msra.mxu0 %v5082
        %6825 = vmatprep.mubr.bf16.mxu0 0
        %6826 = vmatmul.mubr.bf16.gmra.mrb[0].mxu0 %v2601
        %v6827 = vpop.f32.mrb[0].mxu0
        %v6828 = vadd.f32 %v2521, %v6827
        %v6829 = vpop.f32.mrb[0].mxu0
        %v6830 = vadd.f32 %v2522, %v6829
        %v6831 = vpop.f32.mrb[0].mxu0
        %v6832 = vadd.f32 %v2585, %v6831
        %v6833 = vpop.f32.mrb[0].mxu0
        %v6834 = vadd.f32 %v2586, %v6833
        %6835 = vdwg.mxu0
        %6836 = vmatprep.subr.bf16.mxu0 0
        %6837 = vmatpush1.bf16.xpose.msra.mxu0 %v5083
        %6838 = vmatprep.subr.bf16.mxu0 0
        %6839 = vmatpush1.bf16.xpose.msra.mxu0 %v5084
        %6840 = vmatprep.subr.bf16.mxu0 0
        %6841 = vmatpush1.bf16.xpose.msra.mxu0 %v5085
        %6842 = vmatprep.subr.bf16.mxu0 0
        %6843 = vmatpush1.bf16.xpose.msra.mxu0 %v5086
        %6844 = vmatprep.subr.bf16.mxu0 0
        %6845 = vmatpush1.bf16.xpose.msra.mxu0 %v5087
        %6846 = vmatprep.subr.bf16.mxu0 0
        %6847 = vmatpush1.bf16.xpose.msra.mxu0 %v5088
        %6848 = vmatprep.subr.bf16.mxu0 0
        %6849 = vmatpush1.bf16.xpose.msra.mxu0 %v5089
        %6850 = vmatprep.subr.bf16.mxu0 0
        %6851 = vmatpush1.bf16.xpose.msra.mxu0 %v5090
        %6852 = vmatprep.subr.bf16.mxu0 0
        %6853 = vmatpush1.bf16.xpose.msra.mxu0 %v5091
        %6854 = vmatprep.subr.bf16.mxu0 0
        %6855 = vmatpush1.bf16.xpose.msra.mxu0 %v5092
        %6856 = vmatprep.subr.bf16.mxu0 0
        %6857 = vmatpush1.bf16.xpose.msra.mxu0 %v5093
        %6858 = vmatprep.subr.bf16.mxu0 0
        %6859 = vmatpush1.bf16.xpose.msra.mxu0 %v5094
        %6860 = vmatprep.subr.bf16.mxu0 0
        %6861 = vmatpush1.bf16.xpose.msra.mxu0 %v5095
        %6862 = vmatprep.subr.bf16.mxu0 0
        %6863 = vmatpush1.bf16.xpose.msra.mxu0 %v5096
        %6864 = vmatprep.subr.bf16.mxu0 0
        %6865 = vmatpush1.bf16.xpose.msra.mxu0 %v5097
        %6866 = vmatprep.subr.bf16.mxu0 0
        %6867 = vmatpush1.bf16.xpose.msra.mxu0 %v5098
        %6868 = vmatprep.mubr.bf16.mxu0 0
        %6869 = vmatmul.mubr.bf16.gmra.mrb[0].mxu0 %v2601
        %v6870 = vpop.f32.mrb[0].mxu0
        %v6871 = vadd.f32 %v2523, %v6870
        %v6872 = vpop.f32.mrb[0].mxu0
        %v6873 = vadd.f32 %v2524, %v6872
        %v6874 = vpop.f32.mrb[0].mxu0
        %v6875 = vadd.f32 %v2587, %v6874
        %v6876 = vpop.f32.mrb[0].mxu0
        %v6877 = vadd.f32 %v2588, %v6876
        %6878 = vdwg.mxu0
        %6879 = vmatprep.subr.bf16.mxu0 0
        %6880 = vmatpush1.bf16.xpose.msra.mxu0 %v5099
        %6881 = vmatprep.subr.bf16.mxu0 0
        %6882 = vmatpush1.bf16.xpose.msra.mxu0 %v5100
        %6883 = vmatprep.subr.bf16.mxu0 0
        %6884 = vmatpush1.bf16.xpose.msra.mxu0 %v5101
        %6885 = vmatprep.subr.bf16.mxu0 0
        %6886 = vmatpush1.bf16.xpose.msra.mxu0 %v5102
        %6887 = vmatprep.subr.bf16.mxu0 0
        %6888 = vmatpush1.bf16.xpose.msra.mxu0 %v5103
        %6889 = vmatprep.subr.bf16.mxu0 0
        %6890 = vmatpush1.bf16.xpose.msra.mxu0 %v5104
        %6891 = vmatprep.subr.bf16.mxu0 0
        %6892 = vmatpush1.bf16.xpose.msra.mxu0 %v5105
        %6893 = vmatprep.subr.bf16.mxu0 0
        %6894 = vmatpush1.bf16.xpose.msra.mxu0 %v5106
        %6895 = vmatprep.subr.bf16.mxu0 0
        %6896 = vmatpush1.bf16.xpose.msra.mxu0 %v5107
        %6897 = vmatprep.subr.bf16.mxu0 0
        %6898 = vmatpush1.bf16.xpose.msra.mxu0 %v5108
        %6899 = vmatprep.subr.bf16.mxu0 0
        %6900 = vmatpush1.bf16.xpose.msra.mxu0 %v5109
        %6901 = vmatprep.subr.bf16.mxu0 0
        %6902 = vmatpush1.bf16.xpose.msra.mxu0 %v5110
        %6903 = vmatprep.subr.bf16.mxu0 0
        %6904 = vmatpush1.bf16.xpose.msra.mxu0 %v5111
        %6905 = vmatprep.subr.bf16.mxu0 0
        %6906 = vmatpush1.bf16.xpose.msra.mxu0 %v5112
        %6907 = vmatprep.subr.bf16.mxu0 0
        %6908 = vmatpush1.bf16.xpose.msra.mxu0 %v5113
        %6909 = vmatprep.subr.bf16.mxu0 0
        %6910 = vmatpush1.bf16.xpose.msra.mxu0 %v5114
        %6911 = vmatprep.mubr.bf16.mxu0 0
        %6912 = vmatmul.mubr.bf16.gmra.mrb[0].mxu0 %v2601
        %v6913 = vpop.f32.mrb[0].mxu0
        %v6914 = vadd.f32 %v2525, %v6913
        %v6915 = vpop.f32.mrb[0].mxu0
        %v6916 = vadd.f32 %v2526, %v6915
        %v6917 = vpop.f32.mrb[0].mxu0
        %v6918 = vadd.f32 %v2589, %v6917
        %v6919 = vpop.f32.mrb[0].mxu0
        %v6920 = vadd.f32 %v2590, %v6919
        %6921 = vdwg.mxu0
        %6922 = vmatprep.subr.bf16.mxu0 0
        %6923 = vmatpush1.bf16.xpose.msra.mxu0 %v5115
        %6924 = vmatprep.subr.bf16.mxu0 0
        %6925 = vmatpush1.bf16.xpose.msra.mxu0 %v5116
        %6926 = vmatprep.subr.bf16.mxu0 0
        %6927 = vmatpush1.bf16.xpose.msra.mxu0 %v5117
        %6928 = vmatprep.subr.bf16.mxu0 0
        %6929 = vmatpush1.bf16.xpose.msra.mxu0 %v5118
        %6930 = vmatprep.subr.bf16.mxu0 0
        %6931 = vmatpush1.bf16.xpose.msra.mxu0 %v5119
        %6932 = vmatprep.subr.bf16.mxu0 0
        %6933 = vmatpush1.bf16.xpose.msra.mxu0 %v5120
        %6934 = vmatprep.subr.bf16.mxu0 0
        %6935 = vmatpush1.bf16.xpose.msra.mxu0 %v5121
        %6936 = vmatprep.subr.bf16.mxu0 0
        %6937 = vmatpush1.bf16.xpose.msra.mxu0 %v5122
        %6938 = vmatprep.subr.bf16.mxu0 0
        %6939 = vmatpush1.bf16.xpose.msra.mxu0 %v5123
        %6940 = vmatprep.subr.bf16.mxu0 0
        %6941 = vmatpush1.bf16.xpose.msra.mxu0 %v5124
        %6942 = vmatprep.subr.bf16.mxu0 0
        %6943 = vmatpush1.bf16.xpose.msra.mxu0 %v5125
        %6944 = vmatprep.subr.bf16.mxu0 0
        %6945 = vmatpush1.bf16.xpose.msra.mxu0 %v5126
        %6946 = vmatprep.subr.bf16.mxu0 0
        %6947 = vmatpush1.bf16.xpose.msra.mxu0 %v5127
        %6948 = vmatprep.subr.bf16.mxu0 0
        %6949 = vmatpush1.bf16.xpose.msra.mxu0 %v5128
        %6950 = vmatprep.subr.bf16.mxu0 0
        %6951 = vmatpush1.bf16.xpose.msra.mxu0 %v5129
        %6952 = vmatprep.subr.bf16.mxu0 0
        %6953 = vmatpush1.bf16.xpose.msra.mxu0 %v5130
        %6954 = vmatprep.mubr.bf16.mxu0 0
        %6955 = vmatmul.mubr.bf16.gmra.mrb[0].mxu0 %v2601
        %v6956 = vpop.f32.mrb[0].mxu0
        %v6957 = vadd.f32 %v2527, %v6956
        %v6958 = vpop.f32.mrb[0].mxu0
        %v6959 = vadd.f32 %v2528, %v6958
        %v6960 = vpop.f32.mrb[0].mxu0
        %v6961 = vadd.f32 %v2591, %v6960
        %v6962 = vpop.f32.mrb[0].mxu0
        %v6963 = vadd.f32 %v2592, %v6962
        %6964 = vdwg.mxu0
        %6965 = vmatprep.subr.bf16.mxu0 0
        %6966 = vmatpush1.bf16.xpose.msra.mxu0 %v5131
        %6967 = vmatprep.subr.bf16.mxu0 0
        %6968 = vmatpush1.bf16.xpose.msra.mxu0 %v5132
        %6969 = vmatprep.subr.bf16.mxu0 0
        %6970 = vmatpush1.bf16.xpose.msra.mxu0 %v5133
        %6971 = vmatprep.subr.bf16.mxu0 0
        %6972 = vmatpush1.bf16.xpose.msra.mxu0 %v5134
        %6973 = vmatprep.subr.bf16.mxu0 0
        %6974 = vmatpush1.bf16.xpose.msra.mxu0 %v5135
        %6975 = vmatprep.subr.bf16.mxu0 0
        %6976 = vmatpush1.bf16.xpose.msra.mxu0 %v5136
        %6977 = vmatprep.subr.bf16.mxu0 0
        %6978 = vmatpush1.bf16.xpose.msra.mxu0 %v5137
        %6979 = vmatprep.subr.bf16.mxu0 0
        %6980 = vmatpush1.bf16.xpose.msra.mxu0 %v5138
        %6981 = vmatprep.subr.bf16.mxu0 0
        %6982 = vmatpush1.bf16.xpose.msra.mxu0 %v5139
        %6983 = vmatprep.subr.bf16.mxu0 0
        %6984 = vmatpush1.bf16.xpose.msra.mxu0 %v5140
        %6985 = vmatprep.subr.bf16.mxu0 0
        %6986 = vmatpush1.bf16.xpose.msra.mxu0 %v5141
        %6987 = vmatprep.subr.bf16.mxu0 0
        %6988 = vmatpush1.bf16.xpose.msra.mxu0 %v5142
        %6989 = vmatprep.subr.bf16.mxu0 0
        %6990 = vmatpush1.bf16.xpose.msra.mxu0 %v5143
        %6991 = vmatprep.subr.bf16.mxu0 0
        %6992 = vmatpush1.bf16.xpose.msra.mxu0 %v5144
        %6993 = vmatprep.subr.bf16.mxu0 0
        %6994 = vmatpush1.bf16.xpose.msra.mxu0 %v5145
        %6995 = vmatprep.subr.bf16.mxu0 0
        %6996 = vmatpush1.bf16.xpose.msra.mxu0 %v5146
        %6997 = vmatprep.mubr.bf16.mxu0 0
        %6998 = vmatmul.mubr.bf16.gmra.mrb[0].mxu0 %v2601
        %v6999 = vpop.f32.mrb[0].mxu0
        %v7000 = vadd.f32 %v2529, %v6999
        %v7001 = vpop.f32.mrb[0].mxu0
        %v7002 = vadd.f32 %v2530, %v7001
        %v7003 = vpop.f32.mrb[0].mxu0
        %v7004 = vadd.f32 %v2593, %v7003
        %v7005 = vpop.f32.mrb[0].mxu0
        %v7006 = vadd.f32 %v2594, %v7005
        %7007 = vdwg.mxu0
        %7008 = vmatprep.subr.bf16.mxu0 0
        %7009 = vmatpush1.bf16.xpose.msra.mxu0 %v5147
        %7010 = vmatprep.subr.bf16.mxu0 0
        %7011 = vmatpush1.bf16.xpose.msra.mxu0 %v5148
        %7012 = vmatprep.subr.bf16.mxu0 0
        %7013 = vmatpush1.bf16.xpose.msra.mxu0 %v5149
        %7014 = vmatprep.subr.bf16.mxu0 0
        %7015 = vmatpush1.bf16.xpose.msra.mxu0 %v5150
        %7016 = vmatprep.subr.bf16.mxu0 0
        %7017 = vmatpush1.bf16.xpose.msra.mxu0 %v5151
        %7018 = vmatprep.subr.bf16.mxu0 0
        %7019 = vmatpush1.bf16.xpose.msra.mxu0 %v5152
        %7020 = vmatprep.subr.bf16.mxu0 0
        %7021 = vmatpush1.bf16.xpose.msra.mxu0 %v5153
        %7022 = vmatprep.subr.bf16.mxu0 0
        %7023 = vmatpush1.bf16.xpose.msra.mxu0 %v5154
        %7024 = vmatprep.subr.bf16.mxu0 0
        %7025 = vmatpush1.bf16.xpose.msra.mxu0 %v5155
        %7026 = vmatprep.subr.bf16.mxu0 0
        %7027 = vmatpush1.bf16.xpose.msra.mxu0 %v5156
        %7028 = vmatprep.subr.bf16.mxu0 0
        %7029 = vmatpush1.bf16.xpose.msra.mxu0 %v5157
        %7030 = vmatprep.subr.bf16.mxu0 0
        %7031 = vmatpush1.bf16.xpose.msra.mxu0 %v5158
        %7032 = vmatprep.subr.bf16.mxu0 0
        %7033 = vmatpush1.bf16.xpose.msra.mxu0 %v5159
        %7034 = vmatprep.subr.bf16.mxu0 0
        %7035 = vmatpush1.bf16.xpose.msra.mxu0 %v5160
        %7036 = vmatprep.subr.bf16.mxu0 0
        %7037 = vmatpush1.bf16.xpose.msra.mxu0 %v5161
        %7038 = vmatprep.subr.bf16.mxu0 0
        %7039 = vmatpush1.bf16.xpose.msra.mxu0 %v5162
        %7040 = vmatprep.mubr.bf16.mxu0 0
        %7041 = vmatmul.mubr.bf16.gmra.mrb[0].mxu0 %v2601
        %v7042 = vpop.f32.mrb[0].mxu0
        %v7043 = vadd.f32 %v2531, %v7042
        %v7044 = vpop.f32.mrb[0].mxu0
        %v7045 = vadd.f32 %v2532, %v7044
        %v7046 = vpop.f32.mrb[0].mxu0
        %v7047 = vadd.f32 %v2595, %v7046
        %v7048 = vpop.f32.mrb[0].mxu0
        %v7049 = vadd.f32 %v2596, %v7048
        %7050 = vdwg.mxu0
        %v7051 = vld [vmem:[#allocation2] sm:$0xff]
        %v7052 = vld [vmem:[#allocation2 + $0x8] sm:$0xff]
        %v7053 = vmax.f32 %v5710, %v5753
        %v7054 = vmax.f32 %v5712, %v5755
        %v7055 = vmax.f32 %v7053, %v5796
        %v7056 = vmax.f32 %v7054, %v5798
        %v7057 = vmax.f32 %v7055, %v5839
        %v7058 = vmax.f32 %v7056, %v5841
        %v7059 = vmax.f32 %v7057, %v5882
        %v7060 = vmax.f32 %v7058, %v5884
        %v7061 = vmax.f32 %v7059, %v5925
        %v7062 = vmax.f32 %v7060, %v5927
        %v7063 = vmax.f32 %v7061, %v5968
        %v7064 = vmax.f32 %v7062, %v5970
        %v7065 = vmax.f32 %v7063, %v6011
        %v7066 = vmax.f32 %v7064, %v6013
        %v7067 = vmax.f32 %v7065, %v6054
        %v7068 = vmax.f32 %v7066, %v6056
        %v7069 = vmax.f32 %v7067, %v6097
        %v7070 = vmax.f32 %v7068, %v6099
        %v7071 = vmax.f32 %v7069, %v6140
        %v7072 = vmax.f32 %v7070, %v6142
        %v7073 = vmax.f32 %v7071, %v6183
        %v7074 = vmax.f32 %v7072, %v6185
        %v7075 = vmax.f32 %v7073, %v6226
        %v7076 = vmax.f32 %v7074, %v6228
        %v7077 = vmax.f32 %v7075, %v6269
        %v7078 = vmax.f32 %v7076, %v6271
        %v7079 = vmax.f32 %v7077, %v6312
        %v7080 = vmax.f32 %v7078, %v6314
        %v7081 = vmax.f32 %v7079, %v6355
        %v7082 = vmax.f32 %v7080, %v6357
        %v7083 = vmax.f32 %v7081, %v6398
        %v7084 = vmax.f32 %v7082, %v6400
        %v7085 = vmax.f32 %v7083, %v6441
        %v7086 = vmax.f32 %v7084, %v6443
        %v7087 = vmax.f32 %v7085, %v6484
        %v7088 = vmax.f32 %v7086, %v6486
        %v7089 = vmax.f32 %v7087, %v6527
        %v7090 = vmax.f32 %v7088, %v6529
        %v7091 = vmax.f32 %v7089, %v6570
        %v7092 = vmax.f32 %v7090, %v6572
        %v7093 = vmax.f32 %v7091, %v6613
        %v7094 = vmax.f32 %v7092, %v6615
        %v7095 = vmax.f32 %v7093, %v6656
        %v7096 = vmax.f32 %v7094, %v6658
        %v7097 = vmax.f32 %v7095, %v6699
        %v7098 = vmax.f32 %v7096, %v6701
        %v7099 = vmax.f32 %v7097, %v6742
        %v7100 = vmax.f32 %v7098, %v6744
        %v7101 = vmax.f32 %v7099, %v6785
        %v7102 = vmax.f32 %v7100, %v6787
        %v7103 = vmax.f32 %v7101, %v6828
        %v7104 = vmax.f32 %v7102, %v6830
        %v7105 = vmax.f32 %v7103, %v6871
        %v7106 = vmax.f32 %v7104, %v6873
        %v7107 = vmax.f32 %v7105, %v6914
        %v7108 = vmax.f32 %v7106, %v6916
        %v7109 = vmax.f32 %v7107, %v6957
        %v7110 = vmax.f32 %v7108, %v6959
        %v7111 = vmax.f32 %v7109, %v7000
        %v7112 = vmax.f32 %v7110, %v7002
        %v7113 = vmax.f32 %v7111, %v7043
        %v7114 = vmax.f32 %v7112, %v7045
        %v7115 = vmax.f32 %v7113, %v7114
        %7116 = vmax.xlane.f32.xlu0 %v7115
        %v7117 = vpop.xlane.xlu0 %7116
        %v7118 = vmax.f32 %v5714, %v5757
        %v7119 = vmax.f32 %v5716, %v5759
        %v7120 = vmax.f32 %v7118, %v5800
        %v7121 = vmax.f32 %v7119, %v5802
        %v7122 = vmax.f32 %v7120, %v5843
        %v7123 = vmax.f32 %v7121, %v5845
        %v7124 = vmax.f32 %v7122, %v5886
        %v7125 = vmax.f32 %v7123, %v5888
        %v7126 = vmax.f32 %v7124, %v5929
        %v7127 = vmax.f32 %v7125, %v5931
        %v7128 = vmax.f32 %v7126, %v5972
        %v7129 = vmax.f32 %v7127, %v5974
        %v7130 = vmax.f32 %v7128, %v6015
        %v7131 = vmax.f32 %v7129, %v6017
        %v7132 = vmax.f32 %v7130, %v6058
        %v7133 = vmax.f32 %v7131, %v6060
        %v7134 = vmax.f32 %v7132, %v6101
        %v7135 = vmax.f32 %v7133, %v6103
        %v7136 = vmax.f32 %v7134, %v6144
        %v7137 = vmax.f32 %v7135, %v6146
        %v7138 = vmax.f32 %v7136, %v6187
        %v7139 = vmax.f32 %v7137, %v6189
        %v7140 = vmax.f32 %v7138, %v6230
        %v7141 = vmax.f32 %v7139, %v6232
        %v7142 = vmax.f32 %v7140, %v6273
        %v7143 = vmax.f32 %v7141, %v6275
        %v7144 = vmax.f32 %v7142, %v6316
        %v7145 = vmax.f32 %v7143, %v6318
        %v7146 = vmax.f32 %v7144, %v6359
        %v7147 = vmax.f32 %v7145, %v6361
        %v7148 = vmax.f32 %v7146, %v6402
        %v7149 = vmax.f32 %v7147, %v6404
        %v7150 = vmax.f32 %v7148, %v6445
        %v7151 = vmax.f32 %v7149, %v6447
        %v7152 = vmax.f32 %v7150, %v6488
        %v7153 = vmax.f32 %v7151, %v6490
        %v7154 = vmax.f32 %v7152, %v6531
        %v7155 = vmax.f32 %v7153, %v6533
        %v7156 = vmax.f32 %v7154, %v6574
        %v7157 = vmax.f32 %v7155, %v6576
        %v7158 = vmax.f32 %v7156, %v6617
        %v7159 = vmax.f32 %v7157, %v6619
        %v7160 = vmax.f32 %v7158, %v6660
        %v7161 = vmax.f32 %v7159, %v6662
        %v7162 = vmax.f32 %v7160, %v6703
        %v7163 = vmax.f32 %v7161, %v6705
        %v7164 = vmax.f32 %v7162, %v6746
        %v7165 = vmax.f32 %v7163, %v6748
        %v7166 = vmax.f32 %v7164, %v6789
        %v7167 = vmax.f32 %v7165, %v6791
        %v7168 = vmax.f32 %v7166, %v6832
        %v7169 = vmax.f32 %v7167, %v6834
        %v7170 = vmax.f32 %v7168, %v6875
        %v7171 = vmax.f32 %v7169, %v6877
        %v7172 = vmax.f32 %v7170, %v6918
        %v7173 = vmax.f32 %v7171, %v6920
        %v7174 = vmax.f32 %v7172, %v6961
        %v7175 = vmax.f32 %v7173, %v6963
        %v7176 = vmax.f32 %v7174, %v7004
        %v7177 = vmax.f32 %v7175, %v7006
        %v7178 = vmax.f32 %v7176, %v7047
        %v7179 = vmax.f32 %v7177, %v7049
        %v7180 = vmax.f32 %v7178, %v7179
        %7181 = vmax.xlane.f32.xlu0 %v7180
        %v7182 = vpop.xlane.xlu0 %7181
        %v7183 = vmax.f32 %v7051, %v7117
        %v7184 = vmax.f32 %v7052, %v7182
        %v7185 = vsub.f32 %v7051, %v7183
        %v7186 = vsub.f32 %v7052, %v7184
        %v7187 = vmul.f32 %v7185, 1.442695
        %v7188 = vpow.pop %v7187
        %v7189 = vmul.f32 %v7186, 1.442695
        %v7190 = vpow.pop %v7189
        %7192 = vset.pattern.permute.xlu0 0
        %7193 = vperm.xlu0 %7192, %v7183
        %v7194 = vpop.permute.xlu0 %7193
        %7197 = vset.pattern.permute.xlu0 0
        %7198 = vperm.xlu0 %7197, %v7184
        %v7199 = vpop.permute.xlu0 %7198
        %v7201 = vsub.f32 %v5710, %v7194
        %v7202 = vsub.f32 %v5712, %v7194
        %v7203 = vsub.f32 %v5753, %v7194
        %v7204 = vsub.f32 %v5755, %v7194
        %v7205 = vsub.f32 %v5796, %v7194
        %v7206 = vsub.f32 %v5798, %v7194
        %v7207 = vsub.f32 %v5839, %v7194
        %v7208 = vsub.f32 %v5841, %v7194
        %v7209 = vsub.f32 %v5882, %v7194
        %v7210 = vsub.f32 %v5884, %v7194
        %v7211 = vsub.f32 %v5925, %v7194
        %v7212 = vsub.f32 %v5927, %v7194
        %v7213 = vsub.f32 %v5968, %v7194
        %v7214 = vsub.f32 %v5970, %v7194
        %v7215 = vsub.f32 %v6011, %v7194
        %v7216 = vsub.f32 %v6013, %v7194
        %v7217 = vsub.f32 %v6054, %v7194
        %v7218 = vsub.f32 %v6056, %v7194
        %v7219 = vsub.f32 %v6097, %v7194
        %v7220 = vsub.f32 %v6099, %v7194
        %v7221 = vsub.f32 %v6140, %v7194
        %v7222 = vsub.f32 %v6142, %v7194
        %v7223 = vsub.f32 %v6183, %v7194
        %v7224 = vsub.f32 %v6185, %v7194
        %v7225 = vsub.f32 %v6226, %v7194
        %v7226 = vsub.f32 %v6228, %v7194
        %v7227 = vsub.f32 %v6269, %v7194
        %v7228 = vsub.f32 %v6271, %v7194
        %v7229 = vsub.f32 %v6312, %v7194
        %v7230 = vsub.f32 %v6314, %v7194
        %v7231 = vsub.f32 %v6355, %v7194
        %v7232 = vsub.f32 %v6357, %v7194
        %v7233 = vsub.f32 %v6398, %v7194
        %v7234 = vsub.f32 %v6400, %v7194
        %v7235 = vsub.f32 %v6441, %v7194
        %v7236 = vsub.f32 %v6443, %v7194
        %v7237 = vsub.f32 %v6484, %v7194
        %v7238 = vsub.f32 %v6486, %v7194
        %v7239 = vsub.f32 %v6527, %v7194
        %v7240 = vsub.f32 %v6529, %v7194
        %v7241 = vsub.f32 %v6570, %v7194
        %v7242 = vsub.f32 %v6572, %v7194
        %v7243 = vsub.f32 %v6613, %v7194
        %v7244 = vsub.f32 %v6615, %v7194
        %v7245 = vsub.f32 %v6656, %v7194
        %v7246 = vsub.f32 %v6658, %v7194
        %v7247 = vsub.f32 %v6699, %v7194
        %v7248 = vsub.f32 %v6701, %v7194
        %v7249 = vsub.f32 %v6742, %v7194
        %v7250 = vsub.f32 %v6744, %v7194
        %v7251 = vsub.f32 %v6785, %v7194
        %v7252 = vsub.f32 %v6787, %v7194
        %v7253 = vsub.f32 %v6828, %v7194
        %v7254 = vsub.f32 %v6830, %v7194
        %v7255 = vsub.f32 %v6871, %v7194
        %v7256 = vsub.f32 %v6873, %v7194
        %v7257 = vsub.f32 %v6914, %v7194
        %v7258 = vsub.f32 %v6916, %v7194
        %v7259 = vsub.f32 %v6957, %v7194
        %v7260 = vsub.f32 %v6959, %v7194
        %v7261 = vsub.f32 %v7000, %v7194
        %v7262 = vsub.f32 %v7002, %v7194
        %v7263 = vsub.f32 %v7043, %v7194
        %v7264 = vsub.f32 %v7045, %v7194
        %v7265 = vsub.f32 %v5714, %v7199
        %v7266 = vsub.f32 %v5716, %v7199
        %v7267 = vsub.f32 %v5757, %v7199
        %v7268 = vsub.f32 %v5759, %v7199
        %v7269 = vsub.f32 %v5800, %v7199
        %v7270 = vsub.f32 %v5802, %v7199
        %v7271 = vsub.f32 %v5843, %v7199
        %v7272 = vsub.f32 %v5845, %v7199
        %v7273 = vsub.f32 %v5886, %v7199
        %v7274 = vsub.f32 %v5888, %v7199
        %v7275 = vsub.f32 %v5929, %v7199
        %v7276 = vsub.f32 %v5931, %v7199
        %v7277 = vsub.f32 %v5972, %v7199
        %v7278 = vsub.f32 %v5974, %v7199
        %v7279 = vsub.f32 %v6015, %v7199
        %v7280 = vsub.f32 %v6017, %v7199
        %v7281 = vsub.f32 %v6058, %v7199
        %v7282 = vsub.f32 %v6060, %v7199
        %v7283 = vsub.f32 %v6101, %v7199
        %v7284 = vsub.f32 %v6103, %v7199
        %v7285 = vsub.f32 %v6144, %v7199
        %v7286 = vsub.f32 %v6146, %v7199
        %v7287 = vsub.f32 %v6187, %v7199
        %v7288 = vsub.f32 %v6189, %v7199
        %v7289 = vsub.f32 %v6230, %v7199
        %v7290 = vsub.f32 %v6232, %v7199
        %v7291 = vsub.f32 %v6273, %v7199
        %v7292 = vsub.f32 %v6275, %v7199
        %v7293 = vsub.f32 %v6316, %v7199
        %v7294 = vsub.f32 %v6318, %v7199
        %v7295 = vsub.f32 %v6359, %v7199
        %v7296 = vsub.f32 %v6361, %v7199
        %v7297 = vsub.f32 %v6402, %v7199
        %v7298 = vsub.f32 %v6404, %v7199
        %v7299 = vsub.f32 %v6445, %v7199
        %v7300 = vsub.f32 %v6447, %v7199
        %v7301 = vsub.f32 %v6488, %v7199
        %v7302 = vsub.f32 %v6490, %v7199
        %v7303 = vsub.f32 %v6531, %v7199
        %v7304 = vsub.f32 %v6533, %v7199
        %v7305 = vsub.f32 %v6574, %v7199
        %v7306 = vsub.f32 %v6576, %v7199
        %v7307 = vsub.f32 %v6617, %v7199
        %v7308 = vsub.f32 %v6619, %v7199
        %v7309 = vsub.f32 %v6660, %v7199
        %v7310 = vsub.f32 %v6662, %v7199
        %v7311 = vsub.f32 %v6703, %v7199
        %v7312 = vsub.f32 %v6705, %v7199
        %v7313 = vsub.f32 %v6746, %v7199
        %v7314 = vsub.f32 %v6748, %v7199
        %v7315 = vsub.f32 %v6789, %v7199
        %v7316 = vsub.f32 %v6791, %v7199
        %v7317 = vsub.f32 %v6832, %v7199
        %v7318 = vsub.f32 %v6834, %v7199
        %v7319 = vsub.f32 %v6875, %v7199
        %v7320 = vsub.f32 %v6877, %v7199
        %v7321 = vsub.f32 %v6918, %v7199
        %v7322 = vsub.f32 %v6920, %v7199
        %v7323 = vsub.f32 %v6961, %v7199
        %v7324 = vsub.f32 %v6963, %v7199
        %v7325 = vsub.f32 %v7004, %v7199
        %v7326 = vsub.f32 %v7006, %v7199
        %v7327 = vsub.f32 %v7047, %v7199
        %v7328 = vsub.f32 %v7049, %v7199
        %v7329 = vmul.f32 %v7201, 1.442695
        %v7330 = vpow.pop %v7329
        %v7331 = vmul.f32 %v7202, 1.442695
        %v7332 = vpow.pop %v7331
        %v7333 = vmul.f32 %v7203, 1.442695
        %v7334 = vpow.pop %v7333
        %v7335 = vmul.f32 %v7204, 1.442695
        %v7336 = vpow.pop %v7335
        %v7337 = vmul.f32 %v7205, 1.442695
        %v7338 = vpow.pop %v7337
        %v7339 = vmul.f32 %v7206, 1.442695
        %v7340 = vpow.pop %v7339
        %v7341 = vmul.f32 %v7207, 1.442695
        %v7342 = vpow.pop %v7341
        %v7343 = vmul.f32 %v7208, 1.442695
        %v7344 = vpow.pop %v7343
        %v7345 = vmul.f32 %v7209, 1.442695
        %v7346 = vpow.pop %v7345
        %v7347 = vmul.f32 %v7210, 1.442695
        %v7348 = vpow.pop %v7347
        %v7349 = vmul.f32 %v7211, 1.442695
        %v7350 = vpow.pop %v7349
        %v7351 = vmul.f32 %v7212, 1.442695
        %v7352 = vpow.pop %v7351
        %v7353 = vmul.f32 %v7213, 1.442695
        %v7354 = vpow.pop %v7353
        %v7355 = vmul.f32 %v7214, 1.442695
        %v7356 = vpow.pop %v7355
        %v7357 = vmul.f32 %v7215, 1.442695
        %v7358 = vpow.pop %v7357
        %v7359 = vmul.f32 %v7216, 1.442695
        %v7360 = vpow.pop %v7359
        %v7361 = vmul.f32 %v7217, 1.442695
        %v7362 = vpow.pop %v7361
        %v7363 = vmul.f32 %v7218, 1.442695
        %v7364 = vpow.pop %v7363
        %v7365 = vmul.f32 %v7219, 1.442695
        %v7366 = vpow.pop %v7365
        %v7367 = vmul.f32 %v7220, 1.442695
        %v7368 = vpow.pop %v7367
        %v7369 = vmul.f32 %v7221, 1.442695
        %v7370 = vpow.pop %v7369
        %v7371 = vmul.f32 %v7222, 1.442695
        %v7372 = vpow.pop %v7371
        %v7373 = vmul.f32 %v7223, 1.442695
        %v7374 = vpow.pop %v7373
        %v7375 = vmul.f32 %v7224, 1.442695
        %v7376 = vpow.pop %v7375
        %v7377 = vmul.f32 %v7225, 1.442695
        %v7378 = vpow.pop %v7377
        %v7379 = vmul.f32 %v7226, 1.442695
        %v7380 = vpow.pop %v7379
        %v7381 = vmul.f32 %v7227, 1.442695
        %v7382 = vpow.pop %v7381
        %v7383 = vmul.f32 %v7228, 1.442695
        %v7384 = vpow.pop %v7383
        %v7385 = vmul.f32 %v7229, 1.442695
        %v7386 = vpow.pop %v7385
        %v7387 = vmul.f32 %v7230, 1.442695
        %v7388 = vpow.pop %v7387
        %v7389 = vmul.f32 %v7231, 1.442695
        %v7390 = vpow.pop %v7389
        %v7391 = vmul.f32 %v7232, 1.442695
        %v7392 = vpow.pop %v7391
        %v7393 = vmul.f32 %v7233, 1.442695
        %v7394 = vpow.pop %v7393
        %v7395 = vmul.f32 %v7234, 1.442695
        %v7396 = vpow.pop %v7395
        %v7397 = vmul.f32 %v7235, 1.442695
        %v7398 = vpow.pop %v7397
        %v7399 = vmul.f32 %v7236, 1.442695
        %v7400 = vpow.pop %v7399
        %v7401 = vmul.f32 %v7237, 1.442695
        %v7402 = vpow.pop %v7401
        %v7403 = vmul.f32 %v7238, 1.442695
        %v7404 = vpow.pop %v7403
        %v7405 = vmul.f32 %v7239, 1.442695
        %v7406 = vpow.pop %v7405
        %v7407 = vmul.f32 %v7240, 1.442695
        %v7408 = vpow.pop %v7407
        %v7409 = vmul.f32 %v7241, 1.442695
        %v7410 = vpow.pop %v7409
        %v7411 = vmul.f32 %v7242, 1.442695
        %v7412 = vpow.pop %v7411
        %v7413 = vmul.f32 %v7243, 1.442695
        %v7414 = vpow.pop %v7413
        %v7415 = vmul.f32 %v7244, 1.442695
        %v7416 = vpow.pop %v7415
        %v7417 = vmul.f32 %v7245, 1.442695
        %v7418 = vpow.pop %v7417
        %v7419 = vmul.f32 %v7246, 1.442695
        %v7420 = vpow.pop %v7419
        %v7421 = vmul.f32 %v7247, 1.442695
        %v7422 = vpow.pop %v7421
        %v7423 = vmul.f32 %v7248, 1.442695
        %v7424 = vpow.pop %v7423
        %v7425 = vmul.f32 %v7249, 1.442695
        %v7426 = vpow.pop %v7425
        %v7427 = vmul.f32 %v7250, 1.442695
        %v7428 = vpow.pop %v7427
        %v7429 = vmul.f32 %v7251, 1.442695
        %v7430 = vpow.pop %v7429
        %v7431 = vmul.f32 %v7252, 1.442695
        %v7432 = vpow.pop %v7431
        %v7433 = vmul.f32 %v7253, 1.442695
        %v7434 = vpow.pop %v7433
        %v7435 = vmul.f32 %v7254, 1.442695
        %v7436 = vpow.pop %v7435
        %v7437 = vmul.f32 %v7255, 1.442695
        %v7438 = vpow.pop %v7437
        %v7439 = vmul.f32 %v7256, 1.442695
        %v7440 = vpow.pop %v7439
        %v7441 = vmul.f32 %v7257, 1.442695
        %v7442 = vpow.pop %v7441
        %v7443 = vmul.f32 %v7258, 1.442695
        %v7444 = vpow.pop %v7443
        %v7445 = vmul.f32 %v7259, 1.442695
        %v7446 = vpow.pop %v7445
        %v7447 = vmul.f32 %v7260, 1.442695
        %v7448 = vpow.pop %v7447
        %v7449 = vmul.f32 %v7261, 1.442695
        %v7450 = vpow.pop %v7449
        %v7451 = vmul.f32 %v7262, 1.442695
        %v7452 = vpow.pop %v7451
        %v7453 = vmul.f32 %v7263, 1.442695
        %v7454 = vpow.pop %v7453
        %v7455 = vmul.f32 %v7264, 1.442695
        %v7456 = vpow.pop %v7455
        %v7457 = vmul.f32 %v7265, 1.442695
        %v7458 = vpow.pop %v7457
        %v7459 = vmul.f32 %v7266, 1.442695
        %v7460 = vpow.pop %v7459
        %v7461 = vmul.f32 %v7267, 1.442695
        %v7462 = vpow.pop %v7461
        %v7463 = vmul.f32 %v7268, 1.442695
        %v7464 = vpow.pop %v7463
        %v7465 = vmul.f32 %v7269, 1.442695
        %v7466 = vpow.pop %v7465
        %v7467 = vmul.f32 %v7270, 1.442695
        %v7468 = vpow.pop %v7467
        %v7469 = vmul.f32 %v7271, 1.442695
        %v7470 = vpow.pop %v7469
        %v7471 = vmul.f32 %v7272, 1.442695
        %v7472 = vpow.pop %v7471
        %v7473 = vmul.f32 %v7273, 1.442695
        %v7474 = vpow.pop %v7473
        %v7475 = vmul.f32 %v7274, 1.442695
        %v7476 = vpow.pop %v7475
        %v7477 = vmul.f32 %v7275, 1.442695
        %v7478 = vpow.pop %v7477
        %v7479 = vmul.f32 %v7276, 1.442695
        %v7480 = vpow.pop %v7479
        %v7481 = vmul.f32 %v7277, 1.442695
        %v7482 = vpow.pop %v7481
        %v7483 = vmul.f32 %v7278, 1.442695
        %v7484 = vpow.pop %v7483
        %v7485 = vmul.f32 %v7279, 1.442695
        %v7486 = vpow.pop %v7485
        %v7487 = vmul.f32 %v7280, 1.442695
        %v7488 = vpow.pop %v7487
        %v7489 = vmul.f32 %v7281, 1.442695
        %v7490 = vpow.pop %v7489
        %v7491 = vmul.f32 %v7282, 1.442695
        %v7492 = vpow.pop %v7491
        %v7493 = vmul.f32 %v7283, 1.442695
        %v7494 = vpow.pop %v7493
        %v7495 = vmul.f32 %v7284, 1.442695
        %v7496 = vpow.pop %v7495
        %v7497 = vmul.f32 %v7285, 1.442695
        %v7498 = vpow.pop %v7497
        %v7499 = vmul.f32 %v7286, 1.442695
        %v7500 = vpow.pop %v7499
        %v7501 = vmul.f32 %v7287, 1.442695
        %v7502 = vpow.pop %v7501
        %v7503 = vmul.f32 %v7288, 1.442695
        %v7504 = vpow.pop %v7503
        %v7505 = vmul.f32 %v7289, 1.442695
        %v7506 = vpow.pop %v7505
        %v7507 = vmul.f32 %v7290, 1.442695
        %v7508 = vpow.pop %v7507
        %v7509 = vmul.f32 %v7291, 1.442695
        %v7510 = vpow.pop %v7509
        %v7511 = vmul.f32 %v7292, 1.442695
        %v7512 = vpow.pop %v7511
        %v7513 = vmul.f32 %v7293, 1.442695
        %v7514 = vpow.pop %v7513
        %v7515 = vmul.f32 %v7294, 1.442695
        %v7516 = vpow.pop %v7515
        %v7517 = vmul.f32 %v7295, 1.442695
        %v7518 = vpow.pop %v7517
        %v7519 = vmul.f32 %v7296, 1.442695
        %v7520 = vpow.pop %v7519
        %v7521 = vmul.f32 %v7297, 1.442695
        %v7522 = vpow.pop %v7521
        %v7523 = vmul.f32 %v7298, 1.442695
        %v7524 = vpow.pop %v7523
        %v7525 = vmul.f32 %v7299, 1.442695
        %v7526 = vpow.pop %v7525
        %v7527 = vmul.f32 %v7300, 1.442695
        %v7528 = vpow.pop %v7527
        %v7529 = vmul.f32 %v7301, 1.442695
        %v7530 = vpow.pop %v7529
        %v7531 = vmul.f32 %v7302, 1.442695
        %v7532 = vpow.pop %v7531
        %v7533 = vmul.f32 %v7303, 1.442695
        %v7534 = vpow.pop %v7533
        %v7535 = vmul.f32 %v7304, 1.442695
        %v7536 = vpow.pop %v7535
        %v7537 = vmul.f32 %v7305, 1.442695
        %v7538 = vpow.pop %v7537
        %v7539 = vmul.f32 %v7306, 1.442695
        %v7540 = vpow.pop %v7539
        %v7541 = vmul.f32 %v7307, 1.442695
        %v7542 = vpow.pop %v7541
        %v7543 = vmul.f32 %v7308, 1.442695
        %v7544 = vpow.pop %v7543
        %v7545 = vmul.f32 %v7309, 1.442695
        %v7546 = vpow.pop %v7545
        %v7547 = vmul.f32 %v7310, 1.442695
        %v7548 = vpow.pop %v7547
        %v7549 = vmul.f32 %v7311, 1.442695
        %v7550 = vpow.pop %v7549
        %v7551 = vmul.f32 %v7312, 1.442695
        %v7552 = vpow.pop %v7551
        %v7553 = vmul.f32 %v7313, 1.442695
        %v7554 = vpow.pop %v7553
        %v7555 = vmul.f32 %v7314, 1.442695
        %v7556 = vpow.pop %v7555
        %v7557 = vmul.f32 %v7315, 1.442695
        %v7558 = vpow.pop %v7557
        %v7559 = vmul.f32 %v7316, 1.442695
        %v7560 = vpow.pop %v7559
        %v7561 = vmul.f32 %v7317, 1.442695
        %v7562 = vpow.pop %v7561
        %v7563 = vmul.f32 %v7318, 1.442695
        %v7564 = vpow.pop %v7563
        %v7565 = vmul.f32 %v7319, 1.442695
        %v7566 = vpow.pop %v7565
        %v7567 = vmul.f32 %v7320, 1.442695
        %v7568 = vpow.pop %v7567
        %v7569 = vmul.f32 %v7321, 1.442695
        %v7570 = vpow.pop %v7569
        %v7571 = vmul.f32 %v7322, 1.442695
        %v7572 = vpow.pop %v7571
        %v7573 = vmul.f32 %v7323, 1.442695
        %v7574 = vpow.pop %v7573
        %v7575 = vmul.f32 %v7324, 1.442695
        %v7576 = vpow.pop %v7575
        %v7577 = vmul.f32 %v7325, 1.442695
        %v7578 = vpow.pop %v7577
        %v7579 = vmul.f32 %v7326, 1.442695
        %v7580 = vpow.pop %v7579
        %v7581 = vmul.f32 %v7327, 1.442695
        %v7582 = vpow.pop %v7581
        %v7583 = vmul.f32 %v7328, 1.442695
        %v7584 = vpow.pop %v7583
        %v7585 = vld [vmem:[#allocation3] sm:$0xff]
        %v7586 = vld [vmem:[#allocation3 + $0x8] sm:$0xff]
        %v7587 = vmul.f32 %v7188, %v7585
        %v7588 = vmul.f32 %v7190, %v7586
        %v7589 = vadd.f32 %v7330, %v7332
        %v7590 = vadd.f32 %v7589, %v7334
        %v7591 = vadd.f32 %v7590, %v7336
        %v7592 = vadd.f32 %v7591, %v7338
        %v7593 = vadd.f32 %v7592, %v7340
        %v7594 = vadd.f32 %v7593, %v7342
        %v7595 = vadd.f32 %v7594, %v7344
        %v7596 = vadd.f32 %v7595, %v7346
        %v7597 = vadd.f32 %v7596, %v7348
        %v7598 = vadd.f32 %v7597, %v7350
        %v7599 = vadd.f32 %v7598, %v7352
        %v7600 = vadd.f32 %v7599, %v7354
        %v7601 = vadd.f32 %v7600, %v7356
        %v7602 = vadd.f32 %v7601, %v7358
        %v7603 = vadd.f32 %v7602, %v7360
        %v7604 = vadd.f32 %v7603, %v7362
        %v7605 = vadd.f32 %v7604, %v7364
        %v7606 = vadd.f32 %v7605, %v7366
        %v7607 = vadd.f32 %v7606, %v7368
        %v7608 = vadd.f32 %v7607, %v7370
        %v7609 = vadd.f32 %v7608, %v7372
        %v7610 = vadd.f32 %v7609, %v7374
        %v7611 = vadd.f32 %v7610, %v7376
        %v7612 = vadd.f32 %v7611, %v7378
        %v7613 = vadd.f32 %v7612, %v7380
        %v7614 = vadd.f32 %v7613, %v7382
        %v7615 = vadd.f32 %v7614, %v7384
        %v7616 = vadd.f32 %v7615, %v7386
        %v7617 = vadd.f32 %v7616, %v7388
        %v7618 = vadd.f32 %v7617, %v7390
        %v7619 = vadd.f32 %v7618, %v7392
        %v7620 = vadd.f32 %v7619, %v7394
        %v7621 = vadd.f32 %v7620, %v7396
        %v7622 = vadd.f32 %v7621, %v7398
        %v7623 = vadd.f32 %v7622, %v7400
        %v7624 = vadd.f32 %v7623, %v7402
        %v7625 = vadd.f32 %v7624, %v7404
        %v7626 = vadd.f32 %v7625, %v7406
        %v7627 = vadd.f32 %v7626, %v7408
        %v7628 = vadd.f32 %v7627, %v7410
        %v7629 = vadd.f32 %v7628, %v7412
        %v7630 = vadd.f32 %v7629, %v7414
        %v7631 = vadd.f32 %v7630, %v7416
        %v7632 = vadd.f32 %v7631, %v7418
        %v7633 = vadd.f32 %v7632, %v7420
        %v7634 = vadd.f32 %v7633, %v7422
        %v7635 = vadd.f32 %v7634, %v7424
        %v7636 = vadd.f32 %v7635, %v7426
        %v7637 = vadd.f32 %v7636, %v7428
        %v7638 = vadd.f32 %v7637, %v7430
        %v7639 = vadd.f32 %v7638, %v7432
        %v7640 = vadd.f32 %v7639, %v7434
        %v7641 = vadd.f32 %v7640, %v7436
        %v7642 = vadd.f32 %v7641, %v7438
        %v7643 = vadd.f32 %v7642, %v7440
        %v7644 = vadd.f32 %v7643, %v7442
        %v7645 = vadd.f32 %v7644, %v7444
        %v7646 = vadd.f32 %v7645, %v7446
        %v7647 = vadd.f32 %v7646, %v7448
        %v7648 = vadd.f32 %v7647, %v7450
        %v7649 = vadd.f32 %v7648, %v7452
        %v7650 = vadd.f32 %v7649, %v7454
        %v7651 = vadd.f32 %v7650, %v7456
        %7652 = vadd.xlane.f32.xlu0 %v7651
        %v7653 = vpop.xlane.xlu0 %7652
        %v7654 = vadd.f32 %v7458, %v7460
        %v7655 = vadd.f32 %v7654, %v7462
        %v7656 = vadd.f32 %v7655, %v7464
        %v7657 = vadd.f32 %v7656, %v7466
        %v7658 = vadd.f32 %v7657, %v7468
        %v7659 = vadd.f32 %v7658, %v7470
        %v7660 = vadd.f32 %v7659, %v7472
        %v7661 = vadd.f32 %v7660, %v7474
        %v7662 = vadd.f32 %v7661, %v7476
        %v7663 = vadd.f32 %v7662, %v7478
        %v7664 = vadd.f32 %v7663, %v7480
        %v7665 = vadd.f32 %v7664, %v7482
        %v7666 = vadd.f32 %v7665, %v7484
        %v7667 = vadd.f32 %v7666, %v7486
        %v7668 = vadd.f32 %v7667, %v7488
        %v7669 = vadd.f32 %v7668, %v7490
        %v7670 = vadd.f32 %v7669, %v7492
        %v7671 = vadd.f32 %v7670, %v7494
        %v7672 = vadd.f32 %v7671, %v7496
        %v7673 = vadd.f32 %v7672, %v7498
        %v7674 = vadd.f32 %v7673, %v7500
        %v7675 = vadd.f32 %v7674, %v7502
        %v7676 = vadd.f32 %v7675, %v7504
        %v7677 = vadd.f32 %v7676, %v7506
        %v7678 = vadd.f32 %v7677, %v7508
        %v7679 = vadd.f32 %v7678, %v7510
        %v7680 = vadd.f32 %v7679, %v7512
        %v7681 = vadd.f32 %v7680, %v7514
        %v7682 = vadd.f32 %v7681, %v7516
        %v7683 = vadd.f32 %v7682, %v7518
        %v7684 = vadd.f32 %v7683, %v7520
        %v7685 = vadd.f32 %v7684, %v7522
        %v7686 = vadd.f32 %v7685, %v7524
        %v7687 = vadd.f32 %v7686, %v7526
        %v7688 = vadd.f32 %v7687, %v7528
        %v7689 = vadd.f32 %v7688, %v7530
        %v7690 = vadd.f32 %v7689, %v7532
        %v7691 = vadd.f32 %v7690, %v7534
        %v7692 = vadd.f32 %v7691, %v7536
        %v7693 = vadd.f32 %v7692, %v7538
        %v7694 = vadd.f32 %v7693, %v7540
        %v7695 = vadd.f32 %v7694, %v7542
        %v7696 = vadd.f32 %v7695, %v7544
        %v7697 = vadd.f32 %v7696, %v7546
        %v7698 = vadd.f32 %v7697, %v7548
        %v7699 = vadd.f32 %v7698, %v7550
        %v7700 = vadd.f32 %v7699, %v7552
        %v7701 = vadd.f32 %v7700, %v7554
        %v7702 = vadd.f32 %v7701, %v7556
        %v7703 = vadd.f32 %v7702, %v7558
        %v7704 = vadd.f32 %v7703, %v7560
        %v7705 = vadd.f32 %v7704, %v7562
        %v7706 = vadd.f32 %v7705, %v7564
        %v7707 = vadd.f32 %v7706, %v7566
        %v7708 = vadd.f32 %v7707, %v7568
        %v7709 = vadd.f32 %v7708, %v7570
        %v7710 = vadd.f32 %v7709, %v7572
        %v7711 = vadd.f32 %v7710, %v7574
        %v7712 = vadd.f32 %v7711, %v7576
        %v7713 = vadd.f32 %v7712, %v7578
        %v7714 = vadd.f32 %v7713, %v7580
        %v7715 = vadd.f32 %v7714, %v7582
        %v7716 = vadd.f32 %v7715, %v7584
        %7717 = vadd.xlane.f32.xlu0 %v7716
        %v7718 = vpop.xlane.xlu0 %7717
        %v7719 = vadd.f32 %v7587, %v7653
        %v7720 = vadd.f32 %v7588, %v7718
        %vm7721 = vcmask 7168
        %7722 = vst.msk [vmem:[#allocation3] sm:$0xff] %vm7721, %v7719
        %7723 = vst.msk [vmem:[#allocation3 + $0x8] sm:$0xff] %vm7721, %v7720
        %v7724 = vld [vmem:[#allocation4] sm:$0xff]
        %v7725 = vld [vmem:[#allocation4 + $0x8] sm:$0xff]
        %7727 = vset.pattern.permute.xlu0 0
        %7728 = vperm.xlu0 %7727, %v7188
        %v7729 = vpop.permute.xlu0 %7728
        %7732 = vset.pattern.permute.xlu0 0
        %7733 = vperm.xlu0 %7732, %v7190
        %v7734 = vpop.permute.xlu0 %7733
        %v7736 = vmul.f32 %v7729, %v7724
        %v7737 = vmul.f32 %v7734, %v7725
        %v7738 = vpack.c.bf16 %v7458, %v7330
        %v7739 = vpack.c.bf16 %v7460, %v7332
        %v7740 = vpack.c.bf16 %v7462, %v7334
        %v7741 = vpack.c.bf16 %v7464, %v7336
        %v7742 = vpack.c.bf16 %v7466, %v7338
        %v7743 = vpack.c.bf16 %v7468, %v7340
        %v7744 = vpack.c.bf16 %v7470, %v7342
        %v7745 = vpack.c.bf16 %v7472, %v7344
        %v7746 = vpack.c.bf16 %v7474, %v7346
        %v7747 = vpack.c.bf16 %v7476, %v7348
        %v7748 = vpack.c.bf16 %v7478, %v7350
        %v7749 = vpack.c.bf16 %v7480, %v7352
        %v7750 = vpack.c.bf16 %v7482, %v7354
        %v7751 = vpack.c.bf16 %v7484, %v7356
        %v7752 = vpack.c.bf16 %v7486, %v7358
        %v7753 = vpack.c.bf16 %v7488, %v7360
        %v7754 = vpack.c.bf16 %v7490, %v7362
        %v7755 = vpack.c.bf16 %v7492, %v7364
        %v7756 = vpack.c.bf16 %v7494, %v7366
        %v7757 = vpack.c.bf16 %v7496, %v7368
        %v7758 = vpack.c.bf16 %v7498, %v7370
        %v7759 = vpack.c.bf16 %v7500, %v7372
        %v7760 = vpack.c.bf16 %v7502, %v7374
        %v7761 = vpack.c.bf16 %v7504, %v7376
        %v7762 = vpack.c.bf16 %v7506, %v7378
        %v7763 = vpack.c.bf16 %v7508, %v7380
        %v7764 = vpack.c.bf16 %v7510, %v7382
        %v7765 = vpack.c.bf16 %v7512, %v7384
        %v7766 = vpack.c.bf16 %v7514, %v7386
        %v7767 = vpack.c.bf16 %v7516, %v7388
        %v7768 = vpack.c.bf16 %v7518, %v7390
        %v7769 = vpack.c.bf16 %v7520, %v7392
        %v7770 = vpack.c.bf16 %v7522, %v7394
        %v7771 = vpack.c.bf16 %v7524, %v7396
        %v7772 = vpack.c.bf16 %v7526, %v7398
        %v7773 = vpack.c.bf16 %v7528, %v7400
        %v7774 = vpack.c.bf16 %v7530, %v7402
        %v7775 = vpack.c.bf16 %v7532, %v7404
        %v7776 = vpack.c.bf16 %v7534, %v7406
        %v7777 = vpack.c.bf16 %v7536, %v7408
        %v7778 = vpack.c.bf16 %v7538, %v7410
        %v7779 = vpack.c.bf16 %v7540, %v7412
        %v7780 = vpack.c.bf16 %v7542, %v7414
        %v7781 = vpack.c.bf16 %v7544, %v7416
        %v7782 = vpack.c.bf16 %v7546, %v7418
        %v7783 = vpack.c.bf16 %v7548, %v7420
        %v7784 = vpack.c.bf16 %v7550, %v7422
        %v7785 = vpack.c.bf16 %v7552, %v7424
        %v7786 = vpack.c.bf16 %v7554, %v7426
        %v7787 = vpack.c.bf16 %v7556, %v7428
        %v7788 = vpack.c.bf16 %v7558, %v7430
        %v7789 = vpack.c.bf16 %v7560, %v7432
        %v7790 = vpack.c.bf16 %v7562, %v7434
        %v7791 = vpack.c.bf16 %v7564, %v7436
        %v7792 = vpack.c.bf16 %v7566, %v7438
        %v7793 = vpack.c.bf16 %v7568, %v7440
        %v7794 = vpack.c.bf16 %v7570, %v7442
        %v7795 = vpack.c.bf16 %v7572, %v7444
        %v7796 = vpack.c.bf16 %v7574, %v7446
        %v7797 = vpack.c.bf16 %v7576, %v7448
        %v7798 = vpack.c.bf16 %v7578, %v7450
        %v7799 = vpack.c.bf16 %v7580, %v7452
        %v7800 = vpack.c.bf16 %v7582, %v7454
        %v7801 = vpack.c.bf16 %v7584, %v7456
        %v8826 = vunpack.c.l.b16 %v1445
        %v8827 = vunpack.c.l.b16 %v1446
        %v8828 = vunpack.c.l.b16 %v1447
        %v8829 = vunpack.c.l.b16 %v1448
        %v8830 = vunpack.c.l.b16 %v1449
        %v8831 = vunpack.c.l.b16 %v1450
        %v8832 = vunpack.c.l.b16 %v1451
        %v8833 = vunpack.c.l.b16 %v1452
        %v8834 = vunpack.c.l.b16 %v1453
        %v8835 = vunpack.c.l.b16 %v1454
        %v8836 = vunpack.c.l.b16 %v1455
        %v8837 = vunpack.c.l.b16 %v1456
        %v8838 = vunpack.c.l.b16 %v1457
        %v8839 = vunpack.c.l.b16 %v1458
        %v8840 = vunpack.c.l.b16 %v1459
        %v8841 = vunpack.c.l.b16 %v1460
        %v8842 = vunpack.c.l.b16 %v1461
        %v8843 = vunpack.c.l.b16 %v1462
        %v8844 = vunpack.c.l.b16 %v1463
        %v8845 = vunpack.c.l.b16 %v1464
        %v8846 = vunpack.c.l.b16 %v1465
        %v8847 = vunpack.c.l.b16 %v1466
        %v8848 = vunpack.c.l.b16 %v1467
        %v8849 = vunpack.c.l.b16 %v1468
        %v8850 = vunpack.c.l.b16 %v1469
        %v8851 = vunpack.c.l.b16 %v1470
        %v8852 = vunpack.c.l.b16 %v1471
        %v8853 = vunpack.c.l.b16 %v1472
        %v8854 = vunpack.c.l.b16 %v1473
        %v8855 = vunpack.c.l.b16 %v1474
        %v8856 = vunpack.c.l.b16 %v1475
        %v8857 = vunpack.c.l.b16 %v1476
        %v8858 = vunpack.c.l.b16 %v1477
        %v8859 = vunpack.c.l.b16 %v1478
        %v8860 = vunpack.c.l.b16 %v1479
        %v8861 = vunpack.c.l.b16 %v1480
        %v8862 = vunpack.c.l.b16 %v1481
        %v8863 = vunpack.c.l.b16 %v1482
        %v8864 = vunpack.c.l.b16 %v1483
        %v8865 = vunpack.c.l.b16 %v1484
        %v8866 = vunpack.c.l.b16 %v1485
        %v8867 = vunpack.c.l.b16 %v1486
        %v8868 = vunpack.c.l.b16 %v1487
        %v8869 = vunpack.c.l.b16 %v1488
        %v8870 = vunpack.c.l.b16 %v1489
        %v8871 = vunpack.c.l.b16 %v1490
        %v8872 = vunpack.c.l.b16 %v1491
        %v8873 = vunpack.c.l.b16 %v1492
        %v8874 = vunpack.c.l.b16 %v1493
        %v8875 = vunpack.c.l.b16 %v1494
        %v8876 = vunpack.c.l.b16 %v1495
        %v8877 = vunpack.c.l.b16 %v1496
        %v8878 = vunpack.c.l.b16 %v1497
        %v8879 = vunpack.c.l.b16 %v1498
        %v8880 = vunpack.c.l.b16 %v1499
        %v8881 = vunpack.c.l.b16 %v1500
        %v8882 = vunpack.c.l.b16 %v1501
        %v8883 = vunpack.c.l.b16 %v1502
        %v8884 = vunpack.c.l.b16 %v1503
        %v8885 = vunpack.c.l.b16 %v1504
        %v8886 = vunpack.c.l.b16 %v1505
        %v8887 = vunpack.c.l.b16 %v1506
        %v8888 = vunpack.c.l.b16 %v1507
        %v8889 = vunpack.c.l.b16 %v1508
        %v8890 = vunpack.c.l.b16 %v1509
        %v8891 = vunpack.c.l.b16 %v1510
        %v8892 = vunpack.c.l.b16 %v1511
        %v8893 = vunpack.c.l.b16 %v1512
        %v8894 = vunpack.c.l.b16 %v1513
        %v8895 = vunpack.c.l.b16 %v1514
        %v8896 = vunpack.c.l.b16 %v1515
        %v8897 = vunpack.c.l.b16 %v1516
        %v8898 = vunpack.c.l.b16 %v1517
        %v8899 = vunpack.c.l.b16 %v1518
        %v8900 = vunpack.c.l.b16 %v1519
        %v8901 = vunpack.c.l.b16 %v1520
        %v8902 = vunpack.c.l.b16 %v1521
        %v8903 = vunpack.c.l.b16 %v1522
        %v8904 = vunpack.c.l.b16 %v1523
        %v8905 = vunpack.c.l.b16 %v1524
        %v8906 = vunpack.c.l.b16 %v1525
        %v8907 = vunpack.c.l.b16 %v1526
        %v8908 = vunpack.c.l.b16 %v1527
        %v8909 = vunpack.c.l.b16 %v1528
        %v8910 = vunpack.c.l.b16 %v1529
        %v8911 = vunpack.c.l.b16 %v1530
        %v8912 = vunpack.c.l.b16 %v1531
        %v8913 = vunpack.c.l.b16 %v1532
        %v8914 = vunpack.c.l.b16 %v1533
        %v8915 = vunpack.c.l.b16 %v1534
        %v8916 = vunpack.c.l.b16 %v1535
        %v8917 = vunpack.c.l.b16 %v1536
        %v8918 = vunpack.c.l.b16 %v1537
        %v8919 = vunpack.c.l.b16 %v1538
        %v8920 = vunpack.c.l.b16 %v1539
        %v8921 = vunpack.c.l.b16 %v1540
        %v8922 = vunpack.c.l.b16 %v1541
        %v8923 = vunpack.c.l.b16 %v1542
        %v8924 = vunpack.c.l.b16 %v1543
        %v8925 = vunpack.c.l.b16 %v1544
        %v8926 = vunpack.c.l.b16 %v1545
        %v8927 = vunpack.c.l.b16 %v1546
        %v8928 = vunpack.c.l.b16 %v1547
        %v8929 = vunpack.c.l.b16 %v1548
        %v8930 = vunpack.c.l.b16 %v1549
        %v8931 = vunpack.c.l.b16 %v1550
        %v8932 = vunpack.c.l.b16 %v1551
        %v8933 = vunpack.c.l.b16 %v1552
        %v8934 = vunpack.c.l.b16 %v1553
        %v8935 = vunpack.c.l.b16 %v1554
        %v8936 = vunpack.c.l.b16 %v1555
        %v8937 = vunpack.c.l.b16 %v1556
        %v8938 = vunpack.c.l.b16 %v1557
        %v8939 = vunpack.c.l.b16 %v1558
        %v8940 = vunpack.c.l.b16 %v1559
        %v8941 = vunpack.c.l.b16 %v1560
        %v8942 = vunpack.c.l.b16 %v1561
        %v8943 = vunpack.c.l.b16 %v1562
        %v8944 = vunpack.c.l.b16 %v1563
        %v8945 = vunpack.c.l.b16 %v1564
        %v8946 = vunpack.c.l.b16 %v1565
        %v8947 = vunpack.c.l.b16 %v1566
        %v8948 = vunpack.c.l.b16 %v1567
        %v8949 = vunpack.c.l.b16 %v1568
        %v8950 = vunpack.c.l.b16 %v1569
        %v8951 = vunpack.c.l.b16 %v1570
        %v8952 = vunpack.c.l.b16 %v1571
        %v8953 = vunpack.c.l.b16 %v1572
        %v8954 = vunpack.c.l.b16 %v1573
        %v8955 = vunpack.c.l.b16 %v1574
        %v8956 = vunpack.c.l.b16 %v1575
        %v8957 = vunpack.c.l.b16 %v1576
        %v8958 = vunpack.c.l.b16 %v1577
        %v8959 = vunpack.c.l.b16 %v1578
        %v8960 = vunpack.c.l.b16 %v1579
        %v8961 = vunpack.c.l.b16 %v1580
        %v8962 = vunpack.c.l.b16 %v1581
        %v8963 = vunpack.c.l.b16 %v1582
        %v8964 = vunpack.c.l.b16 %v1583
        %v8965 = vunpack.c.l.b16 %v1584
        %v8966 = vunpack.c.l.b16 %v1585
        %v8967 = vunpack.c.l.b16 %v1586
        %v8968 = vunpack.c.l.b16 %v1587
        %v8969 = vunpack.c.l.b16 %v1588
        %v8970 = vunpack.c.l.b16 %v1589
        %v8971 = vunpack.c.l.b16 %v1590
        %v8972 = vunpack.c.l.b16 %v1591
        %v8973 = vunpack.c.l.b16 %v1592
        %v8974 = vunpack.c.l.b16 %v1593
        %v8975 = vunpack.c.l.b16 %v1594
        %v8976 = vunpack.c.l.b16 %v1595
        %v8977 = vunpack.c.l.b16 %v1596
        %v8978 = vunpack.c.l.b16 %v1597
        %v8979 = vunpack.c.l.b16 %v1598
        %v8980 = vunpack.c.l.b16 %v1599
        %v8981 = vunpack.c.l.b16 %v1600
        %v8982 = vunpack.c.l.b16 %v1601
        %v8983 = vunpack.c.l.b16 %v1602
        %v8984 = vunpack.c.l.b16 %v1603
        %v8985 = vunpack.c.l.b16 %v1604
        %v8986 = vunpack.c.l.b16 %v1605
        %v8987 = vunpack.c.l.b16 %v1606
        %v8988 = vunpack.c.l.b16 %v1607
        %v8989 = vunpack.c.l.b16 %v1608
        %v8990 = vunpack.c.l.b16 %v1609
        %v8991 = vunpack.c.l.b16 %v1610
        %v8992 = vunpack.c.l.b16 %v1611
        %v8993 = vunpack.c.l.b16 %v1612
        %v8994 = vunpack.c.l.b16 %v1613
        %v8995 = vunpack.c.l.b16 %v1614
        %v8996 = vunpack.c.l.b16 %v1615
        %v8997 = vunpack.c.l.b16 %v1616
        %v8998 = vunpack.c.l.b16 %v1617
        %v8999 = vunpack.c.l.b16 %v1618
        %v9000 = vunpack.c.l.b16 %v1619
        %v9001 = vunpack.c.l.b16 %v1620
        %v9002 = vunpack.c.l.b16 %v1621
        %v9003 = vunpack.c.l.b16 %v1622
        %v9004 = vunpack.c.l.b16 %v1623
        %v9005 = vunpack.c.l.b16 %v1624
        %v9006 = vunpack.c.l.b16 %v1625
        %v9007 = vunpack.c.l.b16 %v1626
        %v9008 = vunpack.c.l.b16 %v1627
        %v9009 = vunpack.c.l.b16 %v1628
        %v9010 = vunpack.c.l.b16 %v1629
        %v9011 = vunpack.c.l.b16 %v1630
        %v9012 = vunpack.c.l.b16 %v1631
        %v9013 = vunpack.c.l.b16 %v1632
        %v9014 = vunpack.c.l.b16 %v1633
        %v9015 = vunpack.c.l.b16 %v1634
        %v9016 = vunpack.c.l.b16 %v1635
        %v9017 = vunpack.c.l.b16 %v1636
        %v9018 = vunpack.c.l.b16 %v1637
        %v9019 = vunpack.c.l.b16 %v1638
        %v9020 = vunpack.c.l.b16 %v1639
        %v9021 = vunpack.c.l.b16 %v1640
        %v9022 = vunpack.c.l.b16 %v1641
        %v9023 = vunpack.c.l.b16 %v1642
        %v9024 = vunpack.c.l.b16 %v1643
        %v9025 = vunpack.c.l.b16 %v1644
        %v9026 = vunpack.c.l.b16 %v1645
        %v9027 = vunpack.c.l.b16 %v1646
        %v9028 = vunpack.c.l.b16 %v1647
        %v9029 = vunpack.c.l.b16 %v1648
        %v9030 = vunpack.c.l.b16 %v1649
        %v9031 = vunpack.c.l.b16 %v1650
        %v9032 = vunpack.c.l.b16 %v1651
        %v9033 = vunpack.c.l.b16 %v1652
        %v9034 = vunpack.c.l.b16 %v1653
        %v9035 = vunpack.c.l.b16 %v1654
        %v9036 = vunpack.c.l.b16 %v1655
        %v9037 = vunpack.c.l.b16 %v1656
        %v9038 = vunpack.c.l.b16 %v1657
        %v9039 = vunpack.c.l.b16 %v1658
        %v9040 = vunpack.c.l.b16 %v1659
        %v9041 = vunpack.c.l.b16 %v1660
        %v9042 = vunpack.c.l.b16 %v1661
        %v9043 = vunpack.c.l.b16 %v1662
        %v9044 = vunpack.c.l.b16 %v1663
        %v9045 = vunpack.c.l.b16 %v1664
        %v9046 = vunpack.c.l.b16 %v1665
        %v9047 = vunpack.c.l.b16 %v1666
        %v9048 = vunpack.c.l.b16 %v1667
        %v9049 = vunpack.c.l.b16 %v1668
        %v9050 = vunpack.c.l.b16 %v1669
        %v9051 = vunpack.c.l.b16 %v1670
        %v9052 = vunpack.c.l.b16 %v1671
        %v9053 = vunpack.c.l.b16 %v1672
        %v9054 = vunpack.c.l.b16 %v1673
        %v9055 = vunpack.c.l.b16 %v1674
        %v9056 = vunpack.c.l.b16 %v1675
        %v9057 = vunpack.c.l.b16 %v1676
        %v9058 = vunpack.c.l.b16 %v1677
        %v9059 = vunpack.c.l.b16 %v1678
        %v9060 = vunpack.c.l.b16 %v1679
        %v9061 = vunpack.c.l.b16 %v1680
        %v9062 = vunpack.c.l.b16 %v1681
        %v9063 = vunpack.c.l.b16 %v1682
        %v9064 = vunpack.c.l.b16 %v1683
        %v9065 = vunpack.c.l.b16 %v1684
        %v9066 = vunpack.c.l.b16 %v1685
        %v9067 = vunpack.c.l.b16 %v1686
        %v9068 = vunpack.c.l.b16 %v1687
        %v9069 = vunpack.c.l.b16 %v1688
        %v9070 = vunpack.c.l.b16 %v1689
        %v9071 = vunpack.c.l.b16 %v1690
        %v9072 = vunpack.c.l.b16 %v1691
        %v9073 = vunpack.c.l.b16 %v1692
        %v9074 = vunpack.c.l.b16 %v1693
        %v9075 = vunpack.c.l.b16 %v1694
        %v9076 = vunpack.c.l.b16 %v1695
        %v9077 = vunpack.c.l.b16 %v1696
        %v9078 = vunpack.c.l.b16 %v1697
        %v9079 = vunpack.c.l.b16 %v1698
        %v9080 = vunpack.c.l.b16 %v1699
        %v9081 = vunpack.c.l.b16 %v1700
        %v9082 = vunpack.c.l.b16 %v1701
        %v9083 = vunpack.c.l.b16 %v1702
        %v9084 = vunpack.c.l.b16 %v1703
        %v9085 = vunpack.c.l.b16 %v1704
        %v9086 = vunpack.c.l.b16 %v1705
        %v9087 = vunpack.c.l.b16 %v1706
        %v9088 = vunpack.c.l.b16 %v1707
        %v9089 = vunpack.c.l.b16 %v1708
        %v9090 = vunpack.c.l.b16 %v1709
        %v9091 = vunpack.c.l.b16 %v1710
        %v9092 = vunpack.c.l.b16 %v1711
        %v9093 = vunpack.c.l.b16 %v1712
        %v9094 = vunpack.c.l.b16 %v1713
        %v9095 = vunpack.c.l.b16 %v1714
        %v9096 = vunpack.c.l.b16 %v1715
        %v9097 = vunpack.c.l.b16 %v1716
        %v9098 = vunpack.c.l.b16 %v1717
        %v9099 = vunpack.c.l.b16 %v1718
        %v9100 = vunpack.c.l.b16 %v1719
        %v9101 = vunpack.c.l.b16 %v1720
        %v9102 = vunpack.c.l.b16 %v1721
        %v9103 = vunpack.c.l.b16 %v1722
        %v9104 = vunpack.c.l.b16 %v1723
        %v9105 = vunpack.c.l.b16 %v1724
        %v9106 = vunpack.c.l.b16 %v1725
        %v9107 = vunpack.c.l.b16 %v1726
        %v9108 = vunpack.c.l.b16 %v1727
        %v9109 = vunpack.c.l.b16 %v1728
        %v9110 = vunpack.c.l.b16 %v1729
        %v9111 = vunpack.c.l.b16 %v1730
        %v9112 = vunpack.c.l.b16 %v1731
        %v9113 = vunpack.c.l.b16 %v1732
        %v9114 = vunpack.c.l.b16 %v1733
        %v9115 = vunpack.c.l.b16 %v1734
        %v9116 = vunpack.c.l.b16 %v1735
        %v9117 = vunpack.c.l.b16 %v1736
        %v9118 = vunpack.c.l.b16 %v1737
        %v9119 = vunpack.c.l.b16 %v1738
        %v9120 = vunpack.c.l.b16 %v1739
        %v9121 = vunpack.c.l.b16 %v1740
        %v9122 = vunpack.c.l.b16 %v1741
        %v9123 = vunpack.c.l.b16 %v1742
        %v9124 = vunpack.c.l.b16 %v1743
        %v9125 = vunpack.c.l.b16 %v1744
        %v9126 = vunpack.c.l.b16 %v1745
        %v9127 = vunpack.c.l.b16 %v1746
        %v9128 = vunpack.c.l.b16 %v1747
        %v9129 = vunpack.c.l.b16 %v1748
        %v9130 = vunpack.c.l.b16 %v1749
        %v9131 = vunpack.c.l.b16 %v1750
        %v9132 = vunpack.c.l.b16 %v1751
        %v9133 = vunpack.c.l.b16 %v1752
        %v9134 = vunpack.c.l.b16 %v1753
        %v9135 = vunpack.c.l.b16 %v1754
        %v9136 = vunpack.c.l.b16 %v1755
        %v9137 = vunpack.c.l.b16 %v1756
        %v9138 = vunpack.c.l.b16 %v1757
        %v9139 = vunpack.c.l.b16 %v1758
        %v9140 = vunpack.c.l.b16 %v1759
        %v9141 = vunpack.c.l.b16 %v1760
        %v9142 = vunpack.c.l.b16 %v1761
        %v9143 = vunpack.c.l.b16 %v1762
        %v9144 = vunpack.c.l.b16 %v1763
        %v9145 = vunpack.c.l.b16 %v1764
        %v9146 = vunpack.c.l.b16 %v1765
        %v9147 = vunpack.c.l.b16 %v1766
        %v9148 = vunpack.c.l.b16 %v1767
        %v9149 = vunpack.c.l.b16 %v1768
        %v9150 = vunpack.c.l.b16 %v1769
        %v9151 = vunpack.c.l.b16 %v1770
        %v9152 = vunpack.c.l.b16 %v1771
        %v9153 = vunpack.c.l.b16 %v1772
        %v9154 = vunpack.c.l.b16 %v1773
        %v9155 = vunpack.c.l.b16 %v1774
        %v9156 = vunpack.c.l.b16 %v1775
        %v9157 = vunpack.c.l.b16 %v1776
        %v9158 = vunpack.c.l.b16 %v1777
        %v9159 = vunpack.c.l.b16 %v1778
        %v9160 = vunpack.c.l.b16 %v1779
        %v9161 = vunpack.c.l.b16 %v1780
        %v9162 = vunpack.c.l.b16 %v1781
        %v9163 = vunpack.c.l.b16 %v1782
        %v9164 = vunpack.c.l.b16 %v1783
        %v9165 = vunpack.c.l.b16 %v1784
        %v9166 = vunpack.c.l.b16 %v1785
        %v9167 = vunpack.c.l.b16 %v1786
        %v9168 = vunpack.c.l.b16 %v1787
        %v9169 = vunpack.c.l.b16 %v1788
        %v9170 = vunpack.c.l.b16 %v1789
        %v9171 = vunpack.c.l.b16 %v1790
        %v9172 = vunpack.c.l.b16 %v1791
        %v9173 = vunpack.c.l.b16 %v1792
        %v9174 = vunpack.c.l.b16 %v1793
        %v9175 = vunpack.c.l.b16 %v1794
        %v9176 = vunpack.c.l.b16 %v1795
        %v9177 = vunpack.c.l.b16 %v1796
        %v9178 = vunpack.c.l.b16 %v1797
        %v9179 = vunpack.c.l.b16 %v1798
        %v9180 = vunpack.c.l.b16 %v1799
        %v9181 = vunpack.c.l.b16 %v1800
        %v9182 = vunpack.c.l.b16 %v1801
        %v9183 = vunpack.c.l.b16 %v1802
        %v9184 = vunpack.c.l.b16 %v1803
        %v9185 = vunpack.c.l.b16 %v1804
        %v9186 = vunpack.c.l.b16 %v1805
        %v9187 = vunpack.c.l.b16 %v1806
        %v9188 = vunpack.c.l.b16 %v1807
        %v9189 = vunpack.c.l.b16 %v1808
        %v9190 = vunpack.c.l.b16 %v1809
        %v9191 = vunpack.c.l.b16 %v1810
        %v9192 = vunpack.c.l.b16 %v1811
        %v9193 = vunpack.c.l.b16 %v1812
        %v9194 = vunpack.c.l.b16 %v1813
        %v9195 = vunpack.c.l.b16 %v1814
        %v9196 = vunpack.c.l.b16 %v1815
        %v9197 = vunpack.c.l.b16 %v1816
        %v9198 = vunpack.c.l.b16 %v1817
        %v9199 = vunpack.c.l.b16 %v1818
        %v9200 = vunpack.c.l.b16 %v1819
        %v9201 = vunpack.c.l.b16 %v1820
        %v9202 = vunpack.c.l.b16 %v1821
        %v9203 = vunpack.c.l.b16 %v1822
        %v9204 = vunpack.c.l.b16 %v1823
        %v9205 = vunpack.c.l.b16 %v1824
        %v9206 = vunpack.c.l.b16 %v1825
        %v9207 = vunpack.c.l.b16 %v1826
        %v9208 = vunpack.c.l.b16 %v1827
        %v9209 = vunpack.c.l.b16 %v1828
        %v9210 = vunpack.c.l.b16 %v1829
        %v9211 = vunpack.c.l.b16 %v1830
        %v9212 = vunpack.c.l.b16 %v1831
        %v9213 = vunpack.c.l.b16 %v1832
        %v9214 = vunpack.c.l.b16 %v1833
        %v9215 = vunpack.c.l.b16 %v1834
        %v9216 = vunpack.c.l.b16 %v1835
        %v9217 = vunpack.c.l.b16 %v1836
        %v9218 = vunpack.c.l.b16 %v1837
        %v9219 = vunpack.c.l.b16 %v1838
        %v9220 = vunpack.c.l.b16 %v1839
        %v9221 = vunpack.c.l.b16 %v1840
        %v9222 = vunpack.c.l.b16 %v1841
        %v9223 = vunpack.c.l.b16 %v1842
        %v9224 = vunpack.c.l.b16 %v1843
        %v9225 = vunpack.c.l.b16 %v1844
        %v9226 = vunpack.c.l.b16 %v1845
        %v9227 = vunpack.c.l.b16 %v1846
        %v9228 = vunpack.c.l.b16 %v1847
        %v9229 = vunpack.c.l.b16 %v1848
        %v9230 = vunpack.c.l.b16 %v1849
        %v9231 = vunpack.c.l.b16 %v1850
        %v9232 = vunpack.c.l.b16 %v1851
        %v9233 = vunpack.c.l.b16 %v1852
        %v9234 = vunpack.c.l.b16 %v1853
        %v9235 = vunpack.c.l.b16 %v1854
        %v9236 = vunpack.c.l.b16 %v1855
        %v9237 = vunpack.c.l.b16 %v1856
        %v9238 = vunpack.c.l.b16 %v1857
        %v9239 = vunpack.c.l.b16 %v1858
        %v9240 = vunpack.c.l.b16 %v1859
        %v9241 = vunpack.c.l.b16 %v1860
        %v9242 = vunpack.c.l.b16 %v1861
        %v9243 = vunpack.c.l.b16 %v1862
        %v9244 = vunpack.c.l.b16 %v1863
        %v9245 = vunpack.c.l.b16 %v1864
        %v9246 = vunpack.c.l.b16 %v1865
        %v9247 = vunpack.c.l.b16 %v1866
        %v9248 = vunpack.c.l.b16 %v1867
        %v9249 = vunpack.c.l.b16 %v1868
        %v9250 = vunpack.c.l.b16 %v1869
        %v9251 = vunpack.c.l.b16 %v1870
        %v9252 = vunpack.c.l.b16 %v1871
        %v9253 = vunpack.c.l.b16 %v1872
        %v9254 = vunpack.c.l.b16 %v1873
        %v9255 = vunpack.c.l.b16 %v1874
        %v9256 = vunpack.c.l.b16 %v1875
        %v9257 = vunpack.c.l.b16 %v1876
        %v9258 = vunpack.c.l.b16 %v1877
        %v9259 = vunpack.c.l.b16 %v1878
        %v9260 = vunpack.c.l.b16 %v1879
        %v9261 = vunpack.c.l.b16 %v1880
        %v9262 = vunpack.c.l.b16 %v1881
        %v9263 = vunpack.c.l.b16 %v1882
        %v9264 = vunpack.c.l.b16 %v1883
        %v9265 = vunpack.c.l.b16 %v1884
        %v9266 = vunpack.c.l.b16 %v1885
        %v9267 = vunpack.c.l.b16 %v1886
        %v9268 = vunpack.c.l.b16 %v1887
        %v9269 = vunpack.c.l.b16 %v1888
        %v9270 = vunpack.c.l.b16 %v1889
        %v9271 = vunpack.c.l.b16 %v1890
        %v9272 = vunpack.c.l.b16 %v1891
        %v9273 = vunpack.c.l.b16 %v1892
        %v9274 = vunpack.c.l.b16 %v1893
        %v9275 = vunpack.c.l.b16 %v1894
        %v9276 = vunpack.c.l.b16 %v1895
        %v9277 = vunpack.c.l.b16 %v1896
        %v9278 = vunpack.c.l.b16 %v1897
        %v9279 = vunpack.c.l.b16 %v1898
        %v9280 = vunpack.c.l.b16 %v1899
        %v9281 = vunpack.c.l.b16 %v1900
        %v9282 = vunpack.c.l.b16 %v1901
        %v9283 = vunpack.c.l.b16 %v1902
        %v9284 = vunpack.c.l.b16 %v1903
        %v9285 = vunpack.c.l.b16 %v1904
        %v9286 = vunpack.c.l.b16 %v1905
        %v9287 = vunpack.c.l.b16 %v1906
        %v9288 = vunpack.c.l.b16 %v1907
        %v9289 = vunpack.c.l.b16 %v1908
        %v9290 = vunpack.c.l.b16 %v1909
        %v9291 = vunpack.c.l.b16 %v1910
        %v9292 = vunpack.c.l.b16 %v1911
        %v9293 = vunpack.c.l.b16 %v1912
        %v9294 = vunpack.c.l.b16 %v1913
        %v9295 = vunpack.c.l.b16 %v1914
        %v9296 = vunpack.c.l.b16 %v1915
        %v9297 = vunpack.c.l.b16 %v1916
        %v9298 = vunpack.c.l.b16 %v1917
        %v9299 = vunpack.c.l.b16 %v1918
        %v9300 = vunpack.c.l.b16 %v1919
        %v9301 = vunpack.c.l.b16 %v1920
        %v9302 = vunpack.c.l.b16 %v1921
        %v9303 = vunpack.c.l.b16 %v1922
        %v9304 = vunpack.c.l.b16 %v1923
        %v9305 = vunpack.c.l.b16 %v1924
        %v9306 = vunpack.c.l.b16 %v1925
        %v9307 = vunpack.c.l.b16 %v1926
        %v9308 = vunpack.c.l.b16 %v1927
        %v9309 = vunpack.c.l.b16 %v1928
        %v9310 = vunpack.c.l.b16 %v1929
        %v9311 = vunpack.c.l.b16 %v1930
        %v9312 = vunpack.c.l.b16 %v1931
        %v9313 = vunpack.c.l.b16 %v1932
        %v9314 = vunpack.c.l.b16 %v1933
        %v9315 = vunpack.c.l.b16 %v1934
        %v9316 = vunpack.c.l.b16 %v1935
        %v9317 = vunpack.c.l.b16 %v1936
        %v9318 = vunpack.c.l.b16 %v1937
        %v9319 = vunpack.c.l.b16 %v1938
        %v9320 = vunpack.c.l.b16 %v1939
        %v9321 = vunpack.c.l.b16 %v1940
        %v9322 = vunpack.c.l.b16 %v1941
        %v9323 = vunpack.c.l.b16 %v1942
        %v9324 = vunpack.c.l.b16 %v1943
        %v9325 = vunpack.c.l.b16 %v1944
        %v9326 = vunpack.c.l.b16 %v1945
        %v9327 = vunpack.c.l.b16 %v1946
        %v9328 = vunpack.c.l.b16 %v1947
        %v9329 = vunpack.c.l.b16 %v1948
        %v9330 = vunpack.c.l.b16 %v1949
        %v9331 = vunpack.c.l.b16 %v1950
        %v9332 = vunpack.c.l.b16 %v1951
        %v9333 = vunpack.c.l.b16 %v1952
        %v9334 = vunpack.c.l.b16 %v1953
        %v9335 = vunpack.c.l.b16 %v1954
        %v9336 = vunpack.c.l.b16 %v1955
        %v9337 = vunpack.c.l.b16 %v1956
        %v9338 = vunpack.c.l.b16 %v1957
        %v9339 = vunpack.c.l.b16 %v1958
        %v9340 = vunpack.c.l.b16 %v1959
        %v9341 = vunpack.c.l.b16 %v1960
        %v9342 = vunpack.c.l.b16 %v1961
        %v9343 = vunpack.c.l.b16 %v1962
        %v9344 = vunpack.c.l.b16 %v1963
        %v9345 = vunpack.c.l.b16 %v1964
        %v9346 = vunpack.c.l.b16 %v1965
        %v9347 = vunpack.c.l.b16 %v1966
        %v9348 = vunpack.c.l.b16 %v1967
        %v9349 = vunpack.c.l.b16 %v1968
        %v9350 = vunpack.c.l.b16 %v1969
        %v9351 = vunpack.c.l.b16 %v1970
        %v9352 = vunpack.c.l.b16 %v1971
        %v9353 = vunpack.c.l.b16 %v1972
        %v9354 = vunpack.c.l.b16 %v1973
        %v9355 = vunpack.c.l.b16 %v1974
        %v9356 = vunpack.c.l.b16 %v1975
        %v9357 = vunpack.c.l.b16 %v1976
        %v9358 = vunpack.c.l.b16 %v1977
        %v9359 = vunpack.c.l.b16 %v1978
        %v9360 = vunpack.c.l.b16 %v1979
        %v9361 = vunpack.c.l.b16 %v1980
        %v9362 = vunpack.c.l.b16 %v1981
        %v9363 = vunpack.c.l.b16 %v1982
        %v9364 = vunpack.c.l.b16 %v1983
        %v9365 = vunpack.c.l.b16 %v1984
        %v9366 = vunpack.c.l.b16 %v1985
        %v9367 = vunpack.c.l.b16 %v1986
        %v9368 = vunpack.c.l.b16 %v1987
        %v9369 = vunpack.c.l.b16 %v1988
        %v9370 = vunpack.c.l.b16 %v1989
        %v9371 = vunpack.c.l.b16 %v1990
        %v9372 = vunpack.c.l.b16 %v1991
        %v9373 = vunpack.c.l.b16 %v1992
        %v9374 = vunpack.c.l.b16 %v1993
        %v9375 = vunpack.c.l.b16 %v1994
        %v9376 = vunpack.c.l.b16 %v1995
        %v9377 = vunpack.c.l.b16 %v1996
        %v9378 = vunpack.c.l.b16 %v1997
        %v9379 = vunpack.c.l.b16 %v1998
        %v9380 = vunpack.c.l.b16 %v1999
        %v9381 = vunpack.c.l.b16 %v2000
        %v9382 = vunpack.c.l.b16 %v2001
        %v9383 = vunpack.c.l.b16 %v2002
        %v9384 = vunpack.c.l.b16 %v2003
        %v9385 = vunpack.c.l.b16 %v2004
        %v9386 = vunpack.c.l.b16 %v2005
        %v9387 = vunpack.c.l.b16 %v2006
        %v9388 = vunpack.c.l.b16 %v2007
        %v9389 = vunpack.c.l.b16 %v2008
        %v9390 = vunpack.c.l.b16 %v2009
        %v9391 = vunpack.c.l.b16 %v2010
        %v9392 = vunpack.c.l.b16 %v2011
        %v9393 = vunpack.c.l.b16 %v2012
        %v9394 = vunpack.c.l.b16 %v2013
        %v9395 = vunpack.c.l.b16 %v2014
        %v9396 = vunpack.c.l.b16 %v2015
        %v9397 = vunpack.c.l.b16 %v2016
        %v9398 = vunpack.c.l.b16 %v2017
        %v9399 = vunpack.c.l.b16 %v2018
        %v9400 = vunpack.c.l.b16 %v2019
        %v9401 = vunpack.c.l.b16 %v2020
        %v9402 = vunpack.c.l.b16 %v2021
        %v9403 = vunpack.c.l.b16 %v2022
        %v9404 = vunpack.c.l.b16 %v2023
        %v9405 = vunpack.c.l.b16 %v2024
        %v9406 = vunpack.c.l.b16 %v2025
        %v9407 = vunpack.c.l.b16 %v2026
        %v9408 = vunpack.c.l.b16 %v2027
        %v9409 = vunpack.c.l.b16 %v2028
        %v9410 = vunpack.c.l.b16 %v2029
        %v9411 = vunpack.c.l.b16 %v2030
        %v9412 = vunpack.c.l.b16 %v2031
        %v9413 = vunpack.c.l.b16 %v2032
        %v9414 = vunpack.c.l.b16 %v2033
        %v9415 = vunpack.c.l.b16 %v2034
        %v9416 = vunpack.c.l.b16 %v2035
        %v9417 = vunpack.c.l.b16 %v2036
        %v9418 = vunpack.c.l.b16 %v2037
        %v9419 = vunpack.c.l.b16 %v2038
        %v9420 = vunpack.c.l.b16 %v2039
        %v9421 = vunpack.c.l.b16 %v2040
        %v9422 = vunpack.c.l.b16 %v2041
        %v9423 = vunpack.c.l.b16 %v2042
        %v9424 = vunpack.c.l.b16 %v2043
        %v9425 = vunpack.c.l.b16 %v2044
        %v9426 = vunpack.c.l.b16 %v2045
        %v9427 = vunpack.c.l.b16 %v2046
        %v9428 = vunpack.c.l.b16 %v2047
        %v9429 = vunpack.c.l.b16 %v2048
        %v9430 = vunpack.c.l.b16 %v2049
        %v9431 = vunpack.c.l.b16 %v2050
        %v9432 = vunpack.c.l.b16 %v2051
        %v9433 = vunpack.c.l.b16 %v2052
        %v9434 = vunpack.c.l.b16 %v2053
        %v9435 = vunpack.c.l.b16 %v2054
        %v9436 = vunpack.c.l.b16 %v2055
        %v9437 = vunpack.c.l.b16 %v2056
        %v9438 = vunpack.c.l.b16 %v2057
        %v9439 = vunpack.c.l.b16 %v2058
        %v9440 = vunpack.c.l.b16 %v2059
        %v9441 = vunpack.c.l.b16 %v2060
        %v9442 = vunpack.c.l.b16 %v2061
        %v9443 = vunpack.c.l.b16 %v2062
        %v9444 = vunpack.c.l.b16 %v2063
        %v9445 = vunpack.c.l.b16 %v2064
        %v9446 = vunpack.c.l.b16 %v2065
        %v9447 = vunpack.c.l.b16 %v2066
        %v9448 = vunpack.c.l.b16 %v2067
        %v9449 = vunpack.c.l.b16 %v2068
        %v9450 = vunpack.c.l.b16 %v2069
        %v9451 = vunpack.c.l.b16 %v2070
        %v9452 = vunpack.c.l.b16 %v2071
        %v9453 = vunpack.c.l.b16 %v2072
        %v9454 = vunpack.c.l.b16 %v2073
        %v9455 = vunpack.c.l.b16 %v2074
        %v9456 = vunpack.c.l.b16 %v2075
        %v9457 = vunpack.c.l.b16 %v2076
        %v9458 = vunpack.c.l.b16 %v2077
        %v9459 = vunpack.c.l.b16 %v2078
        %v9460 = vunpack.c.l.b16 %v2079
        %v9461 = vunpack.c.l.b16 %v2080
        %v9462 = vunpack.c.l.b16 %v2081
        %v9463 = vunpack.c.l.b16 %v2082
        %v9464 = vunpack.c.l.b16 %v2083
        %v9465 = vunpack.c.l.b16 %v2084
        %v9466 = vunpack.c.l.b16 %v2085
        %v9467 = vunpack.c.l.b16 %v2086
        %v9468 = vunpack.c.l.b16 %v2087
        %v9469 = vunpack.c.l.b16 %v2088
        %v9470 = vunpack.c.l.b16 %v2089
        %v9471 = vunpack.c.l.b16 %v2090
        %v9472 = vunpack.c.l.b16 %v2091
        %v9473 = vunpack.c.l.b16 %v2092
        %v9474 = vunpack.c.l.b16 %v2093
        %v9475 = vunpack.c.l.b16 %v2094
        %v9476 = vunpack.c.l.b16 %v2095
        %v9477 = vunpack.c.l.b16 %v2096
        %v9478 = vunpack.c.l.b16 %v2097
        %v9479 = vunpack.c.l.b16 %v2098
        %v9480 = vunpack.c.l.b16 %v2099
        %v9481 = vunpack.c.l.b16 %v2100
        %v9482 = vunpack.c.l.b16 %v2101
        %v9483 = vunpack.c.l.b16 %v2102
        %v9484 = vunpack.c.l.b16 %v2103
        %v9485 = vunpack.c.l.b16 %v2104
        %v9486 = vunpack.c.l.b16 %v2105
        %v9487 = vunpack.c.l.b16 %v2106
        %v9488 = vunpack.c.l.b16 %v2107
        %v9489 = vunpack.c.l.b16 %v2108
        %v9490 = vunpack.c.l.b16 %v2109
        %v9491 = vunpack.c.l.b16 %v2110
        %v9492 = vunpack.c.l.b16 %v2111
        %v9493 = vunpack.c.l.b16 %v2112
        %v9494 = vunpack.c.l.b16 %v2113
        %v9495 = vunpack.c.l.b16 %v2114
        %v9496 = vunpack.c.l.b16 %v2115
        %v9497 = vunpack.c.l.b16 %v2116
        %v9498 = vunpack.c.l.b16 %v2117
        %v9499 = vunpack.c.l.b16 %v2118
        %v9500 = vunpack.c.l.b16 %v2119
        %v9501 = vunpack.c.l.b16 %v2120
        %v9502 = vunpack.c.l.b16 %v2121
        %v9503 = vunpack.c.l.b16 %v2122
        %v9504 = vunpack.c.l.b16 %v2123
        %v9505 = vunpack.c.l.b16 %v2124
        %v9506 = vunpack.c.l.b16 %v2125
        %v9507 = vunpack.c.l.b16 %v2126
        %v9508 = vunpack.c.l.b16 %v2127
        %v9509 = vunpack.c.l.b16 %v2128
        %v9510 = vunpack.c.l.b16 %v2129
        %v9511 = vunpack.c.l.b16 %v2130
        %v9512 = vunpack.c.l.b16 %v2131
        %v9513 = vunpack.c.l.b16 %v2132
        %v9514 = vunpack.c.l.b16 %v2133
        %v9515 = vunpack.c.l.b16 %v2134
        %v9516 = vunpack.c.l.b16 %v2135
        %v9517 = vunpack.c.l.b16 %v2136
        %v9518 = vunpack.c.l.b16 %v2137
        %v9519 = vunpack.c.l.b16 %v2138
        %v9520 = vunpack.c.l.b16 %v2139
        %v9521 = vunpack.c.l.b16 %v2140
        %v9522 = vunpack.c.l.b16 %v2141
        %v9523 = vunpack.c.l.b16 %v2142
        %v9524 = vunpack.c.l.b16 %v2143
        %v9525 = vunpack.c.l.b16 %v2144
        %v9526 = vunpack.c.l.b16 %v2145
        %v9527 = vunpack.c.l.b16 %v2146
        %v9528 = vunpack.c.l.b16 %v2147
        %v9529 = vunpack.c.l.b16 %v2148
        %v9530 = vunpack.c.l.b16 %v2149
        %v9531 = vunpack.c.l.b16 %v2150
        %v9532 = vunpack.c.l.b16 %v2151
        %v9533 = vunpack.c.l.b16 %v2152
        %v9534 = vunpack.c.l.b16 %v2153
        %v9535 = vunpack.c.l.b16 %v2154
        %v9536 = vunpack.c.l.b16 %v2155
        %v9537 = vunpack.c.l.b16 %v2156
        %v9538 = vunpack.c.l.b16 %v2157
        %v9539 = vunpack.c.l.b16 %v2158
        %v9540 = vunpack.c.l.b16 %v2159
        %v9541 = vunpack.c.l.b16 %v2160
        %v9542 = vunpack.c.l.b16 %v2161
        %v9543 = vunpack.c.l.b16 %v2162
        %v9544 = vunpack.c.l.b16 %v2163
        %v9545 = vunpack.c.l.b16 %v2164
        %v9546 = vunpack.c.l.b16 %v2165
        %v9547 = vunpack.c.l.b16 %v2166
        %v9548 = vunpack.c.l.b16 %v2167
        %v9549 = vunpack.c.l.b16 %v2168
        %v9550 = vunpack.c.l.b16 %v2169
        %v9551 = vunpack.c.l.b16 %v2170
        %v9552 = vunpack.c.l.b16 %v2171
        %v9553 = vunpack.c.l.b16 %v2172
        %v9554 = vunpack.c.l.b16 %v2173
        %v9555 = vunpack.c.l.b16 %v2174
        %v9556 = vunpack.c.l.b16 %v2175
        %v9557 = vunpack.c.l.b16 %v2176
        %v9558 = vunpack.c.l.b16 %v2177
        %v9559 = vunpack.c.l.b16 %v2178
        %v9560 = vunpack.c.l.b16 %v2179
        %v9561 = vunpack.c.l.b16 %v2180
        %v9562 = vunpack.c.l.b16 %v2181
        %v9563 = vunpack.c.l.b16 %v2182
        %v9564 = vunpack.c.l.b16 %v2183
        %v9565 = vunpack.c.l.b16 %v2184
        %v9566 = vunpack.c.l.b16 %v2185
        %v9567 = vunpack.c.l.b16 %v2186
        %v9568 = vunpack.c.l.b16 %v2187
        %v9569 = vunpack.c.l.b16 %v2188
        %v9570 = vunpack.c.l.b16 %v2189
        %v9571 = vunpack.c.l.b16 %v2190
        %v9572 = vunpack.c.l.b16 %v2191
        %v9573 = vunpack.c.l.b16 %v2192
        %v9574 = vunpack.c.l.b16 %v2193
        %v9575 = vunpack.c.l.b16 %v2194
        %v9576 = vunpack.c.l.b16 %v2195
        %v9577 = vunpack.c.l.b16 %v2196
        %v9578 = vunpack.c.l.b16 %v2197
        %v9579 = vunpack.c.l.b16 %v2198
        %v9580 = vunpack.c.l.b16 %v2199
        %v9581 = vunpack.c.l.b16 %v2200
        %v9582 = vunpack.c.l.b16 %v2201
        %v9583 = vunpack.c.l.b16 %v2202
        %v9584 = vunpack.c.l.b16 %v2203
        %v9585 = vunpack.c.l.b16 %v2204
        %v9586 = vunpack.c.l.b16 %v2205
        %v9587 = vunpack.c.l.b16 %v2206
        %v9588 = vunpack.c.l.b16 %v2207
        %v9589 = vunpack.c.l.b16 %v2208
        %v9590 = vunpack.c.l.b16 %v2209
        %v9591 = vunpack.c.l.b16 %v2210
        %v9592 = vunpack.c.l.b16 %v2211
        %v9593 = vunpack.c.l.b16 %v2212
        %v9594 = vunpack.c.l.b16 %v2213
        %v9595 = vunpack.c.l.b16 %v2214
        %v9596 = vunpack.c.l.b16 %v2215
        %v9597 = vunpack.c.l.b16 %v2216
        %v9598 = vunpack.c.l.b16 %v2217
        %v9599 = vunpack.c.l.b16 %v2218
        %v9600 = vunpack.c.l.b16 %v2219
        %v9601 = vunpack.c.l.b16 %v2220
        %v9602 = vunpack.c.l.b16 %v2221
        %v9603 = vunpack.c.l.b16 %v2222
        %v9604 = vunpack.c.l.b16 %v2223
        %v9605 = vunpack.c.l.b16 %v2224
        %v9606 = vunpack.c.l.b16 %v2225
        %v9607 = vunpack.c.l.b16 %v2226
        %v9608 = vunpack.c.l.b16 %v2227
        %v9609 = vunpack.c.l.b16 %v2228
        %v9610 = vunpack.c.l.b16 %v2229
        %v9611 = vunpack.c.l.b16 %v2230
        %v9612 = vunpack.c.l.b16 %v2231
        %v9613 = vunpack.c.l.b16 %v2232
        %v9614 = vunpack.c.l.b16 %v2233
        %v9615 = vunpack.c.l.b16 %v2234
        %v9616 = vunpack.c.l.b16 %v2235
        %v9617 = vunpack.c.l.b16 %v2236
        %v9618 = vunpack.c.l.b16 %v2237
        %v9619 = vunpack.c.l.b16 %v2238
        %v9620 = vunpack.c.l.b16 %v2239
        %v9621 = vunpack.c.l.b16 %v2240
        %v9622 = vunpack.c.l.b16 %v2241
        %v9623 = vunpack.c.l.b16 %v2242
        %v9624 = vunpack.c.l.b16 %v2243
        %v9625 = vunpack.c.l.b16 %v2244
        %v9626 = vunpack.c.l.b16 %v2245
        %v9627 = vunpack.c.l.b16 %v2246
        %v9628 = vunpack.c.l.b16 %v2247
        %v9629 = vunpack.c.l.b16 %v2248
        %v9630 = vunpack.c.l.b16 %v2249
        %v9631 = vunpack.c.l.b16 %v2250
        %v9632 = vunpack.c.l.b16 %v2251
        %v9633 = vunpack.c.l.b16 %v2252
        %v9634 = vunpack.c.l.b16 %v2253
        %v9635 = vunpack.c.l.b16 %v2254
        %v9636 = vunpack.c.l.b16 %v2255
        %v9637 = vunpack.c.l.b16 %v2256
        %v9638 = vunpack.c.l.b16 %v2257
        %v9639 = vunpack.c.l.b16 %v2258
        %v9640 = vunpack.c.l.b16 %v2259
        %v9641 = vunpack.c.l.b16 %v2260
        %v9642 = vunpack.c.l.b16 %v2261
        %v9643 = vunpack.c.l.b16 %v2262
        %v9644 = vunpack.c.l.b16 %v2263
        %v9645 = vunpack.c.l.b16 %v2264
        %v9646 = vunpack.c.l.b16 %v2265
        %v9647 = vunpack.c.l.b16 %v2266
        %v9648 = vunpack.c.l.b16 %v2267
        %v9649 = vunpack.c.l.b16 %v2268
        %v9650 = vunpack.c.l.b16 %v2269
        %v9651 = vunpack.c.l.b16 %v2270
        %v9652 = vunpack.c.l.b16 %v2271
        %v9653 = vunpack.c.l.b16 %v2272
        %v9654 = vunpack.c.l.b16 %v2273
        %v9655 = vunpack.c.l.b16 %v2274
        %v9656 = vunpack.c.l.b16 %v2275
        %v9657 = vunpack.c.l.b16 %v2276
        %v9658 = vunpack.c.l.b16 %v2277
        %v9659 = vunpack.c.l.b16 %v2278
        %v9660 = vunpack.c.l.b16 %v2279
        %v9661 = vunpack.c.l.b16 %v2280
        %v9662 = vunpack.c.l.b16 %v2281
        %v9663 = vunpack.c.l.b16 %v2282
        %v9664 = vunpack.c.l.b16 %v2283
        %v9665 = vunpack.c.l.b16 %v2284
        %v9666 = vunpack.c.l.b16 %v2285
        %v9667 = vunpack.c.l.b16 %v2286
        %v9668 = vunpack.c.l.b16 %v2287
        %v9669 = vunpack.c.l.b16 %v2288
        %v9670 = vunpack.c.l.b16 %v2289
        %v9671 = vunpack.c.l.b16 %v2290
        %v9672 = vunpack.c.l.b16 %v2291
        %v9673 = vunpack.c.l.b16 %v2292
        %v9674 = vunpack.c.l.b16 %v2293
        %v9675 = vunpack.c.l.b16 %v2294
        %v9676 = vunpack.c.l.b16 %v2295
        %v9677 = vunpack.c.l.b16 %v2296
        %v9678 = vunpack.c.l.b16 %v2297
        %v9679 = vunpack.c.l.b16 %v2298
        %v9680 = vunpack.c.l.b16 %v2299
        %v9681 = vunpack.c.l.b16 %v2300
        %v9682 = vunpack.c.l.b16 %v2301
        %v9683 = vunpack.c.l.b16 %v2302
        %v9684 = vunpack.c.l.b16 %v2303
        %v9685 = vunpack.c.l.b16 %v2304
        %v9686 = vunpack.c.l.b16 %v2305
        %v9687 = vunpack.c.l.b16 %v2306
        %v9688 = vunpack.c.l.b16 %v2307
        %v9689 = vunpack.c.l.b16 %v2308
        %v9690 = vunpack.c.l.b16 %v2309
        %v9691 = vunpack.c.l.b16 %v2310
        %v9692 = vunpack.c.l.b16 %v2311
        %v9693 = vunpack.c.l.b16 %v2312
        %v9694 = vunpack.c.l.b16 %v2313
        %v9695 = vunpack.c.l.b16 %v2314
        %v9696 = vunpack.c.l.b16 %v2315
        %v9697 = vunpack.c.l.b16 %v2316
        %v9698 = vunpack.c.l.b16 %v2317
        %v9699 = vunpack.c.l.b16 %v2318
        %v9700 = vunpack.c.l.b16 %v2319
        %v9701 = vunpack.c.l.b16 %v2320
        %v9702 = vunpack.c.l.b16 %v2321
        %v9703 = vunpack.c.l.b16 %v2322
        %v9704 = vunpack.c.l.b16 %v2323
        %v9705 = vunpack.c.l.b16 %v2324
        %v9706 = vunpack.c.l.b16 %v2325
        %v9707 = vunpack.c.l.b16 %v2326
        %v9708 = vunpack.c.l.b16 %v2327
        %v9709 = vunpack.c.l.b16 %v2328
        %v9710 = vunpack.c.l.b16 %v2329
        %v9711 = vunpack.c.l.b16 %v2330
        %v9712 = vunpack.c.l.b16 %v2331
        %v9713 = vunpack.c.l.b16 %v2332
        %v9714 = vunpack.c.l.b16 %v2333
        %v9715 = vunpack.c.l.b16 %v2334
        %v9716 = vunpack.c.l.b16 %v2335
        %v9717 = vunpack.c.l.b16 %v2336
        %v9718 = vunpack.c.l.b16 %v2337
        %v9719 = vunpack.c.l.b16 %v2338
        %v9720 = vunpack.c.l.b16 %v2339
        %v9721 = vunpack.c.l.b16 %v2340
        %v9722 = vunpack.c.l.b16 %v2341
        %v9723 = vunpack.c.l.b16 %v2342
        %v9724 = vunpack.c.l.b16 %v2343
        %v9725 = vunpack.c.l.b16 %v2344
        %v9726 = vunpack.c.l.b16 %v2345
        %v9727 = vunpack.c.l.b16 %v2346
        %v9728 = vunpack.c.l.b16 %v2347
        %v9729 = vunpack.c.l.b16 %v2348
        %v9730 = vunpack.c.l.b16 %v2349
        %v9731 = vunpack.c.l.b16 %v2350
        %v9732 = vunpack.c.l.b16 %v2351
        %v9733 = vunpack.c.l.b16 %v2352
        %v9734 = vunpack.c.l.b16 %v2353
        %v9735 = vunpack.c.l.b16 %v2354
        %v9736 = vunpack.c.l.b16 %v2355
        %v9737 = vunpack.c.l.b16 %v2356
        %v9738 = vunpack.c.l.b16 %v2357
        %v9739 = vunpack.c.l.b16 %v2358
        %v9740 = vunpack.c.l.b16 %v2359
        %v9741 = vunpack.c.l.b16 %v2360
        %v9742 = vunpack.c.l.b16 %v2361
        %v9743 = vunpack.c.l.b16 %v2362
        %v9744 = vunpack.c.l.b16 %v2363
        %v9745 = vunpack.c.l.b16 %v2364
        %v9746 = vunpack.c.l.b16 %v2365
        %v9747 = vunpack.c.l.b16 %v2366
        %v9748 = vunpack.c.l.b16 %v2367
        %v9749 = vunpack.c.l.b16 %v2368
        %v9750 = vunpack.c.l.b16 %v2369
        %v9751 = vunpack.c.l.b16 %v2370
        %v9752 = vunpack.c.l.b16 %v2371
        %v9753 = vunpack.c.l.b16 %v2372
        %v9754 = vunpack.c.l.b16 %v2373
        %v9755 = vunpack.c.l.b16 %v2374
        %v9756 = vunpack.c.l.b16 %v2375
        %v9757 = vunpack.c.l.b16 %v2376
        %v9758 = vunpack.c.l.b16 %v2377
        %v9759 = vunpack.c.l.b16 %v2378
        %v9760 = vunpack.c.l.b16 %v2379
        %v9761 = vunpack.c.l.b16 %v2380
        %v9762 = vunpack.c.l.b16 %v2381
        %v9763 = vunpack.c.l.b16 %v2382
        %v9764 = vunpack.c.l.b16 %v2383
        %v9765 = vunpack.c.l.b16 %v2384
        %v9766 = vunpack.c.l.b16 %v2385
        %v9767 = vunpack.c.l.b16 %v2386
        %v9768 = vunpack.c.l.b16 %v2387
        %v9769 = vunpack.c.l.b16 %v2388
        %v9770 = vunpack.c.l.b16 %v2389
        %v9771 = vunpack.c.l.b16 %v2390
        %v9772 = vunpack.c.l.b16 %v2391
        %v9773 = vunpack.c.l.b16 %v2392
        %v9774 = vunpack.c.l.b16 %v2393
        %v9775 = vunpack.c.l.b16 %v2394
        %v9776 = vunpack.c.l.b16 %v2395
        %v9777 = vunpack.c.l.b16 %v2396
        %v9778 = vunpack.c.l.b16 %v2397
        %v9779 = vunpack.c.l.b16 %v2398
        %v9780 = vunpack.c.l.b16 %v2399
        %v9781 = vunpack.c.l.b16 %v2400
        %v9782 = vunpack.c.l.b16 %v2401
        %v9783 = vunpack.c.l.b16 %v2402
        %v9784 = vunpack.c.l.b16 %v2403
        %v9785 = vunpack.c.l.b16 %v2404
        %v9786 = vunpack.c.l.b16 %v2405
        %v9787 = vunpack.c.l.b16 %v2406
        %v9788 = vunpack.c.l.b16 %v2407
        %v9789 = vunpack.c.l.b16 %v2408
        %v9790 = vunpack.c.l.b16 %v2409
        %v9791 = vunpack.c.l.b16 %v2410
        %v9792 = vunpack.c.l.b16 %v2411
        %v9793 = vunpack.c.l.b16 %v2412
        %v9794 = vunpack.c.l.b16 %v2413
        %v9795 = vunpack.c.l.b16 %v2414
        %v9796 = vunpack.c.l.b16 %v2415
        %v9797 = vunpack.c.l.b16 %v2416
        %v9798 = vunpack.c.l.b16 %v2417
        %v9799 = vunpack.c.l.b16 %v2418
        %v9800 = vunpack.c.l.b16 %v2419
        %v9801 = vunpack.c.l.b16 %v2420
        %v9802 = vunpack.c.l.b16 %v2421
        %v9803 = vunpack.c.l.b16 %v2422
        %v9804 = vunpack.c.l.b16 %v2423
        %v9805 = vunpack.c.l.b16 %v2424
        %v9806 = vunpack.c.l.b16 %v2425
        %v9807 = vunpack.c.l.b16 %v2426
        %v9808 = vunpack.c.l.b16 %v2427
        %v9809 = vunpack.c.l.b16 %v2428
        %v9810 = vunpack.c.l.b16 %v2429
        %v9811 = vunpack.c.l.b16 %v2430
        %v9812 = vunpack.c.l.b16 %v2431
        %v9813 = vunpack.c.l.b16 %v2432
        %v9814 = vunpack.c.l.b16 %v2433
        %v9815 = vunpack.c.l.b16 %v2434
        %v9816 = vunpack.c.l.b16 %v2435
        %v9817 = vunpack.c.l.b16 %v2436
        %v9818 = vunpack.c.l.b16 %v2437
        %v9819 = vunpack.c.l.b16 %v2438
        %v9820 = vunpack.c.l.b16 %v2439
        %v9821 = vunpack.c.l.b16 %v2440
        %v9822 = vunpack.c.l.b16 %v2441
        %v9823 = vunpack.c.l.b16 %v2442
        %v9824 = vunpack.c.l.b16 %v2443
        %v9825 = vunpack.c.l.b16 %v2444
        %v9826 = vunpack.c.l.b16 %v2445
        %v9827 = vunpack.c.l.b16 %v2446
        %v9828 = vunpack.c.l.b16 %v2447
        %v9829 = vunpack.c.l.b16 %v2448
        %v9830 = vunpack.c.l.b16 %v2449
        %v9831 = vunpack.c.l.b16 %v2450
        %v9832 = vunpack.c.l.b16 %v2451
        %v9833 = vunpack.c.l.b16 %v2452
        %v9834 = vunpack.c.l.b16 %v2453
        %v9835 = vunpack.c.l.b16 %v2454
        %v9836 = vunpack.c.l.b16 %v2455
        %v9837 = vunpack.c.l.b16 %v2456
        %v9838 = vunpack.c.l.b16 %v2457
        %v9839 = vunpack.c.l.b16 %v2458
        %v9840 = vunpack.c.l.b16 %v2459
        %v9841 = vunpack.c.l.b16 %v2460
        %v9842 = vunpack.c.l.b16 %v2461
        %v9843 = vunpack.c.l.b16 %v2462
        %v9844 = vunpack.c.l.b16 %v2463
        %v9845 = vunpack.c.l.b16 %v2464
        %v9846 = vunpack.c.l.b16 %v2465
        %v9847 = vunpack.c.l.b16 %v2466
        %v9848 = vunpack.c.l.b16 %v2467
        %v9849 = vunpack.c.l.b16 %v2468
        %v9850 = vpack.c.b16 %v8827, %v8826
        %v9851 = vpack.c.b16 %v8829, %v8828
        %v9852 = vpack.c.b16 %v8831, %v8830
        %v9853 = vpack.c.b16 %v8833, %v8832
        %v9854 = vpack.c.b16 %v8835, %v8834
        %v9855 = vpack.c.b16 %v8837, %v8836
        %v9856 = vpack.c.b16 %v8839, %v8838
        %v9857 = vpack.c.b16 %v8841, %v8840
        %v9858 = vpack.c.b16 %v8843, %v8842
        %v9859 = vpack.c.b16 %v8845, %v8844
        %v9860 = vpack.c.b16 %v8847, %v8846
        %v9861 = vpack.c.b16 %v8849, %v8848
        %v9862 = vpack.c.b16 %v8851, %v8850
        %v9863 = vpack.c.b16 %v8853, %v8852
        %v9864 = vpack.c.b16 %v8855, %v8854
        %v9865 = vpack.c.b16 %v8857, %v8856
        %v9866 = vpack.c.b16 %v8859, %v8858
        %v9867 = vpack.c.b16 %v8861, %v8860
        %v9868 = vpack.c.b16 %v8863, %v8862
        %v9869 = vpack.c.b16 %v8865, %v8864
        %v9870 = vpack.c.b16 %v8867, %v8866
        %v9871 = vpack.c.b16 %v8869, %v8868
        %v9872 = vpack.c.b16 %v8871, %v8870
        %v9873 = vpack.c.b16 %v8873, %v8872
        %v9874 = vpack.c.b16 %v8875, %v8874
        %v9875 = vpack.c.b16 %v8877, %v8876
        %v9876 = vpack.c.b16 %v8879, %v8878
        %v9877 = vpack.c.b16 %v8881, %v8880
        %v9878 = vpack.c.b16 %v8883, %v8882
        %v9879 = vpack.c.b16 %v8885, %v8884
        %v9880 = vpack.c.b16 %v8887, %v8886
        %v9881 = vpack.c.b16 %v8889, %v8888
        %v9882 = vpack.c.b16 %v8891, %v8890
        %v9883 = vpack.c.b16 %v8893, %v8892
        %v9884 = vpack.c.b16 %v8895, %v8894
        %v9885 = vpack.c.b16 %v8897, %v8896
        %v9886 = vpack.c.b16 %v8899, %v8898
        %v9887 = vpack.c.b16 %v8901, %v8900
        %v9888 = vpack.c.b16 %v8903, %v8902
        %v9889 = vpack.c.b16 %v8905, %v8904
        %v9890 = vpack.c.b16 %v8907, %v8906
        %v9891 = vpack.c.b16 %v8909, %v8908
        %v9892 = vpack.c.b16 %v8911, %v8910
        %v9893 = vpack.c.b16 %v8913, %v8912
        %v9894 = vpack.c.b16 %v8915, %v8914
        %v9895 = vpack.c.b16 %v8917, %v8916
        %v9896 = vpack.c.b16 %v8919, %v8918
        %v9897 = vpack.c.b16 %v8921, %v8920
        %v9898 = vpack.c.b16 %v8923, %v8922
        %v9899 = vpack.c.b16 %v8925, %v8924
        %v9900 = vpack.c.b16 %v8927, %v8926
        %v9901 = vpack.c.b16 %v8929, %v8928
        %v9902 = vpack.c.b16 %v8931, %v8930
        %v9903 = vpack.c.b16 %v8933, %v8932
        %v9904 = vpack.c.b16 %v8935, %v8934
        %v9905 = vpack.c.b16 %v8937, %v8936
        %v9906 = vpack.c.b16 %v8939, %v8938
        %v9907 = vpack.c.b16 %v8941, %v8940
        %v9908 = vpack.c.b16 %v8943, %v8942
        %v9909 = vpack.c.b16 %v8945, %v8944
        %v9910 = vpack.c.b16 %v8947, %v8946
        %v9911 = vpack.c.b16 %v8949, %v8948
        %v9912 = vpack.c.b16 %v8951, %v8950
        %v9913 = vpack.c.b16 %v8953, %v8952
        %v9914 = vpack.c.b16 %v8955, %v8954
        %v9915 = vpack.c.b16 %v8957, %v8956
        %v9916 = vpack.c.b16 %v8959, %v8958
        %v9917 = vpack.c.b16 %v8961, %v8960
        %v9918 = vpack.c.b16 %v8963, %v8962
        %v9919 = vpack.c.b16 %v8965, %v8964
        %v9920 = vpack.c.b16 %v8967, %v8966
        %v9921 = vpack.c.b16 %v8969, %v8968
        %v9922 = vpack.c.b16 %v8971, %v8970
        %v9923 = vpack.c.b16 %v8973, %v8972
        %v9924 = vpack.c.b16 %v8975, %v8974
        %v9925 = vpack.c.b16 %v8977, %v8976
        %v9926 = vpack.c.b16 %v8979, %v8978
        %v9927 = vpack.c.b16 %v8981, %v8980
        %v9928 = vpack.c.b16 %v8983, %v8982
        %v9929 = vpack.c.b16 %v8985, %v8984
        %v9930 = vpack.c.b16 %v8987, %v8986
        %v9931 = vpack.c.b16 %v8989, %v8988
        %v9932 = vpack.c.b16 %v8991, %v8990
        %v9933 = vpack.c.b16 %v8993, %v8992
        %v9934 = vpack.c.b16 %v8995, %v8994
        %v9935 = vpack.c.b16 %v8997, %v8996
        %v9936 = vpack.c.b16 %v8999, %v8998
        %v9937 = vpack.c.b16 %v9001, %v9000
        %v9938 = vpack.c.b16 %v9003, %v9002
        %v9939 = vpack.c.b16 %v9005, %v9004
        %v9940 = vpack.c.b16 %v9007, %v9006
        %v9941 = vpack.c.b16 %v9009, %v9008
        %v9942 = vpack.c.b16 %v9011, %v9010
        %v9943 = vpack.c.b16 %v9013, %v9012
        %v9944 = vpack.c.b16 %v9015, %v9014
        %v9945 = vpack.c.b16 %v9017, %v9016
        %v9946 = vpack.c.b16 %v9019, %v9018
        %v9947 = vpack.c.b16 %v9021, %v9020
        %v9948 = vpack.c.b16 %v9023, %v9022
        %v9949 = vpack.c.b16 %v9025, %v9024
        %v9950 = vpack.c.b16 %v9027, %v9026
        %v9951 = vpack.c.b16 %v9029, %v9028
        %v9952 = vpack.c.b16 %v9031, %v9030
        %v9953 = vpack.c.b16 %v9033, %v9032
        %v9954 = vpack.c.b16 %v9035, %v9034
        %v9955 = vpack.c.b16 %v9037, %v9036
        %v9956 = vpack.c.b16 %v9039, %v9038
        %v9957 = vpack.c.b16 %v9041, %v9040
        %v9958 = vpack.c.b16 %v9043, %v9042
        %v9959 = vpack.c.b16 %v9045, %v9044
        %v9960 = vpack.c.b16 %v9047, %v9046
        %v9961 = vpack.c.b16 %v9049, %v9048
        %v9962 = vpack.c.b16 %v9051, %v9050
        %v9963 = vpack.c.b16 %v9053, %v9052
        %v9964 = vpack.c.b16 %v9055, %v9054
        %v9965 = vpack.c.b16 %v9057, %v9056
        %v9966 = vpack.c.b16 %v9059, %v9058
        %v9967 = vpack.c.b16 %v9061, %v9060
        %v9968 = vpack.c.b16 %v9063, %v9062
        %v9969 = vpack.c.b16 %v9065, %v9064
        %v9970 = vpack.c.b16 %v9067, %v9066
        %v9971 = vpack.c.b16 %v9069, %v9068
        %v9972 = vpack.c.b16 %v9071, %v9070
        %v9973 = vpack.c.b16 %v9073, %v9072
        %v9974 = vpack.c.b16 %v9075, %v9074
        %v9975 = vpack.c.b16 %v9077, %v9076
        %v9976 = vpack.c.b16 %v9079, %v9078
        %v9977 = vpack.c.b16 %v9081, %v9080
        %v9978 = vpack.c.b16 %v9083, %v9082
        %v9979 = vpack.c.b16 %v9085, %v9084
        %v9980 = vpack.c.b16 %v9087, %v9086
        %v9981 = vpack.c.b16 %v9089, %v9088
        %v9982 = vpack.c.b16 %v9091, %v9090
        %v9983 = vpack.c.b16 %v9093, %v9092
        %v9984 = vpack.c.b16 %v9095, %v9094
        %v9985 = vpack.c.b16 %v9097, %v9096
        %v9986 = vpack.c.b16 %v9099, %v9098
        %v9987 = vpack.c.b16 %v9101, %v9100
        %v9988 = vpack.c.b16 %v9103, %v9102
        %v9989 = vpack.c.b16 %v9105, %v9104
        %v9990 = vpack.c.b16 %v9107, %v9106
        %v9991 = vpack.c.b16 %v9109, %v9108
        %v9992 = vpack.c.b16 %v9111, %v9110
        %v9993 = vpack.c.b16 %v9113, %v9112
        %v9994 = vpack.c.b16 %v9115, %v9114
        %v9995 = vpack.c.b16 %v9117, %v9116
        %v9996 = vpack.c.b16 %v9119, %v9118
        %v9997 = vpack.c.b16 %v9121, %v9120
        %v9998 = vpack.c.b16 %v9123, %v9122
        %v9999 = vpack.c.b16 %v9125, %v9124
        %v10000 = vpack.c.b16 %v9127, %v9126
        %v10001 = vpack.c.b16 %v9129, %v9128
        %v10002 = vpack.c.b16 %v9131, %v9130
        %v10003 = vpack.c.b16 %v9133, %v9132
        %v10004 = vpack.c.b16 %v9135, %v9134
        %v10005 = vpack.c.b16 %v9137, %v9136
        %v10006 = vpack.c.b16 %v9139, %v9138
        %v10007 = vpack.c.b16 %v9141, %v9140
        %v10008 = vpack.c.b16 %v9143, %v9142
        %v10009 = vpack.c.b16 %v9145, %v9144
        %v10010 = vpack.c.b16 %v9147, %v9146
        %v10011 = vpack.c.b16 %v9149, %v9148
        %v10012 = vpack.c.b16 %v9151, %v9150
        %v10013 = vpack.c.b16 %v9153, %v9152
        %v10014 = vpack.c.b16 %v9155, %v9154
        %v10015 = vpack.c.b16 %v9157, %v9156
        %v10016 = vpack.c.b16 %v9159, %v9158
        %v10017 = vpack.c.b16 %v9161, %v9160
        %v10018 = vpack.c.b16 %v9163, %v9162
        %v10019 = vpack.c.b16 %v9165, %v9164
        %v10020 = vpack.c.b16 %v9167, %v9166
        %v10021 = vpack.c.b16 %v9169, %v9168
        %v10022 = vpack.c.b16 %v9171, %v9170
        %v10023 = vpack.c.b16 %v9173, %v9172
        %v10024 = vpack.c.b16 %v9175, %v9174
        %v10025 = vpack.c.b16 %v9177, %v9176
        %v10026 = vpack.c.b16 %v9179, %v9178
        %v10027 = vpack.c.b16 %v9181, %v9180
        %v10028 = vpack.c.b16 %v9183, %v9182
        %v10029 = vpack.c.b16 %v9185, %v9184
        %v10030 = vpack.c.b16 %v9187, %v9186
        %v10031 = vpack.c.b16 %v9189, %v9188
        %v10032 = vpack.c.b16 %v9191, %v9190
        %v10033 = vpack.c.b16 %v9193, %v9192
        %v10034 = vpack.c.b16 %v9195, %v9194
        %v10035 = vpack.c.b16 %v9197, %v9196
        %v10036 = vpack.c.b16 %v9199, %v9198
        %v10037 = vpack.c.b16 %v9201, %v9200
        %v10038 = vpack.c.b16 %v9203, %v9202
        %v10039 = vpack.c.b16 %v9205, %v9204
        %v10040 = vpack.c.b16 %v9207, %v9206
        %v10041 = vpack.c.b16 %v9209, %v9208
        %v10042 = vpack.c.b16 %v9211, %v9210
        %v10043 = vpack.c.b16 %v9213, %v9212
        %v10044 = vpack.c.b16 %v9215, %v9214
        %v10045 = vpack.c.b16 %v9217, %v9216
        %v10046 = vpack.c.b16 %v9219, %v9218
        %v10047 = vpack.c.b16 %v9221, %v9220
        %v10048 = vpack.c.b16 %v9223, %v9222
        %v10049 = vpack.c.b16 %v9225, %v9224
        %v10050 = vpack.c.b16 %v9227, %v9226
        %v10051 = vpack.c.b16 %v9229, %v9228
        %v10052 = vpack.c.b16 %v9231, %v9230
        %v10053 = vpack.c.b16 %v9233, %v9232
        %v10054 = vpack.c.b16 %v9235, %v9234
        %v10055 = vpack.c.b16 %v9237, %v9236
        %v10056 = vpack.c.b16 %v9239, %v9238
        %v10057 = vpack.c.b16 %v9241, %v9240
        %v10058 = vpack.c.b16 %v9243, %v9242
        %v10059 = vpack.c.b16 %v9245, %v9244
        %v10060 = vpack.c.b16 %v9247, %v9246
        %v10061 = vpack.c.b16 %v9249, %v9248
        %v10062 = vpack.c.b16 %v9251, %v9250
        %v10063 = vpack.c.b16 %v9253, %v9252
        %v10064 = vpack.c.b16 %v9255, %v9254
        %v10065 = vpack.c.b16 %v9257, %v9256
        %v10066 = vpack.c.b16 %v9259, %v9258
        %v10067 = vpack.c.b16 %v9261, %v9260
        %v10068 = vpack.c.b16 %v9263, %v9262
        %v10069 = vpack.c.b16 %v9265, %v9264
        %v10070 = vpack.c.b16 %v9267, %v9266
        %v10071 = vpack.c.b16 %v9269, %v9268
        %v10072 = vpack.c.b16 %v9271, %v9270
        %v10073 = vpack.c.b16 %v9273, %v9272
        %v10074 = vpack.c.b16 %v9275, %v9274
        %v10075 = vpack.c.b16 %v9277, %v9276
        %v10076 = vpack.c.b16 %v9279, %v9278
        %v10077 = vpack.c.b16 %v9281, %v9280
        %v10078 = vpack.c.b16 %v9283, %v9282
        %v10079 = vpack.c.b16 %v9285, %v9284
        %v10080 = vpack.c.b16 %v9287, %v9286
        %v10081 = vpack.c.b16 %v9289, %v9288
        %v10082 = vpack.c.b16 %v9291, %v9290
        %v10083 = vpack.c.b16 %v9293, %v9292
        %v10084 = vpack.c.b16 %v9295, %v9294
        %v10085 = vpack.c.b16 %v9297, %v9296
        %v10086 = vpack.c.b16 %v9299, %v9298
        %v10087 = vpack.c.b16 %v9301, %v9300
        %v10088 = vpack.c.b16 %v9303, %v9302
        %v10089 = vpack.c.b16 %v9305, %v9304
        %v10090 = vpack.c.b16 %v9307, %v9306
        %v10091 = vpack.c.b16 %v9309, %v9308
        %v10092 = vpack.c.b16 %v9311, %v9310
        %v10093 = vpack.c.b16 %v9313, %v9312
        %v10094 = vpack.c.b16 %v9315, %v9314
        %v10095 = vpack.c.b16 %v9317, %v9316
        %v10096 = vpack.c.b16 %v9319, %v9318
        %v10097 = vpack.c.b16 %v9321, %v9320
        %v10098 = vpack.c.b16 %v9323, %v9322
        %v10099 = vpack.c.b16 %v9325, %v9324
        %v10100 = vpack.c.b16 %v9327, %v9326
        %v10101 = vpack.c.b16 %v9329, %v9328
        %v10102 = vpack.c.b16 %v9331, %v9330
        %v10103 = vpack.c.b16 %v9333, %v9332
        %v10104 = vpack.c.b16 %v9335, %v9334
        %v10105 = vpack.c.b16 %v9337, %v9336
        %v10106 = vpack.c.b16 %v9339, %v9338
        %v10107 = vpack.c.b16 %v9341, %v9340
        %v10108 = vpack.c.b16 %v9343, %v9342
        %v10109 = vpack.c.b16 %v9345, %v9344
        %v10110 = vpack.c.b16 %v9347, %v9346
        %v10111 = vpack.c.b16 %v9349, %v9348
        %v10112 = vpack.c.b16 %v9351, %v9350
        %v10113 = vpack.c.b16 %v9353, %v9352
        %v10114 = vpack.c.b16 %v9355, %v9354
        %v10115 = vpack.c.b16 %v9357, %v9356
        %v10116 = vpack.c.b16 %v9359, %v9358
        %v10117 = vpack.c.b16 %v9361, %v9360
        %v10118 = vpack.c.b16 %v9363, %v9362
        %v10119 = vpack.c.b16 %v9365, %v9364
        %v10120 = vpack.c.b16 %v9367, %v9366
        %v10121 = vpack.c.b16 %v9369, %v9368
        %v10122 = vpack.c.b16 %v9371, %v9370
        %v10123 = vpack.c.b16 %v9373, %v9372
        %v10124 = vpack.c.b16 %v9375, %v9374
        %v10125 = vpack.c.b16 %v9377, %v9376
        %v10126 = vpack.c.b16 %v9379, %v9378
        %v10127 = vpack.c.b16 %v9381, %v9380
        %v10128 = vpack.c.b16 %v9383, %v9382
        %v10129 = vpack.c.b16 %v9385, %v9384
        %v10130 = vpack.c.b16 %v9387, %v9386
        %v10131 = vpack.c.b16 %v9389, %v9388
        %v10132 = vpack.c.b16 %v9391, %v9390
        %v10133 = vpack.c.b16 %v9393, %v9392
        %v10134 = vpack.c.b16 %v9395, %v9394
        %v10135 = vpack.c.b16 %v9397, %v9396
        %v10136 = vpack.c.b16 %v9399, %v9398
        %v10137 = vpack.c.b16 %v9401, %v9400
        %v10138 = vpack.c.b16 %v9403, %v9402
        %v10139 = vpack.c.b16 %v9405, %v9404
        %v10140 = vpack.c.b16 %v9407, %v9406
        %v10141 = vpack.c.b16 %v9409, %v9408
        %v10142 = vpack.c.b16 %v9411, %v9410
        %v10143 = vpack.c.b16 %v9413, %v9412
        %v10144 = vpack.c.b16 %v9415, %v9414
        %v10145 = vpack.c.b16 %v9417, %v9416
        %v10146 = vpack.c.b16 %v9419, %v9418
        %v10147 = vpack.c.b16 %v9421, %v9420
        %v10148 = vpack.c.b16 %v9423, %v9422
        %v10149 = vpack.c.b16 %v9425, %v9424
        %v10150 = vpack.c.b16 %v9427, %v9426
        %v10151 = vpack.c.b16 %v9429, %v9428
        %v10152 = vpack.c.b16 %v9431, %v9430
        %v10153 = vpack.c.b16 %v9433, %v9432
        %v10154 = vpack.c.b16 %v9435, %v9434
        %v10155 = vpack.c.b16 %v9437, %v9436
        %v10156 = vpack.c.b16 %v9439, %v9438
        %v10157 = vpack.c.b16 %v9441, %v9440
        %v10158 = vpack.c.b16 %v9443, %v9442
        %v10159 = vpack.c.b16 %v9445, %v9444
        %v10160 = vpack.c.b16 %v9447, %v9446
        %v10161 = vpack.c.b16 %v9449, %v9448
        %v10162 = vpack.c.b16 %v9451, %v9450
        %v10163 = vpack.c.b16 %v9453, %v9452
        %v10164 = vpack.c.b16 %v9455, %v9454
        %v10165 = vpack.c.b16 %v9457, %v9456
        %v10166 = vpack.c.b16 %v9459, %v9458
        %v10167 = vpack.c.b16 %v9461, %v9460
        %v10168 = vpack.c.b16 %v9463, %v9462
        %v10169 = vpack.c.b16 %v9465, %v9464
        %v10170 = vpack.c.b16 %v9467, %v9466
        %v10171 = vpack.c.b16 %v9469, %v9468
        %v10172 = vpack.c.b16 %v9471, %v9470
        %v10173 = vpack.c.b16 %v9473, %v9472
        %v10174 = vpack.c.b16 %v9475, %v9474
        %v10175 = vpack.c.b16 %v9477, %v9476
        %v10176 = vpack.c.b16 %v9479, %v9478
        %v10177 = vpack.c.b16 %v9481, %v9480
        %v10178 = vpack.c.b16 %v9483, %v9482
        %v10179 = vpack.c.b16 %v9485, %v9484
        %v10180 = vpack.c.b16 %v9487, %v9486
        %v10181 = vpack.c.b16 %v9489, %v9488
        %v10182 = vpack.c.b16 %v9491, %v9490
        %v10183 = vpack.c.b16 %v9493, %v9492
        %v10184 = vpack.c.b16 %v9495, %v9494
        %v10185 = vpack.c.b16 %v9497, %v9496
        %v10186 = vpack.c.b16 %v9499, %v9498
        %v10187 = vpack.c.b16 %v9501, %v9500
        %v10188 = vpack.c.b16 %v9503, %v9502
        %v10189 = vpack.c.b16 %v9505, %v9504
        %v10190 = vpack.c.b16 %v9507, %v9506
        %v10191 = vpack.c.b16 %v9509, %v9508
        %v10192 = vpack.c.b16 %v9511, %v9510
        %v10193 = vpack.c.b16 %v9513, %v9512
        %v10194 = vpack.c.b16 %v9515, %v9514
        %v10195 = vpack.c.b16 %v9517, %v9516
        %v10196 = vpack.c.b16 %v9519, %v9518
        %v10197 = vpack.c.b16 %v9521, %v9520
        %v10198 = vpack.c.b16 %v9523, %v9522
        %v10199 = vpack.c.b16 %v9525, %v9524
        %v10200 = vpack.c.b16 %v9527, %v9526
        %v10201 = vpack.c.b16 %v9529, %v9528
        %v10202 = vpack.c.b16 %v9531, %v9530
        %v10203 = vpack.c.b16 %v9533, %v9532
        %v10204 = vpack.c.b16 %v9535, %v9534
        %v10205 = vpack.c.b16 %v9537, %v9536
        %v10206 = vpack.c.b16 %v9539, %v9538
        %v10207 = vpack.c.b16 %v9541, %v9540
        %v10208 = vpack.c.b16 %v9543, %v9542
        %v10209 = vpack.c.b16 %v9545, %v9544
        %v10210 = vpack.c.b16 %v9547, %v9546
        %v10211 = vpack.c.b16 %v9549, %v9548
        %v10212 = vpack.c.b16 %v9551, %v9550
        %v10213 = vpack.c.b16 %v9553, %v9552
        %v10214 = vpack.c.b16 %v9555, %v9554
        %v10215 = vpack.c.b16 %v9557, %v9556
        %v10216 = vpack.c.b16 %v9559, %v9558
        %v10217 = vpack.c.b16 %v9561, %v9560
        %v10218 = vpack.c.b16 %v9563, %v9562
        %v10219 = vpack.c.b16 %v9565, %v9564
        %v10220 = vpack.c.b16 %v9567, %v9566
        %v10221 = vpack.c.b16 %v9569, %v9568
        %v10222 = vpack.c.b16 %v9571, %v9570
        %v10223 = vpack.c.b16 %v9573, %v9572
        %v10224 = vpack.c.b16 %v9575, %v9574
        %v10225 = vpack.c.b16 %v9577, %v9576
        %v10226 = vpack.c.b16 %v9579, %v9578
        %v10227 = vpack.c.b16 %v9581, %v9580
        %v10228 = vpack.c.b16 %v9583, %v9582
        %v10229 = vpack.c.b16 %v9585, %v9584
        %v10230 = vpack.c.b16 %v9587, %v9586
        %v10231 = vpack.c.b16 %v9589, %v9588
        %v10232 = vpack.c.b16 %v9591, %v9590
        %v10233 = vpack.c.b16 %v9593, %v9592
        %v10234 = vpack.c.b16 %v9595, %v9594
        %v10235 = vpack.c.b16 %v9597, %v9596
        %v10236 = vpack.c.b16 %v9599, %v9598
        %v10237 = vpack.c.b16 %v9601, %v9600
        %v10238 = vpack.c.b16 %v9603, %v9602
        %v10239 = vpack.c.b16 %v9605, %v9604
        %v10240 = vpack.c.b16 %v9607, %v9606
        %v10241 = vpack.c.b16 %v9609, %v9608
        %v10242 = vpack.c.b16 %v9611, %v9610
        %v10243 = vpack.c.b16 %v9613, %v9612
        %v10244 = vpack.c.b16 %v9615, %v9614
        %v10245 = vpack.c.b16 %v9617, %v9616
        %v10246 = vpack.c.b16 %v9619, %v9618
        %v10247 = vpack.c.b16 %v9621, %v9620
        %v10248 = vpack.c.b16 %v9623, %v9622
        %v10249 = vpack.c.b16 %v9625, %v9624
        %v10250 = vpack.c.b16 %v9627, %v9626
        %v10251 = vpack.c.b16 %v9629, %v9628
        %v10252 = vpack.c.b16 %v9631, %v9630
        %v10253 = vpack.c.b16 %v9633, %v9632
        %v10254 = vpack.c.b16 %v9635, %v9634
        %v10255 = vpack.c.b16 %v9637, %v9636
        %v10256 = vpack.c.b16 %v9639, %v9638
        %v10257 = vpack.c.b16 %v9641, %v9640
        %v10258 = vpack.c.b16 %v9643, %v9642
        %v10259 = vpack.c.b16 %v9645, %v9644
        %v10260 = vpack.c.b16 %v9647, %v9646
        %v10261 = vpack.c.b16 %v9649, %v9648
        %v10262 = vpack.c.b16 %v9651, %v9650
        %v10263 = vpack.c.b16 %v9653, %v9652
        %v10264 = vpack.c.b16 %v9655, %v9654
        %v10265 = vpack.c.b16 %v9657, %v9656
        %v10266 = vpack.c.b16 %v9659, %v9658
        %v10267 = vpack.c.b16 %v9661, %v9660
        %v10268 = vpack.c.b16 %v9663, %v9662
        %v10269 = vpack.c.b16 %v9665, %v9664
        %v10270 = vpack.c.b16 %v9667, %v9666
        %v10271 = vpack.c.b16 %v9669, %v9668
        %v10272 = vpack.c.b16 %v9671, %v9670
        %v10273 = vpack.c.b16 %v9673, %v9672
        %v10274 = vpack.c.b16 %v9675, %v9674
        %v10275 = vpack.c.b16 %v9677, %v9676
        %v10276 = vpack.c.b16 %v9679, %v9678
        %v10277 = vpack.c.b16 %v9681, %v9680
        %v10278 = vpack.c.b16 %v9683, %v9682
        %v10279 = vpack.c.b16 %v9685, %v9684
        %v10280 = vpack.c.b16 %v9687, %v9686
        %v10281 = vpack.c.b16 %v9689, %v9688
        %v10282 = vpack.c.b16 %v9691, %v9690
        %v10283 = vpack.c.b16 %v9693, %v9692
        %v10284 = vpack.c.b16 %v9695, %v9694
        %v10285 = vpack.c.b16 %v9697, %v9696
        %v10286 = vpack.c.b16 %v9699, %v9698
        %v10287 = vpack.c.b16 %v9701, %v9700
        %v10288 = vpack.c.b16 %v9703, %v9702
        %v10289 = vpack.c.b16 %v9705, %v9704
        %v10290 = vpack.c.b16 %v9707, %v9706
        %v10291 = vpack.c.b16 %v9709, %v9708
        %v10292 = vpack.c.b16 %v9711, %v9710
        %v10293 = vpack.c.b16 %v9713, %v9712
        %v10294 = vpack.c.b16 %v9715, %v9714
        %v10295 = vpack.c.b16 %v9717, %v9716
        %v10296 = vpack.c.b16 %v9719, %v9718
        %v10297 = vpack.c.b16 %v9721, %v9720
        %v10298 = vpack.c.b16 %v9723, %v9722
        %v10299 = vpack.c.b16 %v9725, %v9724
        %v10300 = vpack.c.b16 %v9727, %v9726
        %v10301 = vpack.c.b16 %v9729, %v9728
        %v10302 = vpack.c.b16 %v9731, %v9730
        %v10303 = vpack.c.b16 %v9733, %v9732
        %v10304 = vpack.c.b16 %v9735, %v9734
        %v10305 = vpack.c.b16 %v9737, %v9736
        %v10306 = vpack.c.b16 %v9739, %v9738
        %v10307 = vpack.c.b16 %v9741, %v9740
        %v10308 = vpack.c.b16 %v9743, %v9742
        %v10309 = vpack.c.b16 %v9745, %v9744
        %v10310 = vpack.c.b16 %v9747, %v9746
        %v10311 = vpack.c.b16 %v9749, %v9748
        %v10312 = vpack.c.b16 %v9751, %v9750
        %v10313 = vpack.c.b16 %v9753, %v9752
        %v10314 = vpack.c.b16 %v9755, %v9754
        %v10315 = vpack.c.b16 %v9757, %v9756
        %v10316 = vpack.c.b16 %v9759, %v9758
        %v10317 = vpack.c.b16 %v9761, %v9760
        %v10318 = vpack.c.b16 %v9763, %v9762
        %v10319 = vpack.c.b16 %v9765, %v9764
        %v10320 = vpack.c.b16 %v9767, %v9766
        %v10321 = vpack.c.b16 %v9769, %v9768
        %v10322 = vpack.c.b16 %v9771, %v9770
        %v10323 = vpack.c.b16 %v9773, %v9772
        %v10324 = vpack.c.b16 %v9775, %v9774
        %v10325 = vpack.c.b16 %v9777, %v9776
        %v10326 = vpack.c.b16 %v9779, %v9778
        %v10327 = vpack.c.b16 %v9781, %v9780
        %v10328 = vpack.c.b16 %v9783, %v9782
        %v10329 = vpack.c.b16 %v9785, %v9784
        %v10330 = vpack.c.b16 %v9787, %v9786
        %v10331 = vpack.c.b16 %v9789, %v9788
        %v10332 = vpack.c.b16 %v9791, %v9790
        %v10333 = vpack.c.b16 %v9793, %v9792
        %v10334 = vpack.c.b16 %v9795, %v9794
        %v10335 = vpack.c.b16 %v9797, %v9796
        %v10336 = vpack.c.b16 %v9799, %v9798
        %v10337 = vpack.c.b16 %v9801, %v9800
        %v10338 = vpack.c.b16 %v9803, %v9802
        %v10339 = vpack.c.b16 %v9805, %v9804
        %v10340 = vpack.c.b16 %v9807, %v9806
        %v10341 = vpack.c.b16 %v9809, %v9808
        %v10342 = vpack.c.b16 %v9811, %v9810
        %v10343 = vpack.c.b16 %v9813, %v9812
        %v10344 = vpack.c.b16 %v9815, %v9814
        %v10345 = vpack.c.b16 %v9817, %v9816
        %v10346 = vpack.c.b16 %v9819, %v9818
        %v10347 = vpack.c.b16 %v9821, %v9820
        %v10348 = vpack.c.b16 %v9823, %v9822
        %v10349 = vpack.c.b16 %v9825, %v9824
        %v10350 = vpack.c.b16 %v9827, %v9826
        %v10351 = vpack.c.b16 %v9829, %v9828
        %v10352 = vpack.c.b16 %v9831, %v9830
        %v10353 = vpack.c.b16 %v9833, %v9832
        %v10354 = vpack.c.b16 %v9835, %v9834
        %v10355 = vpack.c.b16 %v9837, %v9836
        %v10356 = vpack.c.b16 %v9839, %v9838
        %v10357 = vpack.c.b16 %v9841, %v9840
        %v10358 = vpack.c.b16 %v9843, %v9842
        %v10359 = vpack.c.b16 %v9845, %v9844
        %v10360 = vpack.c.b16 %v9847, %v9846
        %v10361 = vpack.c.b16 %v9849, %v9848
        %10874 = vmatprep.subr.bf16.mxu0 0
        %10875 = vmatpush1.bf16.msra.mxu0 %v9850
        %10876 = vmatprep.subr.bf16.mxu0 0
        %10877 = vmatpush1.bf16.msra.mxu0 %v9851
        %10878 = vmatprep.subr.bf16.mxu0 0
        %10879 = vmatpush1.bf16.msra.mxu0 %v9852
        %10880 = vmatprep.subr.bf16.mxu0 0
        %10881 = vmatpush1.bf16.msra.mxu0 %v9853
        %10882 = vmatprep.subr.bf16.mxu0 0
        %10883 = vmatpush1.bf16.msra.mxu0 %v9854
        %10884 = vmatprep.subr.bf16.mxu0 0
        %10885 = vmatpush1.bf16.msra.mxu0 %v9855
        %10886 = vmatprep.subr.bf16.mxu0 0
        %10887 = vmatpush1.bf16.msra.mxu0 %v9856
        %10888 = vmatprep.subr.bf16.mxu0 0
        %10889 = vmatpush1.bf16.msra.mxu0 %v9857
        %10890 = vmatprep.subr.bf16.mxu0 0
        %10891 = vmatpush1.bf16.msra.mxu0 %v9858
        %10892 = vmatprep.subr.bf16.mxu0 0
        %10893 = vmatpush1.bf16.msra.mxu0 %v9859
        %10894 = vmatprep.subr.bf16.mxu0 0
        %10895 = vmatpush1.bf16.msra.mxu0 %v9860
        %10896 = vmatprep.subr.bf16.mxu0 0
        %10897 = vmatpush1.bf16.msra.mxu0 %v9861
        %10898 = vmatprep.subr.bf16.mxu0 0
        %10899 = vmatpush1.bf16.msra.mxu0 %v9862
        %10900 = vmatprep.subr.bf16.mxu0 0
        %10901 = vmatpush1.bf16.msra.mxu0 %v9863
        %10902 = vmatprep.subr.bf16.mxu0 0
        %10903 = vmatpush1.bf16.msra.mxu0 %v9864
        %10904 = vmatprep.subr.bf16.mxu0 0
        %10905 = vmatpush1.bf16.msra.mxu0 %v9865
        %10906 = vmatprep.mubr.bf16.mxu0 %v7739
        %10907 = vmatmul.mubr.bf16.gmra.mrb[0].mxu0 %v7738
        %v10908 = vpop.f32.mrb[0].mxu0
        %v10909 = vadd.f32 0.0, %v10908
        %v10910 = vpop.f32.mrb[0].mxu0
        %v10911 = vpop.f32.mrb[0].mxu0
        %v10912 = vadd.f32 0.0, %v10911
        %v10913 = vpop.f32.mrb[0].mxu0
        %10914 = vdwg.mxu0
        %10915 = vmatprep.subr.bf16.mxu0 0
        %10916 = vmatpush1.bf16.msra.mxu0 %v9866
        %10917 = vmatprep.subr.bf16.mxu0 0
        %10918 = vmatpush1.bf16.msra.mxu0 %v9867
        %10919 = vmatprep.subr.bf16.mxu0 0
        %10920 = vmatpush1.bf16.msra.mxu0 %v9868
        %10921 = vmatprep.subr.bf16.mxu0 0
        %10922 = vmatpush1.bf16.msra.mxu0 %v9869
        %10923 = vmatprep.subr.bf16.mxu0 0
        %10924 = vmatpush1.bf16.msra.mxu0 %v9870
        %10925 = vmatprep.subr.bf16.mxu0 0
        %10926 = vmatpush1.bf16.msra.mxu0 %v9871
        %10927 = vmatprep.subr.bf16.mxu0 0
        %10928 = vmatpush1.bf16.msra.mxu0 %v9872
        %10929 = vmatprep.subr.bf16.mxu0 0
        %10930 = vmatpush1.bf16.msra.mxu0 %v9873
        %10931 = vmatprep.subr.bf16.mxu0 0
        %10932 = vmatpush1.bf16.msra.mxu0 %v9874
        %10933 = vmatprep.subr.bf16.mxu0 0
        %10934 = vmatpush1.bf16.msra.mxu0 %v9875
        %10935 = vmatprep.subr.bf16.mxu0 0
        %10936 = vmatpush1.bf16.msra.mxu0 %v9876
        %10937 = vmatprep.subr.bf16.mxu0 0
        %10938 = vmatpush1.bf16.msra.mxu0 %v9877
        %10939 = vmatprep.subr.bf16.mxu0 0
        %10940 = vmatpush1.bf16.msra.mxu0 %v9878
        %10941 = vmatprep.subr.bf16.mxu0 0
        %10942 = vmatpush1.bf16.msra.mxu0 %v9879
        %10943 = vmatprep.subr.bf16.mxu0 0
        %10944 = vmatpush1.bf16.msra.mxu0 %v9880
        %10945 = vmatprep.subr.bf16.mxu0 0
        %10946 = vmatpush1.bf16.msra.mxu0 %v9881
        %10947 = vmatprep.mubr.bf16.mxu0 %v7741
        %10948 = vmatmul.mubr.bf16.gmra.mrb[0].mxu0 %v7740
        %v10949 = vpop.f32.mrb[0].mxu0
        %v10950 = vadd.f32 %v10909, %v10949
        %v10951 = vpop.f32.mrb[0].mxu0
        %v10952 = vpop.f32.mrb[0].mxu0
        %v10953 = vadd.f32 %v10912, %v10952
        %v10954 = vpop.f32.mrb[0].mxu0
        %10955 = vdwg.mxu0
        %10956 = vmatprep.subr.bf16.mxu0 0
        %10957 = vmatpush1.bf16.msra.mxu0 %v9882
        %10958 = vmatprep.subr.bf16.mxu0 0
        %10959 = vmatpush1.bf16.msra.mxu0 %v9883
        %10960 = vmatprep.subr.bf16.mxu0 0
        %10961 = vmatpush1.bf16.msra.mxu0 %v9884
        %10962 = vmatprep.subr.bf16.mxu0 0
        %10963 = vmatpush1.bf16.msra.mxu0 %v9885
        %10964 = vmatprep.subr.bf16.mxu0 0
        %10965 = vmatpush1.bf16.msra.mxu0 %v9886
        %10966 = vmatprep.subr.bf16.mxu0 0
        %10967 = vmatpush1.bf16.msra.mxu0 %v9887
        %10968 = vmatprep.subr.bf16.mxu0 0
        %10969 = vmatpush1.bf16.msra.mxu0 %v9888
        %10970 = vmatprep.subr.bf16.mxu0 0
        %10971 = vmatpush1.bf16.msra.mxu0 %v9889
        %10972 = vmatprep.subr.bf16.mxu0 0
        %10973 = vmatpush1.bf16.msra.mxu0 %v9890
        %10974 = vmatprep.subr.bf16.mxu0 0
        %10975 = vmatpush1.bf16.msra.mxu0 %v9891
        %10976 = vmatprep.subr.bf16.mxu0 0
        %10977 = vmatpush1.bf16.msra.mxu0 %v9892
        %10978 = vmatprep.subr.bf16.mxu0 0
        %10979 = vmatpush1.bf16.msra.mxu0 %v9893
        %10980 = vmatprep.subr.bf16.mxu0 0
        %10981 = vmatpush1.bf16.msra.mxu0 %v9894
        %10982 = vmatprep.subr.bf16.mxu0 0
        %10983 = vmatpush1.bf16.msra.mxu0 %v9895
        %10984 = vmatprep.subr.bf16.mxu0 0
        %10985 = vmatpush1.bf16.msra.mxu0 %v9896
        %10986 = vmatprep.subr.bf16.mxu0 0
        %10987 = vmatpush1.bf16.msra.mxu0 %v9897
        %10988 = vmatprep.mubr.bf16.mxu0 %v7743
        %10989 = vmatmul.mubr.bf16.gmra.mrb[0].mxu0 %v7742
        %v10990 = vpop.f32.mrb[0].mxu0
        %v10991 = vadd.f32 %v10950, %v10990
        %v10992 = vpop.f32.mrb[0].mxu0
        %v10993 = vpop.f32.mrb[0].mxu0
        %v10994 = vadd.f32 %v10953, %v10993
        %v10995 = vpop.f32.mrb[0].mxu0
        %10996 = vdwg.mxu0
        %10997 = vmatprep.subr.bf16.mxu0 0
        %10998 = vmatpush1.bf16.msra.mxu0 %v9898
        %10999 = vmatprep.subr.bf16.mxu0 0
        %11000 = vmatpush1.bf16.msra.mxu0 %v9899
        %11001 = vmatprep.subr.bf16.mxu0 0
        %11002 = vmatpush1.bf16.msra.mxu0 %v9900
        %11003 = vmatprep.subr.bf16.mxu0 0
        %11004 = vmatpush1.bf16.msra.mxu0 %v9901
        %11005 = vmatprep.subr.bf16.mxu0 0
        %11006 = vmatpush1.bf16.msra.mxu0 %v9902
        %11007 = vmatprep.subr.bf16.mxu0 0
        %11008 = vmatpush1.bf16.msra.mxu0 %v9903
        %11009 = vmatprep.subr.bf16.mxu0 0
        %11010 = vmatpush1.bf16.msra.mxu0 %v9904
        %11011 = vmatprep.subr.bf16.mxu0 0
        %11012 = vmatpush1.bf16.msra.mxu0 %v9905
        %11013 = vmatprep.subr.bf16.mxu0 0
        %11014 = vmatpush1.bf16.msra.mxu0 %v9906
        %11015 = vmatprep.subr.bf16.mxu0 0
        %11016 = vmatpush1.bf16.msra.mxu0 %v9907
        %11017 = vmatprep.subr.bf16.mxu0 0
        %11018 = vmatpush1.bf16.msra.mxu0 %v9908
        %11019 = vmatprep.subr.bf16.mxu0 0
        %11020 = vmatpush1.bf16.msra.mxu0 %v9909
        %11021 = vmatprep.subr.bf16.mxu0 0
        %11022 = vmatpush1.bf16.msra.mxu0 %v9910
        %11023 = vmatprep.subr.bf16.mxu0 0
        %11024 = vmatpush1.bf16.msra.mxu0 %v9911
        %11025 = vmatprep.subr.bf16.mxu0 0
        %11026 = vmatpush1.bf16.msra.mxu0 %v9912
        %11027 = vmatprep.subr.bf16.mxu0 0
        %11028 = vmatpush1.bf16.msra.mxu0 %v9913
        %11029 = vmatprep.mubr.bf16.mxu0 %v7745
        %11030 = vmatmul.mubr.bf16.gmra.mrb[0].mxu0 %v7744
        %v11031 = vpop.f32.mrb[0].mxu0
        %v11032 = vadd.f32 %v10991, %v11031
        %v11033 = vpop.f32.mrb[0].mxu0
        %v11034 = vpop.f32.mrb[0].mxu0
        %v11035 = vadd.f32 %v10994, %v11034
        %v11036 = vpop.f32.mrb[0].mxu0
        %11037 = vdwg.mxu0
        %11038 = vmatprep.subr.bf16.mxu0 0
        %11039 = vmatpush1.bf16.msra.mxu0 %v9914
        %11040 = vmatprep.subr.bf16.mxu0 0
        %11041 = vmatpush1.bf16.msra.mxu0 %v9915
        %11042 = vmatprep.subr.bf16.mxu0 0
        %11043 = vmatpush1.bf16.msra.mxu0 %v9916
        %11044 = vmatprep.subr.bf16.mxu0 0
        %11045 = vmatpush1.bf16.msra.mxu0 %v9917
        %11046 = vmatprep.subr.bf16.mxu0 0
        %11047 = vmatpush1.bf16.msra.mxu0 %v9918
        %11048 = vmatprep.subr.bf16.mxu0 0
        %11049 = vmatpush1.bf16.msra.mxu0 %v9919
        %11050 = vmatprep.subr.bf16.mxu0 0
        %11051 = vmatpush1.bf16.msra.mxu0 %v9920
        %11052 = vmatprep.subr.bf16.mxu0 0
        %11053 = vmatpush1.bf16.msra.mxu0 %v9921
        %11054 = vmatprep.subr.bf16.mxu0 0
        %11055 = vmatpush1.bf16.msra.mxu0 %v9922
        %11056 = vmatprep.subr.bf16.mxu0 0
        %11057 = vmatpush1.bf16.msra.mxu0 %v9923
        %11058 = vmatprep.subr.bf16.mxu0 0
        %11059 = vmatpush1.bf16.msra.mxu0 %v9924
        %11060 = vmatprep.subr.bf16.mxu0 0
        %11061 = vmatpush1.bf16.msra.mxu0 %v9925
        %11062 = vmatprep.subr.bf16.mxu0 0
        %11063 = vmatpush1.bf16.msra.mxu0 %v9926
        %11064 = vmatprep.subr.bf16.mxu0 0
        %11065 = vmatpush1.bf16.msra.mxu0 %v9927
        %11066 = vmatprep.subr.bf16.mxu0 0
        %11067 = vmatpush1.bf16.msra.mxu0 %v9928
        %11068 = vmatprep.subr.bf16.mxu0 0
        %11069 = vmatpush1.bf16.msra.mxu0 %v9929
        %11070 = vmatprep.mubr.bf16.mxu0 %v7747
        %11071 = vmatmul.mubr.bf16.gmra.mrb[0].mxu0 %v7746
        %v11072 = vpop.f32.mrb[0].mxu0
        %v11073 = vadd.f32 %v11032, %v11072
        %v11074 = vpop.f32.mrb[0].mxu0
        %v11075 = vpop.f32.mrb[0].mxu0
        %v11076 = vadd.f32 %v11035, %v11075
        %v11077 = vpop.f32.mrb[0].mxu0
        %11078 = vdwg.mxu0
        %11079 = vmatprep.subr.bf16.mxu0 0
        %11080 = vmatpush1.bf16.msra.mxu0 %v9930
        %11081 = vmatprep.subr.bf16.mxu0 0
        %11082 = vmatpush1.bf16.msra.mxu0 %v9931
        %11083 = vmatprep.subr.bf16.mxu0 0
        %11084 = vmatpush1.bf16.msra.mxu0 %v9932
        %11085 = vmatprep.subr.bf16.mxu0 0
        %11086 = vmatpush1.bf16.msra.mxu0 %v9933
        %11087 = vmatprep.subr.bf16.mxu0 0
        %11088 = vmatpush1.bf16.msra.mxu0 %v9934
        %11089 = vmatprep.subr.bf16.mxu0 0
        %11090 = vmatpush1.bf16.msra.mxu0 %v9935
        %11091 = vmatprep.subr.bf16.mxu0 0
        %11092 = vmatpush1.bf16.msra.mxu0 %v9936
        %11093 = vmatprep.subr.bf16.mxu0 0
        %11094 = vmatpush1.bf16.msra.mxu0 %v9937
        %11095 = vmatprep.subr.bf16.mxu0 0
        %11096 = vmatpush1.bf16.msra.mxu0 %v9938
        %11097 = vmatprep.subr.bf16.mxu0 0
        %11098 = vmatpush1.bf16.msra.mxu0 %v9939
        %11099 = vmatprep.subr.bf16.mxu0 0
        %11100 = vmatpush1.bf16.msra.mxu0 %v9940
        %11101 = vmatprep.subr.bf16.mxu0 0
        %11102 = vmatpush1.bf16.msra.mxu0 %v9941
        %11103 = vmatprep.subr.bf16.mxu0 0
        %11104 = vmatpush1.bf16.msra.mxu0 %v9942
        %11105 = vmatprep.subr.bf16.mxu0 0
        %11106 = vmatpush1.bf16.msra.mxu0 %v9943
        %11107 = vmatprep.subr.bf16.mxu0 0
        %11108 = vmatpush1.bf16.msra.mxu0 %v9944
        %11109 = vmatprep.subr.bf16.mxu0 0
        %11110 = vmatpush1.bf16.msra.mxu0 %v9945
        %11111 = vmatprep.mubr.bf16.mxu0 %v7749
        %11112 = vmatmul.mubr.bf16.gmra.mrb[0].mxu0 %v7748
        %v11113 = vpop.f32.mrb[0].mxu0
        %v11114 = vadd.f32 %v11073, %v11113
        %v11115 = vpop.f32.mrb[0].mxu0
        %v11116 = vpop.f32.mrb[0].mxu0
        %v11117 = vadd.f32 %v11076, %v11116
        %v11118 = vpop.f32.mrb[0].mxu0
        %11119 = vdwg.mxu0
        %11120 = vmatprep.subr.bf16.mxu0 0
        %11121 = vmatpush1.bf16.msra.mxu0 %v9946
        %11122 = vmatprep.subr.bf16.mxu0 0
        %11123 = vmatpush1.bf16.msra.mxu0 %v9947
        %11124 = vmatprep.subr.bf16.mxu0 0
        %11125 = vmatpush1.bf16.msra.mxu0 %v9948
        %11126 = vmatprep.subr.bf16.mxu0 0
        %11127 = vmatpush1.bf16.msra.mxu0 %v9949
        %11128 = vmatprep.subr.bf16.mxu0 0
        %11129 = vmatpush1.bf16.msra.mxu0 %v9950
        %11130 = vmatprep.subr.bf16.mxu0 0
        %11131 = vmatpush1.bf16.msra.mxu0 %v9951
        %11132 = vmatprep.subr.bf16.mxu0 0
        %11133 = vmatpush1.bf16.msra.mxu0 %v9952
        %11134 = vmatprep.subr.bf16.mxu0 0
        %11135 = vmatpush1.bf16.msra.mxu0 %v9953
        %11136 = vmatprep.subr.bf16.mxu0 0
        %11137 = vmatpush1.bf16.msra.mxu0 %v9954
        %11138 = vmatprep.subr.bf16.mxu0 0
        %11139 = vmatpush1.bf16.msra.mxu0 %v9955
        %11140 = vmatprep.subr.bf16.mxu0 0
        %11141 = vmatpush1.bf16.msra.mxu0 %v9956
        %11142 = vmatprep.subr.bf16.mxu0 0
        %11143 = vmatpush1.bf16.msra.mxu0 %v9957
        %11144 = vmatprep.subr.bf16.mxu0 0
        %11145 = vmatpush1.bf16.msra.mxu0 %v9958
        %11146 = vmatprep.subr.bf16.mxu0 0
        %11147 = vmatpush1.bf16.msra.mxu0 %v9959
        %11148 = vmatprep.subr.bf16.mxu0 0
        %11149 = vmatpush1.bf16.msra.mxu0 %v9960
        %11150 = vmatprep.subr.bf16.mxu0 0
        %11151 = vmatpush1.bf16.msra.mxu0 %v9961
        %11152 = vmatprep.mubr.bf16.mxu0 %v7751
        %11153 = vmatmul.mubr.bf16.gmra.mrb[0].mxu0 %v7750
        %v11154 = vpop.f32.mrb[0].mxu0
        %v11155 = vadd.f32 %v11114, %v11154
        %v11156 = vpop.f32.mrb[0].mxu0
        %v11157 = vpop.f32.mrb[0].mxu0
        %v11158 = vadd.f32 %v11117, %v11157
        %v11159 = vpop.f32.mrb[0].mxu0
        %11160 = vdwg.mxu0
        %11161 = vmatprep.subr.bf16.mxu0 0
        %11162 = vmatpush1.bf16.msra.mxu0 %v9962
        %11163 = vmatprep.subr.bf16.mxu0 0
        %11164 = vmatpush1.bf16.msra.mxu0 %v9963
        %11165 = vmatprep.subr.bf16.mxu0 0
        %11166 = vmatpush1.bf16.msra.mxu0 %v9964
        %11167 = vmatprep.subr.bf16.mxu0 0
        %11168 = vmatpush1.bf16.msra.mxu0 %v9965
        %11169 = vmatprep.subr.bf16.mxu0 0
        %11170 = vmatpush1.bf16.msra.mxu0 %v9966
        %11171 = vmatprep.subr.bf16.mxu0 0
        %11172 = vmatpush1.bf16.msra.mxu0 %v9967
        %11173 = vmatprep.subr.bf16.mxu0 0
        %11174 = vmatpush1.bf16.msra.mxu0 %v9968
        %11175 = vmatprep.subr.bf16.mxu0 0
        %11176 = vmatpush1.bf16.msra.mxu0 %v9969
        %11177 = vmatprep.subr.bf16.mxu0 0
        %11178 = vmatpush1.bf16.msra.mxu0 %v9970
        %11179 = vmatprep.subr.bf16.mxu0 0
        %11180 = vmatpush1.bf16.msra.mxu0 %v9971
        %11181 = vmatprep.subr.bf16.mxu0 0
        %11182 = vmatpush1.bf16.msra.mxu0 %v9972
        %11183 = vmatprep.subr.bf16.mxu0 0
        %11184 = vmatpush1.bf16.msra.mxu0 %v9973
        %11185 = vmatprep.subr.bf16.mxu0 0
        %11186 = vmatpush1.bf16.msra.mxu0 %v9974
        %11187 = vmatprep.subr.bf16.mxu0 0
        %11188 = vmatpush1.bf16.msra.mxu0 %v9975
        %11189 = vmatprep.subr.bf16.mxu0 0
        %11190 = vmatpush1.bf16.msra.mxu0 %v9976
        %11191 = vmatprep.subr.bf16.mxu0 0
        %11192 = vmatpush1.bf16.msra.mxu0 %v9977
        %11193 = vmatprep.mubr.bf16.mxu0 %v7753
        %11194 = vmatmul.mubr.bf16.gmra.mrb[0].mxu0 %v7752
        %v11195 = vpop.f32.mrb[0].mxu0
        %v11196 = vadd.f32 %v11155, %v11195
        %v11197 = vpop.f32.mrb[0].mxu0
        %v11198 = vpop.f32.mrb[0].mxu0
        %v11199 = vadd.f32 %v11158, %v11198
        %v11200 = vpop.f32.mrb[0].mxu0
        %11201 = vdwg.mxu0
        %11202 = vmatprep.subr.bf16.mxu0 0
        %11203 = vmatpush1.bf16.msra.mxu0 %v9978
        %11204 = vmatprep.subr.bf16.mxu0 0
        %11205 = vmatpush1.bf16.msra.mxu0 %v9979
        %11206 = vmatprep.subr.bf16.mxu0 0
        %11207 = vmatpush1.bf16.msra.mxu0 %v9980
        %11208 = vmatprep.subr.bf16.mxu0 0
        %11209 = vmatpush1.bf16.msra.mxu0 %v9981
        %11210 = vmatprep.subr.bf16.mxu0 0
        %11211 = vmatpush1.bf16.msra.mxu0 %v9982
        %11212 = vmatprep.subr.bf16.mxu0 0
        %11213 = vmatpush1.bf16.msra.mxu0 %v9983
        %11214 = vmatprep.subr.bf16.mxu0 0
        %11215 = vmatpush1.bf16.msra.mxu0 %v9984
        %11216 = vmatprep.subr.bf16.mxu0 0
        %11217 = vmatpush1.bf16.msra.mxu0 %v9985
        %11218 = vmatprep.subr.bf16.mxu0 0
        %11219 = vmatpush1.bf16.msra.mxu0 %v9986
        %11220 = vmatprep.subr.bf16.mxu0 0
        %11221 = vmatpush1.bf16.msra.mxu0 %v9987
        %11222 = vmatprep.subr.bf16.mxu0 0
        %11223 = vmatpush1.bf16.msra.mxu0 %v9988
        %11224 = vmatprep.subr.bf16.mxu0 0
        %11225 = vmatpush1.bf16.msra.mxu0 %v9989
        %11226 = vmatprep.subr.bf16.mxu0 0
        %11227 = vmatpush1.bf16.msra.mxu0 %v9990
        %11228 = vmatprep.subr.bf16.mxu0 0
        %11229 = vmatpush1.bf16.msra.mxu0 %v9991
        %11230 = vmatprep.subr.bf16.mxu0 0
        %11231 = vmatpush1.bf16.msra.mxu0 %v9992
        %11232 = vmatprep.subr.bf16.mxu0 0
        %11233 = vmatpush1.bf16.msra.mxu0 %v9993
        %11234 = vmatprep.mubr.bf16.mxu0 %v7755
        %11235 = vmatmul.mubr.bf16.gmra.mrb[0].mxu0 %v7754
        %v11236 = vpop.f32.mrb[0].mxu0
        %v11237 = vadd.f32 %v11196, %v11236
        %v11238 = vpop.f32.mrb[0].mxu0
        %v11239 = vpop.f32.mrb[0].mxu0
        %v11240 = vadd.f32 %v11199, %v11239
        %v11241 = vpop.f32.mrb[0].mxu0
        %11242 = vdwg.mxu0
        %11243 = vmatprep.subr.bf16.mxu0 0
        %11244 = vmatpush1.bf16.msra.mxu0 %v9994
        %11245 = vmatprep.subr.bf16.mxu0 0
        %11246 = vmatpush1.bf16.msra.mxu0 %v9995
        %11247 = vmatprep.subr.bf16.mxu0 0
        %11248 = vmatpush1.bf16.msra.mxu0 %v9996
        %11249 = vmatprep.subr.bf16.mxu0 0
        %11250 = vmatpush1.bf16.msra.mxu0 %v9997
        %11251 = vmatprep.subr.bf16.mxu0 0
        %11252 = vmatpush1.bf16.msra.mxu0 %v9998
        %11253 = vmatprep.subr.bf16.mxu0 0
        %11254 = vmatpush1.bf16.msra.mxu0 %v9999
        %11255 = vmatprep.subr.bf16.mxu0 0
        %11256 = vmatpush1.bf16.msra.mxu0 %v10000
        %11257 = vmatprep.subr.bf16.mxu0 0
        %11258 = vmatpush1.bf16.msra.mxu0 %v10001
        %11259 = vmatprep.subr.bf16.mxu0 0
        %11260 = vmatpush1.bf16.msra.mxu0 %v10002
        %11261 = vmatprep.subr.bf16.mxu0 0
        %11262 = vmatpush1.bf16.msra.mxu0 %v10003
        %11263 = vmatprep.subr.bf16.mxu0 0
        %11264 = vmatpush1.bf16.msra.mxu0 %v10004
        %11265 = vmatprep.subr.bf16.mxu0 0
        %11266 = vmatpush1.bf16.msra.mxu0 %v10005
        %11267 = vmatprep.subr.bf16.mxu0 0
        %11268 = vmatpush1.bf16.msra.mxu0 %v10006
        %11269 = vmatprep.subr.bf16.mxu0 0
        %11270 = vmatpush1.bf16.msra.mxu0 %v10007
        %11271 = vmatprep.subr.bf16.mxu0 0
        %11272 = vmatpush1.bf16.msra.mxu0 %v10008
        %11273 = vmatprep.subr.bf16.mxu0 0
        %11274 = vmatpush1.bf16.msra.mxu0 %v10009
        %11275 = vmatprep.mubr.bf16.mxu0 %v7757
        %11276 = vmatmul.mubr.bf16.gmra.mrb[0].mxu0 %v7756
        %v11277 = vpop.f32.mrb[0].mxu0
        %v11278 = vadd.f32 %v11237, %v11277
        %v11279 = vpop.f32.mrb[0].mxu0
        %v11280 = vpop.f32.mrb[0].mxu0
        %v11281 = vadd.f32 %v11240, %v11280
        %v11282 = vpop.f32.mrb[0].mxu0
        %11283 = vdwg.mxu0
        %11284 = vmatprep.subr.bf16.mxu0 0
        %11285 = vmatpush1.bf16.msra.mxu0 %v10010
        %11286 = vmatprep.subr.bf16.mxu0 0
        %11287 = vmatpush1.bf16.msra.mxu0 %v10011
        %11288 = vmatprep.subr.bf16.mxu0 0
        %11289 = vmatpush1.bf16.msra.mxu0 %v10012
        %11290 = vmatprep.subr.bf16.mxu0 0
        %11291 = vmatpush1.bf16.msra.mxu0 %v10013
        %11292 = vmatprep.subr.bf16.mxu0 0
        %11293 = vmatpush1.bf16.msra.mxu0 %v10014
        %11294 = vmatprep.subr.bf16.mxu0 0
        %11295 = vmatpush1.bf16.msra.mxu0 %v10015
        %11296 = vmatprep.subr.bf16.mxu0 0
        %11297 = vmatpush1.bf16.msra.mxu0 %v10016
        %11298 = vmatprep.subr.bf16.mxu0 0
        %11299 = vmatpush1.bf16.msra.mxu0 %v10017
        %11300 = vmatprep.subr.bf16.mxu0 0
        %11301 = vmatpush1.bf16.msra.mxu0 %v10018
        %11302 = vmatprep.subr.bf16.mxu0 0
        %11303 = vmatpush1.bf16.msra.mxu0 %v10019
        %11304 = vmatprep.subr.bf16.mxu0 0
        %11305 = vmatpush1.bf16.msra.mxu0 %v10020
        %11306 = vmatprep.subr.bf16.mxu0 0
        %11307 = vmatpush1.bf16.msra.mxu0 %v10021
        %11308 = vmatprep.subr.bf16.mxu0 0
        %11309 = vmatpush1.bf16.msra.mxu0 %v10022
        %11310 = vmatprep.subr.bf16.mxu0 0
        %11311 = vmatpush1.bf16.msra.mxu0 %v10023
        %11312 = vmatprep.subr.bf16.mxu0 0
        %11313 = vmatpush1.bf16.msra.mxu0 %v10024
        %11314 = vmatprep.subr.bf16.mxu0 0
        %11315 = vmatpush1.bf16.msra.mxu0 %v10025
        %11316 = vmatprep.mubr.bf16.mxu0 %v7759
        %11317 = vmatmul.mubr.bf16.gmra.mrb[0].mxu0 %v7758
        %v11318 = vpop.f32.mrb[0].mxu0
        %v11319 = vadd.f32 %v11278, %v11318
        %v11320 = vpop.f32.mrb[0].mxu0
        %v11321 = vpop.f32.mrb[0].mxu0
        %v11322 = vadd.f32 %v11281, %v11321
        %v11323 = vpop.f32.mrb[0].mxu0
        %11324 = vdwg.mxu0
        %11325 = vmatprep.subr.bf16.mxu0 0
        %11326 = vmatpush1.bf16.msra.mxu0 %v10026
        %11327 = vmatprep.subr.bf16.mxu0 0
        %11328 = vmatpush1.bf16.msra.mxu0 %v10027
        %11329 = vmatprep.subr.bf16.mxu0 0
        %11330 = vmatpush1.bf16.msra.mxu0 %v10028
        %11331 = vmatprep.subr.bf16.mxu0 0
        %11332 = vmatpush1.bf16.msra.mxu0 %v10029
        %11333 = vmatprep.subr.bf16.mxu0 0
        %11334 = vmatpush1.bf16.msra.mxu0 %v10030
        %11335 = vmatprep.subr.bf16.mxu0 0
        %11336 = vmatpush1.bf16.msra.mxu0 %v10031
        %11337 = vmatprep.subr.bf16.mxu0 0
        %11338 = vmatpush1.bf16.msra.mxu0 %v10032
        %11339 = vmatprep.subr.bf16.mxu0 0
        %11340 = vmatpush1.bf16.msra.mxu0 %v10033
        %11341 = vmatprep.subr.bf16.mxu0 0
        %11342 = vmatpush1.bf16.msra.mxu0 %v10034
        %11343 = vmatprep.subr.bf16.mxu0 0
        %11344 = vmatpush1.bf16.msra.mxu0 %v10035
        %11345 = vmatprep.subr.bf16.mxu0 0
        %11346 = vmatpush1.bf16.msra.mxu0 %v10036
        %11347 = vmatprep.subr.bf16.mxu0 0
        %11348 = vmatpush1.bf16.msra.mxu0 %v10037
        %11349 = vmatprep.subr.bf16.mxu0 0
        %11350 = vmatpush1.bf16.msra.mxu0 %v10038
        %11351 = vmatprep.subr.bf16.mxu0 0
        %11352 = vmatpush1.bf16.msra.mxu0 %v10039
        %11353 = vmatprep.subr.bf16.mxu0 0
        %11354 = vmatpush1.bf16.msra.mxu0 %v10040
        %11355 = vmatprep.subr.bf16.mxu0 0
        %11356 = vmatpush1.bf16.msra.mxu0 %v10041
        %11357 = vmatprep.mubr.bf16.mxu0 %v7761
        %11358 = vmatmul.mubr.bf16.gmra.mrb[0].mxu0 %v7760
        %v11359 = vpop.f32.mrb[0].mxu0
        %v11360 = vadd.f32 %v11319, %v11359
        %v11361 = vpop.f32.mrb[0].mxu0
        %v11362 = vpop.f32.mrb[0].mxu0
        %v11363 = vadd.f32 %v11322, %v11362
        %v11364 = vpop.f32.mrb[0].mxu0
        %11365 = vdwg.mxu0
        %11366 = vmatprep.subr.bf16.mxu0 0
        %11367 = vmatpush1.bf16.msra.mxu0 %v10042
        %11368 = vmatprep.subr.bf16.mxu0 0
        %11369 = vmatpush1.bf16.msra.mxu0 %v10043
        %11370 = vmatprep.subr.bf16.mxu0 0
        %11371 = vmatpush1.bf16.msra.mxu0 %v10044
        %11372 = vmatprep.subr.bf16.mxu0 0
        %11373 = vmatpush1.bf16.msra.mxu0 %v10045
        %11374 = vmatprep.subr.bf16.mxu0 0
        %11375 = vmatpush1.bf16.msra.mxu0 %v10046
        %11376 = vmatprep.subr.bf16.mxu0 0
        %11377 = vmatpush1.bf16.msra.mxu0 %v10047
        %11378 = vmatprep.subr.bf16.mxu0 0
        %11379 = vmatpush1.bf16.msra.mxu0 %v10048
        %11380 = vmatprep.subr.bf16.mxu0 0
        %11381 = vmatpush1.bf16.msra.mxu0 %v10049
        %11382 = vmatprep.subr.bf16.mxu0 0
        %11383 = vmatpush1.bf16.msra.mxu0 %v10050
        %11384 = vmatprep.subr.bf16.mxu0 0
        %11385 = vmatpush1.bf16.msra.mxu0 %v10051
        %11386 = vmatprep.subr.bf16.mxu0 0
        %11387 = vmatpush1.bf16.msra.mxu0 %v10052
        %11388 = vmatprep.subr.bf16.mxu0 0
        %11389 = vmatpush1.bf16.msra.mxu0 %v10053
        %11390 = vmatprep.subr.bf16.mxu0 0
        %11391 = vmatpush1.bf16.msra.mxu0 %v10054
        %11392 = vmatprep.subr.bf16.mxu0 0
        %11393 = vmatpush1.bf16.msra.mxu0 %v10055
        %11394 = vmatprep.subr.bf16.mxu0 0
        %11395 = vmatpush1.bf16.msra.mxu0 %v10056
        %11396 = vmatprep.subr.bf16.mxu0 0
        %11397 = vmatpush1.bf16.msra.mxu0 %v10057
        %11398 = vmatprep.mubr.bf16.mxu0 %v7763
        %11399 = vmatmul.mubr.bf16.gmra.mrb[0].mxu0 %v7762
        %v11400 = vpop.f32.mrb[0].mxu0
        %v11401 = vadd.f32 %v11360, %v11400
        %v11402 = vpop.f32.mrb[0].mxu0
        %v11403 = vpop.f32.mrb[0].mxu0
        %v11404 = vadd.f32 %v11363, %v11403
        %v11405 = vpop.f32.mrb[0].mxu0
        %11406 = vdwg.mxu0
        %11407 = vmatprep.subr.bf16.mxu0 0
        %11408 = vmatpush1.bf16.msra.mxu0 %v10058
        %11409 = vmatprep.subr.bf16.mxu0 0
        %11410 = vmatpush1.bf16.msra.mxu0 %v10059
        %11411 = vmatprep.subr.bf16.mxu0 0
        %11412 = vmatpush1.bf16.msra.mxu0 %v10060
        %11413 = vmatprep.subr.bf16.mxu0 0
        %11414 = vmatpush1.bf16.msra.mxu0 %v10061
        %11415 = vmatprep.subr.bf16.mxu0 0
        %11416 = vmatpush1.bf16.msra.mxu0 %v10062
        %11417 = vmatprep.subr.bf16.mxu0 0
        %11418 = vmatpush1.bf16.msra.mxu0 %v10063
        %11419 = vmatprep.subr.bf16.mxu0 0
        %11420 = vmatpush1.bf16.msra.mxu0 %v10064
        %11421 = vmatprep.subr.bf16.mxu0 0
        %11422 = vmatpush1.bf16.msra.mxu0 %v10065
        %11423 = vmatprep.subr.bf16.mxu0 0
        %11424 = vmatpush1.bf16.msra.mxu0 %v10066
        %11425 = vmatprep.subr.bf16.mxu0 0
        %11426 = vmatpush1.bf16.msra.mxu0 %v10067
        %11427 = vmatprep.subr.bf16.mxu0 0
        %11428 = vmatpush1.bf16.msra.mxu0 %v10068
        %11429 = vmatprep.subr.bf16.mxu0 0
        %11430 = vmatpush1.bf16.msra.mxu0 %v10069
        %11431 = vmatprep.subr.bf16.mxu0 0
        %11432 = vmatpush1.bf16.msra.mxu0 %v10070
        %11433 = vmatprep.subr.bf16.mxu0 0
        %11434 = vmatpush1.bf16.msra.mxu0 %v10071
        %11435 = vmatprep.subr.bf16.mxu0 0
        %11436 = vmatpush1.bf16.msra.mxu0 %v10072
        %11437 = vmatprep.subr.bf16.mxu0 0
        %11438 = vmatpush1.bf16.msra.mxu0 %v10073
        %11439 = vmatprep.mubr.bf16.mxu0 %v7765
        %11440 = vmatmul.mubr.bf16.gmra.mrb[0].mxu0 %v7764
        %v11441 = vpop.f32.mrb[0].mxu0
        %v11442 = vadd.f32 %v11401, %v11441
        %v11443 = vpop.f32.mrb[0].mxu0
        %v11444 = vpop.f32.mrb[0].mxu0
        %v11445 = vadd.f32 %v11404, %v11444
        %v11446 = vpop.f32.mrb[0].mxu0
        %11447 = vdwg.mxu0
        %11448 = vmatprep.subr.bf16.mxu0 0
        %11449 = vmatpush1.bf16.msra.mxu0 %v10074
        %11450 = vmatprep.subr.bf16.mxu0 0
        %11451 = vmatpush1.bf16.msra.mxu0 %v10075
        %11452 = vmatprep.subr.bf16.mxu0 0
        %11453 = vmatpush1.bf16.msra.mxu0 %v10076
        %11454 = vmatprep.subr.bf16.mxu0 0
        %11455 = vmatpush1.bf16.msra.mxu0 %v10077
        %11456 = vmatprep.subr.bf16.mxu0 0
        %11457 = vmatpush1.bf16.msra.mxu0 %v10078
        %11458 = vmatprep.subr.bf16.mxu0 0
        %11459 = vmatpush1.bf16.msra.mxu0 %v10079
        %11460 = vmatprep.subr.bf16.mxu0 0
        %11461 = vmatpush1.bf16.msra.mxu0 %v10080
        %11462 = vmatprep.subr.bf16.mxu0 0
        %11463 = vmatpush1.bf16.msra.mxu0 %v10081
        %11464 = vmatprep.subr.bf16.mxu0 0
        %11465 = vmatpush1.bf16.msra.mxu0 %v10082
        %11466 = vmatprep.subr.bf16.mxu0 0
        %11467 = vmatpush1.bf16.msra.mxu0 %v10083
        %11468 = vmatprep.subr.bf16.mxu0 0
        %11469 = vmatpush1.bf16.msra.mxu0 %v10084
        %11470 = vmatprep.subr.bf16.mxu0 0
        %11471 = vmatpush1.bf16.msra.mxu0 %v10085
        %11472 = vmatprep.subr.bf16.mxu0 0
        %11473 = vmatpush1.bf16.msra.mxu0 %v10086
        %11474 = vmatprep.subr.bf16.mxu0 0
        %11475 = vmatpush1.bf16.msra.mxu0 %v10087
        %11476 = vmatprep.subr.bf16.mxu0 0
        %11477 = vmatpush1.bf16.msra.mxu0 %v10088
        %11478 = vmatprep.subr.bf16.mxu0 0
        %11479 = vmatpush1.bf16.msra.mxu0 %v10089
        %11480 = vmatprep.mubr.bf16.mxu0 %v7767
        %11481 = vmatmul.mubr.bf16.gmra.mrb[0].mxu0 %v7766
        %v11482 = vpop.f32.mrb[0].mxu0
        %v11483 = vadd.f32 %v11442, %v11482
        %v11484 = vpop.f32.mrb[0].mxu0
        %v11485 = vpop.f32.mrb[0].mxu0
        %v11486 = vadd.f32 %v11445, %v11485
        %v11487 = vpop.f32.mrb[0].mxu0
        %11488 = vdwg.mxu0
        %11489 = vmatprep.subr.bf16.mxu0 0
        %11490 = vmatpush1.bf16.msra.mxu0 %v10090
        %11491 = vmatprep.subr.bf16.mxu0 0
        %11492 = vmatpush1.bf16.msra.mxu0 %v10091
        %11493 = vmatprep.subr.bf16.mxu0 0
        %11494 = vmatpush1.bf16.msra.mxu0 %v10092
        %11495 = vmatprep.subr.bf16.mxu0 0
        %11496 = vmatpush1.bf16.msra.mxu0 %v10093
        %11497 = vmatprep.subr.bf16.mxu0 0
        %11498 = vmatpush1.bf16.msra.mxu0 %v10094
        %11499 = vmatprep.subr.bf16.mxu0 0
        %11500 = vmatpush1.bf16.msra.mxu0 %v10095
        %11501 = vmatprep.subr.bf16.mxu0 0
        %11502 = vmatpush1.bf16.msra.mxu0 %v10096
        %11503 = vmatprep.subr.bf16.mxu0 0
        %11504 = vmatpush1.bf16.msra.mxu0 %v10097
        %11505 = vmatprep.subr.bf16.mxu0 0
        %11506 = vmatpush1.bf16.msra.mxu0 %v10098
        %11507 = vmatprep.subr.bf16.mxu0 0
        %11508 = vmatpush1.bf16.msra.mxu0 %v10099
        %11509 = vmatprep.subr.bf16.mxu0 0
        %11510 = vmatpush1.bf16.msra.mxu0 %v10100
        %11511 = vmatprep.subr.bf16.mxu0 0
        %11512 = vmatpush1.bf16.msra.mxu0 %v10101
        %11513 = vmatprep.subr.bf16.mxu0 0
        %11514 = vmatpush1.bf16.msra.mxu0 %v10102
        %11515 = vmatprep.subr.bf16.mxu0 0
        %11516 = vmatpush1.bf16.msra.mxu0 %v10103
        %11517 = vmatprep.subr.bf16.mxu0 0
        %11518 = vmatpush1.bf16.msra.mxu0 %v10104
        %11519 = vmatprep.subr.bf16.mxu0 0
        %11520 = vmatpush1.bf16.msra.mxu0 %v10105
        %11521 = vmatprep.mubr.bf16.mxu0 %v7769
        %11522 = vmatmul.mubr.bf16.gmra.mrb[0].mxu0 %v7768
        %v11523 = vpop.f32.mrb[0].mxu0
        %v11524 = vadd.f32 %v11483, %v11523
        %v11525 = vpop.f32.mrb[0].mxu0
        %v11526 = vpop.f32.mrb[0].mxu0
        %v11527 = vadd.f32 %v11486, %v11526
        %v11528 = vpop.f32.mrb[0].mxu0
        %11529 = vdwg.mxu0
        %11530 = vmatprep.subr.bf16.mxu0 0
        %11531 = vmatpush1.bf16.msra.mxu0 %v10106
        %11532 = vmatprep.subr.bf16.mxu0 0
        %11533 = vmatpush1.bf16.msra.mxu0 %v10107
        %11534 = vmatprep.subr.bf16.mxu0 0
        %11535 = vmatpush1.bf16.msra.mxu0 %v10108
        %11536 = vmatprep.subr.bf16.mxu0 0
        %11537 = vmatpush1.bf16.msra.mxu0 %v10109
        %11538 = vmatprep.subr.bf16.mxu0 0
        %11539 = vmatpush1.bf16.msra.mxu0 %v10110
        %11540 = vmatprep.subr.bf16.mxu0 0
        %11541 = vmatpush1.bf16.msra.mxu0 %v10111
        %11542 = vmatprep.subr.bf16.mxu0 0
        %11543 = vmatpush1.bf16.msra.mxu0 %v10112
        %11544 = vmatprep.subr.bf16.mxu0 0
        %11545 = vmatpush1.bf16.msra.mxu0 %v10113
        %11546 = vmatprep.subr.bf16.mxu0 0
        %11547 = vmatpush1.bf16.msra.mxu0 %v10114
        %11548 = vmatprep.subr.bf16.mxu0 0
        %11549 = vmatpush1.bf16.msra.mxu0 %v10115
        %11550 = vmatprep.subr.bf16.mxu0 0
        %11551 = vmatpush1.bf16.msra.mxu0 %v10116
        %11552 = vmatprep.subr.bf16.mxu0 0
        %11553 = vmatpush1.bf16.msra.mxu0 %v10117
        %11554 = vmatprep.subr.bf16.mxu0 0
        %11555 = vmatpush1.bf16.msra.mxu0 %v10118
        %11556 = vmatprep.subr.bf16.mxu0 0
        %11557 = vmatpush1.bf16.msra.mxu0 %v10119
        %11558 = vmatprep.subr.bf16.mxu0 0
        %11559 = vmatpush1.bf16.msra.mxu0 %v10120
        %11560 = vmatprep.subr.bf16.mxu0 0
        %11561 = vmatpush1.bf16.msra.mxu0 %v10121
        %11562 = vmatprep.mubr.bf16.mxu0 %v7771
        %11563 = vmatmul.mubr.bf16.gmra.mrb[0].mxu0 %v7770
        %v11564 = vpop.f32.mrb[0].mxu0
        %v11565 = vadd.f32 %v11524, %v11564
        %v11566 = vpop.f32.mrb[0].mxu0
        %v11567 = vpop.f32.mrb[0].mxu0
        %v11568 = vadd.f32 %v11527, %v11567
        %v11569 = vpop.f32.mrb[0].mxu0
        %11570 = vdwg.mxu0
        %11571 = vmatprep.subr.bf16.mxu0 0
        %11572 = vmatpush1.bf16.msra.mxu0 %v10122
        %11573 = vmatprep.subr.bf16.mxu0 0
        %11574 = vmatpush1.bf16.msra.mxu0 %v10123
        %11575 = vmatprep.subr.bf16.mxu0 0
        %11576 = vmatpush1.bf16.msra.mxu0 %v10124
        %11577 = vmatprep.subr.bf16.mxu0 0
        %11578 = vmatpush1.bf16.msra.mxu0 %v10125
        %11579 = vmatprep.subr.bf16.mxu0 0
        %11580 = vmatpush1.bf16.msra.mxu0 %v10126
        %11581 = vmatprep.subr.bf16.mxu0 0
        %11582 = vmatpush1.bf16.msra.mxu0 %v10127
        %11583 = vmatprep.subr.bf16.mxu0 0
        %11584 = vmatpush1.bf16.msra.mxu0 %v10128
        %11585 = vmatprep.subr.bf16.mxu0 0
        %11586 = vmatpush1.bf16.msra.mxu0 %v10129
        %11587 = vmatprep.subr.bf16.mxu0 0
        %11588 = vmatpush1.bf16.msra.mxu0 %v10130
        %11589 = vmatprep.subr.bf16.mxu0 0
        %11590 = vmatpush1.bf16.msra.mxu0 %v10131
        %11591 = vmatprep.subr.bf16.mxu0 0
        %11592 = vmatpush1.bf16.msra.mxu0 %v10132
        %11593 = vmatprep.subr.bf16.mxu0 0
        %11594 = vmatpush1.bf16.msra.mxu0 %v10133
        %11595 = vmatprep.subr.bf16.mxu0 0
        %11596 = vmatpush1.bf16.msra.mxu0 %v10134
        %11597 = vmatprep.subr.bf16.mxu0 0
        %11598 = vmatpush1.bf16.msra.mxu0 %v10135
        %11599 = vmatprep.subr.bf16.mxu0 0
        %11600 = vmatpush1.bf16.msra.mxu0 %v10136
        %11601 = vmatprep.subr.bf16.mxu0 0
        %11602 = vmatpush1.bf16.msra.mxu0 %v10137
        %11603 = vmatprep.mubr.bf16.mxu0 %v7773
        %11604 = vmatmul.mubr.bf16.gmra.mrb[0].mxu0 %v7772
        %v11605 = vpop.f32.mrb[0].mxu0
        %v11606 = vadd.f32 %v11565, %v11605
        %v11607 = vpop.f32.mrb[0].mxu0
        %v11608 = vpop.f32.mrb[0].mxu0
        %v11609 = vadd.f32 %v11568, %v11608
        %v11610 = vpop.f32.mrb[0].mxu0
        %11611 = vdwg.mxu0
        %11612 = vmatprep.subr.bf16.mxu0 0
        %11613 = vmatpush1.bf16.msra.mxu0 %v10138
        %11614 = vmatprep.subr.bf16.mxu0 0
        %11615 = vmatpush1.bf16.msra.mxu0 %v10139
        %11616 = vmatprep.subr.bf16.mxu0 0
        %11617 = vmatpush1.bf16.msra.mxu0 %v10140
        %11618 = vmatprep.subr.bf16.mxu0 0
        %11619 = vmatpush1.bf16.msra.mxu0 %v10141
        %11620 = vmatprep.subr.bf16.mxu0 0
        %11621 = vmatpush1.bf16.msra.mxu0 %v10142
        %11622 = vmatprep.subr.bf16.mxu0 0
        %11623 = vmatpush1.bf16.msra.mxu0 %v10143
        %11624 = vmatprep.subr.bf16.mxu0 0
        %11625 = vmatpush1.bf16.msra.mxu0 %v10144
        %11626 = vmatprep.subr.bf16.mxu0 0
        %11627 = vmatpush1.bf16.msra.mxu0 %v10145
        %11628 = vmatprep.subr.bf16.mxu0 0
        %11629 = vmatpush1.bf16.msra.mxu0 %v10146
        %11630 = vmatprep.subr.bf16.mxu0 0
        %11631 = vmatpush1.bf16.msra.mxu0 %v10147
        %11632 = vmatprep.subr.bf16.mxu0 0
        %11633 = vmatpush1.bf16.msra.mxu0 %v10148
        %11634 = vmatprep.subr.bf16.mxu0 0
        %11635 = vmatpush1.bf16.msra.mxu0 %v10149
        %11636 = vmatprep.subr.bf16.mxu0 0
        %11637 = vmatpush1.bf16.msra.mxu0 %v10150
        %11638 = vmatprep.subr.bf16.mxu0 0
        %11639 = vmatpush1.bf16.msra.mxu0 %v10151
        %11640 = vmatprep.subr.bf16.mxu0 0
        %11641 = vmatpush1.bf16.msra.mxu0 %v10152
        %11642 = vmatprep.subr.bf16.mxu0 0
        %11643 = vmatpush1.bf16.msra.mxu0 %v10153
        %11644 = vmatprep.mubr.bf16.mxu0 %v7775
        %11645 = vmatmul.mubr.bf16.gmra.mrb[0].mxu0 %v7774
        %v11646 = vpop.f32.mrb[0].mxu0
        %v11647 = vadd.f32 %v11606, %v11646
        %v11648 = vpop.f32.mrb[0].mxu0
        %v11649 = vpop.f32.mrb[0].mxu0
        %v11650 = vadd.f32 %v11609, %v11649
        %v11651 = vpop.f32.mrb[0].mxu0
        %11652 = vdwg.mxu0
        %11653 = vmatprep.subr.bf16.mxu0 0
        %11654 = vmatpush1.bf16.msra.mxu0 %v10154
        %11655 = vmatprep.subr.bf16.mxu0 0
        %11656 = vmatpush1.bf16.msra.mxu0 %v10155
        %11657 = vmatprep.subr.bf16.mxu0 0
        %11658 = vmatpush1.bf16.msra.mxu0 %v10156
        %11659 = vmatprep.subr.bf16.mxu0 0
        %11660 = vmatpush1.bf16.msra.mxu0 %v10157
        %11661 = vmatprep.subr.bf16.mxu0 0
        %11662 = vmatpush1.bf16.msra.mxu0 %v10158
        %11663 = vmatprep.subr.bf16.mxu0 0
        %11664 = vmatpush1.bf16.msra.mxu0 %v10159
        %11665 = vmatprep.subr.bf16.mxu0 0
        %11666 = vmatpush1.bf16.msra.mxu0 %v10160
        %11667 = vmatprep.subr.bf16.mxu0 0
        %11668 = vmatpush1.bf16.msra.mxu0 %v10161
        %11669 = vmatprep.subr.bf16.mxu0 0
        %11670 = vmatpush1.bf16.msra.mxu0 %v10162
        %11671 = vmatprep.subr.bf16.mxu0 0
        %11672 = vmatpush1.bf16.msra.mxu0 %v10163
        %11673 = vmatprep.subr.bf16.mxu0 0
        %11674 = vmatpush1.bf16.msra.mxu0 %v10164
        %11675 = vmatprep.subr.bf16.mxu0 0
        %11676 = vmatpush1.bf16.msra.mxu0 %v10165
        %11677 = vmatprep.subr.bf16.mxu0 0
        %11678 = vmatpush1.bf16.msra.mxu0 %v10166
        %11679 = vmatprep.subr.bf16.mxu0 0
        %11680 = vmatpush1.bf16.msra.mxu0 %v10167
        %11681 = vmatprep.subr.bf16.mxu0 0
        %11682 = vmatpush1.bf16.msra.mxu0 %v10168
        %11683 = vmatprep.subr.bf16.mxu0 0
        %11684 = vmatpush1.bf16.msra.mxu0 %v10169
        %11685 = vmatprep.mubr.bf16.mxu0 %v7777
        %11686 = vmatmul.mubr.bf16.gmra.mrb[0].mxu0 %v7776
        %v11687 = vpop.f32.mrb[0].mxu0
        %v11688 = vadd.f32 %v11647, %v11687
        %v11689 = vpop.f32.mrb[0].mxu0
        %v11690 = vpop.f32.mrb[0].mxu0
        %v11691 = vadd.f32 %v11650, %v11690
        %v11692 = vpop.f32.mrb[0].mxu0
        %11693 = vdwg.mxu0
        %11694 = vmatprep.subr.bf16.mxu0 0
        %11695 = vmatpush1.bf16.msra.mxu0 %v10170
        %11696 = vmatprep.subr.bf16.mxu0 0
        %11697 = vmatpush1.bf16.msra.mxu0 %v10171
        %11698 = vmatprep.subr.bf16.mxu0 0
        %11699 = vmatpush1.bf16.msra.mxu0 %v10172
        %11700 = vmatprep.subr.bf16.mxu0 0
        %11701 = vmatpush1.bf16.msra.mxu0 %v10173
        %11702 = vmatprep.subr.bf16.mxu0 0
        %11703 = vmatpush1.bf16.msra.mxu0 %v10174
        %11704 = vmatprep.subr.bf16.mxu0 0
        %11705 = vmatpush1.bf16.msra.mxu0 %v10175
        %11706 = vmatprep.subr.bf16.mxu0 0
        %11707 = vmatpush1.bf16.msra.mxu0 %v10176
        %11708 = vmatprep.subr.bf16.mxu0 0
        %11709 = vmatpush1.bf16.msra.mxu0 %v10177
        %11710 = vmatprep.subr.bf16.mxu0 0
        %11711 = vmatpush1.bf16.msra.mxu0 %v10178
        %11712 = vmatprep.subr.bf16.mxu0 0
        %11713 = vmatpush1.bf16.msra.mxu0 %v10179
        %11714 = vmatprep.subr.bf16.mxu0 0
        %11715 = vmatpush1.bf16.msra.mxu0 %v10180
        %11716 = vmatprep.subr.bf16.mxu0 0
        %11717 = vmatpush1.bf16.msra.mxu0 %v10181
        %11718 = vmatprep.subr.bf16.mxu0 0
        %11719 = vmatpush1.bf16.msra.mxu0 %v10182
        %11720 = vmatprep.subr.bf16.mxu0 0
        %11721 = vmatpush1.bf16.msra.mxu0 %v10183
        %11722 = vmatprep.subr.bf16.mxu0 0
        %11723 = vmatpush1.bf16.msra.mxu0 %v10184
        %11724 = vmatprep.subr.bf16.mxu0 0
        %11725 = vmatpush1.bf16.msra.mxu0 %v10185
        %11726 = vmatprep.mubr.bf16.mxu0 %v7779
        %11727 = vmatmul.mubr.bf16.gmra.mrb[0].mxu0 %v7778
        %v11728 = vpop.f32.mrb[0].mxu0
        %v11729 = vadd.f32 %v11688, %v11728
        %v11730 = vpop.f32.mrb[0].mxu0
        %v11731 = vpop.f32.mrb[0].mxu0
        %v11732 = vadd.f32 %v11691, %v11731
        %v11733 = vpop.f32.mrb[0].mxu0
        %11734 = vdwg.mxu0
        %11735 = vmatprep.subr.bf16.mxu0 0
        %11736 = vmatpush1.bf16.msra.mxu0 %v10186
        %11737 = vmatprep.subr.bf16.mxu0 0
        %11738 = vmatpush1.bf16.msra.mxu0 %v10187
        %11739 = vmatprep.subr.bf16.mxu0 0
        %11740 = vmatpush1.bf16.msra.mxu0 %v10188
        %11741 = vmatprep.subr.bf16.mxu0 0
        %11742 = vmatpush1.bf16.msra.mxu0 %v10189
        %11743 = vmatprep.subr.bf16.mxu0 0
        %11744 = vmatpush1.bf16.msra.mxu0 %v10190
        %11745 = vmatprep.subr.bf16.mxu0 0
        %11746 = vmatpush1.bf16.msra.mxu0 %v10191
        %11747 = vmatprep.subr.bf16.mxu0 0
        %11748 = vmatpush1.bf16.msra.mxu0 %v10192
        %11749 = vmatprep.subr.bf16.mxu0 0
        %11750 = vmatpush1.bf16.msra.mxu0 %v10193
        %11751 = vmatprep.subr.bf16.mxu0 0
        %11752 = vmatpush1.bf16.msra.mxu0 %v10194
        %11753 = vmatprep.subr.bf16.mxu0 0
        %11754 = vmatpush1.bf16.msra.mxu0 %v10195
        %11755 = vmatprep.subr.bf16.mxu0 0
        %11756 = vmatpush1.bf16.msra.mxu0 %v10196
        %11757 = vmatprep.subr.bf16.mxu0 0
        %11758 = vmatpush1.bf16.msra.mxu0 %v10197
        %11759 = vmatprep.subr.bf16.mxu0 0
        %11760 = vmatpush1.bf16.msra.mxu0 %v10198
        %11761 = vmatprep.subr.bf16.mxu0 0
        %11762 = vmatpush1.bf16.msra.mxu0 %v10199
        %11763 = vmatprep.subr.bf16.mxu0 0
        %11764 = vmatpush1.bf16.msra.mxu0 %v10200
        %11765 = vmatprep.subr.bf16.mxu0 0
        %11766 = vmatpush1.bf16.msra.mxu0 %v10201
        %11767 = vmatprep.mubr.bf16.mxu0 %v7781
        %11768 = vmatmul.mubr.bf16.gmra.mrb[0].mxu0 %v7780
        %v11769 = vpop.f32.mrb[0].mxu0
        %v11770 = vadd.f32 %v11729, %v11769
        %v11771 = vpop.f32.mrb[0].mxu0
        %v11772 = vpop.f32.mrb[0].mxu0
        %v11773 = vadd.f32 %v11732, %v11772
        %v11774 = vpop.f32.mrb[0].mxu0
        %11775 = vdwg.mxu0
        %11776 = vmatprep.subr.bf16.mxu0 0
        %11777 = vmatpush1.bf16.msra.mxu0 %v10202
        %11778 = vmatprep.subr.bf16.mxu0 0
        %11779 = vmatpush1.bf16.msra.mxu0 %v10203
        %11780 = vmatprep.subr.bf16.mxu0 0
        %11781 = vmatpush1.bf16.msra.mxu0 %v10204
        %11782 = vmatprep.subr.bf16.mxu0 0
        %11783 = vmatpush1.bf16.msra.mxu0 %v10205
        %11784 = vmatprep.subr.bf16.mxu0 0
        %11785 = vmatpush1.bf16.msra.mxu0 %v10206
        %11786 = vmatprep.subr.bf16.mxu0 0
        %11787 = vmatpush1.bf16.msra.mxu0 %v10207
        %11788 = vmatprep.subr.bf16.mxu0 0
        %11789 = vmatpush1.bf16.msra.mxu0 %v10208
        %11790 = vmatprep.subr.bf16.mxu0 0
        %11791 = vmatpush1.bf16.msra.mxu0 %v10209
        %11792 = vmatprep.subr.bf16.mxu0 0
        %11793 = vmatpush1.bf16.msra.mxu0 %v10210
        %11794 = vmatprep.subr.bf16.mxu0 0
        %11795 = vmatpush1.bf16.msra.mxu0 %v10211
        %11796 = vmatprep.subr.bf16.mxu0 0
        %11797 = vmatpush1.bf16.msra.mxu0 %v10212
        %11798 = vmatprep.subr.bf16.mxu0 0
        %11799 = vmatpush1.bf16.msra.mxu0 %v10213
        %11800 = vmatprep.subr.bf16.mxu0 0
        %11801 = vmatpush1.bf16.msra.mxu0 %v10214
        %11802 = vmatprep.subr.bf16.mxu0 0
        %11803 = vmatpush1.bf16.msra.mxu0 %v10215
        %11804 = vmatprep.subr.bf16.mxu0 0
        %11805 = vmatpush1.bf16.msra.mxu0 %v10216
        %11806 = vmatprep.subr.bf16.mxu0 0
        %11807 = vmatpush1.bf16.msra.mxu0 %v10217
        %11808 = vmatprep.mubr.bf16.mxu0 %v7783
        %11809 = vmatmul.mubr.bf16.gmra.mrb[0].mxu0 %v7782
        %v11810 = vpop.f32.mrb[0].mxu0
        %v11811 = vadd.f32 %v11770, %v11810
        %v11812 = vpop.f32.mrb[0].mxu0
        %v11813 = vpop.f32.mrb[0].mxu0
        %v11814 = vadd.f32 %v11773, %v11813
        %v11815 = vpop.f32.mrb[0].mxu0
        %11816 = vdwg.mxu0
        %11817 = vmatprep.subr.bf16.mxu0 0
        %11818 = vmatpush1.bf16.msra.mxu0 %v10218
        %11819 = vmatprep.subr.bf16.mxu0 0
        %11820 = vmatpush1.bf16.msra.mxu0 %v10219
        %11821 = vmatprep.subr.bf16.mxu0 0
        %11822 = vmatpush1.bf16.msra.mxu0 %v10220
        %11823 = vmatprep.subr.bf16.mxu0 0
        %11824 = vmatpush1.bf16.msra.mxu0 %v10221
        %11825 = vmatprep.subr.bf16.mxu0 0
        %11826 = vmatpush1.bf16.msra.mxu0 %v10222
        %11827 = vmatprep.subr.bf16.mxu0 0
        %11828 = vmatpush1.bf16.msra.mxu0 %v10223
        %11829 = vmatprep.subr.bf16.mxu0 0
        %11830 = vmatpush1.bf16.msra.mxu0 %v10224
        %11831 = vmatprep.subr.bf16.mxu0 0
        %11832 = vmatpush1.bf16.msra.mxu0 %v10225
        %11833 = vmatprep.subr.bf16.mxu0 0
        %11834 = vmatpush1.bf16.msra.mxu0 %v10226
        %11835 = vmatprep.subr.bf16.mxu0 0
        %11836 = vmatpush1.bf16.msra.mxu0 %v10227
        %11837 = vmatprep.subr.bf16.mxu0 0
        %11838 = vmatpush1.bf16.msra.mxu0 %v10228
        %11839 = vmatprep.subr.bf16.mxu0 0
        %11840 = vmatpush1.bf16.msra.mxu0 %v10229
        %11841 = vmatprep.subr.bf16.mxu0 0
        %11842 = vmatpush1.bf16.msra.mxu0 %v10230
        %11843 = vmatprep.subr.bf16.mxu0 0
        %11844 = vmatpush1.bf16.msra.mxu0 %v10231
        %11845 = vmatprep.subr.bf16.mxu0 0
        %11846 = vmatpush1.bf16.msra.mxu0 %v10232
        %11847 = vmatprep.subr.bf16.mxu0 0
        %11848 = vmatpush1.bf16.msra.mxu0 %v10233
        %11849 = vmatprep.mubr.bf16.mxu0 %v7785
        %11850 = vmatmul.mubr.bf16.gmra.mrb[0].mxu0 %v7784
        %v11851 = vpop.f32.mrb[0].mxu0
        %v11852 = vadd.f32 %v11811, %v11851
        %v11853 = vpop.f32.mrb[0].mxu0
        %v11854 = vpop.f32.mrb[0].mxu0
        %v11855 = vadd.f32 %v11814, %v11854
        %v11856 = vpop.f32.mrb[0].mxu0
        %11857 = vdwg.mxu0
        %11858 = vmatprep.subr.bf16.mxu0 0
        %11859 = vmatpush1.bf16.msra.mxu0 %v10234
        %11860 = vmatprep.subr.bf16.mxu0 0
        %11861 = vmatpush1.bf16.msra.mxu0 %v10235
        %11862 = vmatprep.subr.bf16.mxu0 0
        %11863 = vmatpush1.bf16.msra.mxu0 %v10236
        %11864 = vmatprep.subr.bf16.mxu0 0
        %11865 = vmatpush1.bf16.msra.mxu0 %v10237
        %11866 = vmatprep.subr.bf16.mxu0 0
        %11867 = vmatpush1.bf16.msra.mxu0 %v10238
        %11868 = vmatprep.subr.bf16.mxu0 0
        %11869 = vmatpush1.bf16.msra.mxu0 %v10239
        %11870 = vmatprep.subr.bf16.mxu0 0
        %11871 = vmatpush1.bf16.msra.mxu0 %v10240
        %11872 = vmatprep.subr.bf16.mxu0 0
        %11873 = vmatpush1.bf16.msra.mxu0 %v10241
        %11874 = vmatprep.subr.bf16.mxu0 0
        %11875 = vmatpush1.bf16.msra.mxu0 %v10242
        %11876 = vmatprep.subr.bf16.mxu0 0
        %11877 = vmatpush1.bf16.msra.mxu0 %v10243
        %11878 = vmatprep.subr.bf16.mxu0 0
        %11879 = vmatpush1.bf16.msra.mxu0 %v10244
        %11880 = vmatprep.subr.bf16.mxu0 0
        %11881 = vmatpush1.bf16.msra.mxu0 %v10245
        %11882 = vmatprep.subr.bf16.mxu0 0
        %11883 = vmatpush1.bf16.msra.mxu0 %v10246
        %11884 = vmatprep.subr.bf16.mxu0 0
        %11885 = vmatpush1.bf16.msra.mxu0 %v10247
        %11886 = vmatprep.subr.bf16.mxu0 0
        %11887 = vmatpush1.bf16.msra.mxu0 %v10248
        %11888 = vmatprep.subr.bf16.mxu0 0
        %11889 = vmatpush1.bf16.msra.mxu0 %v10249
        %11890 = vmatprep.mubr.bf16.mxu0 %v7787
        %11891 = vmatmul.mubr.bf16.gmra.mrb[0].mxu0 %v7786
        %v11892 = vpop.f32.mrb[0].mxu0
        %v11893 = vadd.f32 %v11852, %v11892
        %v11894 = vpop.f32.mrb[0].mxu0
        %v11895 = vpop.f32.mrb[0].mxu0
        %v11896 = vadd.f32 %v11855, %v11895
        %v11897 = vpop.f32.mrb[0].mxu0
        %11898 = vdwg.mxu0
        %11899 = vmatprep.subr.bf16.mxu0 0
        %11900 = vmatpush1.bf16.msra.mxu0 %v10250
        %11901 = vmatprep.subr.bf16.mxu0 0
        %11902 = vmatpush1.bf16.msra.mxu0 %v10251
        %11903 = vmatprep.subr.bf16.mxu0 0
        %11904 = vmatpush1.bf16.msra.mxu0 %v10252
        %11905 = vmatprep.subr.bf16.mxu0 0
        %11906 = vmatpush1.bf16.msra.mxu0 %v10253
        %11907 = vmatprep.subr.bf16.mxu0 0
        %11908 = vmatpush1.bf16.msra.mxu0 %v10254
        %11909 = vmatprep.subr.bf16.mxu0 0
        %11910 = vmatpush1.bf16.msra.mxu0 %v10255
        %11911 = vmatprep.subr.bf16.mxu0 0
        %11912 = vmatpush1.bf16.msra.mxu0 %v10256
        %11913 = vmatprep.subr.bf16.mxu0 0
        %11914 = vmatpush1.bf16.msra.mxu0 %v10257
        %11915 = vmatprep.subr.bf16.mxu0 0
        %11916 = vmatpush1.bf16.msra.mxu0 %v10258
        %11917 = vmatprep.subr.bf16.mxu0 0
        %11918 = vmatpush1.bf16.msra.mxu0 %v10259
        %11919 = vmatprep.subr.bf16.mxu0 0
        %11920 = vmatpush1.bf16.msra.mxu0 %v10260
        %11921 = vmatprep.subr.bf16.mxu0 0
        %11922 = vmatpush1.bf16.msra.mxu0 %v10261
        %11923 = vmatprep.subr.bf16.mxu0 0
        %11924 = vmatpush1.bf16.msra.mxu0 %v10262
        %11925 = vmatprep.subr.bf16.mxu0 0
        %11926 = vmatpush1.bf16.msra.mxu0 %v10263
        %11927 = vmatprep.subr.bf16.mxu0 0
        %11928 = vmatpush1.bf16.msra.mxu0 %v10264
        %11929 = vmatprep.subr.bf16.mxu0 0
        %11930 = vmatpush1.bf16.msra.mxu0 %v10265
        %11931 = vmatprep.mubr.bf16.mxu0 %v7789
        %11932 = vmatmul.mubr.bf16.gmra.mrb[0].mxu0 %v7788
        %v11933 = vpop.f32.mrb[0].mxu0
        %v11934 = vadd.f32 %v11893, %v11933
        %v11935 = vpop.f32.mrb[0].mxu0
        %v11936 = vpop.f32.mrb[0].mxu0
        %v11937 = vadd.f32 %v11896, %v11936
        %v11938 = vpop.f32.mrb[0].mxu0
        %11939 = vdwg.mxu0
        %11940 = vmatprep.subr.bf16.mxu0 0
        %11941 = vmatpush1.bf16.msra.mxu0 %v10266
        %11942 = vmatprep.subr.bf16.mxu0 0
        %11943 = vmatpush1.bf16.msra.mxu0 %v10267
        %11944 = vmatprep.subr.bf16.mxu0 0
        %11945 = vmatpush1.bf16.msra.mxu0 %v10268
        %11946 = vmatprep.subr.bf16.mxu0 0
        %11947 = vmatpush1.bf16.msra.mxu0 %v10269
        %11948 = vmatprep.subr.bf16.mxu0 0
        %11949 = vmatpush1.bf16.msra.mxu0 %v10270
        %11950 = vmatprep.subr.bf16.mxu0 0
        %11951 = vmatpush1.bf16.msra.mxu0 %v10271
        %11952 = vmatprep.subr.bf16.mxu0 0
        %11953 = vmatpush1.bf16.msra.mxu0 %v10272
        %11954 = vmatprep.subr.bf16.mxu0 0
        %11955 = vmatpush1.bf16.msra.mxu0 %v10273
        %11956 = vmatprep.subr.bf16.mxu0 0
        %11957 = vmatpush1.bf16.msra.mxu0 %v10274
        %11958 = vmatprep.subr.bf16.mxu0 0
        %11959 = vmatpush1.bf16.msra.mxu0 %v10275
        %11960 = vmatprep.subr.bf16.mxu0 0
        %11961 = vmatpush1.bf16.msra.mxu0 %v10276
        %11962 = vmatprep.subr.bf16.mxu0 0
        %11963 = vmatpush1.bf16.msra.mxu0 %v10277
        %11964 = vmatprep.subr.bf16.mxu0 0
        %11965 = vmatpush1.bf16.msra.mxu0 %v10278
        %11966 = vmatprep.subr.bf16.mxu0 0
        %11967 = vmatpush1.bf16.msra.mxu0 %v10279
        %11968 = vmatprep.subr.bf16.mxu0 0
        %11969 = vmatpush1.bf16.msra.mxu0 %v10280
        %11970 = vmatprep.subr.bf16.mxu0 0
        %11971 = vmatpush1.bf16.msra.mxu0 %v10281
        %11972 = vmatprep.mubr.bf16.mxu0 %v7791
        %11973 = vmatmul.mubr.bf16.gmra.mrb[0].mxu0 %v7790
        %v11974 = vpop.f32.mrb[0].mxu0
        %v11975 = vadd.f32 %v11934, %v11974
        %v11976 = vpop.f32.mrb[0].mxu0
        %v11977 = vpop.f32.mrb[0].mxu0
        %v11978 = vadd.f32 %v11937, %v11977
        %v11979 = vpop.f32.mrb[0].mxu0
        %11980 = vdwg.mxu0
        %11981 = vmatprep.subr.bf16.mxu0 0
        %11982 = vmatpush1.bf16.msra.mxu0 %v10282
        %11983 = vmatprep.subr.bf16.mxu0 0
        %11984 = vmatpush1.bf16.msra.mxu0 %v10283
        %11985 = vmatprep.subr.bf16.mxu0 0
        %11986 = vmatpush1.bf16.msra.mxu0 %v10284
        %11987 = vmatprep.subr.bf16.mxu0 0
        %11988 = vmatpush1.bf16.msra.mxu0 %v10285
        %11989 = vmatprep.subr.bf16.mxu0 0
        %11990 = vmatpush1.bf16.msra.mxu0 %v10286
        %11991 = vmatprep.subr.bf16.mxu0 0
        %11992 = vmatpush1.bf16.msra.mxu0 %v10287
        %11993 = vmatprep.subr.bf16.mxu0 0
        %11994 = vmatpush1.bf16.msra.mxu0 %v10288
        %11995 = vmatprep.subr.bf16.mxu0 0
        %11996 = vmatpush1.bf16.msra.mxu0 %v10289
        %11997 = vmatprep.subr.bf16.mxu0 0
        %11998 = vmatpush1.bf16.msra.mxu0 %v10290
        %11999 = vmatprep.subr.bf16.mxu0 0
        %12000 = vmatpush1.bf16.msra.mxu0 %v10291
        %12001 = vmatprep.subr.bf16.mxu0 0
        %12002 = vmatpush1.bf16.msra.mxu0 %v10292
        %12003 = vmatprep.subr.bf16.mxu0 0
        %12004 = vmatpush1.bf16.msra.mxu0 %v10293
        %12005 = vmatprep.subr.bf16.mxu0 0
        %12006 = vmatpush1.bf16.msra.mxu0 %v10294
        %12007 = vmatprep.subr.bf16.mxu0 0
        %12008 = vmatpush1.bf16.msra.mxu0 %v10295
        %12009 = vmatprep.subr.bf16.mxu0 0
        %12010 = vmatpush1.bf16.msra.mxu0 %v10296
        %12011 = vmatprep.subr.bf16.mxu0 0
        %12012 = vmatpush1.bf16.msra.mxu0 %v10297
        %12013 = vmatprep.mubr.bf16.mxu0 %v7793
        %12014 = vmatmul.mubr.bf16.gmra.mrb[0].mxu0 %v7792
        %v12015 = vpop.f32.mrb[0].mxu0
        %v12016 = vadd.f32 %v11975, %v12015
        %v12017 = vpop.f32.mrb[0].mxu0
        %v12018 = vpop.f32.mrb[0].mxu0
        %v12019 = vadd.f32 %v11978, %v12018
        %v12020 = vpop.f32.mrb[0].mxu0
        %12021 = vdwg.mxu0
        %12022 = vmatprep.subr.bf16.mxu0 0
        %12023 = vmatpush1.bf16.msra.mxu0 %v10298
        %12024 = vmatprep.subr.bf16.mxu0 0
        %12025 = vmatpush1.bf16.msra.mxu0 %v10299
        %12026 = vmatprep.subr.bf16.mxu0 0
        %12027 = vmatpush1.bf16.msra.mxu0 %v10300
        %12028 = vmatprep.subr.bf16.mxu0 0
        %12029 = vmatpush1.bf16.msra.mxu0 %v10301
        %12030 = vmatprep.subr.bf16.mxu0 0
        %12031 = vmatpush1.bf16.msra.mxu0 %v10302
        %12032 = vmatprep.subr.bf16.mxu0 0
        %12033 = vmatpush1.bf16.msra.mxu0 %v10303
        %12034 = vmatprep.subr.bf16.mxu0 0
        %12035 = vmatpush1.bf16.msra.mxu0 %v10304
        %12036 = vmatprep.subr.bf16.mxu0 0
        %12037 = vmatpush1.bf16.msra.mxu0 %v10305
        %12038 = vmatprep.subr.bf16.mxu0 0
        %12039 = vmatpush1.bf16.msra.mxu0 %v10306
        %12040 = vmatprep.subr.bf16.mxu0 0
        %12041 = vmatpush1.bf16.msra.mxu0 %v10307
        %12042 = vmatprep.subr.bf16.mxu0 0
        %12043 = vmatpush1.bf16.msra.mxu0 %v10308
        %12044 = vmatprep.subr.bf16.mxu0 0
        %12045 = vmatpush1.bf16.msra.mxu0 %v10309
        %12046 = vmatprep.subr.bf16.mxu0 0
        %12047 = vmatpush1.bf16.msra.mxu0 %v10310
        %12048 = vmatprep.subr.bf16.mxu0 0
        %12049 = vmatpush1.bf16.msra.mxu0 %v10311
        %12050 = vmatprep.subr.bf16.mxu0 0
        %12051 = vmatpush1.bf16.msra.mxu0 %v10312
        %12052 = vmatprep.subr.bf16.mxu0 0
        %12053 = vmatpush1.bf16.msra.mxu0 %v10313
        %12054 = vmatprep.mubr.bf16.mxu0 %v7795
        %12055 = vmatmul.mubr.bf16.gmra.mrb[0].mxu0 %v7794
        %v12056 = vpop.f32.mrb[0].mxu0
        %v12057 = vadd.f32 %v12016, %v12056
        %v12058 = vpop.f32.mrb[0].mxu0
        %v12059 = vpop.f32.mrb[0].mxu0
        %v12060 = vadd.f32 %v12019, %v12059
        %v12061 = vpop.f32.mrb[0].mxu0
        %12062 = vdwg.mxu0
        %12063 = vmatprep.subr.bf16.mxu0 0
        %12064 = vmatpush1.bf16.msra.mxu0 %v10314
        %12065 = vmatprep.subr.bf16.mxu0 0
        %12066 = vmatpush1.bf16.msra.mxu0 %v10315
        %12067 = vmatprep.subr.bf16.mxu0 0
        %12068 = vmatpush1.bf16.msra.mxu0 %v10316
        %12069 = vmatprep.subr.bf16.mxu0 0
        %12070 = vmatpush1.bf16.msra.mxu0 %v10317
        %12071 = vmatprep.subr.bf16.mxu0 0
        %12072 = vmatpush1.bf16.msra.mxu0 %v10318
        %12073 = vmatprep.subr.bf16.mxu0 0
        %12074 = vmatpush1.bf16.msra.mxu0 %v10319
        %12075 = vmatprep.subr.bf16.mxu0 0
        %12076 = vmatpush1.bf16.msra.mxu0 %v10320
        %12077 = vmatprep.subr.bf16.mxu0 0
        %12078 = vmatpush1.bf16.msra.mxu0 %v10321
        %12079 = vmatprep.subr.bf16.mxu0 0
        %12080 = vmatpush1.bf16.msra.mxu0 %v10322
        %12081 = vmatprep.subr.bf16.mxu0 0
        %12082 = vmatpush1.bf16.msra.mxu0 %v10323
        %12083 = vmatprep.subr.bf16.mxu0 0
        %12084 = vmatpush1.bf16.msra.mxu0 %v10324
        %12085 = vmatprep.subr.bf16.mxu0 0
        %12086 = vmatpush1.bf16.msra.mxu0 %v10325
        %12087 = vmatprep.subr.bf16.mxu0 0
        %12088 = vmatpush1.bf16.msra.mxu0 %v10326
        %12089 = vmatprep.subr.bf16.mxu0 0
        %12090 = vmatpush1.bf16.msra.mxu0 %v10327
        %12091 = vmatprep.subr.bf16.mxu0 0
        %12092 = vmatpush1.bf16.msra.mxu0 %v10328
        %12093 = vmatprep.subr.bf16.mxu0 0
        %12094 = vmatpush1.bf16.msra.mxu0 %v10329
        %12095 = vmatprep.mubr.bf16.mxu0 %v7797
        %12096 = vmatmul.mubr.bf16.gmra.mrb[0].mxu0 %v7796
        %v12097 = vpop.f32.mrb[0].mxu0
        %v12098 = vadd.f32 %v12057, %v12097
        %v12099 = vpop.f32.mrb[0].mxu0
        %v12100 = vpop.f32.mrb[0].mxu0
        %v12101 = vadd.f32 %v12060, %v12100
        %v12102 = vpop.f32.mrb[0].mxu0
        %12103 = vdwg.mxu0
        %12104 = vmatprep.subr.bf16.mxu0 0
        %12105 = vmatpush1.bf16.msra.mxu0 %v10330
        %12106 = vmatprep.subr.bf16.mxu0 0
        %12107 = vmatpush1.bf16.msra.mxu0 %v10331
        %12108 = vmatprep.subr.bf16.mxu0 0
        %12109 = vmatpush1.bf16.msra.mxu0 %v10332
        %12110 = vmatprep.subr.bf16.mxu0 0
        %12111 = vmatpush1.bf16.msra.mxu0 %v10333
        %12112 = vmatprep.subr.bf16.mxu0 0
        %12113 = vmatpush1.bf16.msra.mxu0 %v10334
        %12114 = vmatprep.subr.bf16.mxu0 0
        %12115 = vmatpush1.bf16.msra.mxu0 %v10335
        %12116 = vmatprep.subr.bf16.mxu0 0
        %12117 = vmatpush1.bf16.msra.mxu0 %v10336
        %12118 = vmatprep.subr.bf16.mxu0 0
        %12119 = vmatpush1.bf16.msra.mxu0 %v10337
        %12120 = vmatprep.subr.bf16.mxu0 0
        %12121 = vmatpush1.bf16.msra.mxu0 %v10338
        %12122 = vmatprep.subr.bf16.mxu0 0
        %12123 = vmatpush1.bf16.msra.mxu0 %v10339
        %12124 = vmatprep.subr.bf16.mxu0 0
        %12125 = vmatpush1.bf16.msra.mxu0 %v10340
        %12126 = vmatprep.subr.bf16.mxu0 0
        %12127 = vmatpush1.bf16.msra.mxu0 %v10341
        %12128 = vmatprep.subr.bf16.mxu0 0
        %12129 = vmatpush1.bf16.msra.mxu0 %v10342
        %12130 = vmatprep.subr.bf16.mxu0 0
        %12131 = vmatpush1.bf16.msra.mxu0 %v10343
        %12132 = vmatprep.subr.bf16.mxu0 0
        %12133 = vmatpush1.bf16.msra.mxu0 %v10344
        %12134 = vmatprep.subr.bf16.mxu0 0
        %12135 = vmatpush1.bf16.msra.mxu0 %v10345
        %12136 = vmatprep.mubr.bf16.mxu0 %v7799
        %12137 = vmatmul.mubr.bf16.gmra.mrb[0].mxu0 %v7798
        %v12138 = vpop.f32.mrb[0].mxu0
        %v12139 = vadd.f32 %v12098, %v12138
        %v12140 = vpop.f32.mrb[0].mxu0
        %v12141 = vpop.f32.mrb[0].mxu0
        %v12142 = vadd.f32 %v12101, %v12141
        %v12143 = vpop.f32.mrb[0].mxu0
        %12144 = vdwg.mxu0
        %12145 = vmatprep.subr.bf16.mxu0 0
        %12146 = vmatpush1.bf16.msra.mxu0 %v10346
        %12147 = vmatprep.subr.bf16.mxu0 0
        %12148 = vmatpush1.bf16.msra.mxu0 %v10347
        %12149 = vmatprep.subr.bf16.mxu0 0
        %12150 = vmatpush1.bf16.msra.mxu0 %v10348
        %12151 = vmatprep.subr.bf16.mxu0 0
        %12152 = vmatpush1.bf16.msra.mxu0 %v10349
        %12153 = vmatprep.subr.bf16.mxu0 0
        %12154 = vmatpush1.bf16.msra.mxu0 %v10350
        %12155 = vmatprep.subr.bf16.mxu0 0
        %12156 = vmatpush1.bf16.msra.mxu0 %v10351
        %12157 = vmatprep.subr.bf16.mxu0 0
        %12158 = vmatpush1.bf16.msra.mxu0 %v10352
        %12159 = vmatprep.subr.bf16.mxu0 0
        %12160 = vmatpush1.bf16.msra.mxu0 %v10353
        %12161 = vmatprep.subr.bf16.mxu0 0
        %12162 = vmatpush1.bf16.msra.mxu0 %v10354
        %12163 = vmatprep.subr.bf16.mxu0 0
        %12164 = vmatpush1.bf16.msra.mxu0 %v10355
        %12165 = vmatprep.subr.bf16.mxu0 0
        %12166 = vmatpush1.bf16.msra.mxu0 %v10356
        %12167 = vmatprep.subr.bf16.mxu0 0
        %12168 = vmatpush1.bf16.msra.mxu0 %v10357
        %12169 = vmatprep.subr.bf16.mxu0 0
        %12170 = vmatpush1.bf16.msra.mxu0 %v10358
        %12171 = vmatprep.subr.bf16.mxu0 0
        %12172 = vmatpush1.bf16.msra.mxu0 %v10359
        %12173 = vmatprep.subr.bf16.mxu0 0
        %12174 = vmatpush1.bf16.msra.mxu0 %v10360
        %12175 = vmatprep.subr.bf16.mxu0 0
        %12176 = vmatpush1.bf16.msra.mxu0 %v10361
        %12177 = vmatprep.mubr.bf16.mxu0 %v7801
        %12178 = vmatmul.mubr.bf16.gmra.mrb[0].mxu0 %v7800
        %v12179 = vpop.f32.mrb[0].mxu0
        %v12180 = vadd.f32 %v12139, %v12179
        %v12181 = vpop.f32.mrb[0].mxu0
        %v12182 = vpop.f32.mrb[0].mxu0
        %v12183 = vadd.f32 %v12142, %v12182
        %v12184 = vpop.f32.mrb[0].mxu0
        %12185 = vdwg.mxu0
        %v12186 = vadd.f32 %v7736, %v12180
        %v12187 = vadd.f32 %v7737, %v12183
        %12188 = vst [vmem:[#allocation4] sm:$0xff] %v12186
        %12189 = vst [vmem:[#allocation4 + $0x8] sm:$0xff] %v12187
        %12190 = vst.msk [vmem:[#allocation2] sm:$0xff] %vm7721, %v7183
        %12191 = vst.msk [vmem:[#allocation2 + $0x8] sm:$0xff] %vm7721, %v7184
        %p12192 = scmp.eq.s32.totalorder %s32, 1
        // Predicated region
        $region57: #{tpu_custom_call.1} parent=35 // pred_check
          %p12193 = pneg %p12192
        $region58: #{tpu_custom_call.1} parent=35 // pred_check_branch
          %12195 = sbr.rel (%p12193) target = $region60
        $region59: #{tpu_custom_call.1} parent=35 // pred_region
          %v12196 = vld [vmem:[#allocation3] sm:$0xff]
          %v12197 = vld [vmem:[#allocation3 + $0x8] sm:$0xff]
          %v12198 = vrcp.pop %v12196
          %v12199 = vrcp.pop %v12197
          %v12200 = vld [vmem:[#allocation4] sm:$0xff]
          %v12201 = vld [vmem:[#allocation4 + $0x8] sm:$0xff]
          %12203 = vset.pattern.permute.xlu0 0
          %12204 = vperm.xlu0 %12203, %v12198
          %v12205 = vpop.permute.xlu0 %12204
          %12208 = vset.pattern.permute.xlu0 0
          %12209 = vperm.xlu0 %12208, %v12199
          %v12210 = vpop.permute.xlu0 %12209
          %v12212 = vmul.f32 %v12200, %v12205
          %v12213 = vmul.f32 %v12201, %v12210
          %v12214 = vpack.c.bf16 %v12213, %v12212
          %v12216 = vunpack.c.l.b16 %v12214
          %v12217 = vunpack.c.h.b16 %v12214
          %v12218 = vpack.c.b16 %v12216, %v12216
          %v12219 = vpack.c.b16 %v12217, %v12217
          %12222 = vst [vmem:[%s400] sm:$0xf] %v12218
          %12223 = vst [vmem:[%s400 + $0x4] sm:$0xf] %v12219
        $region60: #{tpu_custom_call.1} parent=35 // pred_fallthru
          _
        %s12224 = sand.u32 %s163, 1
        %s12225 = scalar_lea.sflag [#allocation7], %s12224
        %s12226 = sand.u32 %s163, 1
        %s12227 = smul.addr %s12226, 8
        %s12228 = scalar_lea.vmem [#allocation13], %s12227
        // Predicated region
        $region61: #{tpu_custom_call.1} parent=35 // pred_check
          %p12229 = pneg %p173
        $region62: #{tpu_custom_call.1} parent=35 // pred_check_branch
          %12231 = sbr.rel (%p12229) target = $region64
        $region63: #{tpu_custom_call.1} parent=35 // pred_region
          %s12232 = smul.u32 2, %s31
          %s12234 = ssub.s32 128, 128
          %12235 = vsyncadd %s12225, %s12234
          %s12236 = smul.addr %s30, 4
          %s12237 = sadd.s32 %s12232, %s12236
          %s12238 = smul.addr %s12237, 64
          %s12239 = scalar_lea.hbm %s4, %s12238
          %s12240 = sshll.u32 %s12228, 4
          %s12241 = int_to_ptr.vmem [resolvable:$true] %s12240
          %12246 = dma.vmem_to_hbm [thread:$0]  %s12241, 128, %s12239, %s12225, 64, 64, 4
        $region64: #{tpu_custom_call.1} parent=35 // pred_fallthru
          _
      $region36: #{tpu_custom_call.1} parent=5 // pred_fallthru
        _
      %p12247 = scmp.le.s32.totalorder 2, %s20
      // Predicated region
      $region65: #{tpu_custom_call.1} parent=5 // pred_check
        %p12248 = pneg %p12247
      $region66: #{tpu_custom_call.1} parent=5 // pred_check_branch
        %12250 = sbr.rel (%p12248) target = $region68
      $region67: #{tpu_custom_call.1} parent=5 // pred_region
        %s12251 = ssub.s32 %s20, 2
        // Predicated region
        $region69: #{tpu_custom_call.1} parent=67 // pred_check
          %p12252 = pneg %p179
        $region70: #{tpu_custom_call.1} parent=67 // pred_check_branch
          %12254 = sbr.rel (%p12252) target = $region72
        $region71: #{tpu_custom_call.1} parent=67 // pred_region
          %s12255 = sand.u32 %s164, 1
          %s12256 = scalar_lea.sflag [#allocation7], %s12255
          %s12257 = sand.u32 %s164, 1
          %s12258 = smul.addr %s12257, 8
          %s12259 = scalar_lea.vmem [#allocation13], %s12258
          %12260 = dma.done %s12256, 128
        $region72: #{tpu_custom_call.1} parent=67 // pred_fallthru
          _
      $region68: #{tpu_custom_call.1} parent=5 // pred_fallthru
        _
    $region6: #{tpu_custom_call.1} parent=1 // loop_footer
      %s24 = sadd.s32 1, %s20
    $region7: #{tpu_custom_call.1} parent=1 // loop_footer_branch
      %19 = sbr.rel target = $region3
    $region8: #{tpu_custom_call.1} parent=1 // loop_exit
      _
    %12261 = vsyncpa [#allocation6], 1
    %s12262 = scalar_lea.sflag [#allocation6], 1
    %12263 = vsyncpa %s12262, 1
    %12264 = vsyncpa [#allocation9], 1
    %s12265 = scalar_lea.sflag [#allocation9], 1
    %12266 = vsyncpa %s12265, 1
    %12267 = vsyncpa [#allocation12], 1
    %12268 = vsyncpa [#allocation7], 1
    %s12269 = scalar_lea.sflag [#allocation7], 1
    %12270 = vsyncpa %s12269, 1

</llo_original>
